<compile_context>
chip_gen: v7x
topology: tpu7x:2x2x1
jax: 0.10.0
libtpu: 0.0.40
codegen_flags: <defaults>
</compile_context>

<pallas_src>
import functools

import numpy as np

import jax
import jax.numpy as jnp
from jax import lax
from jax.experimental import pallas as pl
from jax.experimental.pallas import tpu as pltpu

LEAK = 0.01  # LeakyReLU negative slope


def _round_up(v, m):
    return (v + m - 1) // m * m


def _derive_dims(hp):
    Hm = hp["max_length"]
    Wm = hp["num_filter_bank"]
    ph, pw = hp["max_pooling_size"]
    T = Hm // ph
    W2 = Wm // pw
    return dict(T=T, W2=W2,
                Hp1=_round_up(Hm + 2, 8), Wp1=Wm + 2,
                Hp2=_round_up(T + 2, 8), Wp2=W2 + 2)


def _full_spec(shape):
    nd = len(shape)
    return pl.BlockSpec(tuple(shape), lambda i, _nd=nd: (0,) * _nd)


# ----------------------------------------------------------------------------
# Kernel 1: conv1 + pool + conv2..6 + linear(+BN folded) + LeakyReLU
# ----------------------------------------------------------------------------
def _cnn_kernel(x_ref, w1_ref, b1_ref, prow_ref, pla_ref, plb_ref,
                w2_ref, b2_ref, wr_ref, br_ref, psel_ref, wlin_ref, blin_ref,
                o_ref, *, n_rest, t_valid):
    f32 = jnp.float32

    def leaky(v):
        return jnp.where(v > 0, v, LEAK * v)

    def conv_banded(h, w3_ref, base, bias):
        # 3x3 'same' conv in banded layout: 2 sublane rolls + 3 MXU dots.
        r = h.shape[0]
        acc = jnp.dot(pltpu.roll(h, 1, 0), w3_ref[base + 0],
                      preferred_element_type=f32)                       # dh=-1
        acc = acc + jnp.dot(h, w3_ref[base + 1],
                            preferred_element_type=f32)                 # dh= 0
        acc = acc + jnp.dot(pltpu.roll(h, r - 1, 0), w3_ref[base + 2],
                            preferred_element_type=f32)                 # dh=+1
        return leaky(acc + bias)

    # conv1 + LeakyReLU  (rows: padded H of one image, lanes: padded W * Cin)
    y1 = conv_banded(x_ref[...], w1_ref, 0, b1_ref[...])

    # 2x2 max-pool + re-embed into the stage-2 padded grid:
    #   row-pair max via one sublane roll, then row/lane selection matmuls.
    r1 = y1.shape[0]
    m1 = jnp.maximum(y1, pltpu.roll(y1, r1 - 1, 0))       # max(y[r], y[r+1])
    t1 = jnp.dot(prow_ref[...], m1, preferred_element_type=f32)
    pooled = jnp.maximum(
        jnp.dot(t1, pla_ref[...], preferred_element_type=f32),   # left col
        jnp.dot(t1, plb_ref[...], preferred_element_type=f32))   # right col

    # conv2..conv6 (+LeakyReLU each); keep the 1-wide zero padding ring
    # exactly zero between convs (iota row mask; padding lanes are zero by
    # banded-weight construction).
    r2 = pooled.shape[0]
    row = lax.broadcasted_iota(jnp.int32, (r2, 1), 0)
    row_mask = ((row >= 1) & (row <= t_valid)).astype(f32)

    h = conv_banded(pooled, w2_ref, 0, b2_ref[...]) * row_mask
    for i in range(n_rest):
        h = conv_banded(h, wr_ref, 3 * i, br_ref[i])
        if i < n_rest - 1:
            h = h * row_mask

    # Extract only the T valid time rows, then linear_cnn_to_lstm
    # (+ folded eval-mode BatchNorm) + LeakyReLU.
    sel = jnp.dot(psel_ref[...], h, preferred_element_type=f32)
    z = jnp.dot(sel, wlin_ref[...], preferred_element_type=f32) + blin_ref[...]
    o_ref[...] = leaky(z)


def cnn_stage(x_pad, prep, hp, batch):
    d = _derive_dims(hp)
    Hp1, Wp1, T = d["Hp1"], d["Wp1"], d["T"]
    Cin = hp["in_channel"]
    Hc = hp["hidden_dim_cnn"]
    # Per-image output block must be sublane aligned (or be the full array).
    assert batch == 1 or T % 8 == 0, "time rows per image must be 8-aligned"

    kern = functools.partial(_cnn_kernel, n_rest=4, t_valid=T)
    in_args = [x_pad,
               prep["conv1_w"], prep["conv1_b"],
               prep["p_rows"], prep["p_lane_a"], prep["p_lane_b"],
               prep["conv2_w"], prep["conv2_b"],
               prep["convr_w"], prep["convr_b"],
               prep["p_sel"], prep["lin_w"], prep["lin_b"]]
    in_specs = [pl.BlockSpec((Hp1, Wp1 * Cin), lambda b: (b, 0))]
    in_specs += [_full_spec(a.shape) for a in in_args[1:]]
    return pl.pallas_call(
        kern,
        out_shape=jax.ShapeDtypeStruct((batch * T, Hc), jnp.float32),
        grid=(batch,),
        in_specs=in_specs,
        out_specs=pl.BlockSpec((T, Hc), lambda b: (b, 0)),
        compiler_params=pltpu.CompilerParams(
            dimension_semantics=("parallel",)),
    )(*in_args)


# ----------------------------------------------------------------------------
# Kernel 2: LSTM gates + bidirectional recurrence + attention + FC head
# ----------------------------------------------------------------------------
def _lstm_head_kernel(*refs, num_layers, t_steps, batch, hdim):
    f32 = jnp.float32
    H = hdim
    it = iter(refs)
    x_ref = next(it)
    perm_ref = next(it)
    layers = [(next(it), next(it), next(it)) for _ in range(num_layers)]
    a1w_ref = next(it)
    sc_ref = next(it)
    fc1w_ref = next(it)
    fc1b_ref = next(it)
    fc2w_ref = next(it)
    fc2b_ref = next(it)
    res_ref = next(it)
    prob_ref = next(it)
    gates_ref = next(it)                       # VMEM scratch (T*B, 8H)

    def cell(g, c):
        i = jax.nn.sigmoid(g[:, 0:H])
        f = jax.nn.sigmoid(g[:, H:2 * H])
        gg = jnp.tanh(g[:, 2 * H:3 * H])
        o = jax.nn.sigmoid(g[:, 3 * H:4 * H])
        c_new = f * c + i * gg
        return o * jnp.tanh(c_new), c_new

    # batch-major rows (from the batch-gridded CNN kernel) -> time-major rows
    x2 = jnp.dot(perm_ref[...], x_ref[...], preferred_element_type=f32)

    oc = None
    for li, (wih_ref, b_ref, whh_ref) in enumerate(layers):
        # All input gates for fwd+bwd with ONE lane-dense (T*B, 8H) matmul.
        gates_ref[...] = (jnp.dot(x2, wih_ref[...],
                                  preferred_element_type=f32) + b_ref[...])
        whh = whh_ref[...]                     # block-diagonal (2H, 8H)
        h_f = jnp.zeros((batch, H), f32)
        c_f = jnp.zeros((batch, H), f32)
        h_b = jnp.zeros((batch, H), f32)
        c_b = jnp.zeros((batch, H), f32)
        outs_f = [None] * t_steps
        outs_b = [None] * t_steps
        for s in range(t_steps):               # static unroll, tiny T
            rec = jnp.dot(jnp.concatenate([h_f, h_b], axis=-1), whh,
                          preferred_element_type=f32)          # one dot/step
            sf = s * batch
            sb = (t_steps - 1 - s) * batch
            gf = gates_ref[sf:sf + batch, 0:4 * H] + rec[:, 0:4 * H]
            gb = gates_ref[sb:sb + batch, 4 * H:8 * H] + rec[:, 4 * H:8 * H]
            h_f, c_f = cell(gf, c_f)
            h_b, c_b = cell(gb, c_b)
            outs_f[s] = h_f
            outs_b[t_steps - 1 - s] = h_b
        oc = [jnp.concatenate([outs_f[t], outs_b[t]], axis=-1)
              for t in range(t_steps)]                          # each (B, 2H)
        if li + 1 < num_layers:
            x2 = jnp.concatenate(oc, axis=0)                    # time-major

    # attention pooling over time: a_fc1 -> sigmoid -> a_fc2 -> softmax(T)
    b1 = sc_ref[0]
    w2 = sc_ref[1]
    b2 = sc_ref[2]
    a1w = a1w_ref[...]                                          # (1, 2H)
    scores = []
    for t in range(t_steps):
        st = jnp.sum(oc[t] * a1w, axis=-1, keepdims=True) + b1
        scores.append(jax.nn.sigmoid(st) * w2 + b2)
    m = scores[0]
    for t in range(1, t_steps):
        m = jnp.maximum(m, scores[t])
    exps = [jnp.exp(sv - m) for sv in scores]
    denom = exps[0]
    for t in range(1, t_steps):
        denom = denom + exps[t]
    inv = 1.0 / denom
    res = (exps[0] * inv) * oc[0]
    for t in range(1, t_steps):
        res = res + (exps[t] * inv) * oc[t]
    res_ref[...] = res                         # single lane-dense (B,2H) store

    # fc1 + LeakyReLU + fc2 + softmax
    z = jnp.dot(res, fc1w_ref[...], preferred_element_type=f32) + fc1b_ref[...]
    z = jnp.where(z > 0, z, LEAK * z)
    lg = jnp.dot(z, fc2w_ref[...], preferred_element_type=f32) + fc2b_ref[...]
    lm = jnp.max(lg, axis=-1, keepdims=True)
    le = jnp.exp(lg - lm)
    prob_ref[...] = le / jnp.sum(le, axis=-1, keepdims=True)


def lstm_attention_head(x_bm, perm, lstm_params, a1w, att_sc,
                        fc1w, fc1b, fc2w, fc2b, *, t_steps, batch, hdim):
    args = [x_bm, perm]
    specs = [_full_spec(x_bm.shape), _full_spec(perm.shape)]
    for lp in lstm_params:
        args += [lp["w_ih"], lp["b"], lp["whh"]]
        specs += [_full_spec(lp["w_ih"].shape), _full_spec(lp["b"].shape),
                  _full_spec(lp["whh"].shape)]
    args += [a1w, att_sc, fc1w, fc1b, fc2w, fc2b]
    specs += [_full_spec(a1w.shape),
              pl.BlockSpec((3,), lambda i: (0,),
                           memory_space=pltpu.MemorySpace.SMEM),
              _full_spec(fc1w.shape), _full_spec(fc1b.shape),
              _full_spec(fc2w.shape), _full_spec(fc2b.shape)]
    nc = fc2w.shape[1]
    kern = functools.partial(_lstm_head_kernel, num_layers=len(lstm_params),
                             t_steps=t_steps, batch=batch, hdim=hdim)
    return pl.pallas_call(
        kern,
        out_shape=(jax.ShapeDtypeStruct((batch, 2 * hdim), jnp.float32),
                   jax.ShapeDtypeStruct((batch, nc), jnp.float32)),
        grid=(1,),
        in_specs=specs,
        out_specs=(_full_spec((batch, 2 * hdim)), _full_spec((batch, nc))),
        scratch_shapes=[pltpu.VMEM((t_steps * batch, 8 * hdim), jnp.float32)],
    )(*args)


# ----------------------------------------------------------------------------
# One-time host-side parameter repack (banded conv weights, BN folding, ...)
# ----------------------------------------------------------------------------
def _banded_conv(w, wpad):
    """(Cout, Cin, 3, 3) torch conv weight -> (3, wpad*Cin, wpad*Cout), dh=-1,0,+1."""
    w = np.asarray(w, np.float32)
    cout, cin = w.shape[0], w.shape[1]
    mats = []
    for dh in (-1, 0, 1):
        m = np.zeros((wpad * cin, wpad * cout), np.float32)
        for wo in range(1, wpad - 1):
            for dw in (-1, 0, 1):
                wi = wo + dw
                m[wi * cin:(wi + 1) * cin, wo * cout:(wo + 1) * cout] = (
                    w[:, :, dh + 1, dw + 1].T)
        mats.append(m)
    return np.stack(mats)


def _banded_bias(b, wpad):
    b = np.asarray(b, np.float32)
    cout = b.shape[0]
    out = np.zeros((1, wpad * cout), np.float32)
    for wo in range(1, wpad - 1):
        out[0, wo * cout:(wo + 1) * cout] = b
    return out


def prepare_params(params, hp):
    assert hp["kernel_size"] == 3
    d = _derive_dims(hp)
    C1, C2 = hp["num_kernel1"], hp["num_kernel2"]
    Hc, H = hp["hidden_dim_cnn"], hp["cell_units"]
    T, W2 = d["T"], d["W2"]
    Hp1, Wp1, Hp2, Wp2 = d["Hp1"], d["Wp1"], d["Hp2"], d["Wp2"]

    prep = {}
    prep["conv1_w"] = jnp.asarray(_banded_conv(params["conv1_w"], Wp1))
    prep["conv1_b"] = jnp.asarray(_banded_bias(params["conv1_b"], Wp1))
    prep["conv2_w"] = jnp.asarray(_banded_conv(params["conv2_w"], Wp2))
    prep["conv2_b"] = jnp.asarray(_banded_bias(params["conv2_b"], Wp2))
    prep["convr_w"] = jnp.asarray(np.concatenate(
        [_banded_conv(params[f"conv{i}_w"], Wp2) for i in range(3, 7)], 0))
    prep["convr_b"] = jnp.asarray(np.stack(
        [_banded_bias(params[f"conv{i}_b"], Wp2) for i in range(3, 7)], 0))

    # pooling / re-embedding / time-row selection matrices (per image)
    p_rows = np.zeros((Hp2, Hp1), np.float32)
    for h2 in range(T):
        p_rows[h2 + 1, 2 * h2 + 1] = 1.0
    p_la = np.zeros((Wp1 * C1, Wp2 * C1), np.float32)
    p_lb = np.zeros((Wp1 * C1, Wp2 * C1), np.float32)
    for w2 in range(W2):
        for c in range(C1):
            p_la[(2 * w2 + 1) * C1 + c, (w2 + 1) * C1 + c] = 1.0
            p_lb[(2 * w2 + 2) * C1 + c, (w2 + 1) * C1 + c] = 1.0
    p_sel = np.zeros((T, Hp2), np.float32)
    for t in range(T):
        p_sel[t, t + 1] = 1.0
    prep["p_rows"] = jnp.asarray(p_rows)
    prep["p_lane_a"] = jnp.asarray(p_la)
    prep["p_lane_b"] = jnp.asarray(p_lb)
    prep["p_sel"] = jnp.asarray(p_sel)

    # linear_cnn_to_lstm with eval-mode BatchNorm1d folded, embedded at the
    # valid (w, c) lane positions (c-fast, matching permute(0,2,3,1).reshape).
    eps = 1e-5
    scale = np.asarray(params["bn_gamma"]) / np.sqrt(
        np.asarray(params["bn_var"]) + eps)
    w_eff = np.asarray(params["lin_w"]) * scale[:, None]
    b_eff = (scale * (np.asarray(params["lin_b"]) - np.asarray(params["bn_mean"]))
             + np.asarray(params["bn_beta"]))
    wlin = np.zeros((Wp2 * C2, Hc), np.float32)
    for w in range(W2):
        wlin[(w + 1) * C2:(w + 2) * C2, :] = w_eff[:, w * C2:(w + 1) * C2].T
    prep["lin_w"] = jnp.asarray(wlin)
    prep["lin_b"] = jnp.asarray(b_eff.reshape(1, Hc).astype(np.float32))

    # LSTM: packed input-gate weights (fwd|bwd) and block-diagonal W_hh
    lstm = []
    for l in range(hp["num_layers_lstm"]):
        pf, pb = params["lstm"][(l, 0)], params["lstm"][(l, 1)]
        w_ih = np.concatenate([np.asarray(pf["w_ih"], np.float32).T,
                               np.asarray(pb["w_ih"], np.float32).T], axis=1)
        b = np.concatenate([np.asarray(pf["b_ih"]) + np.asarray(pf["b_hh"]),
                            np.asarray(pb["b_ih"]) + np.asarray(pb["b_hh"])]
                           ).reshape(1, 8 * H).astype(np.float32)
        whh = np.zeros((2 * H, 8 * H), np.float32)
        whh[0:H, 0:4 * H] = np.asarray(pf["w_hh"], np.float32).T
        whh[H:2 * H, 4 * H:8 * H] = np.asarray(pb["w_hh"], np.float32).T
        lstm.append(dict(w_ih=jnp.asarray(w_ih), b=jnp.asarray(b),
                         whh=jnp.asarray(whh)))
    prep["lstm"] = lstm

    prep["a1_w"] = jnp.asarray(
        np.asarray(params["a_fc1_w"], np.float32).reshape(1, 2 * H))
    prep["att_sc"] = jnp.asarray(np.array([float(params["a_fc1_b"][0]),
                                           float(params["a_fc2_w"][0, 0]),
                                           float(params["a_fc2_b"][0])],
                                          np.float32))
    prep["fc1_w"] = jnp.asarray(np.asarray(params["fc1_w"], np.float32).T)
    prep["fc1_b"] = jnp.asarray(
        np.asarray(params["fc1_b"], np.float32).reshape(1, -1))
    prep["fc2_w"] = jnp.asarray(np.asarray(params["fc2_w"], np.float32).T)
    prep["fc2_b"] = jnp.asarray(
        np.asarray(params["fc2_b"], np.float32).reshape(1, -1))
    return prep


# ----------------------------------------------------------------------------
# Forward pass (2 pallas_calls; the only XLA ops are input embedding)
# ----------------------------------------------------------------------------
def arcnn_forward(prep, x_nchw, hp):
    d = _derive_dims(hp)
    B = x_nchw.shape[0]
    Hm, Cin = hp["max_length"], hp["in_channel"]
    Hp1, Wp1, T = d["Hp1"], d["Wp1"], d["T"]
    H = hp["cell_units"]

    # zero-padded banded layout: rows = (b, padded_h), lanes = (padded_w, c)
    x_nhwc = jnp.transpose(x_nchw, (0, 2, 3, 1))
    x_emb = jnp.pad(x_nhwc, ((0, 0), (1, Hp1 - Hm - 1), (1, 1), (0, 0)))
    x_pad = x_emb.reshape(B * Hp1, Wp1 * Cin)

    lin = cnn_stage(x_pad, prep, hp, B)           # (B*T, hidden_dim_cnn)

    # batch-major -> time-major row permutation, applied in-kernel via one dot
    perm = np.zeros((T * B, T * B), np.float32)
    for s in range(T):
        for b in range(B):
            perm[s * B + b, b * T + s] = 1.0
    perm = jnp.asarray(perm)

    # TODO(synk): dropout layers are identity (inference mode).
    res_att, probs = lstm_attention_head(
        lin, perm, prep["lstm"], prep["a1_w"], prep["att_sc"],
        prep["fc1_w"], prep["fc1_b"], prep["fc2_w"], prep["fc2_b"],
        t_steps=T, batch=B, hdim=H)
    return res_att, probs


# ----------------------------------------------------------------------------
# Pure-JAX reference of the PyTorch module (eval mode) for parity checking
# ----------------------------------------------------------------------------
def reference_forward(params, x, hp):
    leak = lambda v: jnp.where(v > 0, v, LEAK * v)
    H = hp["cell_units"]
    ph, pw = hp["max_pooling_size"]

    def conv(h, w, b):
        y = lax.conv_general_dilated(h, w, (1, 1), "SAME",
                                     dimension_numbers=("NCHW", "OIHW", "NCHW"))
        return leak(y + b.reshape(1, -1, 1, 1))

    h = conv(x, params["conv1_w"], params["conv1_b"])
    B, C, Hh, Ww = h.shape
    h = h.reshape(B, C, Hh // ph, ph, Ww // pw, pw).max(axis=(3, 5))
    for i in range(2, 7):
        h = conv(h, params[f"conv{i}_w"], params[f"conv{i}_b"])
    T = hp["max_length"] // ph
    W2 = hp["num_filter_bank"] // pw
    feat = jnp.transpose(h, (0, 2, 3, 1)).reshape(B * T, W2 * hp["num_kernel2"])
    z = feat @ params["lin_w"].T + params["lin_b"]
    z = ((z - params["bn_mean"]) / jnp.sqrt(params["bn_var"] + 1e-5)
         * params["bn_gamma"] + params["bn_beta"])
    xs = leak(z).reshape(B, T, hp["hidden_dim_cnn"])

    for l in range(hp["num_layers_lstm"]):
        outs = []
        for drn in range(2):
            p = params["lstm"][(l, drn)]

            def step(carry, x_t, p=p):
                h_prev, c_prev = carry
                g = (x_t @ p["w_ih"].T + p["b_ih"]
                     + h_prev @ p["w_hh"].T + p["b_hh"])
                i = jax.nn.sigmoid(g[:, 0:H])
                f = jax.nn.sigmoid(g[:, H:2 * H])
                gg = jnp.tanh(g[:, 2 * H:3 * H])
                o = jax.nn.sigmoid(g[:, 3 * H:4 * H])
                c = f * c_prev + i * gg
                hh = o * jnp.tanh(c)
                return (hh, c), hh

            seq = jnp.transpose(xs, (1, 0, 2))
            if drn == 1:
                seq = seq[::-1]
            _, hs = lax.scan(step, (jnp.zeros((B, H), jnp.float32),
                                    jnp.zeros((B, H), jnp.float32)), seq)
            if drn == 1:
                hs = hs[::-1]
            outs.append(jnp.transpose(hs, (1, 0, 2)))
        xs = jnp.concatenate(outs, axis=-1)
    out_lstm = xs

    v = jax.nn.sigmoid(out_lstm @ params["a_fc1_w"].T + params["a_fc1_b"])
    a2 = (v @ params["a_fc2_w"].T + params["a_fc2_b"])[..., 0]
    alphas = jax.nn.softmax(a2, axis=1)
    res_att = jnp.sum(alphas[:, :, None] * out_lstm, axis=1)
    fc = leak(res_att @ params["fc1_w"].T + params["fc1_b"])
    logits = jax.nn.softmax(fc @ params["fc2_w"].T + params["fc2_b"], axis=1)
    return res_att, logits


# ----------------------------------------------------------------------------
# Parameter init (PyTorch layouts) and demo
# ----------------------------------------------------------------------------
def init_params(key, hp):
    keys = iter(jax.random.split(key, 64))

    def rnd(shape, scale=0.1):
        return scale * jax.random.normal(next(keys), shape, dtype=jnp.float32)

    p = {}
    k = hp["kernel_size"]
    p["conv1_w"] = rnd((hp["num_kernel1"], hp["in_channel"], k, k))
    p["conv1_b"] = rnd((hp["num_kernel1"],))
    in_chans = [hp["num_kernel1"]] + [hp["num_kernel2"]] * 4
    for idx, i in enumerate(range(2, 7)):
        p[f"conv{i}_w"] = rnd((hp["num_kernel2"], in_chans[idx], k, k))
        p[f"conv{i}_b"] = rnd((hp["num_kernel2"],))

    d_in = hp["num_filter_bank"] // hp["max_pooling_size"][1] * hp["num_kernel2"]
    p["lin_w"] = rnd((hp["hidden_dim_cnn"], d_in))
    p["lin_b"] = rnd((hp["hidden_dim_cnn"],))
    p["bn_gamma"] = 1.0 + rnd((hp["hidden_dim_cnn"],))
    p["bn_beta"] = rnd((hp["hidden_dim_cnn"],))
    p["bn_mean"] = rnd((hp["hidden_dim_cnn"],))
    p["bn_var"] = 1.0 + 0.2 * jnp.abs(
        jax.random.normal(next(keys), (hp["hidden_dim_cnn"],), jnp.float32))

    H = hp["cell_units"]
    lstm = {}
    for l in range(hp["num_layers_lstm"]):
        layer_in = hp["hidden_dim_cnn"] if l == 0 else 2 * H
        for drn in range(2):
            lstm[(l, drn)] = dict(w_ih=rnd((4 * H, layer_in)),
                                  w_hh=rnd((4 * H, H)),
                                  b_ih=rnd((4 * H,)),
                                  b_hh=rnd((4 * H,)))
    p["lstm"] = lstm

    p["a_fc1_w"] = rnd((1, 2 * H))
    p["a_fc1_b"] = rnd((1,))
    p["a_fc2_w"] = rnd((1, 1), scale=1.0)
    p["a_fc2_b"] = rnd((1,))
    p["fc1_w"] = rnd((hp["hidden_dim_fc"], 2 * H))
    p["fc1_b"] = rnd((hp["hidden_dim_fc"],))
    p["fc2_w"] = rnd((hp["num_classes"], hp["hidden_dim_fc"]))
    p["fc2_b"] = rnd((hp["num_classes"],))
    return p


if __name__ == "__main__":
    hp = dict(
        num_classes=4,
        in_channel=1,
        num_kernel1=8,
        num_kernel2=8,
        cell_units=16,
        hidden_dim_cnn=32,
        hidden_dim_fc=32,
        kernel_size=3,
        max_pooling_size=(2, 2),
        dropout_prob=0.0,
        num_filter_bank=16,
        num_layers_lstm=1,
        max_length=16,
    )
    key = jax.random.PRNGKey(0)
    pkey, xkey = jax.random.split(key)
    params = init_params(pkey, hp)
    prep = prepare_params(params, hp)          # one-time repack, outside jit

    B = 2
    x = jax.random.normal(
        xkey, (B, hp["in_channel"], hp["max_length"], hp["num_filter_bank"]),
        dtype=jnp.float32)

    fwd = jax.jit(functools.partial(arcnn_forward, hp=hp))
    res_att, probs = fwd(prep, x)
    jax.block_until_ready((res_att, probs))

    # numerical parity vs the pure-JAX reference of the PyTorch module
    with jax.default_matmul_precision("highest"):
        ref_res, ref_probs = reference_forward(params, x, hp)

    assert res_att.shape == (B, 2 * hp["cell_units"])
    assert probs.shape == (B, hp["num_classes"])
    assert bool(jnp.all(jnp.isfinite(res_att))) and bool(jnp.all(jnp.isfinite(probs)))
    assert bool(jnp.allclose(jnp.sum(probs, axis=-1), 1.0, atol=1e-5))
    assert bool(jnp.allclose(res_att, ref_res, atol=5e-3, rtol=1e-2)), (
        "res_att mismatch, max abs err "
        + str(float(jnp.max(jnp.abs(res_att - ref_res)))))
    assert bool(jnp.allclose(probs, ref_probs, atol=5e-3, rtol=1e-2)), (
        "probs mismatch, max abs err "
        + str(float(jnp.max(jnp.abs(probs - ref_probs)))))
    print("KERNEL_OK")
</pallas_src>

<mosaic_0001>
module attributes {stable_mosaic.version = 11 : i64} {
  func.func @_cnn_kernel(%arg0: i32, %arg1: memref<24x18xf32, #tpu.memory_space<vmem>>, %arg2: memref<3x18x144xf32, #tpu.memory_space<vmem>>, %arg3: memref<1x144xf32, #tpu.memory_space<vmem>>, %arg4: memref<16x24xf32, #tpu.memory_space<vmem>>, %arg5: memref<144x80xf32, #tpu.memory_space<vmem>>, %arg6: memref<144x80xf32, #tpu.memory_space<vmem>>, %arg7: memref<3x80x80xf32, #tpu.memory_space<vmem>>, %arg8: memref<1x80xf32, #tpu.memory_space<vmem>>, %arg9: memref<12x80x80xf32, #tpu.memory_space<vmem>>, %arg10: memref<4x1x80xf32, #tpu.memory_space<vmem>>, %arg11: memref<8x16xf32, #tpu.memory_space<vmem>>, %arg12: memref<80x32xf32, #tpu.memory_space<vmem>>, %arg13: memref<1x32xf32, #tpu.memory_space<vmem>>, %arg14: memref<8x32xf32, #tpu.memory_space<vmem>>) attributes {dimension_semantics = [#tpu.dimension_semantics<parallel>], iteration_bounds = array<i64: 2>, scalar_prefetch = 0 : i64, scratch_operands = 0 : i64, tpu.core_type = #tpu.core_type<tc>, window_params = [{transform_indices = @transform_0, window_bounds = array<i64: 24, 18>}, {pipeline_mode = #tpu.pipeline_mode<synchronous>, transform_indices = @transform_1, window_bounds = array<i64: 3, 18, 144>}, {pipeline_mode = #tpu.pipeline_mode<synchronous>, transform_indices = @transform_2, window_bounds = array<i64: 1, 144>}, {pipeline_mode = #tpu.pipeline_mode<synchronous>, transform_indices = @transform_3, window_bounds = array<i64: 16, 24>}, {pipeline_mode = #tpu.pipeline_mode<synchronous>, transform_indices = @transform_4, window_bounds = array<i64: 144, 80>}, {pipeline_mode = #tpu.pipeline_mode<synchronous>, transform_indices = @transform_5, window_bounds = array<i64: 144, 80>}, {pipeline_mode = #tpu.pipeline_mode<synchronous>, transform_indices = @transform_6, window_bounds = array<i64: 3, 80, 80>}, {pipeline_mode = #tpu.pipeline_mode<synchronous>, transform_indices = @transform_7, window_bounds = array<i64: 1, 80>}, {pipeline_mode = #tpu.pipeline_mode<synchronous>, transform_indices = @transform_8, window_bounds = array<i64: 12, 80, 80>}, {pipeline_mode = #tpu.pipeline_mode<synchronous>, transform_indices = @transform_9, window_bounds = array<i64: 4, 1, 80>}, {pipeline_mode = #tpu.pipeline_mode<synchronous>, transform_indices = @transform_10, window_bounds = array<i64: 8, 16>}, {pipeline_mode = #tpu.pipeline_mode<synchronous>, transform_indices = @transform_11, window_bounds = array<i64: 80, 32>}, {pipeline_mode = #tpu.pipeline_mode<synchronous>, transform_indices = @transform_12, window_bounds = array<i64: 1, 32>}, {transform_indices = @transform_13, window_bounds = array<i64: 8, 32>}]} {
    %c0 = arith.constant 0 : index
    %c0_0 = arith.constant 0 : index
    %0 = vector.load %arg1[%c0, %c0_0] : memref<24x18xf32, #tpu.memory_space<vmem>>, vector<24x18xf32>
    %c0_1 = arith.constant 0 : index
    %c0_2 = arith.constant 0 : index
    %1 = vector.load %arg3[%c0_1, %c0_2] : memref<1x144xf32, #tpu.memory_space<vmem>>, vector<1x144xf32>
    %c1_i32 = arith.constant 1 : i32
    %2 = tpu.dynamic_rotate %0 by %c1_i32 dim 0 : vector<24x18xf32>, i32 -> vector<24x18xf32>
    %c0_3 = arith.constant 0 : index
    %c0_4 = arith.constant 0 : index
    %c0_5 = arith.constant 0 : index
    %3 = vector.load %arg2[%c0_3, %c0_4, %c0_5] : memref<3x18x144xf32, #tpu.memory_space<vmem>>, vector<1x18x144xf32>
    %4 = vector.shape_cast %3 : vector<1x18x144xf32> to vector<18x144xf32>
    %cst = arith.constant dense<0.000000e+00> : vector<24x144xf32>
    %5 = tpu.matmul %2, %4, %cst {dimension_numbers = #tpu.dot_dimension_numbers<[1], [0], [0], [1], [0, 0, 1, 1], [], []>} : vector<24x18xf32>, vector<18x144xf32>, vector<24x144xf32> -> vector<24x144xf32>
    %c1 = arith.constant 1 : index
    %c0_6 = arith.constant 0 : index
    %c0_7 = arith.constant 0 : index
    %6 = vector.load %arg2[%c1, %c0_6, %c0_7] : memref<3x18x144xf32, #tpu.memory_space<vmem>>, vector<1x18x144xf32>
    %7 = vector.shape_cast %6 : vector<1x18x144xf32> to vector<18x144xf32>
    %cst_8 = arith.constant dense<0.000000e+00> : vector<24x144xf32>
    %8 = tpu.matmul %0, %7, %cst_8 {dimension_numbers = #tpu.dot_dimension_numbers<[1], [0], [0], [1], [0, 0, 1, 1], [], []>} : vector<24x18xf32>, vector<18x144xf32>, vector<24x144xf32> -> vector<24x144xf32>
    %9 = arith.addf %5, %8 : vector<24x144xf32>
    %c23_i32 = arith.constant 23 : i32
    %10 = tpu.dynamic_rotate %0 by %c23_i32 dim 0 : vector<24x18xf32>, i32 -> vector<24x18xf32>
    %c2 = arith.constant 2 : index
    %c0_9 = arith.constant 0 : index
    %c0_10 = arith.constant 0 : index
    %11 = vector.load %arg2[%c2, %c0_9, %c0_10] : memref<3x18x144xf32, #tpu.memory_space<vmem>>, vector<1x18x144xf32>
    %12 = vector.shape_cast %11 : vector<1x18x144xf32> to vector<18x144xf32>
    %cst_11 = arith.constant dense<0.000000e+00> : vector<24x144xf32>
    %13 = tpu.matmul %10, %12, %cst_11 {dimension_numbers = #tpu.dot_dimension_numbers<[1], [0], [0], [1], [0, 0, 1, 1], [], []>} : vector<24x18xf32>, vector<18x144xf32>, vector<24x144xf32> -> vector<24x144xf32>
    %14 = arith.addf %9, %13 : vector<24x144xf32>
    %15 = vector.broadcast %1 : vector<1x144xf32> to vector<24x144xf32>
    %16 = arith.addf %14, %15 : vector<24x144xf32>
    %cst_12 = arith.constant 0.000000e+00 : f32
    %17 = vector.broadcast %cst_12 : f32 to vector<24x144xf32>
    %18 = arith.cmpf ogt, %16, %17 : vector<24x144xf32>
    %cst_13 = arith.constant 0.00999999977 : f32
    %19 = vector.broadcast %cst_13 : f32 to vector<24x144xf32>
    %20 = arith.mulf %19, %16 : vector<24x144xf32>
    %21 = arith.select %18, %16, %20 : vector<24x144xi1>, vector<24x144xf32>
    %c23_i32_14 = arith.constant 23 : i32
    %22 = tpu.dynamic_rotate %21 by %c23_i32_14 dim 0 : vector<24x144xf32>, i32 -> vector<24x144xf32>
    %23 = arith.maximumf %21, %22 : vector<24x144xf32>
    %c0_15 = arith.constant 0 : index
    %c0_16 = arith.constant 0 : index
    %24 = vector.load %arg4[%c0_15, %c0_16] : memref<16x24xf32, #tpu.memory_space<vmem>>, vector<16x24xf32>
    %cst_17 = arith.constant dense<0.000000e+00> : vector<16x144xf32>
    %25 = tpu.matmul %24, %23, %cst_17 {dimension_numbers = #tpu.dot_dimension_numbers<[1], [0], [0], [1], [0, 0, 1, 1], [], []>} : vector<16x24xf32>, vector<24x144xf32>, vector<16x144xf32> -> vector<16x144xf32>
    %c0_18 = arith.constant 0 : index
    %c0_19 = arith.constant 0 : index
    %26 = vector.load %arg5[%c0_18, %c0_19] : memref<144x80xf32, #tpu.memory_space<vmem>>, vector<144x80xf32>
    %cst_20 = arith.constant dense<0.000000e+00> : vector<16x80xf32>
    %27 = tpu.matmul %25, %26, %cst_20 {dimension_numbers = #tpu.dot_dimension_numbers<[1], [0], [0], [1], [0, 0, 1, 1], [], []>} : vector<16x144xf32>, vector<144x80xf32>, vector<16x80xf32> -> vector<16x80xf32>
    %c0_21 = arith.constant 0 : index
    %c0_22 = arith.constant 0 : index
    %28 = vector.load %arg6[%c0_21, %c0_22] : memref<144x80xf32, #tpu.memory_space<vmem>>, vector<144x80xf32>
    %cst_23 = arith.constant dense<0.000000e+00> : vector<16x80xf32>
    %29 = tpu.matmul %25, %28, %cst_23 {dimension_numbers = #tpu.dot_dimension_numbers<[1], [0], [0], [1], [0, 0, 1, 1], [], []>} : vector<16x144xf32>, vector<144x80xf32>, vector<16x80xf32> -> vector<16x80xf32>
    %30 = arith.maximumf %27, %29 : vector<16x80xf32>
    %31 = tpu.iota {dimensions = array<i32: 0>} : vector<16x1xi32>
    %c1_i32_24 = arith.constant 1 : i32
    %32 = vector.broadcast %c1_i32_24 : i32 to vector<16x1xi32>
    %33 = arith.cmpi sge, %31, %32 : vector<16x1xi32>
    %c8_i32 = arith.constant 8 : i32
    %34 = vector.broadcast %c8_i32 : i32 to vector<16x1xi32>
    %35 = arith.cmpi sle, %31, %34 : vector<16x1xi32>
    %36 = arith.andi %33, %35 : vector<16x1xi1>
    %37 = arith.extui %36 : vector<16x1xi1> to vector<16x1xi32>
    %38 = arith.sitofp %37 : vector<16x1xi32> to vector<16x1xf32>
    %c0_25 = arith.constant 0 : index
    %c0_26 = arith.constant 0 : index
    %39 = vector.load %arg8[%c0_25, %c0_26] : memref<1x80xf32, #tpu.memory_space<vmem>>, vector<1x80xf32>
    %c1_i32_27 = arith.constant 1 : i32
    %40 = tpu.dynamic_rotate %30 by %c1_i32_27 dim 0 : vector<16x80xf32>, i32 -> vector<16x80xf32>
    %c0_28 = arith.constant 0 : index
    %c0_29 = arith.constant 0 : index
    %c0_30 = arith.constant 0 : index
    %41 = vector.load %arg7[%c0_28, %c0_29, %c0_30] : memref<3x80x80xf32, #tpu.memory_space<vmem>>, vector<1x80x80xf32>
    %42 = vector.shape_cast %41 : vector<1x80x80xf32> to vector<80x80xf32>
    %cst_31 = arith.constant dense<0.000000e+00> : vector<16x80xf32>
    %43 = tpu.matmul %40, %42, %cst_31 {dimension_numbers = #tpu.dot_dimension_numbers<[1], [0], [0], [1], [0, 0, 1, 1], [], []>} : vector<16x80xf32>, vector<80x80xf32>, vector<16x80xf32> -> vector<16x80xf32>
    %c1_32 = arith.constant 1 : index
    %c0_33 = arith.constant 0 : index
    %c0_34 = arith.constant 0 : index
    %44 = vector.load %arg7[%c1_32, %c0_33, %c0_34] : memref<3x80x80xf32, #tpu.memory_space<vmem>>, vector<1x80x80xf32>
    %45 = vector.shape_cast %44 : vector<1x80x80xf32> to vector<80x80xf32>
    %cst_35 = arith.constant dense<0.000000e+00> : vector<16x80xf32>
    %46 = tpu.matmul %30, %45, %cst_35 {dimension_numbers = #tpu.dot_dimension_numbers<[1], [0], [0], [1], [0, 0, 1, 1], [], []>} : vector<16x80xf32>, vector<80x80xf32>, vector<16x80xf32> -> vector<16x80xf32>
    %47 = arith.addf %43, %46 : vector<16x80xf32>
    %c15_i32 = arith.constant 15 : i32
    %48 = tpu.dynamic_rotate %30 by %c15_i32 dim 0 : vector<16x80xf32>, i32 -> vector<16x80xf32>
    %c2_36 = arith.constant 2 : index
    %c0_37 = arith.constant 0 : index
    %c0_38 = arith.constant 0 : index
    %49 = vector.load %arg7[%c2_36, %c0_37, %c0_38] : memref<3x80x80xf32, #tpu.memory_space<vmem>>, vector<1x80x80xf32>
    %50 = vector.shape_cast %49 : vector<1x80x80xf32> to vector<80x80xf32>
    %cst_39 = arith.constant dense<0.000000e+00> : vector<16x80xf32>
    %51 = tpu.matmul %48, %50, %cst_39 {dimension_numbers = #tpu.dot_dimension_numbers<[1], [0], [0], [1], [0, 0, 1, 1], [], []>} : vector<16x80xf32>, vector<80x80xf32>, vector<16x80xf32> -> vector<16x80xf32>
    %52 = arith.addf %47, %51 : vector<16x80xf32>
    %53 = vector.broadcast %39 : vector<1x80xf32> to vector<16x80xf32>
    %54 = arith.addf %52, %53 : vector<16x80xf32>
    %cst_40 = arith.constant 0.000000e+00 : f32
    %55 = vector.broadcast %cst_40 : f32 to vector<16x80xf32>
    %56 = arith.cmpf ogt, %54, %55 : vector<16x80xf32>
    %cst_41 = arith.constant 0.00999999977 : f32
    %57 = vector.broadcast %cst_41 : f32 to vector<16x80xf32>
    %58 = arith.mulf %57, %54 : vector<16x80xf32>
    %59 = arith.select %56, %54, %58 : vector<16x80xi1>, vector<16x80xf32>
    %60 = vector.broadcast %38 : vector<16x1xf32> to vector<16x80xf32>
    %61 = arith.mulf %59, %60 : vector<16x80xf32>
    %c0_42 = arith.constant 0 : index
    %c0_43 = arith.constant 0 : index
    %c0_44 = arith.constant 0 : index
    %62 = vector.load %arg10[%c0_42, %c0_43, %c0_44] : memref<4x1x80xf32, #tpu.memory_space<vmem>>, vector<1x1x80xf32>
    %63 = vector.shape_cast %62 : vector<1x1x80xf32> to vector<1x80xf32>
    %c1_i32_45 = arith.constant 1 : i32
    %64 = tpu.dynamic_rotate %61 by %c1_i32_45 dim 0 : vector<16x80xf32>, i32 -> vector<16x80xf32>
    %c0_46 = arith.constant 0 : index
    %c0_47 = arith.constant 0 : index
    %c0_48 = arith.constant 0 : index
    %65 = vector.load %arg9[%c0_46, %c0_47, %c0_48] : memref<12x80x80xf32, #tpu.memory_space<vmem>>, vector<1x80x80xf32>
    %66 = vector.shape_cast %65 : vector<1x80x80xf32> to vector<80x80xf32>
    %cst_49 = arith.constant dense<0.000000e+00> : vector<16x80xf32>
    %67 = tpu.matmul %64, %66, %cst_49 {dimension_numbers = #tpu.dot_dimension_numbers<[1], [0], [0], [1], [0, 0, 1, 1], [], []>} : vector<16x80xf32>, vector<80x80xf32>, vector<16x80xf32> -> vector<16x80xf32>
    %c1_50 = arith.constant 1 : index
    %c0_51 = arith.constant 0 : index
    %c0_52 = arith.constant 0 : index
    %68 = vector.load %arg9[%c1_50, %c0_51, %c0_52] : memref<12x80x80xf32, #tpu.memory_space<vmem>>, vector<1x80x80xf32>
    %69 = vector.shape_cast %68 : vector<1x80x80xf32> to vector<80x80xf32>
    %cst_53 = arith.constant dense<0.000000e+00> : vector<16x80xf32>
    %70 = tpu.matmul %61, %69, %cst_53 {dimension_numbers = #tpu.dot_dimension_numbers<[1], [0], [0], [1], [0, 0, 1, 1], [], []>} : vector<16x80xf32>, vector<80x80xf32>, vector<16x80xf32> -> vector<16x80xf32>
    %71 = arith.addf %67, %70 : vector<16x80xf32>
    %c15_i32_54 = arith.constant 15 : i32
    %72 = tpu.dynamic_rotate %61 by %c15_i32_54 dim 0 : vector<16x80xf32>, i32 -> vector<16x80xf32>
    %c2_55 = arith.constant 2 : index
    %c0_56 = arith.constant 0 : index
    %c0_57 = arith.constant 0 : index
    %73 = vector.load %arg9[%c2_55, %c0_56, %c0_57] : memref<12x80x80xf32, #tpu.memory_space<vmem>>, vector<1x80x80xf32>
    %74 = vector.shape_cast %73 : vector<1x80x80xf32> to vector<80x80xf32>
    %cst_58 = arith.constant dense<0.000000e+00> : vector<16x80xf32>
    %75 = tpu.matmul %72, %74, %cst_58 {dimension_numbers = #tpu.dot_dimension_numbers<[1], [0], [0], [1], [0, 0, 1, 1], [], []>} : vector<16x80xf32>, vector<80x80xf32>, vector<16x80xf32> -> vector<16x80xf32>
    %76 = arith.addf %71, %75 : vector<16x80xf32>
    %77 = vector.broadcast %63 : vector<1x80xf32> to vector<16x80xf32>
    %78 = arith.addf %76, %77 : vector<16x80xf32>
    %cst_59 = arith.constant 0.000000e+00 : f32
    %79 = vector.broadcast %cst_59 : f32 to vector<16x80xf32>
    %80 = arith.cmpf ogt, %78, %79 : vector<16x80xf32>
    %cst_60 = arith.constant 0.00999999977 : f32
    %81 = vector.broadcast %cst_60 : f32 to vector<16x80xf32>
    %82 = arith.mulf %81, %78 : vector<16x80xf32>
    %83 = arith.select %80, %78, %82 : vector<16x80xi1>, vector<16x80xf32>
    %84 = vector.broadcast %38 : vector<16x1xf32> to vector<16x80xf32>
    %85 = arith.mulf %83, %84 : vector<16x80xf32>
    %c1_61 = arith.constant 1 : index
    %c0_62 = arith.constant 0 : index
    %c0_63 = arith.constant 0 : index
    %86 = vector.load %arg10[%c1_61, %c0_62, %c0_63] : memref<4x1x80xf32, #tpu.memory_space<vmem>>, vector<1x1x80xf32>
    %87 = vector.shape_cast %86 : vector<1x1x80xf32> to vector<1x80xf32>
    %c1_i32_64 = arith.constant 1 : i32
    %88 = tpu.dynamic_rotate %85 by %c1_i32_64 dim 0 : vector<16x80xf32>, i32 -> vector<16x80xf32>
    %c3 = arith.constant 3 : index
    %c0_65 = arith.constant 0 : index
    %c0_66 = arith.constant 0 : index
    %89 = vector.load %arg9[%c3, %c0_65, %c0_66] : memref<12x80x80xf32, #tpu.memory_space<vmem>>, vector<1x80x80xf32>
    %90 = vector.shape_cast %89 : vector<1x80x80xf32> to vector<80x80xf32>
    %cst_67 = arith.constant dense<0.000000e+00> : vector<16x80xf32>
    %91 = tpu.matmul %88, %90, %cst_67 {dimension_numbers = #tpu.dot_dimension_numbers<[1], [0], [0], [1], [0, 0, 1, 1], [], []>} : vector<16x80xf32>, vector<80x80xf32>, vector<16x80xf32> -> vector<16x80xf32>
    %c4 = arith.constant 4 : index
    %c0_68 = arith.constant 0 : index
    %c0_69 = arith.constant 0 : index
    %92 = vector.load %arg9[%c4, %c0_68, %c0_69] : memref<12x80x80xf32, #tpu.memory_space<vmem>>, vector<1x80x80xf32>
    %93 = vector.shape_cast %92 : vector<1x80x80xf32> to vector<80x80xf32>
    %cst_70 = arith.constant dense<0.000000e+00> : vector<16x80xf32>
    %94 = tpu.matmul %85, %93, %cst_70 {dimension_numbers = #tpu.dot_dimension_numbers<[1], [0], [0], [1], [0, 0, 1, 1], [], []>} : vector<16x80xf32>, vector<80x80xf32>, vector<16x80xf32> -> vector<16x80xf32>
    %95 = arith.addf %91, %94 : vector<16x80xf32>
    %c15_i32_71 = arith.constant 15 : i32
    %96 = tpu.dynamic_rotate %85 by %c15_i32_71 dim 0 : vector<16x80xf32>, i32 -> vector<16x80xf32>
    %c5 = arith.constant 5 : index
    %c0_72 = arith.constant 0 : index
    %c0_73 = arith.constant 0 : index
    %97 = vector.load %arg9[%c5, %c0_72, %c0_73] : memref<12x80x80xf32, #tpu.memory_space<vmem>>, vector<1x80x80xf32>
    %98 = vector.shape_cast %97 : vector<1x80x80xf32> to vector<80x80xf32>
    %cst_74 = arith.constant dense<0.000000e+00> : vector<16x80xf32>
    %99 = tpu.matmul %96, %98, %cst_74 {dimension_numbers = #tpu.dot_dimension_numbers<[1], [0], [0], [1], [0, 0, 1, 1], [], []>} : vector<16x80xf32>, vector<80x80xf32>, vector<16x80xf32> -> vector<16x80xf32>
    %100 = arith.addf %95, %99 : vector<16x80xf32>
    %101 = vector.broadcast %87 : vector<1x80xf32> to vector<16x80xf32>
    %102 = arith.addf %100, %101 : vector<16x80xf32>
    %cst_75 = arith.constant 0.000000e+00 : f32
    %103 = vector.broadcast %cst_75 : f32 to vector<16x80xf32>
    %104 = arith.cmpf ogt, %102, %103 : vector<16x80xf32>
    %cst_76 = arith.constant 0.00999999977 : f32
    %105 = vector.broadcast %cst_76 : f32 to vector<16x80xf32>
    %106 = arith.mulf %105, %102 : vector<16x80xf32>
    %107 = arith.select %104, %102, %106 : vector<16x80xi1>, vector<16x80xf32>
    %108 = vector.broadcast %38 : vector<16x1xf32> to vector<16x80xf32>
    %109 = arith.mulf %107, %108 : vector<16x80xf32>
    %c2_77 = arith.constant 2 : index
    %c0_78 = arith.constant 0 : index
    %c0_79 = arith.constant 0 : index
    %110 = vector.load %arg10[%c2_77, %c0_78, %c0_79] : memref<4x1x80xf32, #tpu.memory_space<vmem>>, vector<1x1x80xf32>
    %111 = vector.shape_cast %110 : vector<1x1x80xf32> to vector<1x80xf32>
    %c1_i32_80 = arith.constant 1 : i32
    %112 = tpu.dynamic_rotate %109 by %c1_i32_80 dim 0 : vector<16x80xf32>, i32 -> vector<16x80xf32>
    %c6 = arith.constant 6 : index
    %c0_81 = arith.constant 0 : index
    %c0_82 = arith.constant 0 : index
    %113 = vector.load %arg9[%c6, %c0_81, %c0_82] : memref<12x80x80xf32, #tpu.memory_space<vmem>>, vector<1x80x80xf32>
    %114 = vector.shape_cast %113 : vector<1x80x80xf32> to vector<80x80xf32>
    %cst_83 = arith.constant dense<0.000000e+00> : vector<16x80xf32>
    %115 = tpu.matmul %112, %114, %cst_83 {dimension_numbers = #tpu.dot_dimension_numbers<[1], [0], [0], [1], [0, 0, 1, 1], [], []>} : vector<16x80xf32>, vector<80x80xf32>, vector<16x80xf32> -> vector<16x80xf32>
    %c7 = arith.constant 7 : index
    %c0_84 = arith.constant 0 : index
    %c0_85 = arith.constant 0 : index
    %116 = vector.load %arg9[%c7, %c0_84, %c0_85] : memref<12x80x80xf32, #tpu.memory_space<vmem>>, vector<1x80x80xf32>
    %117 = vector.shape_cast %116 : vector<1x80x80xf32> to vector<80x80xf32>
    %cst_86 = arith.constant dense<0.000000e+00> : vector<16x80xf32>
    %118 = tpu.matmul %109, %117, %cst_86 {dimension_numbers = #tpu.dot_dimension_numbers<[1], [0], [0], [1], [0, 0, 1, 1], [], []>} : vector<16x80xf32>, vector<80x80xf32>, vector<16x80xf32> -> vector<16x80xf32>
    %119 = arith.addf %115, %118 : vector<16x80xf32>
    %c15_i32_87 = arith.constant 15 : i32
    %120 = tpu.dynamic_rotate %109 by %c15_i32_87 dim 0 : vector<16x80xf32>, i32 -> vector<16x80xf32>
    %c8 = arith.constant 8 : index
    %c0_88 = arith.constant 0 : index
    %c0_89 = arith.constant 0 : index
    %121 = vector.load %arg9[%c8, %c0_88, %c0_89] : memref<12x80x80xf32, #tpu.memory_space<vmem>>, vector<1x80x80xf32>
    %122 = vector.shape_cast %121 : vector<1x80x80xf32> to vector<80x80xf32>
    %cst_90 = arith.constant dense<0.000000e+00> : vector<16x80xf32>
    %123 = tpu.matmul %120, %122, %cst_90 {dimension_numbers = #tpu.dot_dimension_numbers<[1], [0], [0], [1], [0, 0, 1, 1], [], []>} : vector<16x80xf32>, vector<80x80xf32>, vector<16x80xf32> -> vector<16x80xf32>
    %124 = arith.addf %119, %123 : vector<16x80xf32>
    %125 = vector.broadcast %111 : vector<1x80xf32> to vector<16x80xf32>
    %126 = arith.addf %124, %125 : vector<16x80xf32>
    %cst_91 = arith.constant 0.000000e+00 : f32
    %127 = vector.broadcast %cst_91 : f32 to vector<16x80xf32>
    %128 = arith.cmpf ogt, %126, %127 : vector<16x80xf32>
    %cst_92 = arith.constant 0.00999999977 : f32
    %129 = vector.broadcast %cst_92 : f32 to vector<16x80xf32>
    %130 = arith.mulf %129, %126 : vector<16x80xf32>
    %131 = arith.select %128, %126, %130 : vector<16x80xi1>, vector<16x80xf32>
    %132 = vector.broadcast %38 : vector<16x1xf32> to vector<16x80xf32>
    %133 = arith.mulf %131, %132 : vector<16x80xf32>
    %c3_93 = arith.constant 3 : index
    %c0_94 = arith.constant 0 : index
    %c0_95 = arith.constant 0 : index
    %134 = vector.load %arg10[%c3_93, %c0_94, %c0_95] : memref<4x1x80xf32, #tpu.memory_space<vmem>>, vector<1x1x80xf32>
    %135 = vector.shape_cast %134 : vector<1x1x80xf32> to vector<1x80xf32>
    %c1_i32_96 = arith.constant 1 : i32
    %136 = tpu.dynamic_rotate %133 by %c1_i32_96 dim 0 : vector<16x80xf32>, i32 -> vector<16x80xf32>
    %c9 = arith.constant 9 : index
    %c0_97 = arith.constant 0 : index
    %c0_98 = arith.constant 0 : index
    %137 = vector.load %arg9[%c9, %c0_97, %c0_98] : memref<12x80x80xf32, #tpu.memory_space<vmem>>, vector<1x80x80xf32>
    %138 = vector.shape_cast %137 : vector<1x80x80xf32> to vector<80x80xf32>
    %cst_99 = arith.constant dense<0.000000e+00> : vector<16x80xf32>
    %139 = tpu.matmul %136, %138, %cst_99 {dimension_numbers = #tpu.dot_dimension_numbers<[1], [0], [0], [1], [0, 0, 1, 1], [], []>} : vector<16x80xf32>, vector<80x80xf32>, vector<16x80xf32> -> vector<16x80xf32>
    %c10 = arith.constant 10 : index
    %c0_100 = arith.constant 0 : index
    %c0_101 = arith.constant 0 : index
    %140 = vector.load %arg9[%c10, %c0_100, %c0_101] : memref<12x80x80xf32, #tpu.memory_space<vmem>>, vector<1x80x80xf32>
    %141 = vector.shape_cast %140 : vector<1x80x80xf32> to vector<80x80xf32>
    %cst_102 = arith.constant dense<0.000000e+00> : vector<16x80xf32>
    %142 = tpu.matmul %133, %141, %cst_102 {dimension_numbers = #tpu.dot_dimension_numbers<[1], [0], [0], [1], [0, 0, 1, 1], [], []>} : vector<16x80xf32>, vector<80x80xf32>, vector<16x80xf32> -> vector<16x80xf32>
    %143 = arith.addf %139, %142 : vector<16x80xf32>
    %c15_i32_103 = arith.constant 15 : i32
    %144 = tpu.dynamic_rotate %133 by %c15_i32_103 dim 0 : vector<16x80xf32>, i32 -> vector<16x80xf32>
    %c11 = arith.constant 11 : index
    %c0_104 = arith.constant 0 : index
    %c0_105 = arith.constant 0 : index
    %145 = vector.load %arg9[%c11, %c0_104, %c0_105] : memref<12x80x80xf32, #tpu.memory_space<vmem>>, vector<1x80x80xf32>
    %146 = vector.shape_cast %145 : vector<1x80x80xf32> to vector<80x80xf32>
    %cst_106 = arith.constant dense<0.000000e+00> : vector<16x80xf32>
    %147 = tpu.matmul %144, %146, %cst_106 {dimension_numbers = #tpu.dot_dimension_numbers<[1], [0], [0], [1], [0, 0, 1, 1], [], []>} : vector<16x80xf32>, vector<80x80xf32>, vector<16x80xf32> -> vector<16x80xf32>
    %148 = arith.addf %143, %147 : vector<16x80xf32>
    %149 = vector.broadcast %135 : vector<1x80xf32> to vector<16x80xf32>
    %150 = arith.addf %148, %149 : vector<16x80xf32>
    %cst_107 = arith.constant 0.000000e+00 : f32
    %151 = vector.broadcast %cst_107 : f32 to vector<16x80xf32>
    %152 = arith.cmpf ogt, %150, %151 : vector<16x80xf32>
    %cst_108 = arith.constant 0.00999999977 : f32
    %153 = vector.broadcast %cst_108 : f32 to vector<16x80xf32>
    %154 = arith.mulf %153, %150 : vector<16x80xf32>
    %155 = arith.select %152, %150, %154 : vector<16x80xi1>, vector<16x80xf32>
    %c0_109 = arith.constant 0 : index
    %c0_110 = arith.constant 0 : index
    %156 = vector.load %arg11[%c0_109, %c0_110] : memref<8x16xf32, #tpu.memory_space<vmem>>, vector<8x16xf32>
    %cst_111 = arith.constant dense<0.000000e+00> : vector<8x80xf32>
    %157 = tpu.matmul %156, %155, %cst_111 {dimension_numbers = #tpu.dot_dimension_numbers<[1], [0], [0], [1], [0, 0, 1, 1], [], []>} : vector<8x16xf32>, vector<16x80xf32>, vector<8x80xf32> -> vector<8x80xf32>
    %c0_112 = arith.constant 0 : index
    %c0_113 = arith.constant 0 : index
    %158 = vector.load %arg12[%c0_112, %c0_113] : memref<80x32xf32, #tpu.memory_space<vmem>>, vector<80x32xf32>
    %cst_114 = arith.constant dense<0.000000e+00> : vector<8x32xf32>
    %159 = tpu.matmul %157, %158, %cst_114 {dimension_numbers = #tpu.dot_dimension_numbers<[1], [0], [0], [1], [0, 0, 1, 1], [], []>} : vector<8x80xf32>, vector<80x32xf32>, vector<8x32xf32> -> vector<8x32xf32>
    %c0_115 = arith.constant 0 : index
    %c0_116 = arith.constant 0 : index
    %160 = vector.load %arg13[%c0_115, %c0_116] : memref<1x32xf32, #tpu.memory_space<vmem>>, vector<1x32xf32>
    %161 = vector.broadcast %160 : vector<1x32xf32> to vector<8x32xf32>
    %162 = arith.addf %159, %161 : vector<8x32xf32>
    %cst_117 = arith.constant 0.000000e+00 : f32
    %163 = vector.broadcast %cst_117 : f32 to vector<8x32xf32>
    %164 = arith.cmpf ogt, %162, %163 : vector<8x32xf32>
    %cst_118 = arith.constant 0.00999999977 : f32
    %165 = vector.broadcast %cst_118 : f32 to vector<8x32xf32>
    %166 = arith.mulf %165, %162 : vector<8x32xf32>
    %167 = arith.select %164, %162, %166 : vector<8x32xi1>, vector<8x32xf32>
    %c0_119 = arith.constant 0 : index
    %c0_120 = arith.constant 0 : index
    %168 = vector.load %arg14[%c0_119, %c0_120] : memref<8x32xf32, #tpu.memory_space<vmem>>, vector<8x32xf32>
    tpu.vector_store %arg14[%c0_119, %c0_120], %167 {strides = array<i32>} : memref<8x32xf32, #tpu.memory_space<vmem>>, vector<8x32xf32>,
    return
  }
  func.func @transform_0(%arg0: i32) -> (i32, i32) {
    %c0_i32 = arith.constant 0 : i32
    %c0_i32_0 = arith.constant 0 : i32
    return %arg0, %c0_i32 : i32, i32
  }
  func.func @transform_1(%arg0: i32) -> (i32, i32, i32) {
    %c0_i32 = arith.constant 0 : i32
    %c0_i32_0 = arith.constant 0 : i32
    %c0_i32_1 = arith.constant 0 : i32
    %c0_i32_2 = arith.constant 0 : i32
    return %c0_i32, %c0_i32_0, %c0_i32_1 : i32, i32, i32
  }
  func.func @transform_2(%arg0: i32) -> (i32, i32) {
    %c0_i32 = arith.constant 0 : i32
    %c0_i32_0 = arith.constant 0 : i32
    %c0_i32_1 = arith.constant 0 : i32
    return %c0_i32, %c0_i32_0 : i32, i32
  }
  func.func @transform_3(%arg0: i32) -> (i32, i32) {
    %c0_i32 = arith.constant 0 : i32
    %c0_i32_0 = arith.constant 0 : i32
    %c0_i32_1 = arith.constant 0 : i32
    return %c0_i32, %c0_i32_0 : i32, i32
  }
  func.func @transform_4(%arg0: i32) -> (i32, i32) {
    %c0_i32 = arith.constant 0 : i32
    %c0_i32_0 = arith.constant 0 : i32
    %c0_i32_1 = arith.constant 0 : i32
    return %c0_i32, %c0_i32_0 : i32, i32
  }
  func.func @transform_5(%arg0: i32) -> (i32, i32) {
    %c0_i32 = arith.constant 0 : i32
    %c0_i32_0 = arith.constant 0 : i32
    %c0_i32_1 = arith.constant 0 : i32
    return %c0_i32, %c0_i32_0 : i32, i32
  }
  func.func @transform_6(%arg0: i32) -> (i32, i32, i32) {
    %c0_i32 = arith.constant 0 : i32
    %c0_i32_0 = arith.constant 0 : i32
    %c0_i32_1 = arith.constant 0 : i32
    %c0_i32_2 = arith.constant 0 : i32
    return %c0_i32, %c0_i32_0, %c0_i32_1 : i32, i32, i32
  }
  func.func @transform_7(%arg0: i32) -> (i32, i32) {
    %c0_i32 = arith.constant 0 : i32
    %c0_i32_0 = arith.constant 0 : i32
    %c0_i32_1 = arith.constant 0 : i32
    return %c0_i32, %c0_i32_0 : i32, i32
  }
  func.func @transform_8(%arg0: i32) -> (i32, i32, i32) {
    %c0_i32 = arith.constant 0 : i32
    %c0_i32_0 = arith.constant 0 : i32
    %c0_i32_1 = arith.constant 0 : i32
    %c0_i32_2 = arith.constant 0 : i32
    return %c0_i32, %c0_i32_0, %c0_i32_1 : i32, i32, i32
  }
  func.func @transform_9(%arg0: i32) -> (i32, i32, i32) {
    %c0_i32 = arith.constant 0 : i32
    %c0_i32_0 = arith.constant 0 : i32
    %c0_i32_1 = arith.constant 0 : i32
    %c0_i32_2 = arith.constant 0 : i32
    return %c0_i32, %c0_i32_0, %c0_i32_1 : i32, i32, i32
  }
  func.func @transform_10(%arg0: i32) -> (i32, i32) {
    %c0_i32 = arith.constant 0 : i32
    %c0_i32_0 = arith.constant 0 : i32
    %c0_i32_1 = arith.constant 0 : i32
    return %c0_i32, %c0_i32_0 : i32, i32
  }
  func.func @transform_11(%arg0: i32) -> (i32, i32) {
    %c0_i32 = arith.constant 0 : i32
    %c0_i32_0 = arith.constant 0 : i32
    %c0_i32_1 = arith.constant 0 : i32
    return %c0_i32, %c0_i32_0 : i32, i32
  }
  func.func @transform_12(%arg0: i32) -> (i32, i32) {
    %c0_i32 = arith.constant 0 : i32
    %c0_i32_0 = arith.constant 0 : i32
    %c0_i32_1 = arith.constant 0 : i32
    return %c0_i32, %c0_i32_0 : i32, i32
  }
  func.func @transform_13(%arg0: i32) -> (i32, i32) {
    %c0_i32 = arith.constant 0 : i32
    %c0_i32_0 = arith.constant 0 : i32
    return %arg0, %c0_i32 : i32, i32
  }
}

module attributes {stable_mosaic.version = 11 : i64} {
  func.func @_lstm_head_kernel(%arg0: i32, %arg1: memref<16x32xf32, #tpu.memory_space<vmem>>, %arg2: memref<16x16xf32, #tpu.memory_space<vmem>>, %arg3: memref<32x128xf32, #tpu.memory_space<vmem>>, %arg4: memref<1x128xf32, #tpu.memory_space<vmem>>, %arg5: memref<32x128xf32, #tpu.memory_space<vmem>>, %arg6: memref<1x32xf32, #tpu.memory_space<vmem>>, %arg7: memref<3xf32, #tpu.memory_space<smem>>, %arg8: memref<32x32xf32, #tpu.memory_space<vmem>>, %arg9: memref<1x32xf32, #tpu.memory_space<vmem>>, %arg10: memref<32x4xf32, #tpu.memory_space<vmem>>, %arg11: memref<1x4xf32, #tpu.memory_space<vmem>>, %arg12: memref<2x32xf32, #tpu.memory_space<vmem>>, %arg13: memref<2x4xf32, #tpu.memory_space<vmem>>, %arg14: memref<16x128xf32, #tpu.memory_space<vmem>>) attributes {dimension_semantics = [#tpu.dimension_semantics<arbitrary>], iteration_bounds = array<i64: 1>, scalar_prefetch = 0 : i64, scratch_operands = 1 : i64, tpu.core_type = #tpu.core_type<tc>, window_params = [{pipeline_mode = #tpu.pipeline_mode<synchronous>, transform_indices = @transform_0, window_bounds = array<i64: 16, 32>}, {pipeline_mode = #tpu.pipeline_mode<synchronous>, transform_indices = @transform_1, window_bounds = array<i64: 16, 16>}, {pipeline_mode = #tpu.pipeline_mode<synchronous>, transform_indices = @transform_2, window_bounds = array<i64: 32, 128>}, {pipeline_mode = #tpu.pipeline_mode<synchronous>, transform_indices = @transform_3, window_bounds = array<i64: 1, 128>}, {pipeline_mode = #tpu.pipeline_mode<synchronous>, transform_indices = @transform_4, window_bounds = array<i64: 32, 128>}, {pipeline_mode = #tpu.pipeline_mode<synchronous>, transform_indices = @transform_5, window_bounds = array<i64: 1, 32>}, {transform_indices = @transform_6, window_bounds = array<i64: 3>}, {pipeline_mode = #tpu.pipeline_mode<synchronous>, transform_indices = @transform_7, window_bounds = array<i64: 32, 32>}, {pipeline_mode = #tpu.pipeline_mode<synchronous>, transform_indices = @transform_8, window_bounds = array<i64: 1, 32>}, {pipeline_mode = #tpu.pipeline_mode<synchronous>, transform_indices = @transform_9, window_bounds = array<i64: 32, 4>}, {pipeline_mode = #tpu.pipeline_mode<synchronous>, transform_indices = @transform_10, window_bounds = array<i64: 1, 4>}, {pipeline_mode = #tpu.pipeline_mode<synchronous>, transform_indices = @transform_11, window_bounds = array<i64: 2, 32>}, {pipeline_mode = #tpu.pipeline_mode<synchronous>, transform_indices = @transform_12, window_bounds = array<i64: 2, 4>}]} {
    %c0 = arith.constant 0 : index
    %c0_0 = arith.constant 0 : index
    %0 = vector.load %arg2[%c0, %c0_0] : memref<16x16xf32, #tpu.memory_space<vmem>>, vector<16x16xf32>
    %c0_1 = arith.constant 0 : index
    %c0_2 = arith.constant 0 : index
    %1 = vector.load %arg1[%c0_1, %c0_2] : memref<16x32xf32, #tpu.memory_space<vmem>>, vector<16x32xf32>
    %cst = arith.constant dense<0.000000e+00> : vector<16x32xf32>
    %2 = tpu.matmul %0, %1, %cst {dimension_numbers = #tpu.dot_dimension_numbers<[1], [0], [0], [1], [0, 0, 1, 1], [], []>} : vector<16x16xf32>, vector<16x32xf32>, vector<16x32xf32> -> vector<16x32xf32>
    %c0_3 = arith.constant 0 : index
    %c0_4 = arith.constant 0 : index
    %3 = vector.load %arg3[%c0_3, %c0_4] : memref<32x128xf32, #tpu.memory_space<vmem>>, vector<32x128xf32>
    %cst_5 = arith.constant dense<0.000000e+00> : vector<16x128xf32>
    %4 = tpu.matmul %2, %3, %cst_5 {dimension_numbers = #tpu.dot_dimension_numbers<[1], [0], [0], [1], [0, 0, 1, 1], [], []>} : vector<16x32xf32>, vector<32x128xf32>, vector<16x128xf32> -> vector<16x128xf32>
    %c0_6 = arith.constant 0 : index
    %c0_7 = arith.constant 0 : index
    %5 = vector.load %arg4[%c0_6, %c0_7] : memref<1x128xf32, #tpu.memory_space<vmem>>, vector<1x128xf32>
    %6 = vector.broadcast %5 : vector<1x128xf32> to vector<16x128xf32>
    %7 = arith.addf %4, %6 : vector<16x128xf32>
    %c0_8 = arith.constant 0 : index
    %c0_9 = arith.constant 0 : index
    %8 = vector.load %arg14[%c0_8, %c0_9] : memref<16x128xf32, #tpu.memory_space<vmem>>, vector<16x128xf32>
    tpu.vector_store %arg14[%c0_8, %c0_9], %7 {strides = array<i32>} : memref<16x128xf32, #tpu.memory_space<vmem>>, vector<16x128xf32>,
    %c0_10 = arith.constant 0 : index
    %c0_11 = arith.constant 0 : index
    %9 = vector.load %arg5[%c0_10, %c0_11] : memref<32x128xf32, #tpu.memory_space<vmem>>, vector<32x128xf32>
    %cst_12 = arith.constant 0.000000e+00 : f32
    %10 = vector.broadcast %cst_12 : f32 to vector<2x16xf32>
    %cst_13 = arith.constant 0.000000e+00 : f32
    %11 = vector.broadcast %cst_13 : f32 to vector<2x16xf32>
    %cst_14 = arith.constant 0.000000e+00 : f32
    %12 = vector.broadcast %cst_14 : f32 to vector<2x16xf32>
    %cst_15 = arith.constant 0.000000e+00 : f32
    %13 = vector.broadcast %cst_15 : f32 to vector<2x16xf32>
    %14 = tpu.concatenate %10, %12 in 1 : vector<2x16xf32>, vector<2x16xf32> -> vector<2x32xf32>
    %cst_16 = arith.constant dense<0.000000e+00> : vector<2x128xf32>
    %15 = tpu.matmul %14, %9, %cst_16 {dimension_numbers = #tpu.dot_dimension_numbers<[1], [0], [0], [1], [0, 0, 1, 1], [], []>} : vector<2x32xf32>, vector<32x128xf32>, vector<2x128xf32> -> vector<2x128xf32>
    %c0_17 = arith.constant 0 : index
    %c0_18 = arith.constant 0 : index
    %16 = vector.load %arg14[%c0_17, %c0_18] : memref<16x128xf32, #tpu.memory_space<vmem>>, vector<2x64xf32>
    %17 = vector.extract_strided_slice %15 {offsets = [0, 0], sizes = [2, 64], strides = [1, 1]} : vector<2x128xf32> to vector<2x64xf32>
    %18 = arith.addf %16, %17 : vector<2x64xf32>
    %c14 = arith.constant 14 : index
    %c64 = arith.constant 64 : index
    %19 = vector.load %arg14[%c14, %c64] : memref<16x128xf32, #tpu.memory_space<vmem>>, vector<2x64xf32>
    %20 = vector.extract_strided_slice %15 {offsets = [0, 64], sizes = [2, 64], strides = [1, 1]} : vector<2x128xf32> to vector<2x64xf32>
    %21 = arith.addf %19, %20 : vector<2x64xf32>
    %22 = vector.extract_strided_slice %18 {offsets = [0, 0], sizes = [2, 16], strides = [1, 1]} : vector<2x64xf32> to vector<2x16xf32>
    %23 = arith.negf %22 : vector<2x16xf32>
    %24 = math.exp %23 : vector<2x16xf32>
    %cst_19 = arith.constant 1.000000e+00 : f32
    %25 = vector.broadcast %cst_19 : f32 to vector<2x16xf32>
    %26 = arith.addf %25, %24 : vector<2x16xf32>
    %27 = arith.divf %25, %26 : vector<2x16xf32>
    %28 = vector.extract_strided_slice %18 {offsets = [0, 16], sizes = [2, 16], strides = [1, 1]} : vector<2x64xf32> to vector<2x16xf32>
    %29 = arith.negf %28 : vector<2x16xf32>
    %30 = math.exp %29 : vector<2x16xf32>
    %cst_20 = arith.constant 1.000000e+00 : f32
    %31 = vector.broadcast %cst_20 : f32 to vector<2x16xf32>
    %32 = arith.addf %31, %30 : vector<2x16xf32>
    %33 = arith.divf %31, %32 : vector<2x16xf32>
    %34 = vector.extract_strided_slice %18 {offsets = [0, 32], sizes = [2, 16], strides = [1, 1]} : vector<2x64xf32> to vector<2x16xf32>
    %35 = math.tanh %34 : vector<2x16xf32>
    %36 = vector.extract_strided_slice %18 {offsets = [0, 48], sizes = [2, 16], strides = [1, 1]} : vector<2x64xf32> to vector<2x16xf32>
    %37 = arith.negf %36 : vector<2x16xf32>
    %38 = math.exp %37 : vector<2x16xf32>
    %cst_21 = arith.constant 1.000000e+00 : f32
    %39 = vector.broadcast %cst_21 : f32 to vector<2x16xf32>
    %40 = arith.addf %39, %38 : vector<2x16xf32>
    %41 = arith.divf %39, %40 : vector<2x16xf32>
    %42 = arith.mulf %33, %11 : vector<2x16xf32>
    %43 = arith.mulf %27, %35 : vector<2x16xf32>
    %44 = arith.addf %42, %43 : vector<2x16xf32>
    %45 = math.tanh %44 : vector<2x16xf32>
    %46 = arith.mulf %41, %45 : vector<2x16xf32>
    %47 = vector.extract_strided_slice %21 {offsets = [0, 0], sizes = [2, 16], strides = [1, 1]} : vector<2x64xf32> to vector<2x16xf32>
    %48 = arith.negf %47 : vector<2x16xf32>
    %49 = math.exp %48 : vector<2x16xf32>
    %cst_22 = arith.constant 1.000000e+00 : f32
    %50 = vector.broadcast %cst_22 : f32 to vector<2x16xf32>
    %51 = arith.addf %50, %49 : vector<2x16xf32>
    %52 = arith.divf %50, %51 : vector<2x16xf32>
    %53 = vector.extract_strided_slice %21 {offsets = [0, 16], sizes = [2, 16], strides = [1, 1]} : vector<2x64xf32> to vector<2x16xf32>
    %54 = arith.negf %53 : vector<2x16xf32>
    %55 = math.exp %54 : vector<2x16xf32>
    %cst_23 = arith.constant 1.000000e+00 : f32
    %56 = vector.broadcast %cst_23 : f32 to vector<2x16xf32>
    %57 = arith.addf %56, %55 : vector<2x16xf32>
    %58 = arith.divf %56, %57 : vector<2x16xf32>
    %59 = vector.extract_strided_slice %21 {offsets = [0, 32], sizes = [2, 16], strides = [1, 1]} : vector<2x64xf32> to vector<2x16xf32>
    %60 = math.tanh %59 : vector<2x16xf32>
    %61 = vector.extract_strided_slice %21 {offsets = [0, 48], sizes = [2, 16], strides = [1, 1]} : vector<2x64xf32> to vector<2x16xf32>
    %62 = arith.negf %61 : vector<2x16xf32>
    %63 = math.exp %62 : vector<2x16xf32>
    %cst_24 = arith.constant 1.000000e+00 : f32
    %64 = vector.broadcast %cst_24 : f32 to vector<2x16xf32>
    %65 = arith.addf %64, %63 : vector<2x16xf32>
    %66 = arith.divf %64, %65 : vector<2x16xf32>
    %67 = arith.mulf %58, %13 : vector<2x16xf32>
    %68 = arith.mulf %52, %60 : vector<2x16xf32>
    %69 = arith.addf %67, %68 : vector<2x16xf32>
    %70 = math.tanh %69 : vector<2x16xf32>
    %71 = arith.mulf %66, %70 : vector<2x16xf32>
    %72 = tpu.concatenate %46, %71 in 1 : vector<2x16xf32>, vector<2x16xf32> -> vector<2x32xf32>
    %cst_25 = arith.constant dense<0.000000e+00> : vector<2x128xf32>
    %73 = tpu.matmul %72, %9, %cst_25 {dimension_numbers = #tpu.dot_dimension_numbers<[1], [0], [0], [1], [0, 0, 1, 1], [], []>} : vector<2x32xf32>, vector<32x128xf32>, vector<2x128xf32> -> vector<2x128xf32>
    %c2 = arith.constant 2 : index
    %c0_26 = arith.constant 0 : index
    %74 = vector.load %arg14[%c2, %c0_26] : memref<16x128xf32, #tpu.memory_space<vmem>>, vector<2x64xf32>
    %75 = vector.extract_strided_slice %73 {offsets = [0, 0], sizes = [2, 64], strides = [1, 1]} : vector<2x128xf32> to vector<2x64xf32>
    %76 = arith.addf %74, %75 : vector<2x64xf32>
    %c12 = arith.constant 12 : index
    %c64_27 = arith.constant 64 : index
    %77 = vector.load %arg14[%c12, %c64_27] : memref<16x128xf32, #tpu.memory_space<vmem>>, vector<2x64xf32>
    %78 = vector.extract_strided_slice %73 {offsets = [0, 64], sizes = [2, 64], strides = [1, 1]} : vector<2x128xf32> to vector<2x64xf32>
    %79 = arith.addf %77, %78 : vector<2x64xf32>
    %80 = vector.extract_strided_slice %76 {offsets = [0, 0], sizes = [2, 16], strides = [1, 1]} : vector<2x64xf32> to vector<2x16xf32>
    %81 = arith.negf %80 : vector<2x16xf32>
    %82 = math.exp %81 : vector<2x16xf32>
    %cst_28 = arith.constant 1.000000e+00 : f32
    %83 = vector.broadcast %cst_28 : f32 to vector<2x16xf32>
    %84 = arith.addf %83, %82 : vector<2x16xf32>
    %85 = arith.divf %83, %84 : vector<2x16xf32>
    %86 = vector.extract_strided_slice %76 {offsets = [0, 16], sizes = [2, 16], strides = [1, 1]} : vector<2x64xf32> to vector<2x16xf32>
    %87 = arith.negf %86 : vector<2x16xf32>
    %88 = math.exp %87 : vector<2x16xf32>
    %cst_29 = arith.constant 1.000000e+00 : f32
    %89 = vector.broadcast %cst_29 : f32 to vector<2x16xf32>
    %90 = arith.addf %89, %88 : vector<2x16xf32>
    %91 = arith.divf %89, %90 : vector<2x16xf32>
    %92 = vector.extract_strided_slice %76 {offsets = [0, 32], sizes = [2, 16], strides = [1, 1]} : vector<2x64xf32> to vector<2x16xf32>
    %93 = math.tanh %92 : vector<2x16xf32>
    %94 = vector.extract_strided_slice %76 {offsets = [0, 48], sizes = [2, 16], strides = [1, 1]} : vector<2x64xf32> to vector<2x16xf32>
    %95 = arith.negf %94 : vector<2x16xf32>
    %96 = math.exp %95 : vector<2x16xf32>
    %cst_30 = arith.constant 1.000000e+00 : f32
    %97 = vector.broadcast %cst_30 : f32 to vector<2x16xf32>
    %98 = arith.addf %97, %96 : vector<2x16xf32>
    %99 = arith.divf %97, %98 : vector<2x16xf32>
    %100 = arith.mulf %91, %44 : vector<2x16xf32>
    %101 = arith.mulf %85, %93 : vector<2x16xf32>
    %102 = arith.addf %100, %101 : vector<2x16xf32>
    %103 = math.tanh %102 : vector<2x16xf32>
    %104 = arith.mulf %99, %103 : vector<2x16xf32>
    %105 = vector.extract_strided_slice %79 {offsets = [0, 0], sizes = [2, 16], strides = [1, 1]} : vector<2x64xf32> to vector<2x16xf32>
    %106 = arith.negf %105 : vector<2x16xf32>
    %107 = math.exp %106 : vector<2x16xf32>
    %cst_31 = arith.constant 1.000000e+00 : f32
    %108 = vector.broadcast %cst_31 : f32 to vector<2x16xf32>
    %109 = arith.addf %108, %107 : vector<2x16xf32>
    %110 = arith.divf %108, %109 : vector<2x16xf32>
    %111 = vector.extract_strided_slice %79 {offsets = [0, 16], sizes = [2, 16], strides = [1, 1]} : vector<2x64xf32> to vector<2x16xf32>
    %112 = arith.negf %111 : vector<2x16xf32>
    %113 = math.exp %112 : vector<2x16xf32>
    %cst_32 = arith.constant 1.000000e+00 : f32
    %114 = vector.broadcast %cst_32 : f32 to vector<2x16xf32>
    %115 = arith.addf %114, %113 : vector<2x16xf32>
    %116 = arith.divf %114, %115 : vector<2x16xf32>
    %117 = vector.extract_strided_slice %79 {offsets = [0, 32], sizes = [2, 16], strides = [1, 1]} : vector<2x64xf32> to vector<2x16xf32>
    %118 = math.tanh %117 : vector<2x16xf32>
    %119 = vector.extract_strided_slice %79 {offsets = [0, 48], sizes = [2, 16], strides = [1, 1]} : vector<2x64xf32> to vector<2x16xf32>
    %120 = arith.negf %119 : vector<2x16xf32>
    %121 = math.exp %120 : vector<2x16xf32>
    %cst_33 = arith.constant 1.000000e+00 : f32
    %122 = vector.broadcast %cst_33 : f32 to vector<2x16xf32>
    %123 = arith.addf %122, %121 : vector<2x16xf32>
    %124 = arith.divf %122, %123 : vector<2x16xf32>
    %125 = arith.mulf %116, %69 : vector<2x16xf32>
    %126 = arith.mulf %110, %118 : vector<2x16xf32>
    %127 = arith.addf %125, %126 : vector<2x16xf32>
    %128 = math.tanh %127 : vector<2x16xf32>
    %129 = arith.mulf %124, %128 : vector<2x16xf32>
    %130 = tpu.concatenate %104, %129 in 1 : vector<2x16xf32>, vector<2x16xf32> -> vector<2x32xf32>
    %cst_34 = arith.constant dense<0.000000e+00> : vector<2x128xf32>
    %131 = tpu.matmul %130, %9, %cst_34 {dimension_numbers = #tpu.dot_dimension_numbers<[1], [0], [0], [1], [0, 0, 1, 1], [], []>} : vector<2x32xf32>, vector<32x128xf32>, vector<2x128xf32> -> vector<2x128xf32>
    %c4 = arith.constant 4 : index
    %c0_35 = arith.constant 0 : index
    %132 = vector.load %arg14[%c4, %c0_35] : memref<16x128xf32, #tpu.memory_space<vmem>>, vector<2x64xf32>
    %133 = vector.extract_strided_slice %131 {offsets = [0, 0], sizes = [2, 64], strides = [1, 1]} : vector<2x128xf32> to vector<2x64xf32>
    %134 = arith.addf %132, %133 : vector<2x64xf32>
    %c10 = arith.constant 10 : index
    %c64_36 = arith.constant 64 : index
    %135 = vector.load %arg14[%c10, %c64_36] : memref<16x128xf32, #tpu.memory_space<vmem>>, vector<2x64xf32>
    %136 = vector.extract_strided_slice %131 {offsets = [0, 64], sizes = [2, 64], strides = [1, 1]} : vector<2x128xf32> to vector<2x64xf32>
    %137 = arith.addf %135, %136 : vector<2x64xf32>
    %138 = vector.extract_strided_slice %134 {offsets = [0, 0], sizes = [2, 16], strides = [1, 1]} : vector<2x64xf32> to vector<2x16xf32>
    %139 = arith.negf %138 : vector<2x16xf32>
    %140 = math.exp %139 : vector<2x16xf32>
    %cst_37 = arith.constant 1.000000e+00 : f32
    %141 = vector.broadcast %cst_37 : f32 to vector<2x16xf32>
    %142 = arith.addf %141, %140 : vector<2x16xf32>
    %143 = arith.divf %141, %142 : vector<2x16xf32>
    %144 = vector.extract_strided_slice %134 {offsets = [0, 16], sizes = [2, 16], strides = [1, 1]} : vector<2x64xf32> to vector<2x16xf32>
    %145 = arith.negf %144 : vector<2x16xf32>
    %146 = math.exp %145 : vector<2x16xf32>
    %cst_38 = arith.constant 1.000000e+00 : f32
    %147 = vector.broadcast %cst_38 : f32 to vector<2x16xf32>
    %148 = arith.addf %147, %146 : vector<2x16xf32>
    %149 = arith.divf %147, %148 : vector<2x16xf32>
    %150 = vector.extract_strided_slice %134 {offsets = [0, 32], sizes = [2, 16], strides = [1, 1]} : vector<2x64xf32> to vector<2x16xf32>
    %151 = math.tanh %150 : vector<2x16xf32>
    %152 = vector.extract_strided_slice %134 {offsets = [0, 48], sizes = [2, 16], strides = [1, 1]} : vector<2x64xf32> to vector<2x16xf32>
    %153 = arith.negf %152 : vector<2x16xf32>
    %154 = math.exp %153 : vector<2x16xf32>
    %cst_39 = arith.constant 1.000000e+00 : f32
    %155 = vector.broadcast %cst_39 : f32 to vector<2x16xf32>
    %156 = arith.addf %155, %154 : vector<2x16xf32>
    %157 = arith.divf %155, %156 : vector<2x16xf32>
    %158 = arith.mulf %149, %102 : vector<2x16xf32>
    %159 = arith.mulf %143, %151 : vector<2x16xf32>
    %160 = arith.addf %158, %159 : vector<2x16xf32>
    %161 = math.tanh %160 : vector<2x16xf32>
    %162 = arith.mulf %157, %161 : vector<2x16xf32>
    %163 = vector.extract_strided_slice %137 {offsets = [0, 0], sizes = [2, 16], strides = [1, 1]} : vector<2x64xf32> to vector<2x16xf32>
    %164 = arith.negf %163 : vector<2x16xf32>
    %165 = math.exp %164 : vector<2x16xf32>
    %cst_40 = arith.constant 1.000000e+00 : f32
    %166 = vector.broadcast %cst_40 : f32 to vector<2x16xf32>
    %167 = arith.addf %166, %165 : vector<2x16xf32>
    %168 = arith.divf %166, %167 : vector<2x16xf32>
    %169 = vector.extract_strided_slice %137 {offsets = [0, 16], sizes = [2, 16], strides = [1, 1]} : vector<2x64xf32> to vector<2x16xf32>
    %170 = arith.negf %169 : vector<2x16xf32>
    %171 = math.exp %170 : vector<2x16xf32>
    %cst_41 = arith.constant 1.000000e+00 : f32
    %172 = vector.broadcast %cst_41 : f32 to vector<2x16xf32>
    %173 = arith.addf %172, %171 : vector<2x16xf32>
    %174 = arith.divf %172, %173 : vector<2x16xf32>
    %175 = vector.extract_strided_slice %137 {offsets = [0, 32], sizes = [2, 16], strides = [1, 1]} : vector<2x64xf32> to vector<2x16xf32>
    %176 = math.tanh %175 : vector<2x16xf32>
    %177 = vector.extract_strided_slice %137 {offsets = [0, 48], sizes = [2, 16], strides = [1, 1]} : vector<2x64xf32> to vector<2x16xf32>
    %178 = arith.negf %177 : vector<2x16xf32>
    %179 = math.exp %178 : vector<2x16xf32>
    %cst_42 = arith.constant 1.000000e+00 : f32
    %180 = vector.broadcast %cst_42 : f32 to vector<2x16xf32>
    %181 = arith.addf %180, %179 : vector<2x16xf32>
    %182 = arith.divf %180, %181 : vector<2x16xf32>
    %183 = arith.mulf %174, %127 : vector<2x16xf32>
    %184 = arith.mulf %168, %176 : vector<2x16xf32>
    %185 = arith.addf %183, %184 : vector<2x16xf32>
    %186 = math.tanh %185 : vector<2x16xf32>
    %187 = arith.mulf %182, %186 : vector<2x16xf32>
    %188 = tpu.concatenate %162, %187 in 1 : vector<2x16xf32>, vector<2x16xf32> -> vector<2x32xf32>
    %cst_43 = arith.constant dense<0.000000e+00> : vector<2x128xf32>
    %189 = tpu.matmul %188, %9, %cst_43 {dimension_numbers = #tpu.dot_dimension_numbers<[1], [0], [0], [1], [0, 0, 1, 1], [], []>} : vector<2x32xf32>, vector<32x128xf32>, vector<2x128xf32> -> vector<2x128xf32>
    %c6 = arith.constant 6 : index
    %c0_44 = arith.constant 0 : index
    %190 = vector.load %arg14[%c6, %c0_44] : memref<16x128xf32, #tpu.memory_space<vmem>>, vector<2x64xf32>
    %191 = vector.extract_strided_slice %189 {offsets = [0, 0], sizes = [2, 64], strides = [1, 1]} : vector<2x128xf32> to vector<2x64xf32>
    %192 = arith.addf %190, %191 : vector<2x64xf32>
    %c8 = arith.constant 8 : index
    %c64_45 = arith.constant 64 : index
    %193 = vector.load %arg14[%c8, %c64_45] : memref<16x128xf32, #tpu.memory_space<vmem>>, vector<2x64xf32>
    %194 = vector.extract_strided_slice %189 {offsets = [0, 64], sizes = [2, 64], strides = [1, 1]} : vector<2x128xf32> to vector<2x64xf32>
    %195 = arith.addf %193, %194 : vector<2x64xf32>
    %196 = vector.extract_strided_slice %192 {offsets = [0, 0], sizes = [2, 16], strides = [1, 1]} : vector<2x64xf32> to vector<2x16xf32>
    %197 = arith.negf %196 : vector<2x16xf32>
    %198 = math.exp %197 : vector<2x16xf32>
    %cst_46 = arith.constant 1.000000e+00 : f32
    %199 = vector.broadcast %cst_46 : f32 to vector<2x16xf32>
    %200 = arith.addf %199, %198 : vector<2x16xf32>
    %201 = arith.divf %199, %200 : vector<2x16xf32>
    %202 = vector.extract_strided_slice %192 {offsets = [0, 16], sizes = [2, 16], strides = [1, 1]} : vector<2x64xf32> to vector<2x16xf32>
    %203 = arith.negf %202 : vector<2x16xf32>
    %204 = math.exp %203 : vector<2x16xf32>
    %cst_47 = arith.constant 1.000000e+00 : f32
    %205 = vector.broadcast %cst_47 : f32 to vector<2x16xf32>
    %206 = arith.addf %205, %204 : vector<2x16xf32>
    %207 = arith.divf %205, %206 : vector<2x16xf32>
    %208 = vector.extract_strided_slice %192 {offsets = [0, 32], sizes = [2, 16], strides = [1, 1]} : vector<2x64xf32> to vector<2x16xf32>
    %209 = math.tanh %208 : vector<2x16xf32>
    %210 = vector.extract_strided_slice %192 {offsets = [0, 48], sizes = [2, 16], strides = [1, 1]} : vector<2x64xf32> to vector<2x16xf32>
    %211 = arith.negf %210 : vector<2x16xf32>
    %212 = math.exp %211 : vector<2x16xf32>
    %cst_48 = arith.constant 1.000000e+00 : f32
    %213 = vector.broadcast %cst_48 : f32 to vector<2x16xf32>
    %214 = arith.addf %213, %212 : vector<2x16xf32>
    %215 = arith.divf %213, %214 : vector<2x16xf32>
    %216 = arith.mulf %207, %160 : vector<2x16xf32>
    %217 = arith.mulf %201, %209 : vector<2x16xf32>
    %218 = arith.addf %216, %217 : vector<2x16xf32>
    %219 = math.tanh %218 : vector<2x16xf32>
    %220 = arith.mulf %215, %219 : vector<2x16xf32>
    %221 = vector.extract_strided_slice %195 {offsets = [0, 0], sizes = [2, 16], strides = [1, 1]} : vector<2x64xf32> to vector<2x16xf32>
    %222 = arith.negf %221 : vector<2x16xf32>
    %223 = math.exp %222 : vector<2x16xf32>
    %cst_49 = arith.constant 1.000000e+00 : f32
    %224 = vector.broadcast %cst_49 : f32 to vector<2x16xf32>
    %225 = arith.addf %224, %223 : vector<2x16xf32>
    %226 = arith.divf %224, %225 : vector<2x16xf32>
    %227 = vector.extract_strided_slice %195 {offsets = [0, 16], sizes = [2, 16], strides = [1, 1]} : vector<2x64xf32> to vector<2x16xf32>
    %228 = arith.negf %227 : vector<2x16xf32>
    %229 = math.exp %228 : vector<2x16xf32>
    %cst_50 = arith.constant 1.000000e+00 : f32
    %230 = vector.broadcast %cst_50 : f32 to vector<2x16xf32>
    %231 = arith.addf %230, %229 : vector<2x16xf32>
    %232 = arith.divf %230, %231 : vector<2x16xf32>
    %233 = vector.extract_strided_slice %195 {offsets = [0, 32], sizes = [2, 16], strides = [1, 1]} : vector<2x64xf32> to vector<2x16xf32>
    %234 = math.tanh %233 : vector<2x16xf32>
    %235 = vector.extract_strided_slice %195 {offsets = [0, 48], sizes = [2, 16], strides = [1, 1]} : vector<2x64xf32> to vector<2x16xf32>
    %236 = arith.negf %235 : vector<2x16xf32>
    %237 = math.exp %236 : vector<2x16xf32>
    %cst_51 = arith.constant 1.000000e+00 : f32
    %238 = vector.broadcast %cst_51 : f32 to vector<2x16xf32>
    %239 = arith.addf %238, %237 : vector<2x16xf32>
    %240 = arith.divf %238, %239 : vector<2x16xf32>
    %241 = arith.mulf %232, %185 : vector<2x16xf32>
    %242 = arith.mulf %226, %234 : vector<2x16xf32>
    %243 = arith.addf %241, %242 : vector<2x16xf32>
    %244 = math.tanh %243 : vector<2x16xf32>
    %245 = arith.mulf %240, %244 : vector<2x16xf32>
    %246 = tpu.concatenate %220, %245 in 1 : vector<2x16xf32>, vector<2x16xf32> -> vector<2x32xf32>
    %cst_52 = arith.constant dense<0.000000e+00> : vector<2x128xf32>
    %247 = tpu.matmul %246, %9, %cst_52 {dimension_numbers = #tpu.dot_dimension_numbers<[1], [0], [0], [1], [0, 0, 1, 1], [], []>} : vector<2x32xf32>, vector<32x128xf32>, vector<2x128xf32> -> vector<2x128xf32>
    %c8_53 = arith.constant 8 : index
    %c0_54 = arith.constant 0 : index
    %248 = vector.load %arg14[%c8_53, %c0_54] : memref<16x128xf32, #tpu.memory_space<vmem>>, vector<2x64xf32>
    %249 = vector.extract_strided_slice %247 {offsets = [0, 0], sizes = [2, 64], strides = [1, 1]} : vector<2x128xf32> to vector<2x64xf32>
    %250 = arith.addf %248, %249 : vector<2x64xf32>
    %c6_55 = arith.constant 6 : index
    %c64_56 = arith.constant 64 : index
    %251 = vector.load %arg14[%c6_55, %c64_56] : memref<16x128xf32, #tpu.memory_space<vmem>>, vector<2x64xf32>
    %252 = vector.extract_strided_slice %247 {offsets = [0, 64], sizes = [2, 64], strides = [1, 1]} : vector<2x128xf32> to vector<2x64xf32>
    %253 = arith.addf %251, %252 : vector<2x64xf32>
    %254 = vector.extract_strided_slice %250 {offsets = [0, 0], sizes = [2, 16], strides = [1, 1]} : vector<2x64xf32> to vector<2x16xf32>
    %255 = arith.negf %254 : vector<2x16xf32>
    %256 = math.exp %255 : vector<2x16xf32>
    %cst_57 = arith.constant 1.000000e+00 : f32
    %257 = vector.broadcast %cst_57 : f32 to vector<2x16xf32>
    %258 = arith.addf %257, %256 : vector<2x16xf32>
    %259 = arith.divf %257, %258 : vector<2x16xf32>
    %260 = vector.extract_strided_slice %250 {offsets = [0, 16], sizes = [2, 16], strides = [1, 1]} : vector<2x64xf32> to vector<2x16xf32>
    %261 = arith.negf %260 : vector<2x16xf32>
    %262 = math.exp %261 : vector<2x16xf32>
    %cst_58 = arith.constant 1.000000e+00 : f32
    %263 = vector.broadcast %cst_58 : f32 to vector<2x16xf32>
    %264 = arith.addf %263, %262 : vector<2x16xf32>
    %265 = arith.divf %263, %264 : vector<2x16xf32>
    %266 = vector.extract_strided_slice %250 {offsets = [0, 32], sizes = [2, 16], strides = [1, 1]} : vector<2x64xf32> to vector<2x16xf32>
    %267 = math.tanh %266 : vector<2x16xf32>
    %268 = vector.extract_strided_slice %250 {offsets = [0, 48], sizes = [2, 16], strides = [1, 1]} : vector<2x64xf32> to vector<2x16xf32>
    %269 = arith.negf %268 : vector<2x16xf32>
    %270 = math.exp %269 : vector<2x16xf32>
    %cst_59 = arith.constant 1.000000e+00 : f32
    %271 = vector.broadcast %cst_59 : f32 to vector<2x16xf32>
    %272 = arith.addf %271, %270 : vector<2x16xf32>
    %273 = arith.divf %271, %272 : vector<2x16xf32>
    %274 = arith.mulf %265, %218 : vector<2x16xf32>
    %275 = arith.mulf %259, %267 : vector<2x16xf32>
    %276 = arith.addf %274, %275 : vector<2x16xf32>
    %277 = math.tanh %276 : vector<2x16xf32>
    %278 = arith.mulf %273, %277 : vector<2x16xf32>
    %279 = vector.extract_strided_slice %253 {offsets = [0, 0], sizes = [2, 16], strides = [1, 1]} : vector<2x64xf32> to vector<2x16xf32>
    %280 = arith.negf %279 : vector<2x16xf32>
    %281 = math.exp %280 : vector<2x16xf32>
    %cst_60 = arith.constant 1.000000e+00 : f32
    %282 = vector.broadcast %cst_60 : f32 to vector<2x16xf32>
    %283 = arith.addf %282, %281 : vector<2x16xf32>
    %284 = arith.divf %282, %283 : vector<2x16xf32>
    %285 = vector.extract_strided_slice %253 {offsets = [0, 16], sizes = [2, 16], strides = [1, 1]} : vector<2x64xf32> to vector<2x16xf32>
    %286 = arith.negf %285 : vector<2x16xf32>
    %287 = math.exp %286 : vector<2x16xf32>
    %cst_61 = arith.constant 1.000000e+00 : f32
    %288 = vector.broadcast %cst_61 : f32 to vector<2x16xf32>
    %289 = arith.addf %288, %287 : vector<2x16xf32>
    %290 = arith.divf %288, %289 : vector<2x16xf32>
    %291 = vector.extract_strided_slice %253 {offsets = [0, 32], sizes = [2, 16], strides = [1, 1]} : vector<2x64xf32> to vector<2x16xf32>
    %292 = math.tanh %291 : vector<2x16xf32>
    %293 = vector.extract_strided_slice %253 {offsets = [0, 48], sizes = [2, 16], strides = [1, 1]} : vector<2x64xf32> to vector<2x16xf32>
    %294 = arith.negf %293 : vector<2x16xf32>
    %295 = math.exp %294 : vector<2x16xf32>
    %cst_62 = arith.constant 1.000000e+00 : f32
    %296 = vector.broadcast %cst_62 : f32 to vector<2x16xf32>
    %297 = arith.addf %296, %295 : vector<2x16xf32>
    %298 = arith.divf %296, %297 : vector<2x16xf32>
    %299 = arith.mulf %290, %243 : vector<2x16xf32>
    %300 = arith.mulf %284, %292 : vector<2x16xf32>
    %301 = arith.addf %299, %300 : vector<2x16xf32>
    %302 = math.tanh %301 : vector<2x16xf32>
    %303 = arith.mulf %298, %302 : vector<2x16xf32>
    %304 = tpu.concatenate %278, %303 in 1 : vector<2x16xf32>, vector<2x16xf32> -> vector<2x32xf32>
    %cst_63 = arith.constant dense<0.000000e+00> : vector<2x128xf32>
    %305 = tpu.matmul %304, %9, %cst_63 {dimension_numbers = #tpu.dot_dimension_numbers<[1], [0], [0], [1], [0, 0, 1, 1], [], []>} : vector<2x32xf32>, vector<32x128xf32>, vector<2x128xf32> -> vector<2x128xf32>
    %c10_64 = arith.constant 10 : index
    %c0_65 = arith.constant 0 : index
    %306 = vector.load %arg14[%c10_64, %c0_65] : memref<16x128xf32, #tpu.memory_space<vmem>>, vector<2x64xf32>
    %307 = vector.extract_strided_slice %305 {offsets = [0, 0], sizes = [2, 64], strides = [1, 1]} : vector<2x128xf32> to vector<2x64xf32>
    %308 = arith.addf %306, %307 : vector<2x64xf32>
    %c4_66 = arith.constant 4 : index
    %c64_67 = arith.constant 64 : index
    %309 = vector.load %arg14[%c4_66, %c64_67] : memref<16x128xf32, #tpu.memory_space<vmem>>, vector<2x64xf32>
    %310 = vector.extract_strided_slice %305 {offsets = [0, 64], sizes = [2, 64], strides = [1, 1]} : vector<2x128xf32> to vector<2x64xf32>
    %311 = arith.addf %309, %310 : vector<2x64xf32>
    %312 = vector.extract_strided_slice %308 {offsets = [0, 0], sizes = [2, 16], strides = [1, 1]} : vector<2x64xf32> to vector<2x16xf32>
    %313 = arith.negf %312 : vector<2x16xf32>
    %314 = math.exp %313 : vector<2x16xf32>
    %cst_68 = arith.constant 1.000000e+00 : f32
    %315 = vector.broadcast %cst_68 : f32 to vector<2x16xf32>
    %316 = arith.addf %315, %314 : vector<2x16xf32>
    %317 = arith.divf %315, %316 : vector<2x16xf32>
    %318 = vector.extract_strided_slice %308 {offsets = [0, 16], sizes = [2, 16], strides = [1, 1]} : vector<2x64xf32> to vector<2x16xf32>
    %319 = arith.negf %318 : vector<2x16xf32>
    %320 = math.exp %319 : vector<2x16xf32>
    %cst_69 = arith.constant 1.000000e+00 : f32
    %321 = vector.broadcast %cst_69 : f32 to vector<2x16xf32>
    %322 = arith.addf %321, %320 : vector<2x16xf32>
    %323 = arith.divf %321, %322 : vector<2x16xf32>
    %324 = vector.extract_strided_slice %308 {offsets = [0, 32], sizes = [2, 16], strides = [1, 1]} : vector<2x64xf32> to vector<2x16xf32>
    %325 = math.tanh %324 : vector<2x16xf32>
    %326 = vector.extract_strided_slice %308 {offsets = [0, 48], sizes = [2, 16], strides = [1, 1]} : vector<2x64xf32> to vector<2x16xf32>
    %327 = arith.negf %326 : vector<2x16xf32>
    %328 = math.exp %327 : vector<2x16xf32>
    %cst_70 = arith.constant 1.000000e+00 : f32
    %329 = vector.broadcast %cst_70 : f32 to vector<2x16xf32>
    %330 = arith.addf %329, %328 : vector<2x16xf32>
    %331 = arith.divf %329, %330 : vector<2x16xf32>
    %332 = arith.mulf %323, %276 : vector<2x16xf32>
    %333 = arith.mulf %317, %325 : vector<2x16xf32>
    %334 = arith.addf %332, %333 : vector<2x16xf32>
    %335 = math.tanh %334 : vector<2x16xf32>
    %336 = arith.mulf %331, %335 : vector<2x16xf32>
    %337 = vector.extract_strided_slice %311 {offsets = [0, 0], sizes = [2, 16], strides = [1, 1]} : vector<2x64xf32> to vector<2x16xf32>
    %338 = arith.negf %337 : vector<2x16xf32>
    %339 = math.exp %338 : vector<2x16xf32>
    %cst_71 = arith.constant 1.000000e+00 : f32
    %340 = vector.broadcast %cst_71 : f32 to vector<2x16xf32>
    %341 = arith.addf %340, %339 : vector<2x16xf32>
    %342 = arith.divf %340, %341 : vector<2x16xf32>
    %343 = vector.extract_strided_slice %311 {offsets = [0, 16], sizes = [2, 16], strides = [1, 1]} : vector<2x64xf32> to vector<2x16xf32>
    %344 = arith.negf %343 : vector<2x16xf32>
    %345 = math.exp %344 : vector<2x16xf32>
    %cst_72 = arith.constant 1.000000e+00 : f32
    %346 = vector.broadcast %cst_72 : f32 to vector<2x16xf32>
    %347 = arith.addf %346, %345 : vector<2x16xf32>
    %348 = arith.divf %346, %347 : vector<2x16xf32>
    %349 = vector.extract_strided_slice %311 {offsets = [0, 32], sizes = [2, 16], strides = [1, 1]} : vector<2x64xf32> to vector<2x16xf32>
    %350 = math.tanh %349 : vector<2x16xf32>
    %351 = vector.extract_strided_slice %311 {offsets = [0, 48], sizes = [2, 16], strides = [1, 1]} : vector<2x64xf32> to vector<2x16xf32>
    %352 = arith.negf %351 : vector<2x16xf32>
    %353 = math.exp %352 : vector<2x16xf32>
    %cst_73 = arith.constant 1.000000e+00 : f32
    %354 = vector.broadcast %cst_73 : f32 to vector<2x16xf32>
    %355 = arith.addf %354, %353 : vector<2x16xf32>
    %356 = arith.divf %354, %355 : vector<2x16xf32>
    %357 = arith.mulf %348, %301 : vector<2x16xf32>
    %358 = arith.mulf %342, %350 : vector<2x16xf32>
    %359 = arith.addf %357, %358 : vector<2x16xf32>
    %360 = math.tanh %359 : vector<2x16xf32>
    %361 = arith.mulf %356, %360 : vector<2x16xf32>
    %362 = tpu.concatenate %336, %361 in 1 : vector<2x16xf32>, vector<2x16xf32> -> vector<2x32xf32>
    %cst_74 = arith.constant dense<0.000000e+00> : vector<2x128xf32>
    %363 = tpu.matmul %362, %9, %cst_74 {dimension_numbers = #tpu.dot_dimension_numbers<[1], [0], [0], [1], [0, 0, 1, 1], [], []>} : vector<2x32xf32>, vector<32x128xf32>, vector<2x128xf32> -> vector<2x128xf32>
    %c12_75 = arith.constant 12 : index
    %c0_76 = arith.constant 0 : index
    %364 = vector.load %arg14[%c12_75, %c0_76] : memref<16x128xf32, #tpu.memory_space<vmem>>, vector<2x64xf32>
    %365 = vector.extract_strided_slice %363 {offsets = [0, 0], sizes = [2, 64], strides = [1, 1]} : vector<2x128xf32> to vector<2x64xf32>
    %366 = arith.addf %364, %365 : vector<2x64xf32>
    %c2_77 = arith.constant 2 : index
    %c64_78 = arith.constant 64 : index
    %367 = vector.load %arg14[%c2_77, %c64_78] : memref<16x128xf32, #tpu.memory_space<vmem>>, vector<2x64xf32>
    %368 = vector.extract_strided_slice %363 {offsets = [0, 64], sizes = [2, 64], strides = [1, 1]} : vector<2x128xf32> to vector<2x64xf32>
    %369 = arith.addf %367, %368 : vector<2x64xf32>
    %370 = vector.extract_strided_slice %366 {offsets = [0, 0], sizes = [2, 16], strides = [1, 1]} : vector<2x64xf32> to vector<2x16xf32>
    %371 = arith.negf %370 : vector<2x16xf32>
    %372 = math.exp %371 : vector<2x16xf32>
    %cst_79 = arith.constant 1.000000e+00 : f32
    %373 = vector.broadcast %cst_79 : f32 to vector<2x16xf32>
    %374 = arith.addf %373, %372 : vector<2x16xf32>
    %375 = arith.divf %373, %374 : vector<2x16xf32>
    %376 = vector.extract_strided_slice %366 {offsets = [0, 16], sizes = [2, 16], strides = [1, 1]} : vector<2x64xf32> to vector<2x16xf32>
    %377 = arith.negf %376 : vector<2x16xf32>
    %378 = math.exp %377 : vector<2x16xf32>
    %cst_80 = arith.constant 1.000000e+00 : f32
    %379 = vector.broadcast %cst_80 : f32 to vector<2x16xf32>
    %380 = arith.addf %379, %378 : vector<2x16xf32>
    %381 = arith.divf %379, %380 : vector<2x16xf32>
    %382 = vector.extract_strided_slice %366 {offsets = [0, 32], sizes = [2, 16], strides = [1, 1]} : vector<2x64xf32> to vector<2x16xf32>
    %383 = math.tanh %382 : vector<2x16xf32>
    %384 = vector.extract_strided_slice %366 {offsets = [0, 48], sizes = [2, 16], strides = [1, 1]} : vector<2x64xf32> to vector<2x16xf32>
    %385 = arith.negf %384 : vector<2x16xf32>
    %386 = math.exp %385 : vector<2x16xf32>
    %cst_81 = arith.constant 1.000000e+00 : f32
    %387 = vector.broadcast %cst_81 : f32 to vector<2x16xf32>
    %388 = arith.addf %387, %386 : vector<2x16xf32>
    %389 = arith.divf %387, %388 : vector<2x16xf32>
    %390 = arith.mulf %381, %334 : vector<2x16xf32>
    %391 = arith.mulf %375, %383 : vector<2x16xf32>
    %392 = arith.addf %390, %391 : vector<2x16xf32>
    %393 = math.tanh %392 : vector<2x16xf32>
    %394 = arith.mulf %389, %393 : vector<2x16xf32>
    %395 = vector.extract_strided_slice %369 {offsets = [0, 0], sizes = [2, 16], strides = [1, 1]} : vector<2x64xf32> to vector<2x16xf32>
    %396 = arith.negf %395 : vector<2x16xf32>
    %397 = math.exp %396 : vector<2x16xf32>
    %cst_82 = arith.constant 1.000000e+00 : f32
    %398 = vector.broadcast %cst_82 : f32 to vector<2x16xf32>
    %399 = arith.addf %398, %397 : vector<2x16xf32>
    %400 = arith.divf %398, %399 : vector<2x16xf32>
    %401 = vector.extract_strided_slice %369 {offsets = [0, 16], sizes = [2, 16], strides = [1, 1]} : vector<2x64xf32> to vector<2x16xf32>
    %402 = arith.negf %401 : vector<2x16xf32>
    %403 = math.exp %402 : vector<2x16xf32>
    %cst_83 = arith.constant 1.000000e+00 : f32
    %404 = vector.broadcast %cst_83 : f32 to vector<2x16xf32>
    %405 = arith.addf %404, %403 : vector<2x16xf32>
    %406 = arith.divf %404, %405 : vector<2x16xf32>
    %407 = vector.extract_strided_slice %369 {offsets = [0, 32], sizes = [2, 16], strides = [1, 1]} : vector<2x64xf32> to vector<2x16xf32>
    %408 = math.tanh %407 : vector<2x16xf32>
    %409 = vector.extract_strided_slice %369 {offsets = [0, 48], sizes = [2, 16], strides = [1, 1]} : vector<2x64xf32> to vector<2x16xf32>
    %410 = arith.negf %409 : vector<2x16xf32>
    %411 = math.exp %410 : vector<2x16xf32>
    %cst_84 = arith.constant 1.000000e+00 : f32
    %412 = vector.broadcast %cst_84 : f32 to vector<2x16xf32>
    %413 = arith.addf %412, %411 : vector<2x16xf32>
    %414 = arith.divf %412, %413 : vector<2x16xf32>
    %415 = arith.mulf %406, %359 : vector<2x16xf32>
    %416 = arith.mulf %400, %408 : vector<2x16xf32>
    %417 = arith.addf %415, %416 : vector<2x16xf32>
    %418 = math.tanh %417 : vector<2x16xf32>
    %419 = arith.mulf %414, %418 : vector<2x16xf32>
    %420 = tpu.concatenate %394, %419 in 1 : vector<2x16xf32>, vector<2x16xf32> -> vector<2x32xf32>
    %cst_85 = arith.constant dense<0.000000e+00> : vector<2x128xf32>
    %421 = tpu.matmul %420, %9, %cst_85 {dimension_numbers = #tpu.dot_dimension_numbers<[1], [0], [0], [1], [0, 0, 1, 1], [], []>} : vector<2x32xf32>, vector<32x128xf32>, vector<2x128xf32> -> vector<2x128xf32>
    %c14_86 = arith.constant 14 : index
    %c0_87 = arith.constant 0 : index
    %422 = vector.load %arg14[%c14_86, %c0_87] : memref<16x128xf32, #tpu.memory_space<vmem>>, vector<2x64xf32>
    %423 = vector.extract_strided_slice %421 {offsets = [0, 0], sizes = [2, 64], strides = [1, 1]} : vector<2x128xf32> to vector<2x64xf32>
    %424 = arith.addf %422, %423 : vector<2x64xf32>
    %c0_88 = arith.constant 0 : index
    %c64_89 = arith.constant 64 : index
    %425 = vector.load %arg14[%c0_88, %c64_89] : memref<16x128xf32, #tpu.memory_space<vmem>>, vector<2x64xf32>
    %426 = vector.extract_strided_slice %421 {offsets = [0, 64], sizes = [2, 64], strides = [1, 1]} : vector<2x128xf32> to vector<2x64xf32>
    %427 = arith.addf %425, %426 : vector<2x64xf32>
    %428 = vector.extract_strided_slice %424 {offsets = [0, 0], sizes = [2, 16], strides = [1, 1]} : vector<2x64xf32> to vector<2x16xf32>
    %429 = arith.negf %428 : vector<2x16xf32>
    %430 = math.exp %429 : vector<2x16xf32>
    %cst_90 = arith.constant 1.000000e+00 : f32
    %431 = vector.broadcast %cst_90 : f32 to vector<2x16xf32>
    %432 = arith.addf %431, %430 : vector<2x16xf32>
    %433 = arith.divf %431, %432 : vector<2x16xf32>
    %434 = vector.extract_strided_slice %424 {offsets = [0, 16], sizes = [2, 16], strides = [1, 1]} : vector<2x64xf32> to vector<2x16xf32>
    %435 = arith.negf %434 : vector<2x16xf32>
    %436 = math.exp %435 : vector<2x16xf32>
    %cst_91 = arith.constant 1.000000e+00 : f32
    %437 = vector.broadcast %cst_91 : f32 to vector<2x16xf32>
    %438 = arith.addf %437, %436 : vector<2x16xf32>
    %439 = arith.divf %437, %438 : vector<2x16xf32>
    %440 = vector.extract_strided_slice %424 {offsets = [0, 32], sizes = [2, 16], strides = [1, 1]} : vector<2x64xf32> to vector<2x16xf32>
    %441 = math.tanh %440 : vector<2x16xf32>
    %442 = vector.extract_strided_slice %424 {offsets = [0, 48], sizes = [2, 16], strides = [1, 1]} : vector<2x64xf32> to vector<2x16xf32>
    %443 = arith.negf %442 : vector<2x16xf32>
    %444 = math.exp %443 : vector<2x16xf32>
    %cst_92 = arith.constant 1.000000e+00 : f32
    %445 = vector.broadcast %cst_92 : f32 to vector<2x16xf32>
    %446 = arith.addf %445, %444 : vector<2x16xf32>
    %447 = arith.divf %445, %446 : vector<2x16xf32>
    %448 = arith.mulf %439, %392 : vector<2x16xf32>
    %449 = arith.mulf %433, %441 : vector<2x16xf32>
    %450 = arith.addf %448, %449 : vector<2x16xf32>
    %451 = math.tanh %450 : vector<2x16xf32>
    %452 = arith.mulf %447, %451 : vector<2x16xf32>
    %453 = vector.extract_strided_slice %427 {offsets = [0, 0], sizes = [2, 16], strides = [1, 1]} : vector<2x64xf32> to vector<2x16xf32>
    %454 = arith.negf %453 : vector<2x16xf32>
    %455 = math.exp %454 : vector<2x16xf32>
    %cst_93 = arith.constant 1.000000e+00 : f32
    %456 = vector.broadcast %cst_93 : f32 to vector<2x16xf32>
    %457 = arith.addf %456, %455 : vector<2x16xf32>
    %458 = arith.divf %456, %457 : vector<2x16xf32>
    %459 = vector.extract_strided_slice %427 {offsets = [0, 16], sizes = [2, 16], strides = [1, 1]} : vector<2x64xf32> to vector<2x16xf32>
    %460 = arith.negf %459 : vector<2x16xf32>
    %461 = math.exp %460 : vector<2x16xf32>
    %cst_94 = arith.constant 1.000000e+00 : f32
    %462 = vector.broadcast %cst_94 : f32 to vector<2x16xf32>
    %463 = arith.addf %462, %461 : vector<2x16xf32>
    %464 = arith.divf %462, %463 : vector<2x16xf32>
    %465 = vector.extract_strided_slice %427 {offsets = [0, 32], sizes = [2, 16], strides = [1, 1]} : vector<2x64xf32> to vector<2x16xf32>
    %466 = math.tanh %465 : vector<2x16xf32>
    %467 = vector.extract_strided_slice %427 {offsets = [0, 48], sizes = [2, 16], strides = [1, 1]} : vector<2x64xf32> to vector<2x16xf32>
    %468 = arith.negf %467 : vector<2x16xf32>
    %469 = math.exp %468 : vector<2x16xf32>
    %cst_95 = arith.constant 1.000000e+00 : f32
    %470 = vector.broadcast %cst_95 : f32 to vector<2x16xf32>
    %471 = arith.addf %470, %469 : vector<2x16xf32>
    %472 = arith.divf %470, %471 : vector<2x16xf32>
    %473 = arith.mulf %464, %417 : vector<2x16xf32>
    %474 = arith.mulf %458, %466 : vector<2x16xf32>
    %475 = arith.addf %473, %474 : vector<2x16xf32>
    %476 = math.tanh %475 : vector<2x16xf32>
    %477 = arith.mulf %472, %476 : vector<2x16xf32>
    %478 = tpu.concatenate %46, %477 in 1 : vector<2x16xf32>, vector<2x16xf32> -> vector<2x32xf32>
    %479 = tpu.concatenate %104, %419 in 1 : vector<2x16xf32>, vector<2x16xf32> -> vector<2x32xf32>
    %480 = tpu.concatenate %162, %361 in 1 : vector<2x16xf32>, vector<2x16xf32> -> vector<2x32xf32>
    %481 = tpu.concatenate %220, %303 in 1 : vector<2x16xf32>, vector<2x16xf32> -> vector<2x32xf32>
    %482 = tpu.concatenate %278, %245 in 1 : vector<2x16xf32>, vector<2x16xf32> -> vector<2x32xf32>
    %483 = tpu.concatenate %336, %187 in 1 : vector<2x16xf32>, vector<2x16xf32> -> vector<2x32xf32>
    %484 = tpu.concatenate %394, %129 in 1 : vector<2x16xf32>, vector<2x16xf32> -> vector<2x32xf32>
    %485 = tpu.concatenate %452, %71 in 1 : vector<2x16xf32>, vector<2x16xf32> -> vector<2x32xf32>
    %c0_96 = arith.constant 0 : index
    %486 = memref.load %arg7[%c0_96] : memref<3xf32, #tpu.memory_space<smem>>
    %c1 = arith.constant 1 : index
    %487 = memref.load %arg7[%c1] : memref<3xf32, #tpu.memory_space<smem>>
    %c2_97 = arith.constant 2 : index
    %488 = memref.load %arg7[%c2_97] : memref<3xf32, #tpu.memory_space<smem>>
    %c0_98 = arith.constant 0 : index
    %c0_99 = arith.constant 0 : index
    %489 = vector.load %arg6[%c0_98, %c0_99] : memref<1x32xf32, #tpu.memory_space<vmem>>, vector<1x32xf32>
    %490 = vector.broadcast %489 : vector<1x32xf32> to vector<2x32xf32>
    %491 = arith.mulf %478, %490 : vector<2x32xf32>
    %cst_100 = arith.constant dense<0.000000e+00> : vector<2xf32>
    %492 = vector.multi_reduction <add>, %491, %cst_100 [1] : vector<2x32xf32> to vector<2xf32>
    %493 = vector.shape_cast %492 : vector<2xf32> to vector<2x1xf32>
    %494 = vector.broadcast %486 : f32 to vector<2x1xf32>
    %495 = arith.addf %493, %494 : vector<2x1xf32>
    %496 = arith.negf %495 : vector<2x1xf32>
    %497 = math.exp %496 : vector<2x1xf32>
    %cst_101 = arith.constant 1.000000e+00 : f32
    %498 = vector.broadcast %cst_101 : f32 to vector<2x1xf32>
    %499 = arith.addf %498, %497 : vector<2x1xf32>
    %500 = arith.divf %498, %499 : vector<2x1xf32>
    %501 = vector.broadcast %487 : f32 to vector<2x1xf32>
    %502 = arith.mulf %500, %501 : vector<2x1xf32>
    %503 = vector.broadcast %488 : f32 to vector<2x1xf32>
    %504 = arith.addf %502, %503 : vector<2x1xf32>
    %505 = vector.broadcast %489 : vector<1x32xf32> to vector<2x32xf32>
    %506 = arith.mulf %479, %505 : vector<2x32xf32>
    %cst_102 = arith.constant dense<0.000000e+00> : vector<2xf32>
    %507 = vector.multi_reduction <add>, %506, %cst_102 [1] : vector<2x32xf32> to vector<2xf32>
    %508 = vector.shape_cast %507 : vector<2xf32> to vector<2x1xf32>
    %509 = vector.broadcast %486 : f32 to vector<2x1xf32>
    %510 = arith.addf %508, %509 : vector<2x1xf32>
    %511 = arith.negf %510 : vector<2x1xf32>
    %512 = math.exp %511 : vector<2x1xf32>
    %cst_103 = arith.constant 1.000000e+00 : f32
    %513 = vector.broadcast %cst_103 : f32 to vector<2x1xf32>
    %514 = arith.addf %513, %512 : vector<2x1xf32>
    %515 = arith.divf %513, %514 : vector<2x1xf32>
    %516 = vector.broadcast %487 : f32 to vector<2x1xf32>
    %517 = arith.mulf %515, %516 : vector<2x1xf32>
    %518 = vector.broadcast %488 : f32 to vector<2x1xf32>
    %519 = arith.addf %517, %518 : vector<2x1xf32>
    %520 = vector.broadcast %489 : vector<1x32xf32> to vector<2x32xf32>
    %521 = arith.mulf %480, %520 : vector<2x32xf32>
    %cst_104 = arith.constant dense<0.000000e+00> : vector<2xf32>
    %522 = vector.multi_reduction <add>, %521, %cst_104 [1] : vector<2x32xf32> to vector<2xf32>
    %523 = vector.shape_cast %522 : vector<2xf32> to vector<2x1xf32>
    %524 = vector.broadcast %486 : f32 to vector<2x1xf32>
    %525 = arith.addf %523, %524 : vector<2x1xf32>
    %526 = arith.negf %525 : vector<2x1xf32>
    %527 = math.exp %526 : vector<2x1xf32>
    %cst_105 = arith.constant 1.000000e+00 : f32
    %528 = vector.broadcast %cst_105 : f32 to vector<2x1xf32>
    %529 = arith.addf %528, %527 : vector<2x1xf32>
    %530 = arith.divf %528, %529 : vector<2x1xf32>
    %531 = vector.broadcast %487 : f32 to vector<2x1xf32>
    %532 = arith.mulf %530, %531 : vector<2x1xf32>
    %533 = vector.broadcast %488 : f32 to vector<2x1xf32>
    %534 = arith.addf %532, %533 : vector<2x1xf32>
    %535 = vector.broadcast %489 : vector<1x32xf32> to vector<2x32xf32>
    %536 = arith.mulf %481, %535 : vector<2x32xf32>
    %cst_106 = arith.constant dense<0.000000e+00> : vector<2xf32>
    %537 = vector.multi_reduction <add>, %536, %cst_106 [1] : vector<2x32xf32> to vector<2xf32>
    %538 = vector.shape_cast %537 : vector<2xf32> to vector<2x1xf32>
    %539 = vector.broadcast %486 : f32 to vector<2x1xf32>
    %540 = arith.addf %538, %539 : vector<2x1xf32>
    %541 = arith.negf %540 : vector<2x1xf32>
    %542 = math.exp %541 : vector<2x1xf32>
    %cst_107 = arith.constant 1.000000e+00 : f32
    %543 = vector.broadcast %cst_107 : f32 to vector<2x1xf32>
    %544 = arith.addf %543, %542 : vector<2x1xf32>
    %545 = arith.divf %543, %544 : vector<2x1xf32>
    %546 = vector.broadcast %487 : f32 to vector<2x1xf32>
    %547 = arith.mulf %545, %546 : vector<2x1xf32>
    %548 = vector.broadcast %488 : f32 to vector<2x1xf32>
    %549 = arith.addf %547, %548 : vector<2x1xf32>
    %550 = vector.broadcast %489 : vector<1x32xf32> to vector<2x32xf32>
    %551 = arith.mulf %482, %550 : vector<2x32xf32>
    %cst_108 = arith.constant dense<0.000000e+00> : vector<2xf32>
    %552 = vector.multi_reduction <add>, %551, %cst_108 [1] : vector<2x32xf32> to vector<2xf32>
    %553 = vector.shape_cast %552 : vector<2xf32> to vector<2x1xf32>
    %554 = vector.broadcast %486 : f32 to vector<2x1xf32>
    %555 = arith.addf %553, %554 : vector<2x1xf32>
    %556 = arith.negf %555 : vector<2x1xf32>
    %557 = math.exp %556 : vector<2x1xf32>
    %cst_109 = arith.constant 1.000000e+00 : f32
    %558 = vector.broadcast %cst_109 : f32 to vector<2x1xf32>
    %559 = arith.addf %558, %557 : vector<2x1xf32>
    %560 = arith.divf %558, %559 : vector<2x1xf32>
    %561 = vector.broadcast %487 : f32 to vector<2x1xf32>
    %562 = arith.mulf %560, %561 : vector<2x1xf32>
    %563 = vector.broadcast %488 : f32 to vector<2x1xf32>
    %564 = arith.addf %562, %563 : vector<2x1xf32>
    %565 = vector.broadcast %489 : vector<1x32xf32> to vector<2x32xf32>
    %566 = arith.mulf %483, %565 : vector<2x32xf32>
    %cst_110 = arith.constant dense<0.000000e+00> : vector<2xf32>
    %567 = vector.multi_reduction <add>, %566, %cst_110 [1] : vector<2x32xf32> to vector<2xf32>
    %568 = vector.shape_cast %567 : vector<2xf32> to vector<2x1xf32>
    %569 = vector.broadcast %486 : f32 to vector<2x1xf32>
    %570 = arith.addf %568, %569 : vector<2x1xf32>
    %571 = arith.negf %570 : vector<2x1xf32>
    %572 = math.exp %571 : vector<2x1xf32>
    %cst_111 = arith.constant 1.000000e+00 : f32
    %573 = vector.broadcast %cst_111 : f32 to vector<2x1xf32>
    %574 = arith.addf %573, %572 : vector<2x1xf32>
    %575 = arith.divf %573, %574 : vector<2x1xf32>
    %576 = vector.broadcast %487 : f32 to vector<2x1xf32>
    %577 = arith.mulf %575, %576 : vector<2x1xf32>
    %578 = vector.broadcast %488 : f32 to vector<2x1xf32>
    %579 = arith.addf %577, %578 : vector<2x1xf32>
    %580 = vector.broadcast %489 : vector<1x32xf32> to vector<2x32xf32>
    %581 = arith.mulf %484, %580 : vector<2x32xf32>
    %cst_112 = arith.constant dense<0.000000e+00> : vector<2xf32>
    %582 = vector.multi_reduction <add>, %581, %cst_112 [1] : vector<2x32xf32> to vector<2xf32>
    %583 = vector.shape_cast %582 : vector<2xf32> to vector<2x1xf32>
    %584 = vector.broadcast %486 : f32 to vector<2x1xf32>
    %585 = arith.addf %583, %584 : vector<2x1xf32>
    %586 = arith.negf %585 : vector<2x1xf32>
    %587 = math.exp %586 : vector<2x1xf32>
    %cst_113 = arith.constant 1.000000e+00 : f32
    %588 = vector.broadcast %cst_113 : f32 to vector<2x1xf32>
    %589 = arith.addf %588, %587 : vector<2x1xf32>
    %590 = arith.divf %588, %589 : vector<2x1xf32>
    %591 = vector.broadcast %487 : f32 to vector<2x1xf32>
    %592 = arith.mulf %590, %591 : vector<2x1xf32>
    %593 = vector.broadcast %488 : f32 to vector<2x1xf32>
    %594 = arith.addf %592, %593 : vector<2x1xf32>
    %595 = vector.broadcast %489 : vector<1x32xf32> to vector<2x32xf32>
    %596 = arith.mulf %485, %595 : vector<2x32xf32>
    %cst_114 = arith.constant dense<0.000000e+00> : vector<2xf32>
    %597 = vector.multi_reduction <add>, %596, %cst_114 [1] : vector<2x32xf32> to vector<2xf32>
    %598 = vector.shape_cast %597 : vector<2xf32> to vector<2x1xf32>
    %599 = vector.broadcast %486 : f32 to vector<2x1xf32>
    %600 = arith.addf %598, %599 : vector<2x1xf32>
    %601 = arith.negf %600 : vector<2x1xf32>
    %602 = math.exp %601 : vector<2x1xf32>
    %cst_115 = arith.constant 1.000000e+00 : f32
    %603 = vector.broadcast %cst_115 : f32 to vector<2x1xf32>
    %604 = arith.addf %603, %602 : vector<2x1xf32>
    %605 = arith.divf %603, %604 : vector<2x1xf32>
    %606 = vector.broadcast %487 : f32 to vector<2x1xf32>
    %607 = arith.mulf %605, %606 : vector<2x1xf32>
    %608 = vector.broadcast %488 : f32 to vector<2x1xf32>
    %609 = arith.addf %607, %608 : vector<2x1xf32>
    %610 = arith.maximumf %504, %519 : vector<2x1xf32>
    %611 = arith.maximumf %610, %534 : vector<2x1xf32>
    %612 = arith.maximumf %611, %549 : vector<2x1xf32>
    %613 = arith.maximumf %612, %564 : vector<2x1xf32>
    %614 = arith.maximumf %613, %579 : vector<2x1xf32>
    %615 = arith.maximumf %614, %594 : vector<2x1xf32>
    %616 = arith.maximumf %615, %609 : vector<2x1xf32>
    %617 = arith.subf %504, %616 : vector<2x1xf32>
    %618 = math.exp %617 : vector<2x1xf32>
    %619 = arith.subf %519, %616 : vector<2x1xf32>
    %620 = math.exp %619 : vector<2x1xf32>
    %621 = arith.subf %534, %616 : vector<2x1xf32>
    %622 = math.exp %621 : vector<2x1xf32>
    %623 = arith.subf %549, %616 : vector<2x1xf32>
    %624 = math.exp %623 : vector<2x1xf32>
    %625 = arith.subf %564, %616 : vector<2x1xf32>
    %626 = math.exp %625 : vector<2x1xf32>
    %627 = arith.subf %579, %616 : vector<2x1xf32>
    %628 = math.exp %627 : vector<2x1xf32>
    %629 = arith.subf %594, %616 : vector<2x1xf32>
    %630 = math.exp %629 : vector<2x1xf32>
    %631 = arith.subf %609, %616 : vector<2x1xf32>
    %632 = math.exp %631 : vector<2x1xf32>
    %633 = arith.addf %618, %620 : vector<2x1xf32>
    %634 = arith.addf %633, %622 : vector<2x1xf32>
    %635 = arith.addf %634, %624 : vector<2x1xf32>
    %636 = arith.addf %635, %626 : vector<2x1xf32>
    %637 = arith.addf %636, %628 : vector<2x1xf32>
    %638 = arith.addf %637, %630 : vector<2x1xf32>
    %639 = arith.addf %638, %632 : vector<2x1xf32>
    %cst_116 = arith.constant 1.000000e+00 : f32
    %640 = vector.broadcast %cst_116 : f32 to vector<2x1xf32>
    %641 = arith.divf %640, %639 : vector<2x1xf32>
    %642 = arith.mulf %618, %641 : vector<2x1xf32>
    %643 = vector.broadcast %642 : vector<2x1xf32> to vector<2x32xf32>
    %644 = arith.mulf %643, %478 : vector<2x32xf32>
    %645 = arith.mulf %620, %641 : vector<2x1xf32>
    %646 = vector.broadcast %645 : vector<2x1xf32> to vector<2x32xf32>
    %647 = arith.mulf %646, %479 : vector<2x32xf32>
    %648 = arith.addf %644, %647 : vector<2x32xf32>
    %649 = arith.mulf %622, %641 : vector<2x1xf32>
    %650 = vector.broadcast %649 : vector<2x1xf32> to vector<2x32xf32>
    %651 = arith.mulf %650, %480 : vector<2x32xf32>
    %652 = arith.addf %648, %651 : vector<2x32xf32>
    %653 = arith.mulf %624, %641 : vector<2x1xf32>
    %654 = vector.broadcast %653 : vector<2x1xf32> to vector<2x32xf32>
    %655 = arith.mulf %654, %481 : vector<2x32xf32>
    %656 = arith.addf %652, %655 : vector<2x32xf32>
    %657 = arith.mulf %626, %641 : vector<2x1xf32>
    %658 = vector.broadcast %657 : vector<2x1xf32> to vector<2x32xf32>
    %659 = arith.mulf %658, %482 : vector<2x32xf32>
    %660 = arith.addf %656, %659 : vector<2x32xf32>
    %661 = arith.mulf %628, %641 : vector<2x1xf32>
    %662 = vector.broadcast %661 : vector<2x1xf32> to vector<2x32xf32>
    %663 = arith.mulf %662, %483 : vector<2x32xf32>
    %664 = arith.addf %660, %663 : vector<2x32xf32>
    %665 = arith.mulf %630, %641 : vector<2x1xf32>
    %666 = vector.broadcast %665 : vector<2x1xf32> to vector<2x32xf32>
    %667 = arith.mulf %666, %484 : vector<2x32xf32>
    %668 = arith.addf %664, %667 : vector<2x32xf32>
    %669 = arith.mulf %632, %641 : vector<2x1xf32>
    %670 = vector.broadcast %669 : vector<2x1xf32> to vector<2x32xf32>
    %671 = arith.mulf %670, %485 : vector<2x32xf32>
    %672 = arith.addf %668, %671 : vector<2x32xf32>
    %c0_117 = arith.constant 0 : index
    %c0_118 = arith.constant 0 : index
    %673 = vector.load %arg12[%c0_117, %c0_118] : memref<2x32xf32, #tpu.memory_space<vmem>>, vector<2x32xf32>
    tpu.vector_store %arg12[%c0_117, %c0_118], %672 {strides = array<i32>} : memref<2x32xf32, #tpu.memory_space<vmem>>, vector<2x32xf32>,
    %c0_119 = arith.constant 0 : index
    %c0_120 = arith.constant 0 : index
    %674 = vector.load %arg8[%c0_119, %c0_120] : memref<32x32xf32, #tpu.memory_space<vmem>>, vector<32x32xf32>
    %cst_121 = arith.constant dense<0.000000e+00> : vector<2x32xf32>
    %675 = tpu.matmul %672, %674, %cst_121 {dimension_numbers = #tpu.dot_dimension_numbers<[1], [0], [0], [1], [0, 0, 1, 1], [], []>} : vector<2x32xf32>, vector<32x32xf32>, vector<2x32xf32> -> vector<2x32xf32>
    %c0_122 = arith.constant 0 : index
    %c0_123 = arith.constant 0 : index
    %676 = vector.load %arg9[%c0_122, %c0_123] : memref<1x32xf32, #tpu.memory_space<vmem>>, vector<1x32xf32>
    %677 = vector.broadcast %676 : vector<1x32xf32> to vector<2x32xf32>
    %678 = arith.addf %675, %677 : vector<2x32xf32>
    %cst_124 = arith.constant 0.000000e+00 : f32
    %679 = vector.broadcast %cst_124 : f32 to vector<2x32xf32>
    %680 = arith.cmpf ogt, %678, %679 : vector<2x32xf32>
    %cst_125 = arith.constant 0.00999999977 : f32
    %681 = vector.broadcast %cst_125 : f32 to vector<2x32xf32>
    %682 = arith.mulf %681, %678 : vector<2x32xf32>
    %683 = arith.select %680, %678, %682 : vector<2x32xi1>, vector<2x32xf32>
    %c0_126 = arith.constant 0 : index
    %c0_127 = arith.constant 0 : index
    %684 = vector.load %arg10[%c0_126, %c0_127] : memref<32x4xf32, #tpu.memory_space<vmem>>, vector<32x4xf32>
    %cst_128 = arith.constant dense<0.000000e+00> : vector<2x4xf32>
    %685 = tpu.matmul %683, %684, %cst_128 {dimension_numbers = #tpu.dot_dimension_numbers<[1], [0], [0], [1], [0, 0, 1, 1], [], []>} : vector<2x32xf32>, vector<32x4xf32>, vector<2x4xf32> -> vector<2x4xf32>
    %c0_129 = arith.constant 0 : index
    %c0_130 = arith.constant 0 : index
    %686 = vector.load %arg11[%c0_129, %c0_130] : memref<1x4xf32, #tpu.memory_space<vmem>>, vector<1x4xf32>
    %687 = vector.broadcast %686 : vector<1x4xf32> to vector<2x4xf32>
    %688 = arith.addf %685, %687 : vector<2x4xf32>
    %cst_131 = arith.constant dense<0xFF800000> : vector<2xf32>
    %689 = vector.multi_reduction <maximumf>, %688, %cst_131 [1] : vector<2x4xf32> to vector<2xf32>
    %690 = vector.shape_cast %689 : vector<2xf32> to vector<2x1xf32>
    %691 = vector.broadcast %690 : vector<2x1xf32> to vector<2x4xf32>
    %692 = arith.subf %688, %691 : vector<2x4xf32>
    %693 = math.exp %692 : vector<2x4xf32>
    %cst_132 = arith.constant dense<0.000000e+00> : vector<2xf32>
    %694 = vector.multi_reduction <add>, %693, %cst_132 [1] : vector<2x4xf32> to vector<2xf32>
    %695 = vector.shape_cast %694 : vector<2xf32> to vector<2x1xf32>
    %696 = vector.broadcast %695 : vector<2x1xf32> to vector<2x4xf32>
    %697 = arith.divf %693, %696 : vector<2x4xf32>
    %c0_133 = arith.constant 0 : index
    %c0_134 = arith.constant 0 : index
    %698 = vector.load %arg13[%c0_133, %c0_134] : memref<2x4xf32, #tpu.memory_space<vmem>>, vector<2x4xf32>
    tpu.vector_store %arg13[%c0_133, %c0_134], %697 {strides = array<i32>} : memref<2x4xf32, #tpu.memory_space<vmem>>, vector<2x4xf32>,
    return
  }
  func.func @transform_0(%arg0: i32) -> (i32, i32) {
    %c0_i32 = arith.constant 0 : i32
    %c0_i32_0 = arith.constant 0 : i32
    %c0_i32_1 = arith.constant 0 : i32
    return %c0_i32, %c0_i32_0 : i32, i32
  }
  func.func @transform_1(%arg0: i32) -> (i32, i32) {
    %c0_i32 = arith.constant 0 : i32
    %c0_i32_0 = arith.constant 0 : i32
    %c0_i32_1 = arith.constant 0 : i32
    return %c0_i32, %c0_i32_0 : i32, i32
  }
  func.func @transform_2(%arg0: i32) -> (i32, i32) {
    %c0_i32 = arith.constant 0 : i32
    %c0_i32_0 = arith.constant 0 : i32
    %c0_i32_1 = arith.constant 0 : i32
    return %c0_i32, %c0_i32_0 : i32, i32
  }
  func.func @transform_3(%arg0: i32) -> (i32, i32) {
    %c0_i32 = arith.constant 0 : i32
    %c0_i32_0 = arith.constant 0 : i32
    %c0_i32_1 = arith.constant 0 : i32
    return %c0_i32, %c0_i32_0 : i32, i32
  }
  func.func @transform_4(%arg0: i32) -> (i32, i32) {
    %c0_i32 = arith.constant 0 : i32
    %c0_i32_0 = arith.constant 0 : i32
    %c0_i32_1 = arith.constant 0 : i32
    return %c0_i32, %c0_i32_0 : i32, i32
  }
  func.func @transform_5(%arg0: i32) -> (i32, i32) {
    %c0_i32 = arith.constant 0 : i32
    %c0_i32_0 = arith.constant 0 : i32
    %c0_i32_1 = arith.constant 0 : i32
    return %c0_i32, %c0_i32_0 : i32, i32
  }
  func.func @transform_6(%arg0: i32) -> i32 {
    %c0_i32 = arith.constant 0 : i32
    %c0_i32_0 = arith.constant 0 : i32
    return %c0_i32 : i32
  }
  func.func @transform_7(%arg0: i32) -> (i32, i32) {
    %c0_i32 = arith.constant 0 : i32
    %c0_i32_0 = arith.constant 0 : i32
    %c0_i32_1 = arith.constant 0 : i32
    return %c0_i32, %c0_i32_0 : i32, i32
  }
  func.func @transform_8(%arg0: i32) -> (i32, i32) {
    %c0_i32 = arith.constant 0 : i32
    %c0_i32_0 = arith.constant 0 : i32
    %c0_i32_1 = arith.constant 0 : i32
    return %c0_i32, %c0_i32_0 : i32, i32
  }
  func.func @transform_9(%arg0: i32) -> (i32, i32) {
    %c0_i32 = arith.constant 0 : i32
    %c0_i32_0 = arith.constant 0 : i32
    %c0_i32_1 = arith.constant 0 : i32
    return %c0_i32, %c0_i32_0 : i32, i32
  }
  func.func @transform_10(%arg0: i32) -> (i32, i32) {
    %c0_i32 = arith.constant 0 : i32
    %c0_i32_0 = arith.constant 0 : i32
    %c0_i32_1 = arith.constant 0 : i32
    return %c0_i32, %c0_i32_0 : i32, i32
  }
  func.func @transform_11(%arg0: i32) -> (i32, i32) {
    %c0_i32 = arith.constant 0 : i32
    %c0_i32_0 = arith.constant 0 : i32
    %c0_i32_1 = arith.constant 0 : i32
    return %c0_i32, %c0_i32_0 : i32, i32
  }
  func.func @transform_12(%arg0: i32) -> (i32, i32) {
    %c0_i32 = arith.constant 0 : i32
    %c0_i32_0 = arith.constant 0 : i32
    %c0_i32_1 = arith.constant 0 : i32
    return %c0_i32, %c0_i32_0 : i32, i32
  }
}

</mosaic_0001>

<llo_original>
// kernel: arcnn_forward.3
$region0: #{arcnn_forward.3}
  #allocation0 [shape = 'u32[]', space=smem, size = 0x4, offset = 0x4, fixed_abs, tag = 'smem constant byte address 0x4 - core index']
  #allocation1 [shape = 'u32[144,128]{1,0:T(1,128)}', space=vmem, size = 0x12000, scoped, tag = 'internal scratch']
  #allocation2 [shape = 'f32[16,128]{1,0:T(8,128)}', space=vmem, size = 0x2000, scoped, tag = 'scratch operand']
  %s0 = inlined_call_operand.vmem [shape: f32[16,32], index: 0, kind: input, shape index: {}]
  %s1 = inlined_call_operand.vmem [shape: f32[16,16], index: 1, kind: input, shape index: {}]
  %s2 = inlined_call_operand.vmem [shape: f32[32,128], index: 2, kind: input, shape index: {}]
  %s3 = inlined_call_operand.vmem [shape: f32[1,128], index: 3, kind: input, shape index: {}]
  %s4 = inlined_call_operand.vmem [shape: f32[32,128], index: 4, kind: input, shape index: {}]
  %s5 = inlined_call_operand.vmem [shape: f32[1,32], index: 5, kind: input, shape index: {}]
  %s6 = inlined_call_operand.vmem [shape: f32[3], index: 6, kind: input, shape index: {}]
  %s7 = inlined_call_operand.vmem [shape: f32[32,32], index: 7, kind: input, shape index: {}]
  %s8 = inlined_call_operand.vmem [shape: f32[1,32], index: 8, kind: input, shape index: {}]
  %s9 = inlined_call_operand.vmem [shape: f32[32,4], index: 9, kind: input, shape index: {}]
  %s10 = inlined_call_operand.vmem [shape: f32[1,4], index: 10, kind: input, shape index: {}]
  %s11 = inlined_call_operand.hbm [shape: f32[2,32], index: 11, kind: output, shape index: {0}]
  %s12 = inlined_call_operand.hbm [shape: f32[2,4], index: 12, kind: output, shape index: {1}]
  %13 = xla_tuple %s11, %s12
  %s14 = sld [smem:[#allocation0]]
  $region66: #{arcnn_forward.3} parent=0
    _
  %s16 = ssub.s32 1, %s14
  %s17 = scalar_select 0, %s16, %s14
  $region1: #{arcnn_forward.3} parent=0
    #allocation3 [shape = 'u8[512]{0}', space=smem, size = 0x200, scoped, tag = 'input window, operand 6, single buffered']
    #allocation4 [shape = 's32[1]{0}', space=sflag, size = 0x4, scoped, tag = 'scoped memory for arcnn_forward.3']
    #allocation5 [shape = 's32[1]{0}', space=sflag, size = 0x4, scoped, tag = 'scoped memory for arcnn_forward.3']
    #allocation6 [shape = 'u8[1024]{0}', space=vmem, size = 0x400, scoped, tag = 'output window, operand 0, single buffered']
    #allocation7 [shape = 'u8[1024]{0}', space=vmem, size = 0x400, scoped, tag = 'output window, operand 1, single buffered']
    #allocation8 [shape = 's32[1]{0}', space=sflag, size = 0x4, scoped, tag = 'scoped memory for arcnn_forward.3']
    %18 = vsyncpa [#allocation5], 0
    %19 = vsyncpa [#allocation4], 0
    %20 = vsyncpa [#allocation8], 0
    // Predicated region
    $region2: #{arcnn_forward.3} parent=1 // pred_check
      _
    $region3: #{arcnn_forward.3} parent=1 // pred_check_branch
      %22 = sbr.rel (0) target = $region5
    $region4: #{arcnn_forward.3} parent=1 // pred_region
      _
    $region5: #{arcnn_forward.3} parent=1 // pred_fallthru
      _
    // Predicated region
    $region6: #{arcnn_forward.3} parent=1 // pred_check
      _
    $region7: #{arcnn_forward.3} parent=1 // pred_check_branch
      %24 = sbr.rel (0) target = $region9
    $region8: #{arcnn_forward.3} parent=1 // pred_region
      _
    $region9: #{arcnn_forward.3} parent=1 // pred_fallthru
      _
    // Predicated region
    $region10: #{arcnn_forward.3} parent=1 // pred_check
      _
    $region11: #{arcnn_forward.3} parent=1 // pred_check_branch
      %26 = sbr.rel (0) target = $region13
    $region12: #{arcnn_forward.3} parent=1 // pred_region
      _
    $region13: #{arcnn_forward.3} parent=1 // pred_fallthru
      _
    // Predicated region
    $region14: #{arcnn_forward.3} parent=1 // pred_check
      _
    $region15: #{arcnn_forward.3} parent=1 // pred_check_branch
      %28 = sbr.rel (0) target = $region17
    $region16: #{arcnn_forward.3} parent=1 // pred_region
      _
    $region17: #{arcnn_forward.3} parent=1 // pred_fallthru
      _
    // Predicated region
    $region18: #{arcnn_forward.3} parent=1 // pred_check
      _
    $region19: #{arcnn_forward.3} parent=1 // pred_check_branch
      %30 = sbr.rel (0) target = $region21
    $region20: #{arcnn_forward.3} parent=1 // pred_region
      _
    $region21: #{arcnn_forward.3} parent=1 // pred_fallthru
      _
    // Predicated region
    $region22: #{arcnn_forward.3} parent=1 // pred_check
      _
    $region23: #{arcnn_forward.3} parent=1 // pred_check_branch
      %32 = sbr.rel (0) target = $region25
    $region24: #{arcnn_forward.3} parent=1 // pred_region
      _
    $region25: #{arcnn_forward.3} parent=1 // pred_fallthru
      _
    // Predicated region
    $region26: #{arcnn_forward.3} parent=1 // pred_check
      _
    $region27: #{arcnn_forward.3} parent=1 // pred_check_branch
      %34 = sbr.rel (0) target = $region29
    $region28: #{arcnn_forward.3} parent=1 // pred_region
      %s36 = ssub.s32 16, 16
      %37 = vsyncadd [#allocation5], %s36
      %s39 = sshll.u32 %s6, 4
      %s40 = int_to_ptr.vmem [resolvable:$true] %s39
      %42 = dma.vmem_to_smem %s40, 16, [#allocation3], [#allocation5]
    $region29: #{arcnn_forward.3} parent=1 // pred_fallthru
      _
    // Predicated region
    $region30: #{arcnn_forward.3} parent=1 // pred_check
      _
    $region31: #{arcnn_forward.3} parent=1 // pred_check_branch
      %44 = sbr.rel (0) target = $region33
    $region32: #{arcnn_forward.3} parent=1 // pred_region
      _
    $region33: #{arcnn_forward.3} parent=1 // pred_fallthru
      _
    // Predicated region
    $region34: #{arcnn_forward.3} parent=1 // pred_check
      _
    $region35: #{arcnn_forward.3} parent=1 // pred_check_branch
      %46 = sbr.rel (0) target = $region37
    $region36: #{arcnn_forward.3} parent=1 // pred_region
      _
    $region37: #{arcnn_forward.3} parent=1 // pred_fallthru
      _
    // Predicated region
    $region38: #{arcnn_forward.3} parent=1 // pred_check
      _
    $region39: #{arcnn_forward.3} parent=1 // pred_check_branch
      %48 = sbr.rel (0) target = $region41
    $region40: #{arcnn_forward.3} parent=1 // pred_region
      _
    $region41: #{arcnn_forward.3} parent=1 // pred_fallthru
      _
    // Predicated region
    $region42: #{arcnn_forward.3} parent=1 // pred_check
      _
    $region43: #{arcnn_forward.3} parent=1 // pred_check_branch
      %50 = sbr.rel (0) target = $region45
    $region44: #{arcnn_forward.3} parent=1 // pred_region
      _
    $region45: #{arcnn_forward.3} parent=1 // pred_fallthru
      _
    // Predicated region
    $region46: #{arcnn_forward.3} parent=1 // pred_check
      _
    $region47: #{arcnn_forward.3} parent=1 // pred_check_branch
      %52 = sbr.rel (0) target = $region49
    $region48: #{arcnn_forward.3} parent=1 // pred_region
      %53 = dma.done [#allocation5], 16
    $region49: #{arcnn_forward.3} parent=1 // pred_fallthru
      _
    %54 = sfence
    %v55 = vld [vmem:[%s1] sm:$0xff]
    %v56 = vld [vmem:[%s1 + $0x8] sm:$0xff]
    %v57 = vld [vmem:[%s0] sm:$0xff]
    %v58 = vld [vmem:[%s0 + $0x8] sm:$0xff]
    %vm59 = vcmask 130048
    %v61 = vsel %vm59, %v55, 0
    %v64 = vsel %vm59, %v56, 0
    %66 = vmatprep.subr.mxu0 0.0
    %67 = vmatpush1.msra.mxu0 %v57
    %68 = vmatprep.subr.mxu0 0.0
    %69 = vmatpush1.msra.mxu0 %v58
    %70 = vmatprep.subr.mxu0 0.0
    %71 = vmatpush1.msra.mxu0 0.0
    %72 = vmatprep.subr.mxu0 0.0
    %73 = vmatpush1.msra.mxu0 0.0
    %74 = vmatprep.subr.mxu0 0.0
    %75 = vmatpush1.msra.mxu0 0.0
    %76 = vmatprep.subr.mxu0 0.0
    %77 = vmatpush1.msra.mxu0 0.0
    %78 = vmatprep.subr.mxu0 0.0
    %79 = vmatpush1.msra.mxu0 0.0
    %80 = vmatprep.subr.mxu0 0.0
    %81 = vmatpush1.msra.mxu0 0.0
    %82 = vmatprep.subr.mxu0 0.0
    %83 = vmatpush1.msra.mxu0 0.0
    %84 = vmatprep.subr.mxu0 0.0
    %85 = vmatpush1.msra.mxu0 0.0
    %86 = vmatprep.subr.mxu0 0.0
    %87 = vmatpush1.msra.mxu0 0.0
    %88 = vmatprep.subr.mxu0 0.0
    %89 = vmatpush1.msra.mxu0 0.0
    %90 = vmatprep.subr.mxu0 0.0
    %91 = vmatpush1.msra.mxu0 0.0
    %92 = vmatprep.subr.mxu0 0.0
    %93 = vmatpush1.msra.mxu0 0.0
    %94 = vmatprep.subr.mxu0 0.0
    %95 = vmatpush1.msra.mxu0 0.0
    %96 = vmatprep.subr.mxu0 0.0
    %97 = vmatpush1.msra.mxu0 0.0
    %98 = vmatprep.subr.mxu0 0.0
    %99 = vmatpush1.msra.mxu0 0.0
    %100 = vmatprep.subr.mxu0 0.0
    %101 = vmatpush1.msra.mxu0 0.0
    %102 = vmatprep.subr.mxu0 0.0
    %103 = vmatpush1.msra.mxu0 0.0
    %104 = vmatprep.subr.mxu0 0.0
    %105 = vmatpush1.msra.mxu0 0.0
    %106 = vmatprep.subr.mxu0 0.0
    %107 = vmatpush1.msra.mxu0 0.0
    %108 = vmatprep.subr.mxu0 0.0
    %109 = vmatpush1.msra.mxu0 0.0
    %110 = vmatprep.subr.mxu0 0.0
    %111 = vmatpush1.msra.mxu0 0.0
    %112 = vmatprep.subr.mxu0 0.0
    %113 = vmatpush1.msra.mxu0 0.0
    %114 = vmatprep.subr.mxu0 0.0
    %115 = vmatpush1.msra.mxu0 0.0
    %116 = vmatprep.subr.mxu0 0.0
    %117 = vmatpush1.msra.mxu0 0.0
    %118 = vmatprep.subr.mxu0 0.0
    %119 = vmatpush1.msra.mxu0 0.0
    %120 = vmatprep.subr.mxu0 0.0
    %121 = vmatpush1.msra.mxu0 0.0
    %122 = vmatprep.subr.mxu0 0.0
    %123 = vmatpush1.msra.mxu0 0.0
    %124 = vmatprep.subr.mxu0 0.0
    %125 = vmatpush1.msra.mxu0 0.0
    %126 = vmatprep.subr.mxu0 0.0
    %127 = vmatpush1.msra.mxu0 0.0
    %128 = vmatprep.subr.mxu0 0.0
    %129 = vmatpush1.msra.mxu0 0.0
    %130 = vmatprep.mubr.f32.mxu0 0.0
    %131 = vmatmul.mubr.f32.gmra.mrb[0].mxu0 %v61
    %v132 = vpop.f32.mrb[0].mxu0
    %v133 = vadd.f32 0.0, %v132
    %v134 = vpop.f32.mrb[0].mxu0
    %135 = vmatprep.mubr.f32.mxu0 0.0
    %136 = vmatmul.mubr.f32.gmra.mrb[0].mxu0 %v64
    %v137 = vpop.f32.mrb[0].mxu0
    %v138 = vadd.f32 0.0, %v137
    %v139 = vpop.f32.mrb[0].mxu0
    %140 = vdwg.mxu0
    %v141 = vld [vmem:[%s2] sm:$0xff]
    %v142 = vld [vmem:[%s2 + $0x8] sm:$0xff]
    %v143 = vld [vmem:[%s2 + $0x10] sm:$0xff]
    %v144 = vld [vmem:[%s2 + $0x18] sm:$0xff]
    %v145 = vld [vmem:[%s3] sm:$0x1]
    %v147 = vlaneseq
    %v148 = vshrl.u32 %v147, 7
    %v149 = vsub.s32 0, %v148
    %v150 = vrot.slane %v145, %v149
    %vm152 = vcmask 261120
    %v154 = vsel %vm152, %v133, 0
    %v157 = vsel %vm152, %v138, 0
    %159 = vmatprep.subr.mxu0 0.0
    %160 = vmatpush1.msra.mxu0 %v141
    %161 = vmatprep.subr.mxu0 0.0
    %162 = vmatpush1.msra.mxu0 %v142
    %163 = vmatprep.subr.mxu0 0.0
    %164 = vmatpush1.msra.mxu0 %v143
    %165 = vmatprep.subr.mxu0 0.0
    %166 = vmatpush1.msra.mxu0 %v144
    %167 = vmatprep.subr.mxu0 0.0
    %168 = vmatpush1.msra.mxu0 0.0
    %169 = vmatprep.subr.mxu0 0.0
    %170 = vmatpush1.msra.mxu0 0.0
    %171 = vmatprep.subr.mxu0 0.0
    %172 = vmatpush1.msra.mxu0 0.0
    %173 = vmatprep.subr.mxu0 0.0
    %174 = vmatpush1.msra.mxu0 0.0
    %175 = vmatprep.subr.mxu0 0.0
    %176 = vmatpush1.msra.mxu0 0.0
    %177 = vmatprep.subr.mxu0 0.0
    %178 = vmatpush1.msra.mxu0 0.0
    %179 = vmatprep.subr.mxu0 0.0
    %180 = vmatpush1.msra.mxu0 0.0
    %181 = vmatprep.subr.mxu0 0.0
    %182 = vmatpush1.msra.mxu0 0.0
    %183 = vmatprep.subr.mxu0 0.0
    %184 = vmatpush1.msra.mxu0 0.0
    %185 = vmatprep.subr.mxu0 0.0
    %186 = vmatpush1.msra.mxu0 0.0
    %187 = vmatprep.subr.mxu0 0.0
    %188 = vmatpush1.msra.mxu0 0.0
    %189 = vmatprep.subr.mxu0 0.0
    %190 = vmatpush1.msra.mxu0 0.0
    %191 = vmatprep.subr.mxu0 0.0
    %192 = vmatpush1.msra.mxu0 0.0
    %193 = vmatprep.subr.mxu0 0.0
    %194 = vmatpush1.msra.mxu0 0.0
    %195 = vmatprep.subr.mxu0 0.0
    %196 = vmatpush1.msra.mxu0 0.0
    %197 = vmatprep.subr.mxu0 0.0
    %198 = vmatpush1.msra.mxu0 0.0
    %199 = vmatprep.subr.mxu0 0.0
    %200 = vmatpush1.msra.mxu0 0.0
    %201 = vmatprep.subr.mxu0 0.0
    %202 = vmatpush1.msra.mxu0 0.0
    %203 = vmatprep.subr.mxu0 0.0
    %204 = vmatpush1.msra.mxu0 0.0
    %205 = vmatprep.subr.mxu0 0.0
    %206 = vmatpush1.msra.mxu0 0.0
    %207 = vmatprep.subr.mxu0 0.0
    %208 = vmatpush1.msra.mxu0 0.0
    %209 = vmatprep.subr.mxu0 0.0
    %210 = vmatpush1.msra.mxu0 0.0
    %211 = vmatprep.subr.mxu0 0.0
    %212 = vmatpush1.msra.mxu0 0.0
    %213 = vmatprep.subr.mxu0 0.0
    %214 = vmatpush1.msra.mxu0 0.0
    %215 = vmatprep.subr.mxu0 0.0
    %216 = vmatpush1.msra.mxu0 0.0
    %217 = vmatprep.subr.mxu0 0.0
    %218 = vmatpush1.msra.mxu0 0.0
    %219 = vmatprep.subr.mxu0 0.0
    %220 = vmatpush1.msra.mxu0 0.0
    %221 = vmatprep.subr.mxu0 0.0
    %222 = vmatpush1.msra.mxu0 0.0
    %223 = vmatprep.mubr.f32.mxu0 0.0
    %224 = vmatmul.mubr.f32.gmra.mrb[0].mxu0 %v154
    %v225 = vpop.f32.mrb[0].mxu0
    %v226 = vadd.f32 %v150, %v225
    %v227 = vpop.f32.mrb[0].mxu0
    %228 = vmatprep.mubr.f32.mxu0 0.0
    %229 = vmatmul.mubr.f32.gmra.mrb[0].mxu0 %v157
    %v230 = vpop.f32.mrb[0].mxu0
    %v231 = vadd.f32 %v150, %v230
    %v232 = vpop.f32.mrb[0].mxu0
    %233 = vdwg.mxu0
    %234 = vst [vmem:[#allocation2] sm:$0xff] %v226
    %235 = vst [vmem:[#allocation2 + $0x8] sm:$0xff] %v231
    %v236 = vld [vmem:[%s4] sm:$0xff]
    %v237 = vld [vmem:[%s4 + $0x8] sm:$0xff]
    %v238 = vld [vmem:[%s4 + $0x10] sm:$0xff]
    %v239 = vld [vmem:[%s4 + $0x18] sm:$0xff]
    %v241 = vsel %vm152, 0.0, 0
    %243 = vmatprep.subr.mxu0 0.0
    %244 = vmatpush1.msra.mxu0 %v236
    %245 = vmatprep.subr.mxu0 0.0
    %246 = vmatpush1.msra.mxu0 %v237
    %247 = vmatprep.subr.mxu0 0.0
    %248 = vmatpush1.msra.mxu0 %v238
    %249 = vmatprep.subr.mxu0 0.0
    %250 = vmatpush1.msra.mxu0 %v239
    %251 = vmatprep.subr.mxu0 0.0
    %252 = vmatpush1.msra.mxu0 0.0
    %253 = vmatprep.subr.mxu0 0.0
    %254 = vmatpush1.msra.mxu0 0.0
    %255 = vmatprep.subr.mxu0 0.0
    %256 = vmatpush1.msra.mxu0 0.0
    %257 = vmatprep.subr.mxu0 0.0
    %258 = vmatpush1.msra.mxu0 0.0
    %259 = vmatprep.subr.mxu0 0.0
    %260 = vmatpush1.msra.mxu0 0.0
    %261 = vmatprep.subr.mxu0 0.0
    %262 = vmatpush1.msra.mxu0 0.0
    %263 = vmatprep.subr.mxu0 0.0
    %264 = vmatpush1.msra.mxu0 0.0
    %265 = vmatprep.subr.mxu0 0.0
    %266 = vmatpush1.msra.mxu0 0.0
    %267 = vmatprep.subr.mxu0 0.0
    %268 = vmatpush1.msra.mxu0 0.0
    %269 = vmatprep.subr.mxu0 0.0
    %270 = vmatpush1.msra.mxu0 0.0
    %271 = vmatprep.subr.mxu0 0.0
    %272 = vmatpush1.msra.mxu0 0.0
    %273 = vmatprep.subr.mxu0 0.0
    %274 = vmatpush1.msra.mxu0 0.0
    %275 = vmatprep.subr.mxu0 0.0
    %276 = vmatpush1.msra.mxu0 0.0
    %277 = vmatprep.subr.mxu0 0.0
    %278 = vmatpush1.msra.mxu0 0.0
    %279 = vmatprep.subr.mxu0 0.0
    %280 = vmatpush1.msra.mxu0 0.0
    %281 = vmatprep.subr.mxu0 0.0
    %282 = vmatpush1.msra.mxu0 0.0
    %283 = vmatprep.subr.mxu0 0.0
    %284 = vmatpush1.msra.mxu0 0.0
    %285 = vmatprep.subr.mxu0 0.0
    %286 = vmatpush1.msra.mxu0 0.0
    %287 = vmatprep.subr.mxu0 0.0
    %288 = vmatpush1.msra.mxu0 0.0
    %289 = vmatprep.subr.mxu0 0.0
    %290 = vmatpush1.msra.mxu0 0.0
    %291 = vmatprep.subr.mxu0 0.0
    %292 = vmatpush1.msra.mxu0 0.0
    %293 = vmatprep.subr.mxu0 0.0
    %294 = vmatpush1.msra.mxu0 0.0
    %295 = vmatprep.subr.mxu0 0.0
    %296 = vmatpush1.msra.mxu0 0.0
    %297 = vmatprep.subr.mxu0 0.0
    %298 = vmatpush1.msra.mxu0 0.0
    %299 = vmatprep.subr.mxu0 0.0
    %300 = vmatpush1.msra.mxu0 0.0
    %301 = vmatprep.subr.mxu0 0.0
    %302 = vmatpush1.msra.mxu0 0.0
    %303 = vmatprep.subr.mxu0 0.0
    %304 = vmatpush1.msra.mxu0 0.0
    %305 = vmatprep.subr.mxu0 0.0
    %306 = vmatpush1.msra.mxu0 0.0
    %307 = vmatprep.mubr.f32.mxu0 0.0
    %308 = vmatmul.mubr.f32.gmra.mrb[0].mxu0 %v241
    %v309 = vpop.f32.mrb[0].mxu0
    %v310 = vadd.f32 0.0, %v309
    %v311 = vpop.f32.mrb[0].mxu0
    %312 = vdwg.mxu0
    %v313 = vld [vmem:[#allocation2] sm:$0x3]
    %v314 = vadd.f32 %v313, %v310
    %v315 = vld [vmem:[#allocation2 + $0xe] sm:$0x3]
    %v316 = vadd.f32 %v315, %v310
    %v317 = vxor.u32 %v314, 2147483648
    %v318 = vmul.f32 %v317, 1.442695
    %v319 = vpow.pop %v318
    %v320 = vadd.f32 %v319, 1.0
    %v321 = vrcp.pop %v320
    %v322 = vmul.f32 1.0, %v321
    %v323 = vtanh.pop %v314
    %v324 = vmul.f32 %v322, 0.0
    %326 = vrot.lane.b32.xlu0 %v323, 96
    %v327 = vpop.permute.xlu0 %326
    %v329 = vmul.f32 %v322, %v327
    %331 = vrot.lane.b32.xlu0 %v329, 16
    %v332 = vpop.permute.xlu0 %331
    %v334 = vadd.f32 %v324, %v332
    %v335 = vtanh.pop %v334
    %337 = vrot.lane.b32.xlu0 %v335, 32
    %v338 = vpop.permute.xlu0 %337
    %v340 = vmul.f32 %v322, %v338
    %v341 = vxor.u32 %v316, 2147483648
    %v342 = vmul.f32 %v341, 1.442695
    %v343 = vpow.pop %v342
    %v344 = vadd.f32 %v343, 1.0
    %v345 = vrcp.pop %v344
    %v346 = vmul.f32 1.0, %v345
    %v347 = vtanh.pop %v316
    %v348 = vmul.f32 %v346, 0.0
    %350 = vrot.lane.b32.xlu0 %v347, 96
    %v351 = vpop.permute.xlu0 %350
    %v353 = vmul.f32 %v346, %v351
    %355 = vrot.lane.b32.xlu0 %v353, 16
    %v356 = vpop.permute.xlu0 %355
    %v358 = vadd.f32 %v348, %v356
    %v359 = vtanh.pop %v358
    %361 = vrot.lane.b32.xlu0 %v359, 32
    %v362 = vpop.permute.xlu0 %361
    %v364 = vmul.f32 %v346, %v362
    %366 = vrot.lane.b32.xlu0 %v340, 80
    %v367 = vpop.permute.xlu0 %366
    %370 = vrot.lane.b32.xlu0 %v364, 32
    %v371 = vpop.permute.xlu0 %370
    %v373 = vsel %vm59, %v367, %v371
    %v375 = vsel %vm152, %v373, 0
    %377 = vmatprep.subr.mxu0 0.0
    %378 = vmatpush1.msra.mxu0 %v236
    %379 = vmatprep.subr.mxu0 0.0
    %380 = vmatpush1.msra.mxu0 %v237
    %381 = vmatprep.subr.mxu0 0.0
    %382 = vmatpush1.msra.mxu0 %v238
    %383 = vmatprep.subr.mxu0 0.0
    %384 = vmatpush1.msra.mxu0 %v239
    %385 = vmatprep.subr.mxu0 0.0
    %386 = vmatpush1.msra.mxu0 0.0
    %387 = vmatprep.subr.mxu0 0.0
    %388 = vmatpush1.msra.mxu0 0.0
    %389 = vmatprep.subr.mxu0 0.0
    %390 = vmatpush1.msra.mxu0 0.0
    %391 = vmatprep.subr.mxu0 0.0
    %392 = vmatpush1.msra.mxu0 0.0
    %393 = vmatprep.subr.mxu0 0.0
    %394 = vmatpush1.msra.mxu0 0.0
    %395 = vmatprep.subr.mxu0 0.0
    %396 = vmatpush1.msra.mxu0 0.0
    %397 = vmatprep.subr.mxu0 0.0
    %398 = vmatpush1.msra.mxu0 0.0
    %399 = vmatprep.subr.mxu0 0.0
    %400 = vmatpush1.msra.mxu0 0.0
    %401 = vmatprep.subr.mxu0 0.0
    %402 = vmatpush1.msra.mxu0 0.0
    %403 = vmatprep.subr.mxu0 0.0
    %404 = vmatpush1.msra.mxu0 0.0
    %405 = vmatprep.subr.mxu0 0.0
    %406 = vmatpush1.msra.mxu0 0.0
    %407 = vmatprep.subr.mxu0 0.0
    %408 = vmatpush1.msra.mxu0 0.0
    %409 = vmatprep.subr.mxu0 0.0
    %410 = vmatpush1.msra.mxu0 0.0
    %411 = vmatprep.subr.mxu0 0.0
    %412 = vmatpush1.msra.mxu0 0.0
    %413 = vmatprep.subr.mxu0 0.0
    %414 = vmatpush1.msra.mxu0 0.0
    %415 = vmatprep.subr.mxu0 0.0
    %416 = vmatpush1.msra.mxu0 0.0
    %417 = vmatprep.subr.mxu0 0.0
    %418 = vmatpush1.msra.mxu0 0.0
    %419 = vmatprep.subr.mxu0 0.0
    %420 = vmatpush1.msra.mxu0 0.0
    %421 = vmatprep.subr.mxu0 0.0
    %422 = vmatpush1.msra.mxu0 0.0
    %423 = vmatprep.subr.mxu0 0.0
    %424 = vmatpush1.msra.mxu0 0.0
    %425 = vmatprep.subr.mxu0 0.0
    %426 = vmatpush1.msra.mxu0 0.0
    %427 = vmatprep.subr.mxu0 0.0
    %428 = vmatpush1.msra.mxu0 0.0
    %429 = vmatprep.subr.mxu0 0.0
    %430 = vmatpush1.msra.mxu0 0.0
    %431 = vmatprep.subr.mxu0 0.0
    %432 = vmatpush1.msra.mxu0 0.0
    %433 = vmatprep.subr.mxu0 0.0
    %434 = vmatpush1.msra.mxu0 0.0
    %435 = vmatprep.subr.mxu0 0.0
    %436 = vmatpush1.msra.mxu0 0.0
    %437 = vmatprep.subr.mxu0 0.0
    %438 = vmatpush1.msra.mxu0 0.0
    %439 = vmatprep.subr.mxu0 0.0
    %440 = vmatpush1.msra.mxu0 0.0
    %441 = vmatprep.mubr.f32.mxu0 0.0
    %442 = vmatmul.mubr.f32.gmra.mrb[0].mxu0 %v375
    %v443 = vpop.f32.mrb[0].mxu0
    %v444 = vadd.f32 0.0, %v443
    %v445 = vpop.f32.mrb[0].mxu0
    %446 = vdwg.mxu0
    %v447 = vld [vmem:[#allocation2 + $0x2] sm:$0x3]
    %v448 = vadd.f32 %v447, %v444
    %v449 = vld [vmem:[#allocation2 + $0xc] sm:$0x3]
    %v450 = vadd.f32 %v449, %v444
    %v451 = vxor.u32 %v448, 2147483648
    %v452 = vmul.f32 %v451, 1.442695
    %v453 = vpow.pop %v452
    %v454 = vadd.f32 %v453, 1.0
    %v455 = vrcp.pop %v454
    %v456 = vmul.f32 1.0, %v455
    %v457 = vtanh.pop %v448
    %v458 = vmul.f32 %v456, %v334
    %460 = vrot.lane.b32.xlu0 %v457, 96
    %v461 = vpop.permute.xlu0 %460
    %v463 = vmul.f32 %v456, %v461
    %465 = vrot.lane.b32.xlu0 %v463, 16
    %v466 = vpop.permute.xlu0 %465
    %v468 = vadd.f32 %v458, %v466
    %v469 = vtanh.pop %v468
    %471 = vrot.lane.b32.xlu0 %v469, 32
    %v472 = vpop.permute.xlu0 %471
    %v474 = vmul.f32 %v456, %v472
    %v475 = vxor.u32 %v450, 2147483648
    %v476 = vmul.f32 %v475, 1.442695
    %v477 = vpow.pop %v476
    %v478 = vadd.f32 %v477, 1.0
    %v479 = vrcp.pop %v478
    %v480 = vmul.f32 1.0, %v479
    %v481 = vtanh.pop %v450
    %v482 = vmul.f32 %v480, %v358
    %484 = vrot.lane.b32.xlu0 %v481, 96
    %v485 = vpop.permute.xlu0 %484
    %v487 = vmul.f32 %v480, %v485
    %489 = vrot.lane.b32.xlu0 %v487, 16
    %v490 = vpop.permute.xlu0 %489
    %v492 = vadd.f32 %v482, %v490
    %v493 = vtanh.pop %v492
    %495 = vrot.lane.b32.xlu0 %v493, 32
    %v496 = vpop.permute.xlu0 %495
    %v498 = vmul.f32 %v480, %v496
    %500 = vrot.lane.b32.xlu0 %v474, 80
    %v501 = vpop.permute.xlu0 %500
    %504 = vrot.lane.b32.xlu0 %v498, 32
    %v505 = vpop.permute.xlu0 %504
    %v507 = vsel %vm59, %v501, %v505
    %v509 = vsel %vm152, %v507, 0
    %511 = vmatprep.subr.mxu0 0.0
    %512 = vmatpush1.msra.mxu0 %v236
    %513 = vmatprep.subr.mxu0 0.0
    %514 = vmatpush1.msra.mxu0 %v237
    %515 = vmatprep.subr.mxu0 0.0
    %516 = vmatpush1.msra.mxu0 %v238
    %517 = vmatprep.subr.mxu0 0.0
    %518 = vmatpush1.msra.mxu0 %v239
    %519 = vmatprep.subr.mxu0 0.0
    %520 = vmatpush1.msra.mxu0 0.0
    %521 = vmatprep.subr.mxu0 0.0
    %522 = vmatpush1.msra.mxu0 0.0
    %523 = vmatprep.subr.mxu0 0.0
    %524 = vmatpush1.msra.mxu0 0.0
    %525 = vmatprep.subr.mxu0 0.0
    %526 = vmatpush1.msra.mxu0 0.0
    %527 = vmatprep.subr.mxu0 0.0
    %528 = vmatpush1.msra.mxu0 0.0
    %529 = vmatprep.subr.mxu0 0.0
    %530 = vmatpush1.msra.mxu0 0.0
    %531 = vmatprep.subr.mxu0 0.0
    %532 = vmatpush1.msra.mxu0 0.0
    %533 = vmatprep.subr.mxu0 0.0
    %534 = vmatpush1.msra.mxu0 0.0
    %535 = vmatprep.subr.mxu0 0.0
    %536 = vmatpush1.msra.mxu0 0.0
    %537 = vmatprep.subr.mxu0 0.0
    %538 = vmatpush1.msra.mxu0 0.0
    %539 = vmatprep.subr.mxu0 0.0
    %540 = vmatpush1.msra.mxu0 0.0
    %541 = vmatprep.subr.mxu0 0.0
    %542 = vmatpush1.msra.mxu0 0.0
    %543 = vmatprep.subr.mxu0 0.0
    %544 = vmatpush1.msra.mxu0 0.0
    %545 = vmatprep.subr.mxu0 0.0
    %546 = vmatpush1.msra.mxu0 0.0
    %547 = vmatprep.subr.mxu0 0.0
    %548 = vmatpush1.msra.mxu0 0.0
    %549 = vmatprep.subr.mxu0 0.0
    %550 = vmatpush1.msra.mxu0 0.0
    %551 = vmatprep.subr.mxu0 0.0
    %552 = vmatpush1.msra.mxu0 0.0
    %553 = vmatprep.subr.mxu0 0.0
    %554 = vmatpush1.msra.mxu0 0.0
    %555 = vmatprep.subr.mxu0 0.0
    %556 = vmatpush1.msra.mxu0 0.0
    %557 = vmatprep.subr.mxu0 0.0
    %558 = vmatpush1.msra.mxu0 0.0
    %559 = vmatprep.subr.mxu0 0.0
    %560 = vmatpush1.msra.mxu0 0.0
    %561 = vmatprep.subr.mxu0 0.0
    %562 = vmatpush1.msra.mxu0 0.0
    %563 = vmatprep.subr.mxu0 0.0
    %564 = vmatpush1.msra.mxu0 0.0
    %565 = vmatprep.subr.mxu0 0.0
    %566 = vmatpush1.msra.mxu0 0.0
    %567 = vmatprep.subr.mxu0 0.0
    %568 = vmatpush1.msra.mxu0 0.0
    %569 = vmatprep.subr.mxu0 0.0
    %570 = vmatpush1.msra.mxu0 0.0
    %571 = vmatprep.subr.mxu0 0.0
    %572 = vmatpush1.msra.mxu0 0.0
    %573 = vmatprep.subr.mxu0 0.0
    %574 = vmatpush1.msra.mxu0 0.0
    %575 = vmatprep.mubr.f32.mxu0 0.0
    %576 = vmatmul.mubr.f32.gmra.mrb[0].mxu0 %v509
    %v577 = vpop.f32.mrb[0].mxu0
    %v578 = vadd.f32 0.0, %v577
    %v579 = vpop.f32.mrb[0].mxu0
    %580 = vdwg.mxu0
    %v581 = vld [vmem:[#allocation2 + $0x4] sm:$0x3]
    %v582 = vadd.f32 %v581, %v578
    %v583 = vld [vmem:[#allocation2 + $0xa] sm:$0x3]
    %v584 = vadd.f32 %v583, %v578
    %v585 = vxor.u32 %v582, 2147483648
    %v586 = vmul.f32 %v585, 1.442695
    %v587 = vpow.pop %v586
    %v588 = vadd.f32 %v587, 1.0
    %v589 = vrcp.pop %v588
    %v590 = vmul.f32 1.0, %v589
    %v591 = vtanh.pop %v582
    %v592 = vmul.f32 %v590, %v468
    %594 = vrot.lane.b32.xlu0 %v591, 96
    %v595 = vpop.permute.xlu0 %594
    %v597 = vmul.f32 %v590, %v595
    %599 = vrot.lane.b32.xlu0 %v597, 16
    %v600 = vpop.permute.xlu0 %599
    %v602 = vadd.f32 %v592, %v600
    %v603 = vtanh.pop %v602
    %605 = vrot.lane.b32.xlu0 %v603, 32
    %v606 = vpop.permute.xlu0 %605
    %v608 = vmul.f32 %v590, %v606
    %v609 = vxor.u32 %v584, 2147483648
    %v610 = vmul.f32 %v609, 1.442695
    %v611 = vpow.pop %v610
    %v612 = vadd.f32 %v611, 1.0
    %v613 = vrcp.pop %v612
    %v614 = vmul.f32 1.0, %v613
    %v615 = vtanh.pop %v584
    %v616 = vmul.f32 %v614, %v492
    %618 = vrot.lane.b32.xlu0 %v615, 96
    %v619 = vpop.permute.xlu0 %618
    %v621 = vmul.f32 %v614, %v619
    %623 = vrot.lane.b32.xlu0 %v621, 16
    %v624 = vpop.permute.xlu0 %623
    %v626 = vadd.f32 %v616, %v624
    %v627 = vtanh.pop %v626
    %629 = vrot.lane.b32.xlu0 %v627, 32
    %v630 = vpop.permute.xlu0 %629
    %v632 = vmul.f32 %v614, %v630
    %634 = vrot.lane.b32.xlu0 %v608, 80
    %v635 = vpop.permute.xlu0 %634
    %638 = vrot.lane.b32.xlu0 %v632, 32
    %v639 = vpop.permute.xlu0 %638
    %v641 = vsel %vm59, %v635, %v639
    %v643 = vsel %vm152, %v641, 0
    %645 = vmatprep.subr.mxu0 0.0
    %646 = vmatpush1.msra.mxu0 %v236
    %647 = vmatprep.subr.mxu0 0.0
    %648 = vmatpush1.msra.mxu0 %v237
    %649 = vmatprep.subr.mxu0 0.0
    %650 = vmatpush1.msra.mxu0 %v238
    %651 = vmatprep.subr.mxu0 0.0
    %652 = vmatpush1.msra.mxu0 %v239
    %653 = vmatprep.subr.mxu0 0.0
    %654 = vmatpush1.msra.mxu0 0.0
    %655 = vmatprep.subr.mxu0 0.0
    %656 = vmatpush1.msra.mxu0 0.0
    %657 = vmatprep.subr.mxu0 0.0
    %658 = vmatpush1.msra.mxu0 0.0
    %659 = vmatprep.subr.mxu0 0.0
    %660 = vmatpush1.msra.mxu0 0.0
    %661 = vmatprep.subr.mxu0 0.0
    %662 = vmatpush1.msra.mxu0 0.0
    %663 = vmatprep.subr.mxu0 0.0
    %664 = vmatpush1.msra.mxu0 0.0
    %665 = vmatprep.subr.mxu0 0.0
    %666 = vmatpush1.msra.mxu0 0.0
    %667 = vmatprep.subr.mxu0 0.0
    %668 = vmatpush1.msra.mxu0 0.0
    %669 = vmatprep.subr.mxu0 0.0
    %670 = vmatpush1.msra.mxu0 0.0
    %671 = vmatprep.subr.mxu0 0.0
    %672 = vmatpush1.msra.mxu0 0.0
    %673 = vmatprep.subr.mxu0 0.0
    %674 = vmatpush1.msra.mxu0 0.0
    %675 = vmatprep.subr.mxu0 0.0
    %676 = vmatpush1.msra.mxu0 0.0
    %677 = vmatprep.subr.mxu0 0.0
    %678 = vmatpush1.msra.mxu0 0.0
    %679 = vmatprep.subr.mxu0 0.0
    %680 = vmatpush1.msra.mxu0 0.0
    %681 = vmatprep.subr.mxu0 0.0
    %682 = vmatpush1.msra.mxu0 0.0
    %683 = vmatprep.subr.mxu0 0.0
    %684 = vmatpush1.msra.mxu0 0.0
    %685 = vmatprep.subr.mxu0 0.0
    %686 = vmatpush1.msra.mxu0 0.0
    %687 = vmatprep.subr.mxu0 0.0
    %688 = vmatpush1.msra.mxu0 0.0
    %689 = vmatprep.subr.mxu0 0.0
    %690 = vmatpush1.msra.mxu0 0.0
    %691 = vmatprep.subr.mxu0 0.0
    %692 = vmatpush1.msra.mxu0 0.0
    %693 = vmatprep.subr.mxu0 0.0
    %694 = vmatpush1.msra.mxu0 0.0
    %695 = vmatprep.subr.mxu0 0.0
    %696 = vmatpush1.msra.mxu0 0.0
    %697 = vmatprep.subr.mxu0 0.0
    %698 = vmatpush1.msra.mxu0 0.0
    %699 = vmatprep.subr.mxu0 0.0
    %700 = vmatpush1.msra.mxu0 0.0
    %701 = vmatprep.subr.mxu0 0.0
    %702 = vmatpush1.msra.mxu0 0.0
    %703 = vmatprep.subr.mxu0 0.0
    %704 = vmatpush1.msra.mxu0 0.0
    %705 = vmatprep.subr.mxu0 0.0
    %706 = vmatpush1.msra.mxu0 0.0
    %707 = vmatprep.subr.mxu0 0.0
    %708 = vmatpush1.msra.mxu0 0.0
    %709 = vmatprep.mubr.f32.mxu0 0.0
    %710 = vmatmul.mubr.f32.gmra.mrb[0].mxu0 %v643
    %v711 = vpop.f32.mrb[0].mxu0
    %v712 = vadd.f32 0.0, %v711
    %v713 = vpop.f32.mrb[0].mxu0
    %714 = vdwg.mxu0
    %v715 = vld [vmem:[#allocation2 + $0x6] sm:$0x3]
    %v716 = vadd.f32 %v715, %v712
    %v717 = vld [vmem:[#allocation2 + $0x8] sm:$0x3]
    %v718 = vadd.f32 %v717, %v712
    %v719 = vxor.u32 %v716, 2147483648
    %v720 = vmul.f32 %v719, 1.442695
    %v721 = vpow.pop %v720
    %v722 = vadd.f32 %v721, 1.0
    %v723 = vrcp.pop %v722
    %v724 = vmul.f32 1.0, %v723
    %v725 = vtanh.pop %v716
    %v726 = vmul.f32 %v724, %v602
    %728 = vrot.lane.b32.xlu0 %v725, 96
    %v729 = vpop.permute.xlu0 %728
    %v731 = vmul.f32 %v724, %v729
    %733 = vrot.lane.b32.xlu0 %v731, 16
    %v734 = vpop.permute.xlu0 %733
    %v736 = vadd.f32 %v726, %v734
    %v737 = vtanh.pop %v736
    %739 = vrot.lane.b32.xlu0 %v737, 32
    %v740 = vpop.permute.xlu0 %739
    %v742 = vmul.f32 %v724, %v740
    %v743 = vxor.u32 %v718, 2147483648
    %v744 = vmul.f32 %v743, 1.442695
    %v745 = vpow.pop %v744
    %v746 = vadd.f32 %v745, 1.0
    %v747 = vrcp.pop %v746
    %v748 = vmul.f32 1.0, %v747
    %v749 = vtanh.pop %v718
    %v750 = vmul.f32 %v748, %v626
    %752 = vrot.lane.b32.xlu0 %v749, 96
    %v753 = vpop.permute.xlu0 %752
    %v755 = vmul.f32 %v748, %v753
    %757 = vrot.lane.b32.xlu0 %v755, 16
    %v758 = vpop.permute.xlu0 %757
    %v760 = vadd.f32 %v750, %v758
    %v761 = vtanh.pop %v760
    %763 = vrot.lane.b32.xlu0 %v761, 32
    %v764 = vpop.permute.xlu0 %763
    %v766 = vmul.f32 %v748, %v764
    %768 = vrot.lane.b32.xlu0 %v742, 80
    %v769 = vpop.permute.xlu0 %768
    %772 = vrot.lane.b32.xlu0 %v766, 32
    %v773 = vpop.permute.xlu0 %772
    %v775 = vsel %vm59, %v769, %v773
    %v777 = vsel %vm152, %v775, 0
    %779 = vmatprep.subr.mxu0 0.0
    %780 = vmatpush1.msra.mxu0 %v236
    %781 = vmatprep.subr.mxu0 0.0
    %782 = vmatpush1.msra.mxu0 %v237
    %783 = vmatprep.subr.mxu0 0.0
    %784 = vmatpush1.msra.mxu0 %v238
    %785 = vmatprep.subr.mxu0 0.0
    %786 = vmatpush1.msra.mxu0 %v239
    %787 = vmatprep.subr.mxu0 0.0
    %788 = vmatpush1.msra.mxu0 0.0
    %789 = vmatprep.subr.mxu0 0.0
    %790 = vmatpush1.msra.mxu0 0.0
    %791 = vmatprep.subr.mxu0 0.0
    %792 = vmatpush1.msra.mxu0 0.0
    %793 = vmatprep.subr.mxu0 0.0
    %794 = vmatpush1.msra.mxu0 0.0
    %795 = vmatprep.subr.mxu0 0.0
    %796 = vmatpush1.msra.mxu0 0.0
    %797 = vmatprep.subr.mxu0 0.0
    %798 = vmatpush1.msra.mxu0 0.0
    %799 = vmatprep.subr.mxu0 0.0
    %800 = vmatpush1.msra.mxu0 0.0
    %801 = vmatprep.subr.mxu0 0.0
    %802 = vmatpush1.msra.mxu0 0.0
    %803 = vmatprep.subr.mxu0 0.0
    %804 = vmatpush1.msra.mxu0 0.0
    %805 = vmatprep.subr.mxu0 0.0
    %806 = vmatpush1.msra.mxu0 0.0
    %807 = vmatprep.subr.mxu0 0.0
    %808 = vmatpush1.msra.mxu0 0.0
    %809 = vmatprep.subr.mxu0 0.0
    %810 = vmatpush1.msra.mxu0 0.0
    %811 = vmatprep.subr.mxu0 0.0
    %812 = vmatpush1.msra.mxu0 0.0
    %813 = vmatprep.subr.mxu0 0.0
    %814 = vmatpush1.msra.mxu0 0.0
    %815 = vmatprep.subr.mxu0 0.0
    %816 = vmatpush1.msra.mxu0 0.0
    %817 = vmatprep.subr.mxu0 0.0
    %818 = vmatpush1.msra.mxu0 0.0
    %819 = vmatprep.subr.mxu0 0.0
    %820 = vmatpush1.msra.mxu0 0.0
    %821 = vmatprep.subr.mxu0 0.0
    %822 = vmatpush1.msra.mxu0 0.0
    %823 = vmatprep.subr.mxu0 0.0
    %824 = vmatpush1.msra.mxu0 0.0
    %825 = vmatprep.subr.mxu0 0.0
    %826 = vmatpush1.msra.mxu0 0.0
    %827 = vmatprep.subr.mxu0 0.0
    %828 = vmatpush1.msra.mxu0 0.0
    %829 = vmatprep.subr.mxu0 0.0
    %830 = vmatpush1.msra.mxu0 0.0
    %831 = vmatprep.subr.mxu0 0.0
    %832 = vmatpush1.msra.mxu0 0.0
    %833 = vmatprep.subr.mxu0 0.0
    %834 = vmatpush1.msra.mxu0 0.0
    %835 = vmatprep.subr.mxu0 0.0
    %836 = vmatpush1.msra.mxu0 0.0
    %837 = vmatprep.subr.mxu0 0.0
    %838 = vmatpush1.msra.mxu0 0.0
    %839 = vmatprep.subr.mxu0 0.0
    %840 = vmatpush1.msra.mxu0 0.0
    %841 = vmatprep.subr.mxu0 0.0
    %842 = vmatpush1.msra.mxu0 0.0
    %843 = vmatprep.mubr.f32.mxu0 0.0
    %844 = vmatmul.mubr.f32.gmra.mrb[0].mxu0 %v777
    %v845 = vpop.f32.mrb[0].mxu0
    %v846 = vadd.f32 0.0, %v845
    %v847 = vpop.f32.mrb[0].mxu0
    %848 = vdwg.mxu0
    %v849 = vadd.f32 %v717, %v846
    %v850 = vadd.f32 %v715, %v846
    %v851 = vxor.u32 %v849, 2147483648
    %v852 = vmul.f32 %v851, 1.442695
    %v853 = vpow.pop %v852
    %v854 = vadd.f32 %v853, 1.0
    %v855 = vrcp.pop %v854
    %v856 = vmul.f32 1.0, %v855
    %v857 = vtanh.pop %v849
    %v858 = vmul.f32 %v856, %v736
    %860 = vrot.lane.b32.xlu0 %v857, 96
    %v861 = vpop.permute.xlu0 %860
    %v863 = vmul.f32 %v856, %v861
    %865 = vrot.lane.b32.xlu0 %v863, 16
    %v866 = vpop.permute.xlu0 %865
    %v868 = vadd.f32 %v858, %v866
    %v869 = vtanh.pop %v868
    %871 = vrot.lane.b32.xlu0 %v869, 32
    %v872 = vpop.permute.xlu0 %871
    %v874 = vmul.f32 %v856, %v872
    %v875 = vxor.u32 %v850, 2147483648
    %v876 = vmul.f32 %v875, 1.442695
    %v877 = vpow.pop %v876
    %v878 = vadd.f32 %v877, 1.0
    %v879 = vrcp.pop %v878
    %v880 = vmul.f32 1.0, %v879
    %v881 = vtanh.pop %v850
    %v882 = vmul.f32 %v880, %v760
    %884 = vrot.lane.b32.xlu0 %v881, 96
    %v885 = vpop.permute.xlu0 %884
    %v887 = vmul.f32 %v880, %v885
    %889 = vrot.lane.b32.xlu0 %v887, 16
    %v890 = vpop.permute.xlu0 %889
    %v892 = vadd.f32 %v882, %v890
    %v893 = vtanh.pop %v892
    %895 = vrot.lane.b32.xlu0 %v893, 32
    %v896 = vpop.permute.xlu0 %895
    %v898 = vmul.f32 %v880, %v896
    %900 = vrot.lane.b32.xlu0 %v874, 80
    %v901 = vpop.permute.xlu0 %900
    %904 = vrot.lane.b32.xlu0 %v898, 32
    %v905 = vpop.permute.xlu0 %904
    %v907 = vsel %vm59, %v901, %v905
    %v909 = vsel %vm152, %v907, 0
    %911 = vmatprep.subr.mxu0 0.0
    %912 = vmatpush1.msra.mxu0 %v236
    %913 = vmatprep.subr.mxu0 0.0
    %914 = vmatpush1.msra.mxu0 %v237
    %915 = vmatprep.subr.mxu0 0.0
    %916 = vmatpush1.msra.mxu0 %v238
    %917 = vmatprep.subr.mxu0 0.0
    %918 = vmatpush1.msra.mxu0 %v239
    %919 = vmatprep.subr.mxu0 0.0
    %920 = vmatpush1.msra.mxu0 0.0
    %921 = vmatprep.subr.mxu0 0.0
    %922 = vmatpush1.msra.mxu0 0.0
    %923 = vmatprep.subr.mxu0 0.0
    %924 = vmatpush1.msra.mxu0 0.0
    %925 = vmatprep.subr.mxu0 0.0
    %926 = vmatpush1.msra.mxu0 0.0
    %927 = vmatprep.subr.mxu0 0.0
    %928 = vmatpush1.msra.mxu0 0.0
    %929 = vmatprep.subr.mxu0 0.0
    %930 = vmatpush1.msra.mxu0 0.0
    %931 = vmatprep.subr.mxu0 0.0
    %932 = vmatpush1.msra.mxu0 0.0
    %933 = vmatprep.subr.mxu0 0.0
    %934 = vmatpush1.msra.mxu0 0.0
    %935 = vmatprep.subr.mxu0 0.0
    %936 = vmatpush1.msra.mxu0 0.0
    %937 = vmatprep.subr.mxu0 0.0
    %938 = vmatpush1.msra.mxu0 0.0
    %939 = vmatprep.subr.mxu0 0.0
    %940 = vmatpush1.msra.mxu0 0.0
    %941 = vmatprep.subr.mxu0 0.0
    %942 = vmatpush1.msra.mxu0 0.0
    %943 = vmatprep.subr.mxu0 0.0
    %944 = vmatpush1.msra.mxu0 0.0
    %945 = vmatprep.subr.mxu0 0.0
    %946 = vmatpush1.msra.mxu0 0.0
    %947 = vmatprep.subr.mxu0 0.0
    %948 = vmatpush1.msra.mxu0 0.0
    %949 = vmatprep.subr.mxu0 0.0
    %950 = vmatpush1.msra.mxu0 0.0
    %951 = vmatprep.subr.mxu0 0.0
    %952 = vmatpush1.msra.mxu0 0.0
    %953 = vmatprep.subr.mxu0 0.0
    %954 = vmatpush1.msra.mxu0 0.0
    %955 = vmatprep.subr.mxu0 0.0
    %956 = vmatpush1.msra.mxu0 0.0
    %957 = vmatprep.subr.mxu0 0.0
    %958 = vmatpush1.msra.mxu0 0.0
    %959 = vmatprep.subr.mxu0 0.0
    %960 = vmatpush1.msra.mxu0 0.0
    %961 = vmatprep.subr.mxu0 0.0
    %962 = vmatpush1.msra.mxu0 0.0
    %963 = vmatprep.subr.mxu0 0.0
    %964 = vmatpush1.msra.mxu0 0.0
    %965 = vmatprep.subr.mxu0 0.0
    %966 = vmatpush1.msra.mxu0 0.0
    %967 = vmatprep.subr.mxu0 0.0
    %968 = vmatpush1.msra.mxu0 0.0
    %969 = vmatprep.subr.mxu0 0.0
    %970 = vmatpush1.msra.mxu0 0.0
    %971 = vmatprep.subr.mxu0 0.0
    %972 = vmatpush1.msra.mxu0 0.0
    %973 = vmatprep.subr.mxu0 0.0
    %974 = vmatpush1.msra.mxu0 0.0
    %975 = vmatprep.mubr.f32.mxu0 0.0
    %976 = vmatmul.mubr.f32.gmra.mrb[0].mxu0 %v909
    %v977 = vpop.f32.mrb[0].mxu0
    %v978 = vadd.f32 0.0, %v977
    %v979 = vpop.f32.mrb[0].mxu0
    %980 = vdwg.mxu0
    %v981 = vadd.f32 %v583, %v978
    %v982 = vadd.f32 %v581, %v978
    %v983 = vxor.u32 %v981, 2147483648
    %v984 = vmul.f32 %v983, 1.442695
    %v985 = vpow.pop %v984
    %v986 = vadd.f32 %v985, 1.0
    %v987 = vrcp.pop %v986
    %v988 = vmul.f32 1.0, %v987
    %v989 = vtanh.pop %v981
    %v990 = vmul.f32 %v988, %v868
    %992 = vrot.lane.b32.xlu0 %v989, 96
    %v993 = vpop.permute.xlu0 %992
    %v995 = vmul.f32 %v988, %v993
    %997 = vrot.lane.b32.xlu0 %v995, 16
    %v998 = vpop.permute.xlu0 %997
    %v1000 = vadd.f32 %v990, %v998
    %v1001 = vtanh.pop %v1000
    %1003 = vrot.lane.b32.xlu0 %v1001, 32
    %v1004 = vpop.permute.xlu0 %1003
    %v1006 = vmul.f32 %v988, %v1004
    %v1007 = vxor.u32 %v982, 2147483648
    %v1008 = vmul.f32 %v1007, 1.442695
    %v1009 = vpow.pop %v1008
    %v1010 = vadd.f32 %v1009, 1.0
    %v1011 = vrcp.pop %v1010
    %v1012 = vmul.f32 1.0, %v1011
    %v1013 = vtanh.pop %v982
    %v1014 = vmul.f32 %v1012, %v892
    %1016 = vrot.lane.b32.xlu0 %v1013, 96
    %v1017 = vpop.permute.xlu0 %1016
    %v1019 = vmul.f32 %v1012, %v1017
    %1021 = vrot.lane.b32.xlu0 %v1019, 16
    %v1022 = vpop.permute.xlu0 %1021
    %v1024 = vadd.f32 %v1014, %v1022
    %v1025 = vtanh.pop %v1024
    %1027 = vrot.lane.b32.xlu0 %v1025, 32
    %v1028 = vpop.permute.xlu0 %1027
    %v1030 = vmul.f32 %v1012, %v1028
    %1032 = vrot.lane.b32.xlu0 %v1006, 80
    %v1033 = vpop.permute.xlu0 %1032
    %1036 = vrot.lane.b32.xlu0 %v1030, 32
    %v1037 = vpop.permute.xlu0 %1036
    %v1039 = vsel %vm59, %v1033, %v1037
    %v1041 = vsel %vm152, %v1039, 0
    %1043 = vmatprep.subr.mxu0 0.0
    %1044 = vmatpush1.msra.mxu0 %v236
    %1045 = vmatprep.subr.mxu0 0.0
    %1046 = vmatpush1.msra.mxu0 %v237
    %1047 = vmatprep.subr.mxu0 0.0
    %1048 = vmatpush1.msra.mxu0 %v238
    %1049 = vmatprep.subr.mxu0 0.0
    %1050 = vmatpush1.msra.mxu0 %v239
    %1051 = vmatprep.subr.mxu0 0.0
    %1052 = vmatpush1.msra.mxu0 0.0
    %1053 = vmatprep.subr.mxu0 0.0
    %1054 = vmatpush1.msra.mxu0 0.0
    %1055 = vmatprep.subr.mxu0 0.0
    %1056 = vmatpush1.msra.mxu0 0.0
    %1057 = vmatprep.subr.mxu0 0.0
    %1058 = vmatpush1.msra.mxu0 0.0
    %1059 = vmatprep.subr.mxu0 0.0
    %1060 = vmatpush1.msra.mxu0 0.0
    %1061 = vmatprep.subr.mxu0 0.0
    %1062 = vmatpush1.msra.mxu0 0.0
    %1063 = vmatprep.subr.mxu0 0.0
    %1064 = vmatpush1.msra.mxu0 0.0
    %1065 = vmatprep.subr.mxu0 0.0
    %1066 = vmatpush1.msra.mxu0 0.0
    %1067 = vmatprep.subr.mxu0 0.0
    %1068 = vmatpush1.msra.mxu0 0.0
    %1069 = vmatprep.subr.mxu0 0.0
    %1070 = vmatpush1.msra.mxu0 0.0
    %1071 = vmatprep.subr.mxu0 0.0
    %1072 = vmatpush1.msra.mxu0 0.0
    %1073 = vmatprep.subr.mxu0 0.0
    %1074 = vmatpush1.msra.mxu0 0.0
    %1075 = vmatprep.subr.mxu0 0.0
    %1076 = vmatpush1.msra.mxu0 0.0
    %1077 = vmatprep.subr.mxu0 0.0
    %1078 = vmatpush1.msra.mxu0 0.0
    %1079 = vmatprep.subr.mxu0 0.0
    %1080 = vmatpush1.msra.mxu0 0.0
    %1081 = vmatprep.subr.mxu0 0.0
    %1082 = vmatpush1.msra.mxu0 0.0
    %1083 = vmatprep.subr.mxu0 0.0
    %1084 = vmatpush1.msra.mxu0 0.0
    %1085 = vmatprep.subr.mxu0 0.0
    %1086 = vmatpush1.msra.mxu0 0.0
    %1087 = vmatprep.subr.mxu0 0.0
    %1088 = vmatpush1.msra.mxu0 0.0
    %1089 = vmatprep.subr.mxu0 0.0
    %1090 = vmatpush1.msra.mxu0 0.0
    %1091 = vmatprep.subr.mxu0 0.0
    %1092 = vmatpush1.msra.mxu0 0.0
    %1093 = vmatprep.subr.mxu0 0.0
    %1094 = vmatpush1.msra.mxu0 0.0
    %1095 = vmatprep.subr.mxu0 0.0
    %1096 = vmatpush1.msra.mxu0 0.0
    %1097 = vmatprep.subr.mxu0 0.0
    %1098 = vmatpush1.msra.mxu0 0.0
    %1099 = vmatprep.subr.mxu0 0.0
    %1100 = vmatpush1.msra.mxu0 0.0
    %1101 = vmatprep.subr.mxu0 0.0
    %1102 = vmatpush1.msra.mxu0 0.0
    %1103 = vmatprep.subr.mxu0 0.0
    %1104 = vmatpush1.msra.mxu0 0.0
    %1105 = vmatprep.subr.mxu0 0.0
    %1106 = vmatpush1.msra.mxu0 0.0
    %1107 = vmatprep.mubr.f32.mxu0 0.0
    %1108 = vmatmul.mubr.f32.gmra.mrb[0].mxu0 %v1041
    %v1109 = vpop.f32.mrb[0].mxu0
    %v1110 = vadd.f32 0.0, %v1109
    %v1111 = vpop.f32.mrb[0].mxu0
    %1112 = vdwg.mxu0
    %v1113 = vadd.f32 %v449, %v1110
    %v1114 = vadd.f32 %v447, %v1110
    %v1115 = vxor.u32 %v1113, 2147483648
    %v1116 = vmul.f32 %v1115, 1.442695
    %v1117 = vpow.pop %v1116
    %v1118 = vadd.f32 %v1117, 1.0
    %v1119 = vrcp.pop %v1118
    %v1120 = vmul.f32 1.0, %v1119
    %v1121 = vtanh.pop %v1113
    %v1122 = vmul.f32 %v1120, %v1000
    %1124 = vrot.lane.b32.xlu0 %v1121, 96
    %v1125 = vpop.permute.xlu0 %1124
    %v1127 = vmul.f32 %v1120, %v1125
    %1129 = vrot.lane.b32.xlu0 %v1127, 16
    %v1130 = vpop.permute.xlu0 %1129
    %v1132 = vadd.f32 %v1122, %v1130
    %v1133 = vtanh.pop %v1132
    %1135 = vrot.lane.b32.xlu0 %v1133, 32
    %v1136 = vpop.permute.xlu0 %1135
    %v1138 = vmul.f32 %v1120, %v1136
    %v1139 = vxor.u32 %v1114, 2147483648
    %v1140 = vmul.f32 %v1139, 1.442695
    %v1141 = vpow.pop %v1140
    %v1142 = vadd.f32 %v1141, 1.0
    %v1143 = vrcp.pop %v1142
    %v1144 = vmul.f32 1.0, %v1143
    %v1145 = vtanh.pop %v1114
    %v1146 = vmul.f32 %v1144, %v1024
    %1148 = vrot.lane.b32.xlu0 %v1145, 96
    %v1149 = vpop.permute.xlu0 %1148
    %v1151 = vmul.f32 %v1144, %v1149
    %1153 = vrot.lane.b32.xlu0 %v1151, 16
    %v1154 = vpop.permute.xlu0 %1153
    %v1156 = vadd.f32 %v1146, %v1154
    %v1157 = vtanh.pop %v1156
    %1159 = vrot.lane.b32.xlu0 %v1157, 32
    %v1160 = vpop.permute.xlu0 %1159
    %v1162 = vmul.f32 %v1144, %v1160
    %1164 = vrot.lane.b32.xlu0 %v1138, 80
    %v1165 = vpop.permute.xlu0 %1164
    %1168 = vrot.lane.b32.xlu0 %v1162, 32
    %v1169 = vpop.permute.xlu0 %1168
    %v1171 = vsel %vm59, %v1165, %v1169
    %v1173 = vsel %vm152, %v1171, 0
    %1175 = vmatprep.subr.mxu0 0.0
    %1176 = vmatpush1.msra.mxu0 %v236
    %1177 = vmatprep.subr.mxu0 0.0
    %1178 = vmatpush1.msra.mxu0 %v237
    %1179 = vmatprep.subr.mxu0 0.0
    %1180 = vmatpush1.msra.mxu0 %v238
    %1181 = vmatprep.subr.mxu0 0.0
    %1182 = vmatpush1.msra.mxu0 %v239
    %1183 = vmatprep.subr.mxu0 0.0
    %1184 = vmatpush1.msra.mxu0 0.0
    %1185 = vmatprep.subr.mxu0 0.0
    %1186 = vmatpush1.msra.mxu0 0.0
    %1187 = vmatprep.subr.mxu0 0.0
    %1188 = vmatpush1.msra.mxu0 0.0
    %1189 = vmatprep.subr.mxu0 0.0
    %1190 = vmatpush1.msra.mxu0 0.0
    %1191 = vmatprep.subr.mxu0 0.0
    %1192 = vmatpush1.msra.mxu0 0.0
    %1193 = vmatprep.subr.mxu0 0.0
    %1194 = vmatpush1.msra.mxu0 0.0
    %1195 = vmatprep.subr.mxu0 0.0
    %1196 = vmatpush1.msra.mxu0 0.0
    %1197 = vmatprep.subr.mxu0 0.0
    %1198 = vmatpush1.msra.mxu0 0.0
    %1199 = vmatprep.subr.mxu0 0.0
    %1200 = vmatpush1.msra.mxu0 0.0
    %1201 = vmatprep.subr.mxu0 0.0
    %1202 = vmatpush1.msra.mxu0 0.0
    %1203 = vmatprep.subr.mxu0 0.0
    %1204 = vmatpush1.msra.mxu0 0.0
    %1205 = vmatprep.subr.mxu0 0.0
    %1206 = vmatpush1.msra.mxu0 0.0
    %1207 = vmatprep.subr.mxu0 0.0
    %1208 = vmatpush1.msra.mxu0 0.0
    %1209 = vmatprep.subr.mxu0 0.0
    %1210 = vmatpush1.msra.mxu0 0.0
    %1211 = vmatprep.subr.mxu0 0.0
    %1212 = vmatpush1.msra.mxu0 0.0
    %1213 = vmatprep.subr.mxu0 0.0
    %1214 = vmatpush1.msra.mxu0 0.0
    %1215 = vmatprep.subr.mxu0 0.0
    %1216 = vmatpush1.msra.mxu0 0.0
    %1217 = vmatprep.subr.mxu0 0.0
    %1218 = vmatpush1.msra.mxu0 0.0
    %1219 = vmatprep.subr.mxu0 0.0
    %1220 = vmatpush1.msra.mxu0 0.0
    %1221 = vmatprep.subr.mxu0 0.0
    %1222 = vmatpush1.msra.mxu0 0.0
    %1223 = vmatprep.subr.mxu0 0.0
    %1224 = vmatpush1.msra.mxu0 0.0
    %1225 = vmatprep.subr.mxu0 0.0
    %1226 = vmatpush1.msra.mxu0 0.0
    %1227 = vmatprep.subr.mxu0 0.0
    %1228 = vmatpush1.msra.mxu0 0.0
    %1229 = vmatprep.subr.mxu0 0.0
    %1230 = vmatpush1.msra.mxu0 0.0
    %1231 = vmatprep.subr.mxu0 0.0
    %1232 = vmatpush1.msra.mxu0 0.0
    %1233 = vmatprep.subr.mxu0 0.0
    %1234 = vmatpush1.msra.mxu0 0.0
    %1235 = vmatprep.subr.mxu0 0.0
    %1236 = vmatpush1.msra.mxu0 0.0
    %1237 = vmatprep.subr.mxu0 0.0
    %1238 = vmatpush1.msra.mxu0 0.0
    %1239 = vmatprep.mubr.f32.mxu0 0.0
    %1240 = vmatmul.mubr.f32.gmra.mrb[0].mxu0 %v1173
    %v1241 = vpop.f32.mrb[0].mxu0
    %v1242 = vadd.f32 0.0, %v1241
    %v1243 = vpop.f32.mrb[0].mxu0
    %1244 = vdwg.mxu0
    %v1245 = vadd.f32 %v315, %v1242
    %v1246 = vadd.f32 %v313, %v1242
    %v1247 = vxor.u32 %v1245, 2147483648
    %v1248 = vmul.f32 %v1247, 1.442695
    %v1249 = vpow.pop %v1248
    %v1250 = vadd.f32 %v1249, 1.0
    %v1251 = vrcp.pop %v1250
    %v1252 = vmul.f32 1.0, %v1251
    %v1253 = vtanh.pop %v1245
    %v1254 = vmul.f32 %v1252, %v1132
    %1256 = vrot.lane.b32.xlu0 %v1253, 96
    %v1257 = vpop.permute.xlu0 %1256
    %v1259 = vmul.f32 %v1252, %v1257
    %1261 = vrot.lane.b32.xlu0 %v1259, 16
    %v1262 = vpop.permute.xlu0 %1261
    %v1264 = vadd.f32 %v1254, %v1262
    %v1265 = vtanh.pop %v1264
    %1267 = vrot.lane.b32.xlu0 %v1265, 32
    %v1268 = vpop.permute.xlu0 %1267
    %v1270 = vmul.f32 %v1252, %v1268
    %v1271 = vxor.u32 %v1246, 2147483648
    %v1272 = vmul.f32 %v1271, 1.442695
    %v1273 = vpow.pop %v1272
    %v1274 = vadd.f32 %v1273, 1.0
    %v1275 = vrcp.pop %v1274
    %v1276 = vmul.f32 1.0, %v1275
    %v1277 = vtanh.pop %v1246
    %v1278 = vmul.f32 %v1276, %v1156
    %1280 = vrot.lane.b32.xlu0 %v1277, 96
    %v1281 = vpop.permute.xlu0 %1280
    %v1283 = vmul.f32 %v1276, %v1281
    %1285 = vrot.lane.b32.xlu0 %v1283, 16
    %v1286 = vpop.permute.xlu0 %1285
    %v1288 = vadd.f32 %v1278, %v1286
    %v1289 = vtanh.pop %v1288
    %1291 = vrot.lane.b32.xlu0 %v1289, 32
    %v1292 = vpop.permute.xlu0 %1291
    %v1294 = vmul.f32 %v1276, %v1292
    %1296 = vrot.lane.b32.xlu0 %v1294, 32
    %v1297 = vpop.permute.xlu0 %1296
    %v1299 = vsel %vm59, %v367, %v1297
    %v1300 = vsel %vm59, %v501, %v1169
    %v1301 = vsel %vm59, %v635, %v1037
    %v1302 = vsel %vm59, %v769, %v905
    %v1303 = vsel %vm59, %v901, %v773
    %v1304 = vsel %vm59, %v1033, %v639
    %v1305 = vsel %vm59, %v1165, %v505
    %1307 = vrot.lane.b32.xlu0 %v1270, 80
    %v1308 = vpop.permute.xlu0 %1307
    %v1310 = vsel %vm59, %v1308, %v371
    %s1311 = sld [smem:[#allocation3]]
    %s1312 = sld [smem:[#allocation3 + $0x1]]
    %s1313 = sld [smem:[#allocation3 + $0x2]]
    %v1314 = vld [vmem:[%s5] sm:$0x1]
    %v1316 = vlaneseq
    %v1317 = vshrl.u32 %v1316, 7
    %v1318 = vsub.s32 0, %v1317
    %v1319 = vrot.slane %v1314, %v1318
    %v1321 = vmul.f32 %v1299, %v1319
    %vm1322 = vcmask 254976
    %v1323 = vsel %vm1322, %v1321, 0.0
    %1324 = vadd.xlane.f32.xlu0 %v1323
    %v1325 = vpop.xlane.xlu0 %1324
    %v1326 = vstv %s1311
    %v1327 = vadd.f32 %v1325, %v1326
    %v1328 = vxor.u32 %v1327, 2147483648
    %v1329 = vmul.f32 %v1328, 1.442695
    %v1330 = vpow.pop %v1329
    %v1331 = vadd.f32 %v1330, 1.0
    %v1332 = vrcp.pop %v1331
    %v1333 = vmul.f32 1.0, %v1332
    %v1334 = vstv %s1312
    %v1335 = vmul.f32 %v1333, %v1334
    %v1336 = vstv %s1313
    %v1337 = vadd.f32 %v1335, %v1336
    %v1338 = vmul.f32 %v1300, %v1319
    %v1339 = vsel %vm1322, %v1338, 0.0
    %1340 = vadd.xlane.f32.xlu0 %v1339
    %v1341 = vpop.xlane.xlu0 %1340
    %v1342 = vadd.f32 %v1341, %v1326
    %v1343 = vxor.u32 %v1342, 2147483648
    %v1344 = vmul.f32 %v1343, 1.442695
    %v1345 = vpow.pop %v1344
    %v1346 = vadd.f32 %v1345, 1.0
    %v1347 = vrcp.pop %v1346
    %v1348 = vmul.f32 1.0, %v1347
    %v1349 = vmul.f32 %v1348, %v1334
    %v1350 = vadd.f32 %v1349, %v1336
    %v1351 = vmul.f32 %v1301, %v1319
    %v1352 = vsel %vm1322, %v1351, 0.0
    %1353 = vadd.xlane.f32.xlu0 %v1352
    %v1354 = vpop.xlane.xlu0 %1353
    %v1355 = vadd.f32 %v1354, %v1326
    %v1356 = vxor.u32 %v1355, 2147483648
    %v1357 = vmul.f32 %v1356, 1.442695
    %v1358 = vpow.pop %v1357
    %v1359 = vadd.f32 %v1358, 1.0
    %v1360 = vrcp.pop %v1359
    %v1361 = vmul.f32 1.0, %v1360
    %v1362 = vmul.f32 %v1361, %v1334
    %v1363 = vadd.f32 %v1362, %v1336
    %v1364 = vmul.f32 %v1302, %v1319
    %v1365 = vsel %vm1322, %v1364, 0.0
    %1366 = vadd.xlane.f32.xlu0 %v1365
    %v1367 = vpop.xlane.xlu0 %1366
    %v1368 = vadd.f32 %v1367, %v1326
    %v1369 = vxor.u32 %v1368, 2147483648
    %v1370 = vmul.f32 %v1369, 1.442695
    %v1371 = vpow.pop %v1370
    %v1372 = vadd.f32 %v1371, 1.0
    %v1373 = vrcp.pop %v1372
    %v1374 = vmul.f32 1.0, %v1373
    %v1375 = vmul.f32 %v1374, %v1334
    %v1376 = vadd.f32 %v1375, %v1336
    %v1377 = vmul.f32 %v1303, %v1319
    %v1378 = vsel %vm1322, %v1377, 0.0
    %1379 = vadd.xlane.f32.xlu0 %v1378
    %v1380 = vpop.xlane.xlu0 %1379
    %v1381 = vadd.f32 %v1380, %v1326
    %v1382 = vxor.u32 %v1381, 2147483648
    %v1383 = vmul.f32 %v1382, 1.442695
    %v1384 = vpow.pop %v1383
    %v1385 = vadd.f32 %v1384, 1.0
    %v1386 = vrcp.pop %v1385
    %v1387 = vmul.f32 1.0, %v1386
    %v1388 = vmul.f32 %v1387, %v1334
    %v1389 = vadd.f32 %v1388, %v1336
    %v1390 = vmul.f32 %v1304, %v1319
    %v1391 = vsel %vm1322, %v1390, 0.0
    %1392 = vadd.xlane.f32.xlu0 %v1391
    %v1393 = vpop.xlane.xlu0 %1392
    %v1394 = vadd.f32 %v1393, %v1326
    %v1395 = vxor.u32 %v1394, 2147483648
    %v1396 = vmul.f32 %v1395, 1.442695
    %v1397 = vpow.pop %v1396
    %v1398 = vadd.f32 %v1397, 1.0
    %v1399 = vrcp.pop %v1398
    %v1400 = vmul.f32 1.0, %v1399
    %v1401 = vmul.f32 %v1400, %v1334
    %v1402 = vadd.f32 %v1401, %v1336
    %v1403 = vmul.f32 %v1305, %v1319
    %v1404 = vsel %vm1322, %v1403, 0.0
    %1405 = vadd.xlane.f32.xlu0 %v1404
    %v1406 = vpop.xlane.xlu0 %1405
    %v1407 = vadd.f32 %v1406, %v1326
    %v1408 = vxor.u32 %v1407, 2147483648
    %v1409 = vmul.f32 %v1408, 1.442695
    %v1410 = vpow.pop %v1409
    %v1411 = vadd.f32 %v1410, 1.0
    %v1412 = vrcp.pop %v1411
    %v1413 = vmul.f32 1.0, %v1412
    %v1414 = vmul.f32 %v1413, %v1334
    %v1415 = vadd.f32 %v1414, %v1336
    %v1416 = vmul.f32 %v1310, %v1319
    %v1417 = vsel %vm1322, %v1416, 0.0
    %1418 = vadd.xlane.f32.xlu0 %v1417
    %v1419 = vpop.xlane.xlu0 %1418
    %v1420 = vadd.f32 %v1419, %v1326
    %v1421 = vxor.u32 %v1420, 2147483648
    %v1422 = vmul.f32 %v1421, 1.442695
    %v1423 = vpow.pop %v1422
    %v1424 = vadd.f32 %v1423, 1.0
    %v1425 = vrcp.pop %v1424
    %v1426 = vmul.f32 1.0, %v1425
    %v1427 = vmul.f32 %v1426, %v1334
    %v1428 = vadd.f32 %v1427, %v1336
    %v1429 = vmax.f32 %v1337, %v1350
    %v1430 = vmax.f32 %v1429, %v1363
    %v1431 = vmax.f32 %v1430, %v1376
    %v1432 = vmax.f32 %v1431, %v1389
    %v1433 = vmax.f32 %v1432, %v1402
    %v1434 = vmax.f32 %v1433, %v1415
    %v1435 = vmax.f32 %v1434, %v1428
    %v1436 = vsub.f32 %v1337, %v1435
    %v1437 = vmul.f32 %v1436, 1.442695
    %v1438 = vpow.pop %v1437
    %v1439 = vsub.f32 %v1350, %v1435
    %v1440 = vmul.f32 %v1439, 1.442695
    %v1441 = vpow.pop %v1440
    %v1442 = vsub.f32 %v1363, %v1435
    %v1443 = vmul.f32 %v1442, 1.442695
    %v1444 = vpow.pop %v1443
    %v1445 = vsub.f32 %v1376, %v1435
    %v1446 = vmul.f32 %v1445, 1.442695
    %v1447 = vpow.pop %v1446
    %v1448 = vsub.f32 %v1389, %v1435
    %v1449 = vmul.f32 %v1448, 1.442695
    %v1450 = vpow.pop %v1449
    %v1451 = vsub.f32 %v1402, %v1435
    %v1452 = vmul.f32 %v1451, 1.442695
    %v1453 = vpow.pop %v1452
    %v1454 = vsub.f32 %v1415, %v1435
    %v1455 = vmul.f32 %v1454, 1.442695
    %v1456 = vpow.pop %v1455
    %v1457 = vsub.f32 %v1428, %v1435
    %v1458 = vmul.f32 %v1457, 1.442695
    %v1459 = vpow.pop %v1458
    %v1460 = vadd.f32 %v1438, %v1441
    %v1461 = vadd.f32 %v1460, %v1444
    %v1462 = vadd.f32 %v1461, %v1447
    %v1463 = vadd.f32 %v1462, %v1450
    %v1464 = vadd.f32 %v1463, %v1453
    %v1465 = vadd.f32 %v1464, %v1456
    %v1466 = vadd.f32 %v1465, %v1459
    %v1467 = vrcp.pop %v1466
    %v1468 = vmul.f32 1.0, %v1467
    %v1469 = vmul.f32 %v1438, %v1468
    %v1470 = vmul.f32 %v1469, %v1299
    %v1471 = vmul.f32 %v1441, %v1468
    %v1472 = vmul.f32 %v1471, %v1300
    %v1473 = vadd.f32 %v1470, %v1472
    %v1474 = vmul.f32 %v1444, %v1468
    %v1475 = vmul.f32 %v1474, %v1301
    %v1476 = vadd.f32 %v1473, %v1475
    %v1477 = vmul.f32 %v1447, %v1468
    %v1478 = vmul.f32 %v1477, %v1302
    %v1479 = vadd.f32 %v1476, %v1478
    %v1480 = vmul.f32 %v1450, %v1468
    %v1481 = vmul.f32 %v1480, %v1303
    %v1482 = vadd.f32 %v1479, %v1481
    %v1483 = vmul.f32 %v1453, %v1468
    %v1484 = vmul.f32 %v1483, %v1304
    %v1485 = vadd.f32 %v1482, %v1484
    %v1486 = vmul.f32 %v1456, %v1468
    %v1487 = vmul.f32 %v1486, %v1305
    %v1488 = vadd.f32 %v1485, %v1487
    %v1489 = vmul.f32 %v1459, %v1468
    %v1490 = vmul.f32 %v1489, %v1310
    %v1491 = vadd.f32 %v1488, %v1490
    %1492 = vst.msk [vmem:[#allocation6] sm:$0x3] %vm1322, %v1491
    %v1493 = vld [vmem:[%s7] sm:$0xff]
    %v1494 = vld [vmem:[%s7 + $0x8] sm:$0xff]
    %v1495 = vld [vmem:[%s7 + $0x10] sm:$0xff]
    %v1496 = vld [vmem:[%s7 + $0x18] sm:$0xff]
    %v1497 = vld [vmem:[%s8] sm:$0x1]
    %v1499 = vlaneseq
    %v1500 = vshrl.u32 %v1499, 7
    %v1501 = vsub.s32 0, %v1500
    %v1502 = vrot.slane %v1497, %v1501
    %v1505 = vsel %vm152, %v1491, 0
    %1507 = vmatprep.subr.mxu0 0.0
    %1508 = vmatpush1.msra.mxu0 %v1493
    %1509 = vmatprep.subr.mxu0 0.0
    %1510 = vmatpush1.msra.mxu0 %v1494
    %1511 = vmatprep.subr.mxu0 0.0
    %1512 = vmatpush1.msra.mxu0 %v1495
    %1513 = vmatprep.subr.mxu0 0.0
    %1514 = vmatpush1.msra.mxu0 %v1496
    %1515 = vmatprep.subr.mxu0 0.0
    %1516 = vmatpush1.msra.mxu0 0.0
    %1517 = vmatprep.subr.mxu0 0.0
    %1518 = vmatpush1.msra.mxu0 0.0
    %1519 = vmatprep.subr.mxu0 0.0
    %1520 = vmatpush1.msra.mxu0 0.0
    %1521 = vmatprep.subr.mxu0 0.0
    %1522 = vmatpush1.msra.mxu0 0.0
    %1523 = vmatprep.subr.mxu0 0.0
    %1524 = vmatpush1.msra.mxu0 0.0
    %1525 = vmatprep.subr.mxu0 0.0
    %1526 = vmatpush1.msra.mxu0 0.0
    %1527 = vmatprep.subr.mxu0 0.0
    %1528 = vmatpush1.msra.mxu0 0.0
    %1529 = vmatprep.subr.mxu0 0.0
    %1530 = vmatpush1.msra.mxu0 0.0
    %1531 = vmatprep.subr.mxu0 0.0
    %1532 = vmatpush1.msra.mxu0 0.0
    %1533 = vmatprep.subr.mxu0 0.0
    %1534 = vmatpush1.msra.mxu0 0.0
    %1535 = vmatprep.subr.mxu0 0.0
    %1536 = vmatpush1.msra.mxu0 0.0
    %1537 = vmatprep.subr.mxu0 0.0
    %1538 = vmatpush1.msra.mxu0 0.0
    %1539 = vmatprep.subr.mxu0 0.0
    %1540 = vmatpush1.msra.mxu0 0.0
    %1541 = vmatprep.subr.mxu0 0.0
    %1542 = vmatpush1.msra.mxu0 0.0
    %1543 = vmatprep.subr.mxu0 0.0
    %1544 = vmatpush1.msra.mxu0 0.0
    %1545 = vmatprep.subr.mxu0 0.0
    %1546 = vmatpush1.msra.mxu0 0.0
    %1547 = vmatprep.subr.mxu0 0.0
    %1548 = vmatpush1.msra.mxu0 0.0
    %1549 = vmatprep.subr.mxu0 0.0
    %1550 = vmatpush1.msra.mxu0 0.0
    %1551 = vmatprep.subr.mxu0 0.0
    %1552 = vmatpush1.msra.mxu0 0.0
    %1553 = vmatprep.subr.mxu0 0.0
    %1554 = vmatpush1.msra.mxu0 0.0
    %1555 = vmatprep.subr.mxu0 0.0
    %1556 = vmatpush1.msra.mxu0 0.0
    %1557 = vmatprep.subr.mxu0 0.0
    %1558 = vmatpush1.msra.mxu0 0.0
    %1559 = vmatprep.subr.mxu0 0.0
    %1560 = vmatpush1.msra.mxu0 0.0
    %1561 = vmatprep.subr.mxu0 0.0
    %1562 = vmatpush1.msra.mxu0 0.0
    %1563 = vmatprep.subr.mxu0 0.0
    %1564 = vmatpush1.msra.mxu0 0.0
    %1565 = vmatprep.subr.mxu0 0.0
    %1566 = vmatpush1.msra.mxu0 0.0
    %1567 = vmatprep.subr.mxu0 0.0
    %1568 = vmatpush1.msra.mxu0 0.0
    %1569 = vmatprep.subr.mxu0 0.0
    %1570 = vmatpush1.msra.mxu0 0.0
    %1571 = vmatprep.mubr.f32.mxu0 0.0
    %1572 = vmatmul.mubr.f32.gmra.mrb[0].mxu0 %v1505
    %v1573 = vpop.f32.mrb[0].mxu0
    %v1574 = vadd.f32 %v1502, %v1573
    %v1575 = vpop.f32.mrb[0].mxu0
    %1576 = vdwg.mxu0
    %vm1577 = vcmp.gt.f32.partialorder %v1574, 0.0
    %v1578 = vmul.f32 %v1574, 0.01
    %v1579 = vsel %vm1577, %v1574, %v1578
    %v1580 = vld [vmem:[%s9] sm:$0xff]
    %v1581 = vld [vmem:[%s9 + $0x8] sm:$0xff]
    %v1582 = vld [vmem:[%s9 + $0x10] sm:$0xff]
    %v1583 = vld [vmem:[%s9 + $0x18] sm:$0xff]
    %v1584 = vld [vmem:[%s10] sm:$0x1]
    %v1586 = vlaneseq
    %v1587 = vshrl.u32 %v1586, 7
    %v1588 = vsub.s32 0, %v1587
    %v1589 = vrot.slane %v1584, %v1588
    %v1592 = vsel %vm152, %v1579, 0
    %1594 = vmatprep.subr.mxu0 0.0
    %1595 = vmatpush1.msra.mxu0 %v1580
    %1596 = vmatprep.subr.mxu0 0.0
    %1597 = vmatpush1.msra.mxu0 %v1581
    %1598 = vmatprep.subr.mxu0 0.0
    %1599 = vmatpush1.msra.mxu0 %v1582
    %1600 = vmatprep.subr.mxu0 0.0
    %1601 = vmatpush1.msra.mxu0 %v1583
    %1602 = vmatprep.subr.mxu0 0.0
    %1603 = vmatpush1.msra.mxu0 0.0
    %1604 = vmatprep.subr.mxu0 0.0
    %1605 = vmatpush1.msra.mxu0 0.0
    %1606 = vmatprep.subr.mxu0 0.0
    %1607 = vmatpush1.msra.mxu0 0.0
    %1608 = vmatprep.subr.mxu0 0.0
    %1609 = vmatpush1.msra.mxu0 0.0
    %1610 = vmatprep.subr.mxu0 0.0
    %1611 = vmatpush1.msra.mxu0 0.0
    %1612 = vmatprep.subr.mxu0 0.0
    %1613 = vmatpush1.msra.mxu0 0.0
    %1614 = vmatprep.subr.mxu0 0.0
    %1615 = vmatpush1.msra.mxu0 0.0
    %1616 = vmatprep.subr.mxu0 0.0
    %1617 = vmatpush1.msra.mxu0 0.0
    %1618 = vmatprep.subr.mxu0 0.0
    %1619 = vmatpush1.msra.mxu0 0.0
    %1620 = vmatprep.subr.mxu0 0.0
    %1621 = vmatpush1.msra.mxu0 0.0
    %1622 = vmatprep.subr.mxu0 0.0
    %1623 = vmatpush1.msra.mxu0 0.0
    %1624 = vmatprep.subr.mxu0 0.0
    %1625 = vmatpush1.msra.mxu0 0.0
    %1626 = vmatprep.subr.mxu0 0.0
    %1627 = vmatpush1.msra.mxu0 0.0
    %1628 = vmatprep.subr.mxu0 0.0
    %1629 = vmatpush1.msra.mxu0 0.0
    %1630 = vmatprep.subr.mxu0 0.0
    %1631 = vmatpush1.msra.mxu0 0.0
    %1632 = vmatprep.subr.mxu0 0.0
    %1633 = vmatpush1.msra.mxu0 0.0
    %1634 = vmatprep.subr.mxu0 0.0
    %1635 = vmatpush1.msra.mxu0 0.0
    %1636 = vmatprep.subr.mxu0 0.0
    %1637 = vmatpush1.msra.mxu0 0.0
    %1638 = vmatprep.subr.mxu0 0.0
    %1639 = vmatpush1.msra.mxu0 0.0
    %1640 = vmatprep.subr.mxu0 0.0
    %1641 = vmatpush1.msra.mxu0 0.0
    %1642 = vmatprep.subr.mxu0 0.0
    %1643 = vmatpush1.msra.mxu0 0.0
    %1644 = vmatprep.subr.mxu0 0.0
    %1645 = vmatpush1.msra.mxu0 0.0
    %1646 = vmatprep.subr.mxu0 0.0
    %1647 = vmatpush1.msra.mxu0 0.0
    %1648 = vmatprep.subr.mxu0 0.0
    %1649 = vmatpush1.msra.mxu0 0.0
    %1650 = vmatprep.subr.mxu0 0.0
    %1651 = vmatpush1.msra.mxu0 0.0
    %1652 = vmatprep.subr.mxu0 0.0
    %1653 = vmatpush1.msra.mxu0 0.0
    %1654 = vmatprep.subr.mxu0 0.0
    %1655 = vmatpush1.msra.mxu0 0.0
    %1656 = vmatprep.subr.mxu0 0.0
    %1657 = vmatpush1.msra.mxu0 0.0
    %1658 = vmatprep.mubr.f32.mxu0 0.0
    %1659 = vmatmul.mubr.f32.gmra.mrb[0].mxu0 %v1592
    %v1660 = vpop.f32.mrb[0].mxu0
    %v1661 = vadd.f32 %v1589, %v1660
    %v1662 = vpop.f32.mrb[0].mxu0
    %1663 = vdwg.mxu0
    %vm1664 = vcmask 25600
    %v1665 = vsel %vm1664, %v1661, -inf
    %1666 = vmax.xlane.f32.xlu0 %v1665
    %v1667 = vpop.xlane.xlu0 %1666
    %v1668 = vsub.f32 %v1661, %v1667
    %v1669 = vmul.f32 %v1668, 1.442695
    %v1670 = vpow.pop %v1669
    %v1671 = vsel %vm1664, %v1670, 0.0
    %1672 = vadd.xlane.f32.xlu0 %v1671
    %v1673 = vpop.xlane.xlu0 %1672
    %v1674 = vrcp.pop %v1673
    %v1675 = vmul.f32 %v1670, %v1674
    %1676 = vst.msk [vmem:[#allocation7] sm:$0x3] %vm1664, %v1675
    // Predicated region
    $region50: #{arcnn_forward.3} parent=1 // pred_check
      _
    $region51: #{arcnn_forward.3} parent=1 // pred_check_branch
      %1678 = sbr.rel (0) target = $region53
    $region52: #{arcnn_forward.3} parent=1 // pred_region
      %s1680 = ssub.s32 32, 32
      %1681 = vsyncadd [#allocation4], %s1680
      %s1683 = sshll.u32 [#allocation6], 4
      %s1684 = int_to_ptr.vmem [resolvable:$true] %s1683
      %1686 = dma.vmem_to_hbm [thread:$0]  %s1684, 32, %s11, [#allocation4]
    $region53: #{arcnn_forward.3} parent=1 // pred_fallthru
      _
    // Predicated region
    $region54: #{arcnn_forward.3} parent=1 // pred_check
      _
    $region55: #{arcnn_forward.3} parent=1 // pred_check_branch
      %1688 = sbr.rel (0) target = $region57
    $region56: #{arcnn_forward.3} parent=1 // pred_region
      %s1690 = ssub.s32 32, 32
      %1691 = vsyncadd [#allocation8], %s1690
      %s1693 = sshll.u32 [#allocation7], 4
      %s1694 = int_to_ptr.vmem [resolvable:$true] %s1693
      %1696 = dma.vmem_to_hbm [thread:$0]  %s1694, 32, %s12, [#allocation8]
    $region57: #{arcnn_forward.3} parent=1 // pred_fallthru
      _
    // Predicated region
    $region58: #{arcnn_forward.3} parent=1 // pred_check
      _
    $region59: #{arcnn_forward.3} parent=1 // pred_check_branch
      %1698 = sbr.rel (0) target = $region61
    $region60: #{arcnn_forward.3} parent=1 // pred_region
      %1699 = dma.done [#allocation4], 32
    $region61: #{arcnn_forward.3} parent=1 // pred_fallthru
      _
    // Predicated region
    $region62: #{arcnn_forward.3} parent=1 // pred_check
      _
    $region63: #{arcnn_forward.3} parent=1 // pred_check_branch
      %1701 = sbr.rel (0) target = $region65
    $region64: #{arcnn_forward.3} parent=1 // pred_region
      %1702 = dma.done [#allocation8], 32
    $region65: #{arcnn_forward.3} parent=1 // pred_fallthru
      _
    %1703 = vsyncpa [#allocation4], 1
    %1704 = vsyncpa [#allocation8], 1
    %1705 = vsyncpa [#allocation5], 1

// kernel: arcnn_forward.2
$region0: #{arcnn_forward.2}
  #allocation0 [shape = 'u32[]', space=smem, size = 0x4, offset = 0x4, fixed_abs, tag = 'smem constant byte address 0x4 - core index']
  #allocation1 [shape = 'u32[144,128]{1,0:T(1,128)}', space=vmem, size = 0x12000, scoped, tag = 'internal scratch']
  %s0 = inlined_call_operand.vmem [shape: f32[48,18], index: 0, kind: input, shape index: {}]
  %s1 = inlined_call_operand.hbm [shape: f32[3,18,144], index: 1, kind: input, shape index: {}]
  %s2 = inlined_call_operand.hbm [shape: f32[1,144], index: 2, kind: input, shape index: {}]
  %s3 = inlined_call_operand.hbm [shape: f32[16,24], index: 3, kind: input, shape index: {}]
  %s4 = inlined_call_operand.hbm [shape: f32[144,80], index: 4, kind: input, shape index: {}]
  %s5 = inlined_call_operand.hbm [shape: f32[144,80], index: 5, kind: input, shape index: {}]
  %s6 = inlined_call_operand.vmem [shape: f32[3,80,80], index: 6, kind: input, shape index: {}]
  %s7 = inlined_call_operand.hbm [shape: f32[1,80], index: 7, kind: input, shape index: {}]
  %s8 = inlined_call_operand.hbm [shape: f32[12,80,80], index: 8, kind: input, shape index: {}]
  %s9 = inlined_call_operand.hbm [shape: f32[4,1,80], index: 9, kind: input, shape index: {}]
  %s10 = inlined_call_operand.hbm [shape: f32[8,16], index: 10, kind: input, shape index: {}]
  %s11 = inlined_call_operand.vmem [shape: f32[80,32], index: 11, kind: input, shape index: {}]
  %s12 = inlined_call_operand.hbm [shape: f32[1,32], index: 12, kind: input, shape index: {}]
  %s13 = inlined_call_operand.vmem [shape: f32[16,32], index: 13, kind: output, shape index: {}]
  %s14 = sld [smem:[#allocation0]]
  $region125: #{arcnn_forward.2} parent=0
    _
  %s16 = ssub.s32 1, %s14
  %s17 = scalar_select 0, %s16, %s14
  $region1: #{arcnn_forward.2} parent=0
    #allocation2 [shape = 'u8[73728]{0}', space=vmem, size = 0x12000, scoped, tag = 'input window, operand 1, single buffered']
    #allocation3 [shape = 's32[2]{0}', space=sflag, size = 0x8, scoped, tag = 'scoped memory for arcnn_forward.2']
    #allocation4 [shape = 'u8[1024]{0}', space=vmem, size = 0x400, scoped, tag = 'input window, operand 2, single buffered']
    #allocation5 [shape = 's32[1]{0}', space=sflag, size = 0x4, scoped, tag = 'scoped memory for arcnn_forward.2']
    #allocation6 [shape = 'u8[8192]{0}', space=vmem, size = 0x2000, scoped, tag = 'input window, operand 3, single buffered']
    #allocation7 [shape = 'u8[73728]{0}', space=vmem, size = 0x12000, scoped, tag = 'input window, operand 4, single buffered']
    #allocation8 [shape = 's32[1]{0}', space=sflag, size = 0x4, scoped, tag = 'scoped memory for arcnn_forward.2']
    #allocation9 [shape = 'u8[73728]{0}', space=vmem, size = 0x12000, scoped, tag = 'input window, operand 5, single buffered']
    #allocation10 [shape = 'u8[512]{0}', space=vmem, size = 0x400, scoped, tag = 'input window, operand 7, single buffered']
    #allocation11 [shape = 's32[1]{0}', space=sflag, size = 0x4, scoped, tag = 'scoped memory for arcnn_forward.2']
    #allocation12 [shape = 'u8[491520]{0}', space=vmem, size = 0x78000, scoped, tag = 'input window, operand 8, single buffered']
    #allocation13 [shape = 'u8[2048]{0}', space=vmem, size = 0x800, scoped, tag = 'input window, operand 9, single buffered']
    #allocation14 [shape = 's32[1]{0}', space=sflag, size = 0x4, scoped, tag = 'scoped memory for arcnn_forward.2']
    #allocation15 [shape = 'u8[4096]{0}', space=vmem, size = 0x1000, scoped, tag = 'input window, operand 10, single buffered']
    #allocation16 [shape = 'u8[512]{0}', space=vmem, size = 0x400, scoped, tag = 'input window, operand 12, single buffered']
    #allocation17 [shape = 's32[1]{0}', space=sflag, size = 0x4, scoped, tag = 'scoped memory for arcnn_forward.2']
    %18 = vsyncpa [#allocation3], 0
    %19 = vsyncpa [#allocation5], 0
    %20 = vsyncpa [#allocation8], 0
    %21 = vsyncpa [#allocation11], 0
    %22 = vsyncpa [#allocation14], 0
    %23 = vsyncpa [#allocation17], 0
    loop: start=0, step=1, limit=4
    $region2: #{arcnn_forward.2} parent=1 // loop_pre_header
      _
    $region3: #{arcnn_forward.2} parent=1 // loop_header
      %s25 = sphi 0, %s29
      %p26 = scmp.ge.s32.totalorder %s25, 4
      %s35 = sphi 0, %s37
      %s38 = sphi 0, %s35
      %s39 = sphi 0, %s38
      %s55 = sphi 0, %s39
      %s59 = sphi 0, %s59
      %s61 = sphi 0, %s59
      %s62 = sphi 0, %s61
      %s76 = sphi 0, %s62
      %s80 = sphi 0, %s80
      %s82 = sphi 0, %s80
      %s83 = sphi 0, %s82
      %s97 = sphi 0, %s83
      %s101 = sphi 0, %s101
      %s103 = sphi 0, %s101
      %s104 = sphi 0, %s103
      %s118 = sphi 0, %s104
      %s122 = sphi 0, %s122
      %s124 = sphi 0, %s122
      %s125 = sphi 0, %s124
      %s139 = sphi 0, %s125
      %s143 = sphi 0, %s143
      %s145 = sphi 0, %s143
      %s146 = sphi 0, %s145
      %s160 = sphi 0, %s146
      %s164 = sphi 0, %s164
      %s166 = sphi 0, %s164
      %s167 = sphi 0, %s166
      %s181 = sphi 0, %s167
      %s185 = sphi 0, %s185
      %s187 = sphi 0, %s185
      %s188 = sphi 0, %s187
      %s202 = sphi 0, %s188
      %s206 = sphi 0, %s206
      %s208 = sphi 0, %s206
      %s209 = sphi 0, %s208
      %s223 = sphi 0, %s209
      %s227 = sphi 0, %s227
      %s229 = sphi 0, %s227
      %s230 = sphi 0, %s229
      %s244 = sphi 0, %s230
      %s248 = sphi 0, %s248
      %s250 = sphi 0, %s248
      %s251 = sphi 0, %s250
      %s265 = sphi 0, %s251
      %s269 = sphi 0, %s269
      %s271 = sphi 0, %s269
      %s272 = sphi 0, %s271
      %s286 = sphi 0, %s272
      %s290 = sphi 0, %s290
      %s292 = sphi 0, %s290
      %s293 = sphi 0, %s292
      %s307 = sphi 0, %s293
      %s313 = sphi 0, %s315
      %s316 = sphi 0, %s313
      %s317 = sphi 0, %s316
      %s333 = sphi 0, %s317
    $region4: #{arcnn_forward.2} parent=1 // loop_header_branch
      %28 = sbr.rel (%p26) target = $region8
    $region5: #{arcnn_forward.2} parent=1 // loop_body
      %s30 = ssub.s32 %s25, 1
      %s31 = ssub.s32 %s25, 2
      %s32 = sadd.s32 %s25, 1
      %s33 = ssub.s32 %s25, %s32
      %p34 = scmp.eq.s32.totalorder %s33, 0
      %s36 = sadd.s32 %s35, 1
      %s37 = scalar_select %p34, %s35, %s36
      %p40 = pneg %p34
      %p41 = scmp.eq.s32.totalorder %s25, 1
      %p42 = por %p40, %p41
      %p43 = scmp.ne.s32.totalorder %s35, %s38
      %p44 = scmp.eq.s32.totalorder %s25, 0
      %p45 = por %p43, %p44
      %p46 = scmp.ne.s32.totalorder %s35, %s38
      %p47 = scmp.eq.s32.totalorder %s30, 1
      %p48 = por %p46, %p47
      %p49 = scmp.ne.s32.totalorder %s38, %s39
      %p50 = scmp.eq.s32.totalorder %s30, 0
      %p51 = por %p49, %p50
      %p52 = scmp.ne.s32.totalorder %s38, %s39
      %p53 = scmp.eq.s32.totalorder %s31, 1
      %p54 = por %p52, %p53
      %p56 = scmp.ne.s32.totalorder %s39, %s55
      %p57 = scmp.eq.s32.totalorder %s31, 0
      %p58 = por %p56, %p57
      %s60 = sadd.s32 %s59, 1
      %p63 = scmp.eq.s32.totalorder %s25, 1
      %p64 = scmp.ne.s32.totalorder %s59, %s61
      %p65 = scmp.eq.s32.totalorder %s25, 0
      %p66 = por %p64, %p65
      %p67 = scmp.ne.s32.totalorder %s59, %s61
      %p68 = scmp.eq.s32.totalorder %s30, 1
      %p69 = por %p67, %p68
      %p70 = scmp.ne.s32.totalorder %s61, %s62
      %p71 = scmp.eq.s32.totalorder %s30, 0
      %p72 = por %p70, %p71
      %p73 = scmp.ne.s32.totalorder %s61, %s62
      %p74 = scmp.eq.s32.totalorder %s31, 1
      %p75 = por %p73, %p74
      %p77 = scmp.ne.s32.totalorder %s62, %s76
      %p78 = scmp.eq.s32.totalorder %s31, 0
      %p79 = por %p77, %p78
      %s81 = sadd.s32 %s80, 1
      %p84 = scmp.eq.s32.totalorder %s25, 1
      %p85 = scmp.ne.s32.totalorder %s80, %s82
      %p86 = scmp.eq.s32.totalorder %s25, 0
      %p87 = por %p85, %p86
      %p88 = scmp.ne.s32.totalorder %s80, %s82
      %p89 = scmp.eq.s32.totalorder %s30, 1
      %p90 = por %p88, %p89
      %p91 = scmp.ne.s32.totalorder %s82, %s83
      %p92 = scmp.eq.s32.totalorder %s30, 0
      %p93 = por %p91, %p92
      %p94 = scmp.ne.s32.totalorder %s82, %s83
      %p95 = scmp.eq.s32.totalorder %s31, 1
      %p96 = por %p94, %p95
      %p98 = scmp.ne.s32.totalorder %s83, %s97
      %p99 = scmp.eq.s32.totalorder %s31, 0
      %p100 = por %p98, %p99
      %s102 = sadd.s32 %s101, 1
      %p105 = scmp.eq.s32.totalorder %s25, 1
      %p106 = scmp.ne.s32.totalorder %s101, %s103
      %p107 = scmp.eq.s32.totalorder %s25, 0
      %p108 = por %p106, %p107
      %p109 = scmp.ne.s32.totalorder %s101, %s103
      %p110 = scmp.eq.s32.totalorder %s30, 1
      %p111 = por %p109, %p110
      %p112 = scmp.ne.s32.totalorder %s103, %s104
      %p113 = scmp.eq.s32.totalorder %s30, 0
      %p114 = por %p112, %p113
      %p115 = scmp.ne.s32.totalorder %s103, %s104
      %p116 = scmp.eq.s32.totalorder %s31, 1
      %p117 = por %p115, %p116
      %p119 = scmp.ne.s32.totalorder %s104, %s118
      %p120 = scmp.eq.s32.totalorder %s31, 0
      %p121 = por %p119, %p120
      %s123 = sadd.s32 %s122, 1
      %p126 = scmp.eq.s32.totalorder %s25, 1
      %p127 = scmp.ne.s32.totalorder %s122, %s124
      %p128 = scmp.eq.s32.totalorder %s25, 0
      %p129 = por %p127, %p128
      %p130 = scmp.ne.s32.totalorder %s122, %s124
      %p131 = scmp.eq.s32.totalorder %s30, 1
      %p132 = por %p130, %p131
      %p133 = scmp.ne.s32.totalorder %s124, %s125
      %p134 = scmp.eq.s32.totalorder %s30, 0
      %p135 = por %p133, %p134
      %p136 = scmp.ne.s32.totalorder %s124, %s125
      %p137 = scmp.eq.s32.totalorder %s31, 1
      %p138 = por %p136, %p137
      %p140 = scmp.ne.s32.totalorder %s125, %s139
      %p141 = scmp.eq.s32.totalorder %s31, 0
      %p142 = por %p140, %p141
      %s144 = sadd.s32 %s143, 1
      %p147 = scmp.eq.s32.totalorder %s25, 1
      %p148 = scmp.ne.s32.totalorder %s143, %s145
      %p149 = scmp.eq.s32.totalorder %s25, 0
      %p150 = por %p148, %p149
      %p151 = scmp.ne.s32.totalorder %s143, %s145
      %p152 = scmp.eq.s32.totalorder %s30, 1
      %p153 = por %p151, %p152
      %p154 = scmp.ne.s32.totalorder %s145, %s146
      %p155 = scmp.eq.s32.totalorder %s30, 0
      %p156 = por %p154, %p155
      %p157 = scmp.ne.s32.totalorder %s145, %s146
      %p158 = scmp.eq.s32.totalorder %s31, 1
      %p159 = por %p157, %p158
      %p161 = scmp.ne.s32.totalorder %s146, %s160
      %p162 = scmp.eq.s32.totalorder %s31, 0
      %p163 = por %p161, %p162
      %s165 = sadd.s32 %s164, 1
      %p168 = scmp.eq.s32.totalorder %s25, 1
      %p169 = scmp.ne.s32.totalorder %s164, %s166
      %p170 = scmp.eq.s32.totalorder %s25, 0
      %p171 = por %p169, %p170
      %p172 = scmp.ne.s32.totalorder %s164, %s166
      %p173 = scmp.eq.s32.totalorder %s30, 1
      %p174 = por %p172, %p173
      %p175 = scmp.ne.s32.totalorder %s166, %s167
      %p176 = scmp.eq.s32.totalorder %s30, 0
      %p177 = por %p175, %p176
      %p178 = scmp.ne.s32.totalorder %s166, %s167
      %p179 = scmp.eq.s32.totalorder %s31, 1
      %p180 = por %p178, %p179
      %p182 = scmp.ne.s32.totalorder %s167, %s181
      %p183 = scmp.eq.s32.totalorder %s31, 0
      %p184 = por %p182, %p183
      %s186 = sadd.s32 %s185, 1
      %p189 = scmp.eq.s32.totalorder %s25, 1
      %p190 = scmp.ne.s32.totalorder %s185, %s187
      %p191 = scmp.eq.s32.totalorder %s25, 0
      %p192 = por %p190, %p191
      %p193 = scmp.ne.s32.totalorder %s185, %s187
      %p194 = scmp.eq.s32.totalorder %s30, 1
      %p195 = por %p193, %p194
      %p196 = scmp.ne.s32.totalorder %s187, %s188
      %p197 = scmp.eq.s32.totalorder %s30, 0
      %p198 = por %p196, %p197
      %p199 = scmp.ne.s32.totalorder %s187, %s188
      %p200 = scmp.eq.s32.totalorder %s31, 1
      %p201 = por %p199, %p200
      %p203 = scmp.ne.s32.totalorder %s188, %s202
      %p204 = scmp.eq.s32.totalorder %s31, 0
      %p205 = por %p203, %p204
      %s207 = sadd.s32 %s206, 1
      %p210 = scmp.eq.s32.totalorder %s25, 1
      %p211 = scmp.ne.s32.totalorder %s206, %s208
      %p212 = scmp.eq.s32.totalorder %s25, 0
      %p213 = por %p211, %p212
      %p214 = scmp.ne.s32.totalorder %s206, %s208
      %p215 = scmp.eq.s32.totalorder %s30, 1
      %p216 = por %p214, %p215
      %p217 = scmp.ne.s32.totalorder %s208, %s209
      %p218 = scmp.eq.s32.totalorder %s30, 0
      %p219 = por %p217, %p218
      %p220 = scmp.ne.s32.totalorder %s208, %s209
      %p221 = scmp.eq.s32.totalorder %s31, 1
      %p222 = por %p220, %p221
      %p224 = scmp.ne.s32.totalorder %s209, %s223
      %p225 = scmp.eq.s32.totalorder %s31, 0
      %p226 = por %p224, %p225
      %s228 = sadd.s32 %s227, 1
      %p231 = scmp.eq.s32.totalorder %s25, 1
      %p232 = scmp.ne.s32.totalorder %s227, %s229
      %p233 = scmp.eq.s32.totalorder %s25, 0
      %p234 = por %p232, %p233
      %p235 = scmp.ne.s32.totalorder %s227, %s229
      %p236 = scmp.eq.s32.totalorder %s30, 1
      %p237 = por %p235, %p236
      %p238 = scmp.ne.s32.totalorder %s229, %s230
      %p239 = scmp.eq.s32.totalorder %s30, 0
      %p240 = por %p238, %p239
      %p241 = scmp.ne.s32.totalorder %s229, %s230
      %p242 = scmp.eq.s32.totalorder %s31, 1
      %p243 = por %p241, %p242
      %p245 = scmp.ne.s32.totalorder %s230, %s244
      %p246 = scmp.eq.s32.totalorder %s31, 0
      %p247 = por %p245, %p246
      %s249 = sadd.s32 %s248, 1
      %p252 = scmp.eq.s32.totalorder %s25, 1
      %p253 = scmp.ne.s32.totalorder %s248, %s250
      %p254 = scmp.eq.s32.totalorder %s25, 0
      %p255 = por %p253, %p254
      %p256 = scmp.ne.s32.totalorder %s248, %s250
      %p257 = scmp.eq.s32.totalorder %s30, 1
      %p258 = por %p256, %p257
      %p259 = scmp.ne.s32.totalorder %s250, %s251
      %p260 = scmp.eq.s32.totalorder %s30, 0
      %p261 = por %p259, %p260
      %p262 = scmp.ne.s32.totalorder %s250, %s251
      %p263 = scmp.eq.s32.totalorder %s31, 1
      %p264 = por %p262, %p263
      %p266 = scmp.ne.s32.totalorder %s251, %s265
      %p267 = scmp.eq.s32.totalorder %s31, 0
      %p268 = por %p266, %p267
      %s270 = sadd.s32 %s269, 1
      %p273 = scmp.eq.s32.totalorder %s25, 1
      %p274 = scmp.ne.s32.totalorder %s269, %s271
      %p275 = scmp.eq.s32.totalorder %s25, 0
      %p276 = por %p274, %p275
      %p277 = scmp.ne.s32.totalorder %s269, %s271
      %p278 = scmp.eq.s32.totalorder %s30, 1
      %p279 = por %p277, %p278
      %p280 = scmp.ne.s32.totalorder %s271, %s272
      %p281 = scmp.eq.s32.totalorder %s30, 0
      %p282 = por %p280, %p281
      %p283 = scmp.ne.s32.totalorder %s271, %s272
      %p284 = scmp.eq.s32.totalorder %s31, 1
      %p285 = por %p283, %p284
      %p287 = scmp.ne.s32.totalorder %s272, %s286
      %p288 = scmp.eq.s32.totalorder %s31, 0
      %p289 = por %p287, %p288
      %s291 = sadd.s32 %s290, 1
      %p294 = scmp.eq.s32.totalorder %s25, 1
      %p295 = scmp.ne.s32.totalorder %s290, %s292
      %p296 = scmp.eq.s32.totalorder %s25, 0
      %p297 = por %p295, %p296
      %p298 = scmp.ne.s32.totalorder %s290, %s292
      %p299 = scmp.eq.s32.totalorder %s30, 1
      %p300 = por %p298, %p299
      %p301 = scmp.ne.s32.totalorder %s292, %s293
      %p302 = scmp.eq.s32.totalorder %s30, 0
      %p303 = por %p301, %p302
      %p304 = scmp.ne.s32.totalorder %s292, %s293
      %p305 = scmp.eq.s32.totalorder %s31, 1
      %p306 = por %p304, %p305
      %p308 = scmp.ne.s32.totalorder %s293, %s307
      %p309 = scmp.eq.s32.totalorder %s31, 0
      %p310 = por %p308, %p309
      %s311 = ssub.s32 %s25, %s32
      %p312 = scmp.eq.s32.totalorder %s311, 0
      %s314 = sadd.s32 %s313, 1
      %s315 = scalar_select %p312, %s313, %s314
      %p318 = pneg %p312
      %p319 = scmp.eq.s32.totalorder %s25, 1
      %p320 = por %p318, %p319
      %p321 = scmp.ne.s32.totalorder %s313, %s316
      %p322 = scmp.eq.s32.totalorder %s25, 0
      %p323 = por %p321, %p322
      %p324 = scmp.ne.s32.totalorder %s313, %s316
      %p325 = scmp.eq.s32.totalorder %s30, 1
      %p326 = por %p324, %p325
      %p327 = scmp.ne.s32.totalorder %s316, %s317
      %p328 = scmp.eq.s32.totalorder %s30, 0
      %p329 = por %p327, %p328
      %p330 = scmp.ne.s32.totalorder %s316, %s317
      %p331 = scmp.eq.s32.totalorder %s31, 1
      %p332 = por %p330, %p331
      %p334 = scmp.ne.s32.totalorder %s317, %s333
      %p335 = scmp.eq.s32.totalorder %s31, 0
      %p336 = por %p334, %p335
      %p337 = scmp.le.s32.totalorder 1, %s25
      %p338 = scmp.lt.s32.totalorder %s25, 3
      %p339 = pnand %p337, %p338
      %p340 = pneg %p339
      // Predicated region
      $region9: #{arcnn_forward.2} parent=5 // pred_check
        _
      $region10: #{arcnn_forward.2} parent=5 // pred_check_branch
        %342 = sbr.rel (%p339) target = $region12
      $region11: #{arcnn_forward.2} parent=5 // pred_region
        %s343 = ssub.s32 %s25, 1
        // Predicated region
        $region13: #{arcnn_forward.2} parent=11 // pred_check
          %p344 = pneg %p72
        $region14: #{arcnn_forward.2} parent=11 // pred_check_branch
          %346 = sbr.rel (%p344) target = $region16
        $region15: #{arcnn_forward.2} parent=11 // pred_region
          %s348 = ssub.s32 2304, 2304
          %349 = vsyncadd [#allocation3], %s348
          %s350 = sshll.u32 [#allocation2], 4
          %s351 = int_to_ptr.vmem [resolvable:$true] %s350
          %356 = dma.hbm_to_vmem [thread:$0]  %s1, 2304, %s351, [#allocation3], 256, 256, 16
        $region16: #{arcnn_forward.2} parent=11 // pred_fallthru
          _
        // Predicated region
        $region17: #{arcnn_forward.2} parent=11 // pred_check
          %p357 = pneg %p93
        $region18: #{arcnn_forward.2} parent=11 // pred_check_branch
          %359 = sbr.rel (%p357) target = $region20
        $region19: #{arcnn_forward.2} parent=11 // pred_region
          %s361 = ssub.s32 32, 32
          %362 = vsyncadd [#allocation5], %s361
          %s364 = sshll.u32 [#allocation4], 4
          %s365 = int_to_ptr.vmem [resolvable:$true] %s364
          %367 = dma.hbm_to_vmem [thread:$0]  %s2, 32, %s365, [#allocation5]
        $region20: #{arcnn_forward.2} parent=11 // pred_fallthru
          _
        // Predicated region
        $region21: #{arcnn_forward.2} parent=11 // pred_check
          %p368 = pneg %p114
        $region22: #{arcnn_forward.2} parent=11 // pred_check_branch
          %370 = sbr.rel (%p368) target = $region24
        $region23: #{arcnn_forward.2} parent=11 // pred_region
          %s372 = ssub.s32 256, 256
          %373 = vsyncadd [#allocation5], %s372
          %s374 = sshll.u32 [#allocation6], 4
          %s375 = int_to_ptr.vmem [resolvable:$true] %s374
          %380 = dma.hbm_to_vmem [thread:$0]  %s3, 256, %s375, [#allocation5], 128, 128, 8
        $region24: #{arcnn_forward.2} parent=11 // pred_fallthru
          _
        // Predicated region
        $region25: #{arcnn_forward.2} parent=11 // pred_check
          %p381 = pneg %p135
        $region26: #{arcnn_forward.2} parent=11 // pred_check_branch
          %383 = sbr.rel (%p381) target = $region28
        $region27: #{arcnn_forward.2} parent=11 // pred_region
          %s385 = ssub.s32 2304, 2304
          %386 = vsyncadd [#allocation8], %s385
          %s387 = sshll.u32 [#allocation7], 4
          %s388 = int_to_ptr.vmem [resolvable:$true] %s387
          %393 = dma.hbm_to_vmem [thread:$0]  %s4, 2304, %s388, [#allocation8], 128, 128, 8
        $region28: #{arcnn_forward.2} parent=11 // pred_fallthru
          _
        // Predicated region
        $region29: #{arcnn_forward.2} parent=11 // pred_check
          %p394 = pneg %p156
        $region30: #{arcnn_forward.2} parent=11 // pred_check_branch
          %396 = sbr.rel (%p394) target = $region32
        $region31: #{arcnn_forward.2} parent=11 // pred_region
          %s398 = ssub.s32 2304, 2304
          %399 = vsyncadd [#allocation8], %s398
          %s400 = sshll.u32 [#allocation9], 4
          %s401 = int_to_ptr.vmem [resolvable:$true] %s400
          %406 = dma.hbm_to_vmem [thread:$0]  %s5, 2304, %s401, [#allocation8], 128, 128, 8
        $region32: #{arcnn_forward.2} parent=11 // pred_fallthru
          _
        // Predicated region
        $region33: #{arcnn_forward.2} parent=11 // pred_check
          %p407 = pneg %p177
        $region34: #{arcnn_forward.2} parent=11 // pred_check_branch
          %409 = sbr.rel (%p407) target = $region36
        $region35: #{arcnn_forward.2} parent=11 // pred_region
          _
        $region36: #{arcnn_forward.2} parent=11 // pred_fallthru
          _
        // Predicated region
        $region37: #{arcnn_forward.2} parent=11 // pred_check
          %p410 = pneg %p198
        $region38: #{arcnn_forward.2} parent=11 // pred_check_branch
          %412 = sbr.rel (%p410) target = $region40
        $region39: #{arcnn_forward.2} parent=11 // pred_region
          %s414 = ssub.s32 16, 16
          %415 = vsyncadd [#allocation11], %s414
          %s417 = sshll.u32 [#allocation10], 4
          %s418 = int_to_ptr.vmem [resolvable:$true] %s417
          %420 = dma.hbm_to_vmem [thread:$0]  %s7, 16, %s418, [#allocation11]
        $region40: #{arcnn_forward.2} parent=11 // pred_fallthru
          _
        // Predicated region
        $region41: #{arcnn_forward.2} parent=11 // pred_check
          %p421 = pneg %p219
        $region42: #{arcnn_forward.2} parent=11 // pred_check_branch
          %423 = sbr.rel (%p421) target = $region44
        $region43: #{arcnn_forward.2} parent=11 // pred_region
          %s425 = ssub.s32 15360, 15360
          %426 = vsyncadd [#allocation11], %s425
          %s427 = sshll.u32 [#allocation12], 4
          %s428 = int_to_ptr.vmem [resolvable:$true] %s427
          %433 = dma.hbm_to_vmem [thread:$0]  %s8, 15360, %s428, [#allocation11], 128, 128, 8
        $region44: #{arcnn_forward.2} parent=11 // pred_fallthru
          _
        // Predicated region
        $region45: #{arcnn_forward.2} parent=11 // pred_check
          %p434 = pneg %p240
        $region46: #{arcnn_forward.2} parent=11 // pred_check_branch
          %436 = sbr.rel (%p434) target = $region48
        $region47: #{arcnn_forward.2} parent=11 // pred_region
          %s438 = ssub.s32 64, 64
          %439 = vsyncadd [#allocation14], %s438
          %s440 = sshll.u32 [#allocation13], 4
          %s441 = int_to_ptr.vmem [resolvable:$true] %s440
          %446 = dma.hbm_to_vmem [thread:$0]  %s9, 64, %s441, [#allocation14], 16, 16, 1
        $region48: #{arcnn_forward.2} parent=11 // pred_fallthru
          _
        // Predicated region
        $region49: #{arcnn_forward.2} parent=11 // pred_check
          %p447 = pneg %p261
        $region50: #{arcnn_forward.2} parent=11 // pred_check_branch
          %449 = sbr.rel (%p447) target = $region52
        $region51: #{arcnn_forward.2} parent=11 // pred_region
          %s451 = ssub.s32 128, 128
          %452 = vsyncadd [#allocation14], %s451
          %s454 = sshll.u32 [#allocation15], 4
          %s455 = int_to_ptr.vmem [resolvable:$true] %s454
          %457 = dma.hbm_to_vmem [thread:$0]  %s10, 128, %s455, [#allocation14]
        $region52: #{arcnn_forward.2} parent=11 // pred_fallthru
          _
        // Predicated region
        $region53: #{arcnn_forward.2} parent=11 // pred_check
          %p458 = pneg %p282
        $region54: #{arcnn_forward.2} parent=11 // pred_check_branch
          %460 = sbr.rel (%p458) target = $region56
        $region55: #{arcnn_forward.2} parent=11 // pred_region
          _
        $region56: #{arcnn_forward.2} parent=11 // pred_fallthru
          _
        // Predicated region
        $region57: #{arcnn_forward.2} parent=11 // pred_check
          %p461 = pneg %p303
        $region58: #{arcnn_forward.2} parent=11 // pred_check_branch
          %463 = sbr.rel (%p461) target = $region60
        $region59: #{arcnn_forward.2} parent=11 // pred_region
          %s465 = ssub.s32 16, 16
          %466 = vsyncadd [#allocation17], %s465
          %s468 = sshll.u32 [#allocation16], 4
          %s469 = int_to_ptr.vmem [resolvable:$true] %s468
          %471 = dma.hbm_to_vmem [thread:$0]  %s12, 16, %s469, [#allocation17]
        $region60: #{arcnn_forward.2} parent=11 // pred_fallthru
          _
      $region12: #{arcnn_forward.2} parent=5 // pred_fallthru
        _
      %p472 = scmp.lt.s32.totalorder %s25, 2
      // Predicated region
      $region61: #{arcnn_forward.2} parent=5 // pred_check
        %p473 = pneg %p472
      $region62: #{arcnn_forward.2} parent=5 // pred_check_branch
        %475 = sbr.rel (%p473) target = $region64
      $region63: #{arcnn_forward.2} parent=5 // pred_region
        // Predicated region
        $region65: #{arcnn_forward.2} parent=63 // pred_check
          %p476 = pneg %p45
        $region66: #{arcnn_forward.2} parent=63 // pred_check_branch
          %478 = sbr.rel (%p476) target = $region68
        $region67: #{arcnn_forward.2} parent=63 // pred_region
          %s479 = smul.u32 3, %s25
          %p480 = scmp.lt.s32.totalorder %s479, 5
          %s481 = scalar_select %p480, %s479, 5
          %s482 = smul.addr %s481, 8
          %s483 = scalar_lea.vmem %s0, %s482
          %s484 = smul.u32 3, %s25
        $region68: #{arcnn_forward.2} parent=63 // pred_fallthru
          _
      $region64: #{arcnn_forward.2} parent=5 // pred_fallthru
        _
      %p485 = scmp.le.s32.totalorder 1, %s25
      %p486 = scmp.lt.s32.totalorder %s25, 3
      %p487 = pnand %p485, %p486
      %p488 = pneg %p487
      // Predicated region
      $region69: #{arcnn_forward.2} parent=5 // pred_check
        _
      $region70: #{arcnn_forward.2} parent=5 // pred_check_branch
        %490 = sbr.rel (%p487) target = $region72
      $region71: #{arcnn_forward.2} parent=5 // pred_region
        %s491 = ssub.s32 %s25, 1
        // Predicated region
        $region73: #{arcnn_forward.2} parent=71 // pred_check
          %p492 = pneg %p72
        $region74: #{arcnn_forward.2} parent=71 // pred_check_branch
          %494 = sbr.rel (%p492) target = $region76
        $region75: #{arcnn_forward.2} parent=71 // pred_region
          %495 = dma.done [#allocation3], 2304
        $region76: #{arcnn_forward.2} parent=71 // pred_fallthru
          _
        // Predicated region
        $region77: #{arcnn_forward.2} parent=71 // pred_check
          %p496 = pneg %p93
        $region78: #{arcnn_forward.2} parent=71 // pred_check_branch
          %498 = sbr.rel (%p496) target = $region80
        $region79: #{arcnn_forward.2} parent=71 // pred_region
          %499 = dma.done [#allocation5], 32
        $region80: #{arcnn_forward.2} parent=71 // pred_fallthru
          _
        // Predicated region
        $region81: #{arcnn_forward.2} parent=71 // pred_check
          %p500 = pneg %p114
        $region82: #{arcnn_forward.2} parent=71 // pred_check_branch
          %502 = sbr.rel (%p500) target = $region84
        $region83: #{arcnn_forward.2} parent=71 // pred_region
          %503 = dma.done [#allocation5], 256
        $region84: #{arcnn_forward.2} parent=71 // pred_fallthru
          _
        // Predicated region
        $region85: #{arcnn_forward.2} parent=71 // pred_check
          %p504 = pneg %p135
        $region86: #{arcnn_forward.2} parent=71 // pred_check_branch
          %506 = sbr.rel (%p504) target = $region88
        $region87: #{arcnn_forward.2} parent=71 // pred_region
          %507 = dma.done [#allocation8], 2304
        $region88: #{arcnn_forward.2} parent=71 // pred_fallthru
          _
        // Predicated region
        $region89: #{arcnn_forward.2} parent=71 // pred_check
          %p508 = pneg %p156
        $region90: #{arcnn_forward.2} parent=71 // pred_check_branch
          %510 = sbr.rel (%p508) target = $region92
        $region91: #{arcnn_forward.2} parent=71 // pred_region
          %511 = dma.done [#allocation8], 2304
        $region92: #{arcnn_forward.2} parent=71 // pred_fallthru
          _
        // Predicated region
        $region93: #{arcnn_forward.2} parent=71 // pred_check
          %p512 = pneg %p198
        $region94: #{arcnn_forward.2} parent=71 // pred_check_branch
          %514 = sbr.rel (%p512) target = $region96
        $region95: #{arcnn_forward.2} parent=71 // pred_region
          %515 = dma.done [#allocation11], 16
        $region96: #{arcnn_forward.2} parent=71 // pred_fallthru
          _
        // Predicated region
        $region97: #{arcnn_forward.2} parent=71 // pred_check
          %p516 = pneg %p219
        $region98: #{arcnn_forward.2} parent=71 // pred_check_branch
          %518 = sbr.rel (%p516) target = $region100
        $region99: #{arcnn_forward.2} parent=71 // pred_region
          %519 = dma.done [#allocation11], 15360
        $region100: #{arcnn_forward.2} parent=71 // pred_fallthru
          _
        // Predicated region
        $region101: #{arcnn_forward.2} parent=71 // pred_check
          %p520 = pneg %p240
        $region102: #{arcnn_forward.2} parent=71 // pred_check_branch
          %522 = sbr.rel (%p520) target = $region104
        $region103: #{arcnn_forward.2} parent=71 // pred_region
          %523 = dma.done [#allocation14], 64
        $region104: #{arcnn_forward.2} parent=71 // pred_fallthru
          _
        // Predicated region
        $region105: #{arcnn_forward.2} parent=71 // pred_check
          %p524 = pneg %p261
        $region106: #{arcnn_forward.2} parent=71 // pred_check_branch
          %526 = sbr.rel (%p524) target = $region108
        $region107: #{arcnn_forward.2} parent=71 // pred_region
          %527 = dma.done [#allocation14], 128
        $region108: #{arcnn_forward.2} parent=71 // pred_fallthru
          _
        // Predicated region
        $region109: #{arcnn_forward.2} parent=71 // pred_check
          %p528 = pneg %p303
        $region110: #{arcnn_forward.2} parent=71 // pred_check_branch
          %530 = sbr.rel (%p528) target = $region112
        $region111: #{arcnn_forward.2} parent=71 // pred_region
          %531 = dma.done [#allocation17], 16
        $region112: #{arcnn_forward.2} parent=71 // pred_fallthru
          _
        %s532 = smul.u32 3, %s30
        %p533 = scmp.lt.s32.totalorder %s532, 5
        %s534 = scalar_select %p533, %s532, 5
        %s535 = smul.addr %s534, 8
        %s536 = scalar_lea.vmem %s0, %s535
        %p537 = pneg %p51
        %p538 = pneg %p48
        %p539 = pneg %p72
        %p540 = pneg %p69
        %p541 = pneg %p93
        %p542 = pneg %p90
        %p543 = pneg %p114
        %p544 = pneg %p111
        %p545 = pneg %p135
        %p546 = pneg %p132
        %p547 = pneg %p156
        %p548 = pneg %p153
        %p549 = pneg %p177
        %p550 = pneg %p174
        %p551 = pneg %p198
        %p552 = pneg %p195
        %p553 = pneg %p219
        %p554 = pneg %p216
        %p555 = pneg %p240
        %p556 = pneg %p237
        %p557 = pneg %p261
        %p558 = pneg %p258
        %p559 = pneg %p282
        %p560 = pneg %p279
        %p561 = pneg %p303
        %p562 = pneg %p300
        %p563 = pneg %p329
        %p564 = pneg %p326
        %p565 = scmp.lt.s32.totalorder %s30, 1
        %s566 = scalar_select %p565, %s30, 1
        %s567 = smul.addr %s566, 8
        %s568 = scalar_lea.vmem %s13, %s567
        %s569 = smul.u32 3, %s30
        %p570 = scmp.lt.s32.totalorder %s569, 5
        %s571 = scalar_select %p570, %s569, 5
        %s572 = smul.addr %s571, 8
        %s573 = scalar_lea.vmem %s0, %s572
        %s574 = smul.u32 3, %s30
        %p575 = scmp.lt.s32.totalorder %s30, 1
        %s576 = scalar_select %p575, %s30, 1
        %s577 = smul.addr %s576, 8
        %s578 = scalar_lea.vmem %s13, %s577
        %v579 = vld [vmem:[%s573] sm:$0xff]
        %v580 = vld [vmem:[%s573 + $0x8] sm:$0xff]
        %v581 = vld [vmem:[%s573 + $0x10] sm:$0xff]
        %v582 = vld [vmem:[#allocation4] sm:$0x3]
        %v583 = vrot.slane %v579, 7
        %v584 = vrot.slane %v580, 7
        %v585 = vrot.slane %v581, 7
        %v586 = vlaneseq
        %v587 = vshrl.u32 %v586, 7
        %vm588 = vcmp.lt.s32.totalorder %v587, 1
        %v589 = vsel %vm588, %v584, %v585
        %v590 = vsel %vm588, %v583, %v584
        %v591 = vsel %vm588, %v585, %v583
        %v592 = vld [vmem:[#allocation2] sm:$0xff]
        %v593 = vld [vmem:[#allocation2 + $0x8] sm:$0xff]
        %v594 = vld [vmem:[#allocation2 + $0x10] sm:$0xff]
        %v595 = vld [vmem:[#allocation2 + $0x18] sm:$0xff]
        %v596 = vld [vmem:[#allocation2 + $0x20] sm:$0x3]
        %v597 = vld [vmem:[#allocation2 + $0x28] sm:$0x3]
        %s598 = scalar_lea.vmem [#allocation2], 48
        %v599 = vld [vmem:[%s598] sm:$0xff]
        %v600 = vld [vmem:[%s598 + $0x8] sm:$0xff]
        %v601 = vld [vmem:[%s598 + $0x10] sm:$0xff]
        %v602 = vld [vmem:[%s598 + $0x18] sm:$0xff]
        %v603 = vld [vmem:[%s598 + $0x20] sm:$0x3]
        %v604 = vld [vmem:[%s598 + $0x28] sm:$0x3]
        %vm605 = vcmask 146432
        %v607 = vsel %vm605, %v579, 0
        %v610 = vsel %vm605, %v580, 0
        %v613 = vsel %vm605, %v581, 0
        %vm615 = vcmask 1041408
        %v617 = vsel %vm615, %v603, 0
        %v620 = vsel %vm615, %v604, 0
        %622 = vmatprep.subr.mxu0 %v600
        %623 = vmatpush1.msra.mxu0 %v599
        %624 = vmatprep.subr.mxu0 %v602
        %625 = vmatpush1.msra.mxu0 %v601
        %626 = vmatprep.subr.mxu0 %v620
        %627 = vmatpush1.msra.mxu0 %v617
        %628 = vmatprep.subr.mxu0 0.0
        %629 = vmatpush1.msra.mxu0 0.0
        %630 = vmatprep.subr.mxu0 0.0
        %631 = vmatpush1.msra.mxu0 0.0
        %632 = vmatprep.subr.mxu0 0.0
        %633 = vmatpush1.msra.mxu0 0.0
        %634 = vmatprep.subr.mxu0 0.0
        %635 = vmatpush1.msra.mxu0 0.0
        %636 = vmatprep.subr.mxu0 0.0
        %637 = vmatpush1.msra.mxu0 0.0
        %638 = vmatprep.subr.mxu0 0.0
        %639 = vmatpush1.msra.mxu0 0.0
        %640 = vmatprep.subr.mxu0 0.0
        %641 = vmatpush1.msra.mxu0 0.0
        %642 = vmatprep.subr.mxu0 0.0
        %643 = vmatpush1.msra.mxu0 0.0
        %644 = vmatprep.subr.mxu0 0.0
        %645 = vmatpush1.msra.mxu0 0.0
        %646 = vmatprep.subr.mxu0 0.0
        %647 = vmatpush1.msra.mxu0 0.0
        %648 = vmatprep.subr.mxu0 0.0
        %649 = vmatpush1.msra.mxu0 0.0
        %650 = vmatprep.subr.mxu0 0.0
        %651 = vmatpush1.msra.mxu0 0.0
        %652 = vmatprep.subr.mxu0 0.0
        %653 = vmatpush1.msra.mxu0 0.0
        %654 = vmatprep.subr.mxu0 0.0
        %655 = vmatpush1.msra.mxu0 0.0
        %656 = vmatprep.subr.mxu0 0.0
        %657 = vmatpush1.msra.mxu0 0.0
        %658 = vmatprep.subr.mxu0 0.0
        %659 = vmatpush1.msra.mxu0 0.0
        %660 = vmatprep.subr.mxu0 0.0
        %661 = vmatpush1.msra.mxu0 0.0
        %662 = vmatprep.subr.mxu0 0.0
        %663 = vmatpush1.msra.mxu0 0.0
        %664 = vmatprep.subr.mxu0 0.0
        %665 = vmatpush1.msra.mxu0 0.0
        %666 = vmatprep.subr.mxu0 0.0
        %667 = vmatpush1.msra.mxu0 0.0
        %668 = vmatprep.subr.mxu0 0.0
        %669 = vmatpush1.msra.mxu0 0.0
        %670 = vmatprep.subr.mxu0 0.0
        %671 = vmatpush1.msra.mxu0 0.0
        %672 = vmatprep.subr.mxu0 0.0
        %673 = vmatpush1.msra.mxu0 0.0
        %674 = vmatprep.subr.mxu0 0.0
        %675 = vmatpush1.msra.mxu0 0.0
        %676 = vmatprep.subr.mxu0 0.0
        %677 = vmatpush1.msra.mxu0 0.0
        %678 = vmatprep.subr.mxu0 0.0
        %679 = vmatpush1.msra.mxu0 0.0
        %680 = vmatprep.subr.mxu0 0.0
        %681 = vmatpush1.msra.mxu0 0.0
        %682 = vmatprep.subr.mxu0 0.0
        %683 = vmatpush1.msra.mxu0 0.0
        %684 = vmatprep.subr.mxu0 0.0
        %685 = vmatpush1.msra.mxu0 0.0
        %686 = vmatprep.mubr.f32.mxu0 0.0
        %687 = vmatmul.mubr.f32.gmra.mrb[0].mxu0 %v607
        %v688 = vpop.f32.mrb[0].mxu0
        %v689 = vadd.f32 0.0, %v688
        %v690 = vpop.f32.mrb[0].mxu0
        %v691 = vadd.f32 0.0, %v690
        %692 = vmatprep.mubr.f32.mxu0 0.0
        %693 = vmatmul.mubr.f32.gmra.mrb[0].mxu0 %v610
        %v694 = vpop.f32.mrb[0].mxu0
        %v695 = vadd.f32 0.0, %v694
        %v696 = vpop.f32.mrb[0].mxu0
        %v697 = vadd.f32 0.0, %v696
        %698 = vmatprep.mubr.f32.mxu0 0.0
        %699 = vmatmul.mubr.f32.gmra.mrb[0].mxu0 %v613
        %v700 = vpop.f32.mrb[0].mxu0
        %v701 = vadd.f32 0.0, %v700
        %v702 = vpop.f32.mrb[0].mxu0
        %v703 = vadd.f32 0.0, %v702
        %704 = vdwg.mxu0
        %v706 = vsel %vm605, %v591, 0
        %v709 = vsel %vm605, %v590, 0
        %v712 = vsel %vm605, %v589, 0
        %v715 = vsel %vm615, %v596, 0
        %v718 = vsel %vm615, %v597, 0
        %720 = vmatprep.subr.mxu0 %v593
        %721 = vmatpush1.msra.mxu0 %v592
        %722 = vmatprep.subr.mxu0 %v595
        %723 = vmatpush1.msra.mxu0 %v594
        %724 = vmatprep.subr.mxu0 %v718
        %725 = vmatpush1.msra.mxu0 %v715
        %726 = vmatprep.subr.mxu0 0.0
        %727 = vmatpush1.msra.mxu0 0.0
        %728 = vmatprep.subr.mxu0 0.0
        %729 = vmatpush1.msra.mxu0 0.0
        %730 = vmatprep.subr.mxu0 0.0
        %731 = vmatpush1.msra.mxu0 0.0
        %732 = vmatprep.subr.mxu0 0.0
        %733 = vmatpush1.msra.mxu0 0.0
        %734 = vmatprep.subr.mxu0 0.0
        %735 = vmatpush1.msra.mxu0 0.0
        %736 = vmatprep.subr.mxu0 0.0
        %737 = vmatpush1.msra.mxu0 0.0
        %738 = vmatprep.subr.mxu0 0.0
        %739 = vmatpush1.msra.mxu0 0.0
        %740 = vmatprep.subr.mxu0 0.0
        %741 = vmatpush1.msra.mxu0 0.0
        %742 = vmatprep.subr.mxu0 0.0
        %743 = vmatpush1.msra.mxu0 0.0
        %744 = vmatprep.subr.mxu0 0.0
        %745 = vmatpush1.msra.mxu0 0.0
        %746 = vmatprep.subr.mxu0 0.0
        %747 = vmatpush1.msra.mxu0 0.0
        %748 = vmatprep.subr.mxu0 0.0
        %749 = vmatpush1.msra.mxu0 0.0
        %750 = vmatprep.subr.mxu0 0.0
        %751 = vmatpush1.msra.mxu0 0.0
        %752 = vmatprep.subr.mxu0 0.0
        %753 = vmatpush1.msra.mxu0 0.0
        %754 = vmatprep.subr.mxu0 0.0
        %755 = vmatpush1.msra.mxu0 0.0
        %756 = vmatprep.subr.mxu0 0.0
        %757 = vmatpush1.msra.mxu0 0.0
        %758 = vmatprep.subr.mxu0 0.0
        %759 = vmatpush1.msra.mxu0 0.0
        %760 = vmatprep.subr.mxu0 0.0
        %761 = vmatpush1.msra.mxu0 0.0
        %762 = vmatprep.subr.mxu0 0.0
        %763 = vmatpush1.msra.mxu0 0.0
        %764 = vmatprep.subr.mxu0 0.0
        %765 = vmatpush1.msra.mxu0 0.0
        %766 = vmatprep.subr.mxu0 0.0
        %767 = vmatpush1.msra.mxu0 0.0
        %768 = vmatprep.subr.mxu0 0.0
        %769 = vmatpush1.msra.mxu0 0.0
        %770 = vmatprep.subr.mxu0 0.0
        %771 = vmatpush1.msra.mxu0 0.0
        %772 = vmatprep.subr.mxu0 0.0
        %773 = vmatpush1.msra.mxu0 0.0
        %774 = vmatprep.subr.mxu0 0.0
        %775 = vmatpush1.msra.mxu0 0.0
        %776 = vmatprep.subr.mxu0 0.0
        %777 = vmatpush1.msra.mxu0 0.0
        %778 = vmatprep.subr.mxu0 0.0
        %779 = vmatpush1.msra.mxu0 0.0
        %780 = vmatprep.subr.mxu0 0.0
        %781 = vmatpush1.msra.mxu0 0.0
        %782 = vmatprep.subr.mxu0 0.0
        %783 = vmatpush1.msra.mxu0 0.0
        %784 = vmatprep.mubr.f32.mxu0 0.0
        %785 = vmatmul.mubr.f32.gmra.mrb[0].mxu0 %v706
        %v786 = vpop.f32.mrb[0].mxu0
        %v787 = vadd.f32 %v689, %v786
        %v788 = vpop.f32.mrb[0].mxu0
        %v789 = vadd.f32 %v691, %v788
        %790 = vmatprep.mubr.f32.mxu0 0.0
        %791 = vmatmul.mubr.f32.gmra.mrb[0].mxu0 %v709
        %v792 = vpop.f32.mrb[0].mxu0
        %v793 = vadd.f32 %v695, %v792
        %v794 = vpop.f32.mrb[0].mxu0
        %v795 = vadd.f32 %v697, %v794
        %796 = vmatprep.mubr.f32.mxu0 0.0
        %797 = vmatmul.mubr.f32.gmra.mrb[0].mxu0 %v712
        %v798 = vpop.f32.mrb[0].mxu0
        %v799 = vadd.f32 %v701, %v798
        %v800 = vpop.f32.mrb[0].mxu0
        %v801 = vadd.f32 %v703, %v800
        %802 = vdwg.mxu0
        %v803 = vrot.slane %v579, 1
        %v804 = vrot.slane %v580, 1
        %v805 = vrot.slane %v581, 1
        %vm806 = vcmp.lt.s32.totalorder %v587, 7
        %v807 = vsel %vm806, %v804, %v805
        %v808 = vsel %vm806, %v803, %v804
        %v809 = vsel %vm806, %v805, %v803
        %s810 = scalar_lea.vmem [#allocation2], 96
        %v811 = vld [vmem:[%s810] sm:$0xff]
        %v812 = vld [vmem:[%s810 + $0x8] sm:$0xff]
        %v813 = vld [vmem:[%s810 + $0x10] sm:$0xff]
        %v814 = vld [vmem:[%s810 + $0x18] sm:$0xff]
        %v815 = vld [vmem:[%s810 + $0x20] sm:$0x3]
        %v816 = vld [vmem:[%s810 + $0x28] sm:$0x3]
        %v818 = vsel %vm605, %v808, 0
        %v821 = vsel %vm605, %v807, 0
        %v824 = vsel %vm605, %v809, 0
        %v827 = vsel %vm615, %v815, 0
        %v830 = vsel %vm615, %v816, 0
        %832 = vmatprep.subr.mxu0 %v812
        %833 = vmatpush1.msra.mxu0 %v811
        %834 = vmatprep.subr.mxu0 %v814
        %835 = vmatpush1.msra.mxu0 %v813
        %836 = vmatprep.subr.mxu0 %v830
        %837 = vmatpush1.msra.mxu0 %v827
        %838 = vmatprep.subr.mxu0 0.0
        %839 = vmatpush1.msra.mxu0 0.0
        %840 = vmatprep.subr.mxu0 0.0
        %841 = vmatpush1.msra.mxu0 0.0
        %842 = vmatprep.subr.mxu0 0.0
        %843 = vmatpush1.msra.mxu0 0.0
        %844 = vmatprep.subr.mxu0 0.0
        %845 = vmatpush1.msra.mxu0 0.0
        %846 = vmatprep.subr.mxu0 0.0
        %847 = vmatpush1.msra.mxu0 0.0
        %848 = vmatprep.subr.mxu0 0.0
        %849 = vmatpush1.msra.mxu0 0.0
        %850 = vmatprep.subr.mxu0 0.0
        %851 = vmatpush1.msra.mxu0 0.0
        %852 = vmatprep.subr.mxu0 0.0
        %853 = vmatpush1.msra.mxu0 0.0
        %854 = vmatprep.subr.mxu0 0.0
        %855 = vmatpush1.msra.mxu0 0.0
        %856 = vmatprep.subr.mxu0 0.0
        %857 = vmatpush1.msra.mxu0 0.0
        %858 = vmatprep.subr.mxu0 0.0
        %859 = vmatpush1.msra.mxu0 0.0
        %860 = vmatprep.subr.mxu0 0.0
        %861 = vmatpush1.msra.mxu0 0.0
        %862 = vmatprep.subr.mxu0 0.0
        %863 = vmatpush1.msra.mxu0 0.0
        %864 = vmatprep.subr.mxu0 0.0
        %865 = vmatpush1.msra.mxu0 0.0
        %866 = vmatprep.subr.mxu0 0.0
        %867 = vmatpush1.msra.mxu0 0.0
        %868 = vmatprep.subr.mxu0 0.0
        %869 = vmatpush1.msra.mxu0 0.0
        %870 = vmatprep.subr.mxu0 0.0
        %871 = vmatpush1.msra.mxu0 0.0
        %872 = vmatprep.subr.mxu0 0.0
        %873 = vmatpush1.msra.mxu0 0.0
        %874 = vmatprep.subr.mxu0 0.0
        %875 = vmatpush1.msra.mxu0 0.0
        %876 = vmatprep.subr.mxu0 0.0
        %877 = vmatpush1.msra.mxu0 0.0
        %878 = vmatprep.subr.mxu0 0.0
        %879 = vmatpush1.msra.mxu0 0.0
        %880 = vmatprep.subr.mxu0 0.0
        %881 = vmatpush1.msra.mxu0 0.0
        %882 = vmatprep.subr.mxu0 0.0
        %883 = vmatpush1.msra.mxu0 0.0
        %884 = vmatprep.subr.mxu0 0.0
        %885 = vmatpush1.msra.mxu0 0.0
        %886 = vmatprep.subr.mxu0 0.0
        %887 = vmatpush1.msra.mxu0 0.0
        %888 = vmatprep.subr.mxu0 0.0
        %889 = vmatpush1.msra.mxu0 0.0
        %890 = vmatprep.subr.mxu0 0.0
        %891 = vmatpush1.msra.mxu0 0.0
        %892 = vmatprep.subr.mxu0 0.0
        %893 = vmatpush1.msra.mxu0 0.0
        %894 = vmatprep.subr.mxu0 0.0
        %895 = vmatpush1.msra.mxu0 0.0
        %896 = vmatprep.mubr.f32.mxu0 0.0
        %897 = vmatmul.mubr.f32.gmra.mrb[0].mxu0 %v818
        %v898 = vpop.f32.mrb[0].mxu0
        %v899 = vadd.f32 0.0, %v898
        %v900 = vpop.f32.mrb[0].mxu0
        %v901 = vadd.f32 0.0, %v900
        %902 = vmatprep.mubr.f32.mxu0 0.0
        %903 = vmatmul.mubr.f32.gmra.mrb[0].mxu0 %v821
        %v904 = vpop.f32.mrb[0].mxu0
        %v905 = vadd.f32 0.0, %v904
        %v906 = vpop.f32.mrb[0].mxu0
        %v907 = vadd.f32 0.0, %v906
        %908 = vmatprep.mubr.f32.mxu0 0.0
        %909 = vmatmul.mubr.f32.gmra.mrb[0].mxu0 %v824
        %v910 = vpop.f32.mrb[0].mxu0
        %v911 = vadd.f32 0.0, %v910
        %v912 = vpop.f32.mrb[0].mxu0
        %v913 = vadd.f32 0.0, %v912
        %914 = vdwg.mxu0
        %v915 = vadd.f32 %v787, %v899
        %v916 = vadd.f32 %v789, %v901
        %v917 = vadd.f32 %v793, %v905
        %v918 = vadd.f32 %v795, %v907
        %v919 = vadd.f32 %v799, %v911
        %v920 = vadd.f32 %v801, %v913
        %v922 = vlaneseq
        %v923 = vshrl.u32 %v922, 7
        %v924 = vsub.s32 0, %v923
        %v925 = vrot.slane %v582, %v924
        %v926 = vlaneseq
        %v927 = vshrl.u32 %v926, 7
        %v928 = vsub.s32 1, %v927
        %v929 = vrot.slane %v582, %v928
        %v932 = vadd.f32 %v915, %v925
        %v933 = vadd.f32 %v916, %v929
        %v934 = vadd.f32 %v917, %v925
        %v935 = vadd.f32 %v918, %v929
        %v936 = vadd.f32 %v919, %v925
        %v937 = vadd.f32 %v920, %v929
        %vm938 = vcmp.gt.f32.partialorder %v932, 0.0
        %vm939 = vcmp.gt.f32.partialorder %v933, 0.0
        %vm940 = vcmp.gt.f32.partialorder %v934, 0.0
        %vm941 = vcmp.gt.f32.partialorder %v935, 0.0
        %vm942 = vcmp.gt.f32.partialorder %v936, 0.0
        %vm943 = vcmp.gt.f32.partialorder %v937, 0.0
        %v944 = vmul.f32 %v932, 0.01
        %v945 = vmul.f32 %v933, 0.01
        %v946 = vmul.f32 %v934, 0.01
        %v947 = vmul.f32 %v935, 0.01
        %v948 = vmul.f32 %v936, 0.01
        %v949 = vmul.f32 %v937, 0.01
        %v950 = vsel %vm938, %v932, %v944
        %v951 = vsel %vm939, %v933, %v945
        %v952 = vsel %vm940, %v934, %v946
        %v953 = vsel %vm941, %v935, %v947
        %v954 = vsel %vm942, %v936, %v948
        %v955 = vsel %vm943, %v937, %v949
        %v956 = vrot.slane %v950, 1
        %v957 = vrot.slane %v951, 1
        %v958 = vrot.slane %v952, 1
        %v959 = vrot.slane %v953, 1
        %v960 = vrot.slane %v954, 1
        %v961 = vrot.slane %v955, 1
        %v962 = vsel %vm806, %v958, %v960
        %v963 = vsel %vm806, %v959, %v961
        %v964 = vsel %vm806, %v956, %v958
        %v965 = vsel %vm806, %v957, %v959
        %v966 = vsel %vm806, %v960, %v956
        %v967 = vsel %vm806, %v961, %v957
        %v968 = vmax.f32 %v950, %v964
        %v969 = vmax.f32 %v951, %v965
        %v970 = vmax.f32 %v952, %v962
        %v971 = vmax.f32 %v953, %v963
        %v972 = vmax.f32 %v954, %v966
        %v973 = vmax.f32 %v955, %v967
        %v974 = vld [vmem:[#allocation6] sm:$0xff]
        %v975 = vld [vmem:[#allocation6 + $0x8] sm:$0xff]
        %vm976 = vcmask 195584
        %v978 = vsel %vm976, %v974, 0
        %v981 = vsel %vm976, %v975, 0
        %983 = vmatprep.subr.mxu0 %v969
        %984 = vmatpush1.msra.mxu0 %v968
        %985 = vmatprep.subr.mxu0 %v971
        %986 = vmatpush1.msra.mxu0 %v970
        %987 = vmatprep.subr.mxu0 %v973
        %988 = vmatpush1.msra.mxu0 %v972
        %989 = vmatprep.subr.mxu0 0.0
        %990 = vmatpush1.msra.mxu0 0.0
        %991 = vmatprep.subr.mxu0 0.0
        %992 = vmatpush1.msra.mxu0 0.0
        %993 = vmatprep.subr.mxu0 0.0
        %994 = vmatpush1.msra.mxu0 0.0
        %995 = vmatprep.subr.mxu0 0.0
        %996 = vmatpush1.msra.mxu0 0.0
        %997 = vmatprep.subr.mxu0 0.0
        %998 = vmatpush1.msra.mxu0 0.0
        %999 = vmatprep.subr.mxu0 0.0
        %1000 = vmatpush1.msra.mxu0 0.0
        %1001 = vmatprep.subr.mxu0 0.0
        %1002 = vmatpush1.msra.mxu0 0.0
        %1003 = vmatprep.subr.mxu0 0.0
        %1004 = vmatpush1.msra.mxu0 0.0
        %1005 = vmatprep.subr.mxu0 0.0
        %1006 = vmatpush1.msra.mxu0 0.0
        %1007 = vmatprep.subr.mxu0 0.0
        %1008 = vmatpush1.msra.mxu0 0.0
        %1009 = vmatprep.subr.mxu0 0.0
        %1010 = vmatpush1.msra.mxu0 0.0
        %1011 = vmatprep.subr.mxu0 0.0
        %1012 = vmatpush1.msra.mxu0 0.0
        %1013 = vmatprep.subr.mxu0 0.0
        %1014 = vmatpush1.msra.mxu0 0.0
        %1015 = vmatprep.subr.mxu0 0.0
        %1016 = vmatpush1.msra.mxu0 0.0
        %1017 = vmatprep.subr.mxu0 0.0
        %1018 = vmatpush1.msra.mxu0 0.0
        %1019 = vmatprep.subr.mxu0 0.0
        %1020 = vmatpush1.msra.mxu0 0.0
        %1021 = vmatprep.subr.mxu0 0.0
        %1022 = vmatpush1.msra.mxu0 0.0
        %1023 = vmatprep.subr.mxu0 0.0
        %1024 = vmatpush1.msra.mxu0 0.0
        %1025 = vmatprep.subr.mxu0 0.0
        %1026 = vmatpush1.msra.mxu0 0.0
        %1027 = vmatprep.subr.mxu0 0.0
        %1028 = vmatpush1.msra.mxu0 0.0
        %1029 = vmatprep.subr.mxu0 0.0
        %1030 = vmatpush1.msra.mxu0 0.0
        %1031 = vmatprep.subr.mxu0 0.0
        %1032 = vmatpush1.msra.mxu0 0.0
        %1033 = vmatprep.subr.mxu0 0.0
        %1034 = vmatpush1.msra.mxu0 0.0
        %1035 = vmatprep.subr.mxu0 0.0
        %1036 = vmatpush1.msra.mxu0 0.0
        %1037 = vmatprep.subr.mxu0 0.0
        %1038 = vmatpush1.msra.mxu0 0.0
        %1039 = vmatprep.subr.mxu0 0.0
        %1040 = vmatpush1.msra.mxu0 0.0
        %1041 = vmatprep.subr.mxu0 0.0
        %1042 = vmatpush1.msra.mxu0 0.0
        %1043 = vmatprep.subr.mxu0 0.0
        %1044 = vmatpush1.msra.mxu0 0.0
        %1045 = vmatprep.subr.mxu0 0.0
        %1046 = vmatpush1.msra.mxu0 0.0
        %1047 = vmatprep.mubr.f32.mxu0 0.0
        %1048 = vmatmul.mubr.f32.gmra.mrb[0].mxu0 %v978
        %v1049 = vpop.f32.mrb[0].mxu0
        %v1050 = vadd.f32 0.0, %v1049
        %v1051 = vpop.f32.mrb[0].mxu0
        %v1052 = vadd.f32 0.0, %v1051
        %1053 = vmatprep.mubr.f32.mxu0 0.0
        %1054 = vmatmul.mubr.f32.gmra.mrb[0].mxu0 %v981
        %v1055 = vpop.f32.mrb[0].mxu0
        %v1056 = vadd.f32 0.0, %v1055
        %v1057 = vpop.f32.mrb[0].mxu0
        %v1058 = vadd.f32 0.0, %v1057
        %1059 = vdwg.mxu0
        %v1060 = vld [vmem:[#allocation7] sm:$0xff]
        %v1061 = vld [vmem:[#allocation7 + $0x8] sm:$0xff]
        %v1062 = vld [vmem:[#allocation7 + $0x10] sm:$0xff]
        %v1063 = vld [vmem:[#allocation7 + $0x18] sm:$0xff]
        %v1064 = vld [vmem:[#allocation7 + $0x20] sm:$0xff]
        %v1065 = vld [vmem:[#allocation7 + $0x28] sm:$0xff]
        %v1066 = vld [vmem:[#allocation7 + $0x30] sm:$0xff]
        %v1067 = vld [vmem:[#allocation7 + $0x38] sm:$0xff]
        %v1068 = vld [vmem:[#allocation7 + $0x40] sm:$0xff]
        %v1069 = vld [vmem:[#allocation7 + $0x48] sm:$0xff]
        %v1070 = vld [vmem:[#allocation7 + $0x50] sm:$0xff]
        %v1071 = vld [vmem:[#allocation7 + $0x58] sm:$0xff]
        %v1072 = vld [vmem:[#allocation7 + $0x60] sm:$0xff]
        %v1073 = vld [vmem:[#allocation7 + $0x68] sm:$0xff]
        %v1074 = vld [vmem:[#allocation7 + $0x70] sm:$0xff]
        %v1075 = vld [vmem:[#allocation7 + $0x78] sm:$0xff]
        %v1076 = vld [vmem:[#allocation7 + $0x80] sm:$0xff]
        %v1077 = vld [vmem:[#allocation7 + $0x88] sm:$0xff]
        %vm1078 = vcmask 130048
        %v1080 = vsel %vm1078, %v1052, 0
        %v1083 = vsel %vm1078, %v1058, 0
        %1085 = vmatprep.subr.mxu0 0.0
        %1086 = vmatpush1.msra.mxu0 %v1060
        %1087 = vmatprep.subr.mxu0 0.0
        %1088 = vmatpush1.msra.mxu0 %v1061
        %1089 = vmatprep.subr.mxu0 0.0
        %1090 = vmatpush1.msra.mxu0 %v1062
        %1091 = vmatprep.subr.mxu0 0.0
        %1092 = vmatpush1.msra.mxu0 %v1063
        %1093 = vmatprep.subr.mxu0 0.0
        %1094 = vmatpush1.msra.mxu0 %v1064
        %1095 = vmatprep.subr.mxu0 0.0
        %1096 = vmatpush1.msra.mxu0 %v1065
        %1097 = vmatprep.subr.mxu0 0.0
        %1098 = vmatpush1.msra.mxu0 %v1066
        %1099 = vmatprep.subr.mxu0 0.0
        %1100 = vmatpush1.msra.mxu0 %v1067
        %1101 = vmatprep.subr.mxu0 0.0
        %1102 = vmatpush1.msra.mxu0 %v1068
        %1103 = vmatprep.subr.mxu0 0.0
        %1104 = vmatpush1.msra.mxu0 %v1069
        %1105 = vmatprep.subr.mxu0 0.0
        %1106 = vmatpush1.msra.mxu0 %v1070
        %1107 = vmatprep.subr.mxu0 0.0
        %1108 = vmatpush1.msra.mxu0 %v1071
        %1109 = vmatprep.subr.mxu0 0.0
        %1110 = vmatpush1.msra.mxu0 %v1072
        %1111 = vmatprep.subr.mxu0 0.0
        %1112 = vmatpush1.msra.mxu0 %v1073
        %1113 = vmatprep.subr.mxu0 0.0
        %1114 = vmatpush1.msra.mxu0 %v1074
        %1115 = vmatprep.subr.mxu0 0.0
        %1116 = vmatpush1.msra.mxu0 %v1075
        %1117 = vmatprep.subr.mxu0 0.0
        %1118 = vmatpush1.msra.mxu0 %v1076
        %1119 = vmatprep.subr.mxu0 0.0
        %1120 = vmatpush1.msra.mxu0 %v1077
        %1121 = vmatprep.subr.mxu0 0.0
        %1122 = vmatpush1.msra.mxu0 0.0
        %1123 = vmatprep.subr.mxu0 0.0
        %1124 = vmatpush1.msra.mxu0 0.0
        %1125 = vmatprep.subr.mxu0 0.0
        %1126 = vmatpush1.msra.mxu0 0.0
        %1127 = vmatprep.subr.mxu0 0.0
        %1128 = vmatpush1.msra.mxu0 0.0
        %1129 = vmatprep.subr.mxu0 0.0
        %1130 = vmatpush1.msra.mxu0 0.0
        %1131 = vmatprep.subr.mxu0 0.0
        %1132 = vmatpush1.msra.mxu0 0.0
        %1133 = vmatprep.subr.mxu0 0.0
        %1134 = vmatpush1.msra.mxu0 0.0
        %1135 = vmatprep.subr.mxu0 0.0
        %1136 = vmatpush1.msra.mxu0 0.0
        %1137 = vmatprep.subr.mxu0 0.0
        %1138 = vmatpush1.msra.mxu0 0.0
        %1139 = vmatprep.subr.mxu0 0.0
        %1140 = vmatpush1.msra.mxu0 0.0
        %1141 = vmatprep.subr.mxu0 0.0
        %1142 = vmatpush1.msra.mxu0 0.0
        %1143 = vmatprep.subr.mxu0 0.0
        %1144 = vmatpush1.msra.mxu0 0.0
        %1145 = vmatprep.subr.mxu0 0.0
        %1146 = vmatpush1.msra.mxu0 0.0
        %1147 = vmatprep.subr.mxu0 0.0
        %1148 = vmatpush1.msra.mxu0 0.0
        %1149 = vmatprep.mubr.f32.mxu0 %v1080
        %1150 = vmatmul.mubr.f32.gmra.mrb[0].mxu0 %v1050
        %v1151 = vpop.f32.mrb[0].mxu0
        %v1152 = vadd.f32 0.0, %v1151
        %v1153 = vpop.f32.mrb[0].mxu0
        %1154 = vmatprep.mubr.f32.mxu0 %v1083
        %1155 = vmatmul.mubr.f32.gmra.mrb[0].mxu0 %v1056
        %v1156 = vpop.f32.mrb[0].mxu0
        %v1157 = vadd.f32 0.0, %v1156
        %v1158 = vpop.f32.mrb[0].mxu0
        %1159 = vdwg.mxu0
        %v1160 = vld [vmem:[#allocation9] sm:$0xff]
        %v1161 = vld [vmem:[#allocation9 + $0x8] sm:$0xff]
        %v1162 = vld [vmem:[#allocation9 + $0x10] sm:$0xff]
        %v1163 = vld [vmem:[#allocation9 + $0x18] sm:$0xff]
        %v1164 = vld [vmem:[#allocation9 + $0x20] sm:$0xff]
        %v1165 = vld [vmem:[#allocation9 + $0x28] sm:$0xff]
        %v1166 = vld [vmem:[#allocation9 + $0x30] sm:$0xff]
        %v1167 = vld [vmem:[#allocation9 + $0x38] sm:$0xff]
        %v1168 = vld [vmem:[#allocation9 + $0x40] sm:$0xff]
        %v1169 = vld [vmem:[#allocation9 + $0x48] sm:$0xff]
        %v1170 = vld [vmem:[#allocation9 + $0x50] sm:$0xff]
        %v1171 = vld [vmem:[#allocation9 + $0x58] sm:$0xff]
        %v1172 = vld [vmem:[#allocation9 + $0x60] sm:$0xff]
        %v1173 = vld [vmem:[#allocation9 + $0x68] sm:$0xff]
        %v1174 = vld [vmem:[#allocation9 + $0x70] sm:$0xff]
        %v1175 = vld [vmem:[#allocation9 + $0x78] sm:$0xff]
        %v1176 = vld [vmem:[#allocation9 + $0x80] sm:$0xff]
        %v1177 = vld [vmem:[#allocation9 + $0x88] sm:$0xff]
        %1178 = vmatprep.subr.mxu0 0.0
        %1179 = vmatpush1.msra.mxu0 %v1160
        %1180 = vmatprep.subr.mxu0 0.0
        %1181 = vmatpush1.msra.mxu0 %v1161
        %1182 = vmatprep.subr.mxu0 0.0
        %1183 = vmatpush1.msra.mxu0 %v1162
        %1184 = vmatprep.subr.mxu0 0.0
        %1185 = vmatpush1.msra.mxu0 %v1163
        %1186 = vmatprep.subr.mxu0 0.0
        %1187 = vmatpush1.msra.mxu0 %v1164
        %1188 = vmatprep.subr.mxu0 0.0
        %1189 = vmatpush1.msra.mxu0 %v1165
        %1190 = vmatprep.subr.mxu0 0.0
        %1191 = vmatpush1.msra.mxu0 %v1166
        %1192 = vmatprep.subr.mxu0 0.0
        %1193 = vmatpush1.msra.mxu0 %v1167
        %1194 = vmatprep.subr.mxu0 0.0
        %1195 = vmatpush1.msra.mxu0 %v1168
        %1196 = vmatprep.subr.mxu0 0.0
        %1197 = vmatpush1.msra.mxu0 %v1169
        %1198 = vmatprep.subr.mxu0 0.0
        %1199 = vmatpush1.msra.mxu0 %v1170
        %1200 = vmatprep.subr.mxu0 0.0
        %1201 = vmatpush1.msra.mxu0 %v1171
        %1202 = vmatprep.subr.mxu0 0.0
        %1203 = vmatpush1.msra.mxu0 %v1172
        %1204 = vmatprep.subr.mxu0 0.0
        %1205 = vmatpush1.msra.mxu0 %v1173
        %1206 = vmatprep.subr.mxu0 0.0
        %1207 = vmatpush1.msra.mxu0 %v1174
        %1208 = vmatprep.subr.mxu0 0.0
        %1209 = vmatpush1.msra.mxu0 %v1175
        %1210 = vmatprep.subr.mxu0 0.0
        %1211 = vmatpush1.msra.mxu0 %v1176
        %1212 = vmatprep.subr.mxu0 0.0
        %1213 = vmatpush1.msra.mxu0 %v1177
        %1214 = vmatprep.subr.mxu0 0.0
        %1215 = vmatpush1.msra.mxu0 0.0
        %1216 = vmatprep.subr.mxu0 0.0
        %1217 = vmatpush1.msra.mxu0 0.0
        %1218 = vmatprep.subr.mxu0 0.0
        %1219 = vmatpush1.msra.mxu0 0.0
        %1220 = vmatprep.subr.mxu0 0.0
        %1221 = vmatpush1.msra.mxu0 0.0
        %1222 = vmatprep.subr.mxu0 0.0
        %1223 = vmatpush1.msra.mxu0 0.0
        %1224 = vmatprep.subr.mxu0 0.0
        %1225 = vmatpush1.msra.mxu0 0.0
        %1226 = vmatprep.subr.mxu0 0.0
        %1227 = vmatpush1.msra.mxu0 0.0
        %1228 = vmatprep.subr.mxu0 0.0
        %1229 = vmatpush1.msra.mxu0 0.0
        %1230 = vmatprep.subr.mxu0 0.0
        %1231 = vmatpush1.msra.mxu0 0.0
        %1232 = vmatprep.subr.mxu0 0.0
        %1233 = vmatpush1.msra.mxu0 0.0
        %1234 = vmatprep.subr.mxu0 0.0
        %1235 = vmatpush1.msra.mxu0 0.0
        %1236 = vmatprep.subr.mxu0 0.0
        %1237 = vmatpush1.msra.mxu0 0.0
        %1238 = vmatprep.subr.mxu0 0.0
        %1239 = vmatpush1.msra.mxu0 0.0
        %1240 = vmatprep.subr.mxu0 0.0
        %1241 = vmatpush1.msra.mxu0 0.0
        %1242 = vmatprep.mubr.f32.mxu0 %v1080
        %1243 = vmatmul.mubr.f32.gmra.mrb[0].mxu0 %v1050
        %v1244 = vpop.f32.mrb[0].mxu0
        %v1245 = vadd.f32 0.0, %v1244
        %v1246 = vpop.f32.mrb[0].mxu0
        %1247 = vmatprep.mubr.f32.mxu0 %v1083
        %1248 = vmatmul.mubr.f32.gmra.mrb[0].mxu0 %v1056
        %v1249 = vpop.f32.mrb[0].mxu0
        %v1250 = vadd.f32 0.0, %v1249
        %v1251 = vpop.f32.mrb[0].mxu0
        %1252 = vdwg.mxu0
        %v1253 = vmax.f32 %v1152, %v1245
        %v1254 = vmax.f32 %v1157, %v1250
        %v1255 = vadd.s32 %v587, 8
        %vm1256 = vcmp.ge.s32.totalorder %v587, 1
        %vm1257 = vcmp.ge.s32.totalorder %v1255, 1
        %vm1258 = vcmp.le.s32.totalorder %v587, 8
        %vm1259 = vcmp.le.s32.totalorder %v1255, 8
        %vm1260 = vmand %vm1256, %vm1258
        %vm1261 = vmand %vm1257, %vm1259
        %v1262 = vsel %vm1260, 1, 0
        %v1263 = vsel %vm1261, 1, 0
        %v1264 = vcvt.s32.f32 %v1262
        %v1265 = vcvt.s32.f32 %v1263
        %v1266 = vld [vmem:[#allocation10] sm:$0x1]
        %v1267 = vrot.slane %v1253, 7
        %v1268 = vrot.slane %v1254, 7
        %v1269 = vsel %vm588, %v1267, %v1268
        %v1270 = vsel %vm588, %v1268, %v1267
        %v1271 = vld [vmem:[%s6] sm:$0xff]
        %v1272 = vld [vmem:[%s6 + $0x8] sm:$0xff]
        %v1273 = vld [vmem:[%s6 + $0x10] sm:$0xff]
        %v1274 = vld [vmem:[%s6 + $0x18] sm:$0xff]
        %v1275 = vld [vmem:[%s6 + $0x20] sm:$0xff]
        %v1276 = vld [vmem:[%s6 + $0x28] sm:$0xff]
        %v1277 = vld [vmem:[%s6 + $0x30] sm:$0xff]
        %v1278 = vld [vmem:[%s6 + $0x38] sm:$0xff]
        %v1279 = vld [vmem:[%s6 + $0x40] sm:$0xff]
        %v1280 = vld [vmem:[%s6 + $0x48] sm:$0xff]
        %s1281 = scalar_lea.vmem %s6, 80
        %v1282 = vld [vmem:[%s1281] sm:$0xff]
        %v1283 = vld [vmem:[%s1281 + $0x8] sm:$0xff]
        %v1284 = vld [vmem:[%s1281 + $0x10] sm:$0xff]
        %v1285 = vld [vmem:[%s1281 + $0x18] sm:$0xff]
        %v1286 = vld [vmem:[%s1281 + $0x20] sm:$0xff]
        %v1287 = vld [vmem:[%s1281 + $0x28] sm:$0xff]
        %v1288 = vld [vmem:[%s1281 + $0x30] sm:$0xff]
        %v1289 = vld [vmem:[%s1281 + $0x38] sm:$0xff]
        %v1290 = vld [vmem:[%s1281 + $0x40] sm:$0xff]
        %v1291 = vld [vmem:[%s1281 + $0x48] sm:$0xff]
        %vm1292 = vcmask 654336
        %v1294 = vsel %vm1292, %v1253, 0
        %v1297 = vsel %vm1292, %v1254, 0
        %1299 = vmatprep.subr.mxu0 0.0
        %1300 = vmatpush1.msra.mxu0 %v1282
        %1301 = vmatprep.subr.mxu0 0.0
        %1302 = vmatpush1.msra.mxu0 %v1283
        %1303 = vmatprep.subr.mxu0 0.0
        %1304 = vmatpush1.msra.mxu0 %v1284
        %1305 = vmatprep.subr.mxu0 0.0
        %1306 = vmatpush1.msra.mxu0 %v1285
        %1307 = vmatprep.subr.mxu0 0.0
        %1308 = vmatpush1.msra.mxu0 %v1286
        %1309 = vmatprep.subr.mxu0 0.0
        %1310 = vmatpush1.msra.mxu0 %v1287
        %1311 = vmatprep.subr.mxu0 0.0
        %1312 = vmatpush1.msra.mxu0 %v1288
        %1313 = vmatprep.subr.mxu0 0.0
        %1314 = vmatpush1.msra.mxu0 %v1289
        %1315 = vmatprep.subr.mxu0 0.0
        %1316 = vmatpush1.msra.mxu0 %v1290
        %1317 = vmatprep.subr.mxu0 0.0
        %1318 = vmatpush1.msra.mxu0 %v1291
        %1319 = vmatprep.subr.mxu0 0.0
        %1320 = vmatpush1.msra.mxu0 0.0
        %1321 = vmatprep.subr.mxu0 0.0
        %1322 = vmatpush1.msra.mxu0 0.0
        %1323 = vmatprep.subr.mxu0 0.0
        %1324 = vmatpush1.msra.mxu0 0.0
        %1325 = vmatprep.subr.mxu0 0.0
        %1326 = vmatpush1.msra.mxu0 0.0
        %1327 = vmatprep.subr.mxu0 0.0
        %1328 = vmatpush1.msra.mxu0 0.0
        %1329 = vmatprep.subr.mxu0 0.0
        %1330 = vmatpush1.msra.mxu0 0.0
        %1331 = vmatprep.subr.mxu0 0.0
        %1332 = vmatpush1.msra.mxu0 0.0
        %1333 = vmatprep.subr.mxu0 0.0
        %1334 = vmatpush1.msra.mxu0 0.0
        %1335 = vmatprep.subr.mxu0 0.0
        %1336 = vmatpush1.msra.mxu0 0.0
        %1337 = vmatprep.subr.mxu0 0.0
        %1338 = vmatpush1.msra.mxu0 0.0
        %1339 = vmatprep.subr.mxu0 0.0
        %1340 = vmatpush1.msra.mxu0 0.0
        %1341 = vmatprep.subr.mxu0 0.0
        %1342 = vmatpush1.msra.mxu0 0.0
        %1343 = vmatprep.subr.mxu0 0.0
        %1344 = vmatpush1.msra.mxu0 0.0
        %1345 = vmatprep.subr.mxu0 0.0
        %1346 = vmatpush1.msra.mxu0 0.0
        %1347 = vmatprep.subr.mxu0 0.0
        %1348 = vmatpush1.msra.mxu0 0.0
        %1349 = vmatprep.subr.mxu0 0.0
        %1350 = vmatpush1.msra.mxu0 0.0
        %1351 = vmatprep.subr.mxu0 0.0
        %1352 = vmatpush1.msra.mxu0 0.0
        %1353 = vmatprep.subr.mxu0 0.0
        %1354 = vmatpush1.msra.mxu0 0.0
        %1355 = vmatprep.subr.mxu0 0.0
        %1356 = vmatpush1.msra.mxu0 0.0
        %1357 = vmatprep.subr.mxu0 0.0
        %1358 = vmatpush1.msra.mxu0 0.0
        %1359 = vmatprep.subr.mxu0 0.0
        %1360 = vmatpush1.msra.mxu0 0.0
        %1361 = vmatprep.subr.mxu0 0.0
        %1362 = vmatpush1.msra.mxu0 0.0
        %1363 = vmatprep.mubr.f32.mxu0 0.0
        %1364 = vmatmul.mubr.f32.gmra.mrb[0].mxu0 %v1294
        %v1365 = vpop.f32.mrb[0].mxu0
        %v1366 = vadd.f32 0.0, %v1365
        %v1367 = vpop.f32.mrb[0].mxu0
        %1368 = vmatprep.mubr.f32.mxu0 0.0
        %1369 = vmatmul.mubr.f32.gmra.mrb[0].mxu0 %v1297
        %v1370 = vpop.f32.mrb[0].mxu0
        %v1371 = vadd.f32 0.0, %v1370
        %v1372 = vpop.f32.mrb[0].mxu0
        %1373 = vdwg.mxu0
        %v1375 = vsel %vm1292, %v1270, 0
        %v1378 = vsel %vm1292, %v1269, 0
        %1380 = vmatprep.subr.mxu0 0.0
        %1381 = vmatpush1.msra.mxu0 %v1271
        %1382 = vmatprep.subr.mxu0 0.0
        %1383 = vmatpush1.msra.mxu0 %v1272
        %1384 = vmatprep.subr.mxu0 0.0
        %1385 = vmatpush1.msra.mxu0 %v1273
        %1386 = vmatprep.subr.mxu0 0.0
        %1387 = vmatpush1.msra.mxu0 %v1274
        %1388 = vmatprep.subr.mxu0 0.0
        %1389 = vmatpush1.msra.mxu0 %v1275
        %1390 = vmatprep.subr.mxu0 0.0
        %1391 = vmatpush1.msra.mxu0 %v1276
        %1392 = vmatprep.subr.mxu0 0.0
        %1393 = vmatpush1.msra.mxu0 %v1277
        %1394 = vmatprep.subr.mxu0 0.0
        %1395 = vmatpush1.msra.mxu0 %v1278
        %1396 = vmatprep.subr.mxu0 0.0
        %1397 = vmatpush1.msra.mxu0 %v1279
        %1398 = vmatprep.subr.mxu0 0.0
        %1399 = vmatpush1.msra.mxu0 %v1280
        %1400 = vmatprep.subr.mxu0 0.0
        %1401 = vmatpush1.msra.mxu0 0.0
        %1402 = vmatprep.subr.mxu0 0.0
        %1403 = vmatpush1.msra.mxu0 0.0
        %1404 = vmatprep.subr.mxu0 0.0
        %1405 = vmatpush1.msra.mxu0 0.0
        %1406 = vmatprep.subr.mxu0 0.0
        %1407 = vmatpush1.msra.mxu0 0.0
        %1408 = vmatprep.subr.mxu0 0.0
        %1409 = vmatpush1.msra.mxu0 0.0
        %1410 = vmatprep.subr.mxu0 0.0
        %1411 = vmatpush1.msra.mxu0 0.0
        %1412 = vmatprep.subr.mxu0 0.0
        %1413 = vmatpush1.msra.mxu0 0.0
        %1414 = vmatprep.subr.mxu0 0.0
        %1415 = vmatpush1.msra.mxu0 0.0
        %1416 = vmatprep.subr.mxu0 0.0
        %1417 = vmatpush1.msra.mxu0 0.0
        %1418 = vmatprep.subr.mxu0 0.0
        %1419 = vmatpush1.msra.mxu0 0.0
        %1420 = vmatprep.subr.mxu0 0.0
        %1421 = vmatpush1.msra.mxu0 0.0
        %1422 = vmatprep.subr.mxu0 0.0
        %1423 = vmatpush1.msra.mxu0 0.0
        %1424 = vmatprep.subr.mxu0 0.0
        %1425 = vmatpush1.msra.mxu0 0.0
        %1426 = vmatprep.subr.mxu0 0.0
        %1427 = vmatpush1.msra.mxu0 0.0
        %1428 = vmatprep.subr.mxu0 0.0
        %1429 = vmatpush1.msra.mxu0 0.0
        %1430 = vmatprep.subr.mxu0 0.0
        %1431 = vmatpush1.msra.mxu0 0.0
        %1432 = vmatprep.subr.mxu0 0.0
        %1433 = vmatpush1.msra.mxu0 0.0
        %1434 = vmatprep.subr.mxu0 0.0
        %1435 = vmatpush1.msra.mxu0 0.0
        %1436 = vmatprep.subr.mxu0 0.0
        %1437 = vmatpush1.msra.mxu0 0.0
        %1438 = vmatprep.subr.mxu0 0.0
        %1439 = vmatpush1.msra.mxu0 0.0
        %1440 = vmatprep.subr.mxu0 0.0
        %1441 = vmatpush1.msra.mxu0 0.0
        %1442 = vmatprep.subr.mxu0 0.0
        %1443 = vmatpush1.msra.mxu0 0.0
        %1444 = vmatprep.mubr.f32.mxu0 0.0
        %1445 = vmatmul.mubr.f32.gmra.mrb[0].mxu0 %v1375
        %v1446 = vpop.f32.mrb[0].mxu0
        %v1447 = vadd.f32 %v1366, %v1446
        %v1448 = vpop.f32.mrb[0].mxu0
        %1449 = vmatprep.mubr.f32.mxu0 0.0
        %1450 = vmatmul.mubr.f32.gmra.mrb[0].mxu0 %v1378
        %v1451 = vpop.f32.mrb[0].mxu0
        %v1452 = vadd.f32 %v1371, %v1451
        %v1453 = vpop.f32.mrb[0].mxu0
        %1454 = vdwg.mxu0
        %v1455 = vrot.slane %v1253, 1
        %v1456 = vrot.slane %v1254, 1
        %v1457 = vsel %vm806, %v1455, %v1456
        %v1458 = vsel %vm806, %v1456, %v1455
        %s1459 = scalar_lea.vmem %s6, 160
        %v1460 = vld [vmem:[%s1459] sm:$0xff]
        %v1461 = vld [vmem:[%s1459 + $0x8] sm:$0xff]
        %v1462 = vld [vmem:[%s1459 + $0x10] sm:$0xff]
        %v1463 = vld [vmem:[%s1459 + $0x18] sm:$0xff]
        %v1464 = vld [vmem:[%s1459 + $0x20] sm:$0xff]
        %v1465 = vld [vmem:[%s1459 + $0x28] sm:$0xff]
        %v1466 = vld [vmem:[%s1459 + $0x30] sm:$0xff]
        %v1467 = vld [vmem:[%s1459 + $0x38] sm:$0xff]
        %v1468 = vld [vmem:[%s1459 + $0x40] sm:$0xff]
        %v1469 = vld [vmem:[%s1459 + $0x48] sm:$0xff]
        %v1471 = vsel %vm1292, %v1457, 0
        %v1474 = vsel %vm1292, %v1458, 0
        %1476 = vmatprep.subr.mxu0 0.0
        %1477 = vmatpush1.msra.mxu0 %v1460
        %1478 = vmatprep.subr.mxu0 0.0
        %1479 = vmatpush1.msra.mxu0 %v1461
        %1480 = vmatprep.subr.mxu0 0.0
        %1481 = vmatpush1.msra.mxu0 %v1462
        %1482 = vmatprep.subr.mxu0 0.0
        %1483 = vmatpush1.msra.mxu0 %v1463
        %1484 = vmatprep.subr.mxu0 0.0
        %1485 = vmatpush1.msra.mxu0 %v1464
        %1486 = vmatprep.subr.mxu0 0.0
        %1487 = vmatpush1.msra.mxu0 %v1465
        %1488 = vmatprep.subr.mxu0 0.0
        %1489 = vmatpush1.msra.mxu0 %v1466
        %1490 = vmatprep.subr.mxu0 0.0
        %1491 = vmatpush1.msra.mxu0 %v1467
        %1492 = vmatprep.subr.mxu0 0.0
        %1493 = vmatpush1.msra.mxu0 %v1468
        %1494 = vmatprep.subr.mxu0 0.0
        %1495 = vmatpush1.msra.mxu0 %v1469
        %1496 = vmatprep.subr.mxu0 0.0
        %1497 = vmatpush1.msra.mxu0 0.0
        %1498 = vmatprep.subr.mxu0 0.0
        %1499 = vmatpush1.msra.mxu0 0.0
        %1500 = vmatprep.subr.mxu0 0.0
        %1501 = vmatpush1.msra.mxu0 0.0
        %1502 = vmatprep.subr.mxu0 0.0
        %1503 = vmatpush1.msra.mxu0 0.0
        %1504 = vmatprep.subr.mxu0 0.0
        %1505 = vmatpush1.msra.mxu0 0.0
        %1506 = vmatprep.subr.mxu0 0.0
        %1507 = vmatpush1.msra.mxu0 0.0
        %1508 = vmatprep.subr.mxu0 0.0
        %1509 = vmatpush1.msra.mxu0 0.0
        %1510 = vmatprep.subr.mxu0 0.0
        %1511 = vmatpush1.msra.mxu0 0.0
        %1512 = vmatprep.subr.mxu0 0.0
        %1513 = vmatpush1.msra.mxu0 0.0
        %1514 = vmatprep.subr.mxu0 0.0
        %1515 = vmatpush1.msra.mxu0 0.0
        %1516 = vmatprep.subr.mxu0 0.0
        %1517 = vmatpush1.msra.mxu0 0.0
        %1518 = vmatprep.subr.mxu0 0.0
        %1519 = vmatpush1.msra.mxu0 0.0
        %1520 = vmatprep.subr.mxu0 0.0
        %1521 = vmatpush1.msra.mxu0 0.0
        %1522 = vmatprep.subr.mxu0 0.0
        %1523 = vmatpush1.msra.mxu0 0.0
        %1524 = vmatprep.subr.mxu0 0.0
        %1525 = vmatpush1.msra.mxu0 0.0
        %1526 = vmatprep.subr.mxu0 0.0
        %1527 = vmatpush1.msra.mxu0 0.0
        %1528 = vmatprep.subr.mxu0 0.0
        %1529 = vmatpush1.msra.mxu0 0.0
        %1530 = vmatprep.subr.mxu0 0.0
        %1531 = vmatpush1.msra.mxu0 0.0
        %1532 = vmatprep.subr.mxu0 0.0
        %1533 = vmatpush1.msra.mxu0 0.0
        %1534 = vmatprep.subr.mxu0 0.0
        %1535 = vmatpush1.msra.mxu0 0.0
        %1536 = vmatprep.subr.mxu0 0.0
        %1537 = vmatpush1.msra.mxu0 0.0
        %1538 = vmatprep.subr.mxu0 0.0
        %1539 = vmatpush1.msra.mxu0 0.0
        %1540 = vmatprep.mubr.f32.mxu0 0.0
        %1541 = vmatmul.mubr.f32.gmra.mrb[0].mxu0 %v1471
        %v1542 = vpop.f32.mrb[0].mxu0
        %v1543 = vadd.f32 0.0, %v1542
        %v1544 = vpop.f32.mrb[0].mxu0
        %1545 = vmatprep.mubr.f32.mxu0 0.0
        %1546 = vmatmul.mubr.f32.gmra.mrb[0].mxu0 %v1474
        %v1547 = vpop.f32.mrb[0].mxu0
        %v1548 = vadd.f32 0.0, %v1547
        %v1549 = vpop.f32.mrb[0].mxu0
        %1550 = vdwg.mxu0
        %v1551 = vadd.f32 %v1447, %v1543
        %v1552 = vadd.f32 %v1452, %v1548
        %v1554 = vlaneseq
        %v1555 = vshrl.u32 %v1554, 7
        %v1556 = vsub.s32 0, %v1555
        %v1557 = vrot.slane %v1266, %v1556
        %v1559 = vadd.f32 %v1551, %v1557
        %v1560 = vadd.f32 %v1552, %v1557
        %vm1561 = vcmp.gt.f32.partialorder %v1559, 0.0
        %vm1562 = vcmp.gt.f32.partialorder %v1560, 0.0
        %v1563 = vmul.f32 %v1559, 0.01
        %v1564 = vmul.f32 %v1560, 0.01
        %v1565 = vsel %vm1561, %v1559, %v1563
        %v1566 = vsel %vm1562, %v1560, %v1564
        %v1567 = vmul.f32 %v1565, %v1264
        %v1568 = vmul.f32 %v1566, %v1265
        %v1569 = vld [vmem:[#allocation13] sm:$0x1]
        %v1570 = vrot.slane %v1567, 7
        %v1571 = vrot.slane %v1568, 7
        %v1572 = vsel %vm588, %v1570, %v1571
        %v1573 = vsel %vm588, %v1571, %v1570
        %v1574 = vld [vmem:[#allocation12] sm:$0xff]
        %v1575 = vld [vmem:[#allocation12 + $0x8] sm:$0xff]
        %v1576 = vld [vmem:[#allocation12 + $0x10] sm:$0xff]
        %v1577 = vld [vmem:[#allocation12 + $0x18] sm:$0xff]
        %v1578 = vld [vmem:[#allocation12 + $0x20] sm:$0xff]
        %v1579 = vld [vmem:[#allocation12 + $0x28] sm:$0xff]
        %v1580 = vld [vmem:[#allocation12 + $0x30] sm:$0xff]
        %v1581 = vld [vmem:[#allocation12 + $0x38] sm:$0xff]
        %v1582 = vld [vmem:[#allocation12 + $0x40] sm:$0xff]
        %v1583 = vld [vmem:[#allocation12 + $0x48] sm:$0xff]
        %s1584 = scalar_lea.vmem [#allocation12], 80
        %v1585 = vld [vmem:[%s1584] sm:$0xff]
        %v1586 = vld [vmem:[%s1584 + $0x8] sm:$0xff]
        %v1587 = vld [vmem:[%s1584 + $0x10] sm:$0xff]
        %v1588 = vld [vmem:[%s1584 + $0x18] sm:$0xff]
        %v1589 = vld [vmem:[%s1584 + $0x20] sm:$0xff]
        %v1590 = vld [vmem:[%s1584 + $0x28] sm:$0xff]
        %v1591 = vld [vmem:[%s1584 + $0x30] sm:$0xff]
        %v1592 = vld [vmem:[%s1584 + $0x38] sm:$0xff]
        %v1593 = vld [vmem:[%s1584 + $0x40] sm:$0xff]
        %v1594 = vld [vmem:[%s1584 + $0x48] sm:$0xff]
        %v1596 = vsel %vm1292, %v1567, 0
        %v1599 = vsel %vm1292, %v1568, 0
        %1601 = vmatprep.subr.mxu0 0.0
        %1602 = vmatpush1.msra.mxu0 %v1585
        %1603 = vmatprep.subr.mxu0 0.0
        %1604 = vmatpush1.msra.mxu0 %v1586
        %1605 = vmatprep.subr.mxu0 0.0
        %1606 = vmatpush1.msra.mxu0 %v1587
        %1607 = vmatprep.subr.mxu0 0.0
        %1608 = vmatpush1.msra.mxu0 %v1588
        %1609 = vmatprep.subr.mxu0 0.0
        %1610 = vmatpush1.msra.mxu0 %v1589
        %1611 = vmatprep.subr.mxu0 0.0
        %1612 = vmatpush1.msra.mxu0 %v1590
        %1613 = vmatprep.subr.mxu0 0.0
        %1614 = vmatpush1.msra.mxu0 %v1591
        %1615 = vmatprep.subr.mxu0 0.0
        %1616 = vmatpush1.msra.mxu0 %v1592
        %1617 = vmatprep.subr.mxu0 0.0
        %1618 = vmatpush1.msra.mxu0 %v1593
        %1619 = vmatprep.subr.mxu0 0.0
        %1620 = vmatpush1.msra.mxu0 %v1594
        %1621 = vmatprep.subr.mxu0 0.0
        %1622 = vmatpush1.msra.mxu0 0.0
        %1623 = vmatprep.subr.mxu0 0.0
        %1624 = vmatpush1.msra.mxu0 0.0
        %1625 = vmatprep.subr.mxu0 0.0
        %1626 = vmatpush1.msra.mxu0 0.0
        %1627 = vmatprep.subr.mxu0 0.0
        %1628 = vmatpush1.msra.mxu0 0.0
        %1629 = vmatprep.subr.mxu0 0.0
        %1630 = vmatpush1.msra.mxu0 0.0
        %1631 = vmatprep.subr.mxu0 0.0
        %1632 = vmatpush1.msra.mxu0 0.0
        %1633 = vmatprep.subr.mxu0 0.0
        %1634 = vmatpush1.msra.mxu0 0.0
        %1635 = vmatprep.subr.mxu0 0.0
        %1636 = vmatpush1.msra.mxu0 0.0
        %1637 = vmatprep.subr.mxu0 0.0
        %1638 = vmatpush1.msra.mxu0 0.0
        %1639 = vmatprep.subr.mxu0 0.0
        %1640 = vmatpush1.msra.mxu0 0.0
        %1641 = vmatprep.subr.mxu0 0.0
        %1642 = vmatpush1.msra.mxu0 0.0
        %1643 = vmatprep.subr.mxu0 0.0
        %1644 = vmatpush1.msra.mxu0 0.0
        %1645 = vmatprep.subr.mxu0 0.0
        %1646 = vmatpush1.msra.mxu0 0.0
        %1647 = vmatprep.subr.mxu0 0.0
        %1648 = vmatpush1.msra.mxu0 0.0
        %1649 = vmatprep.subr.mxu0 0.0
        %1650 = vmatpush1.msra.mxu0 0.0
        %1651 = vmatprep.subr.mxu0 0.0
        %1652 = vmatpush1.msra.mxu0 0.0
        %1653 = vmatprep.subr.mxu0 0.0
        %1654 = vmatpush1.msra.mxu0 0.0
        %1655 = vmatprep.subr.mxu0 0.0
        %1656 = vmatpush1.msra.mxu0 0.0
        %1657 = vmatprep.subr.mxu0 0.0
        %1658 = vmatpush1.msra.mxu0 0.0
        %1659 = vmatprep.subr.mxu0 0.0
        %1660 = vmatpush1.msra.mxu0 0.0
        %1661 = vmatprep.subr.mxu0 0.0
        %1662 = vmatpush1.msra.mxu0 0.0
        %1663 = vmatprep.subr.mxu0 0.0
        %1664 = vmatpush1.msra.mxu0 0.0
        %1665 = vmatprep.mubr.f32.mxu0 0.0
        %1666 = vmatmul.mubr.f32.gmra.mrb[0].mxu0 %v1596
        %v1667 = vpop.f32.mrb[0].mxu0
        %v1668 = vadd.f32 0.0, %v1667
        %v1669 = vpop.f32.mrb[0].mxu0
        %1670 = vmatprep.mubr.f32.mxu0 0.0
        %1671 = vmatmul.mubr.f32.gmra.mrb[0].mxu0 %v1599
        %v1672 = vpop.f32.mrb[0].mxu0
        %v1673 = vadd.f32 0.0, %v1672
        %v1674 = vpop.f32.mrb[0].mxu0
        %1675 = vdwg.mxu0
        %v1677 = vsel %vm1292, %v1573, 0
        %v1680 = vsel %vm1292, %v1572, 0
        %1682 = vmatprep.subr.mxu0 0.0
        %1683 = vmatpush1.msra.mxu0 %v1574
        %1684 = vmatprep.subr.mxu0 0.0
        %1685 = vmatpush1.msra.mxu0 %v1575
        %1686 = vmatprep.subr.mxu0 0.0
        %1687 = vmatpush1.msra.mxu0 %v1576
        %1688 = vmatprep.subr.mxu0 0.0
        %1689 = vmatpush1.msra.mxu0 %v1577
        %1690 = vmatprep.subr.mxu0 0.0
        %1691 = vmatpush1.msra.mxu0 %v1578
        %1692 = vmatprep.subr.mxu0 0.0
        %1693 = vmatpush1.msra.mxu0 %v1579
        %1694 = vmatprep.subr.mxu0 0.0
        %1695 = vmatpush1.msra.mxu0 %v1580
        %1696 = vmatprep.subr.mxu0 0.0
        %1697 = vmatpush1.msra.mxu0 %v1581
        %1698 = vmatprep.subr.mxu0 0.0
        %1699 = vmatpush1.msra.mxu0 %v1582
        %1700 = vmatprep.subr.mxu0 0.0
        %1701 = vmatpush1.msra.mxu0 %v1583
        %1702 = vmatprep.subr.mxu0 0.0
        %1703 = vmatpush1.msra.mxu0 0.0
        %1704 = vmatprep.subr.mxu0 0.0
        %1705 = vmatpush1.msra.mxu0 0.0
        %1706 = vmatprep.subr.mxu0 0.0
        %1707 = vmatpush1.msra.mxu0 0.0
        %1708 = vmatprep.subr.mxu0 0.0
        %1709 = vmatpush1.msra.mxu0 0.0
        %1710 = vmatprep.subr.mxu0 0.0
        %1711 = vmatpush1.msra.mxu0 0.0
        %1712 = vmatprep.subr.mxu0 0.0
        %1713 = vmatpush1.msra.mxu0 0.0
        %1714 = vmatprep.subr.mxu0 0.0
        %1715 = vmatpush1.msra.mxu0 0.0
        %1716 = vmatprep.subr.mxu0 0.0
        %1717 = vmatpush1.msra.mxu0 0.0
        %1718 = vmatprep.subr.mxu0 0.0
        %1719 = vmatpush1.msra.mxu0 0.0
        %1720 = vmatprep.subr.mxu0 0.0
        %1721 = vmatpush1.msra.mxu0 0.0
        %1722 = vmatprep.subr.mxu0 0.0
        %1723 = vmatpush1.msra.mxu0 0.0
        %1724 = vmatprep.subr.mxu0 0.0
        %1725 = vmatpush1.msra.mxu0 0.0
        %1726 = vmatprep.subr.mxu0 0.0
        %1727 = vmatpush1.msra.mxu0 0.0
        %1728 = vmatprep.subr.mxu0 0.0
        %1729 = vmatpush1.msra.mxu0 0.0
        %1730 = vmatprep.subr.mxu0 0.0
        %1731 = vmatpush1.msra.mxu0 0.0
        %1732 = vmatprep.subr.mxu0 0.0
        %1733 = vmatpush1.msra.mxu0 0.0
        %1734 = vmatprep.subr.mxu0 0.0
        %1735 = vmatpush1.msra.mxu0 0.0
        %1736 = vmatprep.subr.mxu0 0.0
        %1737 = vmatpush1.msra.mxu0 0.0
        %1738 = vmatprep.subr.mxu0 0.0
        %1739 = vmatpush1.msra.mxu0 0.0
        %1740 = vmatprep.subr.mxu0 0.0
        %1741 = vmatpush1.msra.mxu0 0.0
        %1742 = vmatprep.subr.mxu0 0.0
        %1743 = vmatpush1.msra.mxu0 0.0
        %1744 = vmatprep.subr.mxu0 0.0
        %1745 = vmatpush1.msra.mxu0 0.0
        %1746 = vmatprep.mubr.f32.mxu0 0.0
        %1747 = vmatmul.mubr.f32.gmra.mrb[0].mxu0 %v1677
        %v1748 = vpop.f32.mrb[0].mxu0
        %v1749 = vadd.f32 %v1668, %v1748
        %v1750 = vpop.f32.mrb[0].mxu0
        %1751 = vmatprep.mubr.f32.mxu0 0.0
        %1752 = vmatmul.mubr.f32.gmra.mrb[0].mxu0 %v1680
        %v1753 = vpop.f32.mrb[0].mxu0
        %v1754 = vadd.f32 %v1673, %v1753
        %v1755 = vpop.f32.mrb[0].mxu0
        %1756 = vdwg.mxu0
        %v1757 = vrot.slane %v1567, 1
        %v1758 = vrot.slane %v1568, 1
        %v1759 = vsel %vm806, %v1757, %v1758
        %v1760 = vsel %vm806, %v1758, %v1757
        %s1761 = scalar_lea.vmem [#allocation12], 160
        %v1762 = vld [vmem:[%s1761] sm:$0xff]
        %v1763 = vld [vmem:[%s1761 + $0x8] sm:$0xff]
        %v1764 = vld [vmem:[%s1761 + $0x10] sm:$0xff]
        %v1765 = vld [vmem:[%s1761 + $0x18] sm:$0xff]
        %v1766 = vld [vmem:[%s1761 + $0x20] sm:$0xff]
        %v1767 = vld [vmem:[%s1761 + $0x28] sm:$0xff]
        %v1768 = vld [vmem:[%s1761 + $0x30] sm:$0xff]
        %v1769 = vld [vmem:[%s1761 + $0x38] sm:$0xff]
        %v1770 = vld [vmem:[%s1761 + $0x40] sm:$0xff]
        %v1771 = vld [vmem:[%s1761 + $0x48] sm:$0xff]
        %v1773 = vsel %vm1292, %v1759, 0
        %v1776 = vsel %vm1292, %v1760, 0
        %1778 = vmatprep.subr.mxu0 0.0
        %1779 = vmatpush1.msra.mxu0 %v1762
        %1780 = vmatprep.subr.mxu0 0.0
        %1781 = vmatpush1.msra.mxu0 %v1763
        %1782 = vmatprep.subr.mxu0 0.0
        %1783 = vmatpush1.msra.mxu0 %v1764
        %1784 = vmatprep.subr.mxu0 0.0
        %1785 = vmatpush1.msra.mxu0 %v1765
        %1786 = vmatprep.subr.mxu0 0.0
        %1787 = vmatpush1.msra.mxu0 %v1766
        %1788 = vmatprep.subr.mxu0 0.0
        %1789 = vmatpush1.msra.mxu0 %v1767
        %1790 = vmatprep.subr.mxu0 0.0
        %1791 = vmatpush1.msra.mxu0 %v1768
        %1792 = vmatprep.subr.mxu0 0.0
        %1793 = vmatpush1.msra.mxu0 %v1769
        %1794 = vmatprep.subr.mxu0 0.0
        %1795 = vmatpush1.msra.mxu0 %v1770
        %1796 = vmatprep.subr.mxu0 0.0
        %1797 = vmatpush1.msra.mxu0 %v1771
        %1798 = vmatprep.subr.mxu0 0.0
        %1799 = vmatpush1.msra.mxu0 0.0
        %1800 = vmatprep.subr.mxu0 0.0
        %1801 = vmatpush1.msra.mxu0 0.0
        %1802 = vmatprep.subr.mxu0 0.0
        %1803 = vmatpush1.msra.mxu0 0.0
        %1804 = vmatprep.subr.mxu0 0.0
        %1805 = vmatpush1.msra.mxu0 0.0
        %1806 = vmatprep.subr.mxu0 0.0
        %1807 = vmatpush1.msra.mxu0 0.0
        %1808 = vmatprep.subr.mxu0 0.0
        %1809 = vmatpush1.msra.mxu0 0.0
        %1810 = vmatprep.subr.mxu0 0.0
        %1811 = vmatpush1.msra.mxu0 0.0
        %1812 = vmatprep.subr.mxu0 0.0
        %1813 = vmatpush1.msra.mxu0 0.0
        %1814 = vmatprep.subr.mxu0 0.0
        %1815 = vmatpush1.msra.mxu0 0.0
        %1816 = vmatprep.subr.mxu0 0.0
        %1817 = vmatpush1.msra.mxu0 0.0
        %1818 = vmatprep.subr.mxu0 0.0
        %1819 = vmatpush1.msra.mxu0 0.0
        %1820 = vmatprep.subr.mxu0 0.0
        %1821 = vmatpush1.msra.mxu0 0.0
        %1822 = vmatprep.subr.mxu0 0.0
        %1823 = vmatpush1.msra.mxu0 0.0
        %1824 = vmatprep.subr.mxu0 0.0
        %1825 = vmatpush1.msra.mxu0 0.0
        %1826 = vmatprep.subr.mxu0 0.0
        %1827 = vmatpush1.msra.mxu0 0.0
        %1828 = vmatprep.subr.mxu0 0.0
        %1829 = vmatpush1.msra.mxu0 0.0
        %1830 = vmatprep.subr.mxu0 0.0
        %1831 = vmatpush1.msra.mxu0 0.0
        %1832 = vmatprep.subr.mxu0 0.0
        %1833 = vmatpush1.msra.mxu0 0.0
        %1834 = vmatprep.subr.mxu0 0.0
        %1835 = vmatpush1.msra.mxu0 0.0
        %1836 = vmatprep.subr.mxu0 0.0
        %1837 = vmatpush1.msra.mxu0 0.0
        %1838 = vmatprep.subr.mxu0 0.0
        %1839 = vmatpush1.msra.mxu0 0.0
        %1840 = vmatprep.subr.mxu0 0.0
        %1841 = vmatpush1.msra.mxu0 0.0
        %1842 = vmatprep.mubr.f32.mxu0 0.0
        %1843 = vmatmul.mubr.f32.gmra.mrb[0].mxu0 %v1773
        %v1844 = vpop.f32.mrb[0].mxu0
        %v1845 = vadd.f32 0.0, %v1844
        %v1846 = vpop.f32.mrb[0].mxu0
        %1847 = vmatprep.mubr.f32.mxu0 0.0
        %1848 = vmatmul.mubr.f32.gmra.mrb[0].mxu0 %v1776
        %v1849 = vpop.f32.mrb[0].mxu0
        %v1850 = vadd.f32 0.0, %v1849
        %v1851 = vpop.f32.mrb[0].mxu0
        %1852 = vdwg.mxu0
        %v1853 = vadd.f32 %v1749, %v1845
        %v1854 = vadd.f32 %v1754, %v1850
        %v1856 = vlaneseq
        %v1857 = vshrl.u32 %v1856, 7
        %v1858 = vsub.s32 0, %v1857
        %v1859 = vrot.slane %v1569, %v1858
        %v1861 = vadd.f32 %v1853, %v1859
        %v1862 = vadd.f32 %v1854, %v1859
        %vm1863 = vcmp.gt.f32.partialorder %v1861, 0.0
        %vm1864 = vcmp.gt.f32.partialorder %v1862, 0.0
        %v1865 = vmul.f32 %v1861, 0.01
        %v1866 = vmul.f32 %v1862, 0.01
        %v1867 = vsel %vm1863, %v1861, %v1865
        %v1868 = vsel %vm1864, %v1862, %v1866
        %v1869 = vmul.f32 %v1867, %v1264
        %v1870 = vmul.f32 %v1868, %v1265
        %s1871 = scalar_lea.vmem [#allocation13], 1
        %v1872 = vld [vmem:[%s1871] sm:$0x1]
        %v1873 = vrot.slane %v1869, 7
        %v1874 = vrot.slane %v1870, 7
        %v1875 = vsel %vm588, %v1873, %v1874
        %v1876 = vsel %vm588, %v1874, %v1873
        %s1877 = scalar_lea.vmem [#allocation12], 240
        %v1878 = vld [vmem:[%s1877] sm:$0xff]
        %v1879 = vld [vmem:[%s1877 + $0x8] sm:$0xff]
        %v1880 = vld [vmem:[%s1877 + $0x10] sm:$0xff]
        %v1881 = vld [vmem:[%s1877 + $0x18] sm:$0xff]
        %v1882 = vld [vmem:[%s1877 + $0x20] sm:$0xff]
        %v1883 = vld [vmem:[%s1877 + $0x28] sm:$0xff]
        %v1884 = vld [vmem:[%s1877 + $0x30] sm:$0xff]
        %v1885 = vld [vmem:[%s1877 + $0x38] sm:$0xff]
        %v1886 = vld [vmem:[%s1877 + $0x40] sm:$0xff]
        %v1887 = vld [vmem:[%s1877 + $0x48] sm:$0xff]
        %s1888 = scalar_lea.vmem [#allocation12], 320
        %v1889 = vld [vmem:[%s1888] sm:$0xff]
        %v1890 = vld [vmem:[%s1888 + $0x8] sm:$0xff]
        %v1891 = vld [vmem:[%s1888 + $0x10] sm:$0xff]
        %v1892 = vld [vmem:[%s1888 + $0x18] sm:$0xff]
        %v1893 = vld [vmem:[%s1888 + $0x20] sm:$0xff]
        %v1894 = vld [vmem:[%s1888 + $0x28] sm:$0xff]
        %v1895 = vld [vmem:[%s1888 + $0x30] sm:$0xff]
        %v1896 = vld [vmem:[%s1888 + $0x38] sm:$0xff]
        %v1897 = vld [vmem:[%s1888 + $0x40] sm:$0xff]
        %v1898 = vld [vmem:[%s1888 + $0x48] sm:$0xff]
        %v1900 = vsel %vm1292, %v1869, 0
        %v1903 = vsel %vm1292, %v1870, 0
        %1905 = vmatprep.subr.mxu0 0.0
        %1906 = vmatpush1.msra.mxu0 %v1889
        %1907 = vmatprep.subr.mxu0 0.0
        %1908 = vmatpush1.msra.mxu0 %v1890
        %1909 = vmatprep.subr.mxu0 0.0
        %1910 = vmatpush1.msra.mxu0 %v1891
        %1911 = vmatprep.subr.mxu0 0.0
        %1912 = vmatpush1.msra.mxu0 %v1892
        %1913 = vmatprep.subr.mxu0 0.0
        %1914 = vmatpush1.msra.mxu0 %v1893
        %1915 = vmatprep.subr.mxu0 0.0
        %1916 = vmatpush1.msra.mxu0 %v1894
        %1917 = vmatprep.subr.mxu0 0.0
        %1918 = vmatpush1.msra.mxu0 %v1895
        %1919 = vmatprep.subr.mxu0 0.0
        %1920 = vmatpush1.msra.mxu0 %v1896
        %1921 = vmatprep.subr.mxu0 0.0
        %1922 = vmatpush1.msra.mxu0 %v1897
        %1923 = vmatprep.subr.mxu0 0.0
        %1924 = vmatpush1.msra.mxu0 %v1898
        %1925 = vmatprep.subr.mxu0 0.0
        %1926 = vmatpush1.msra.mxu0 0.0
        %1927 = vmatprep.subr.mxu0 0.0
        %1928 = vmatpush1.msra.mxu0 0.0
        %1929 = vmatprep.subr.mxu0 0.0
        %1930 = vmatpush1.msra.mxu0 0.0
        %1931 = vmatprep.subr.mxu0 0.0
        %1932 = vmatpush1.msra.mxu0 0.0
        %1933 = vmatprep.subr.mxu0 0.0
        %1934 = vmatpush1.msra.mxu0 0.0
        %1935 = vmatprep.subr.mxu0 0.0
        %1936 = vmatpush1.msra.mxu0 0.0
        %1937 = vmatprep.subr.mxu0 0.0
        %1938 = vmatpush1.msra.mxu0 0.0
        %1939 = vmatprep.subr.mxu0 0.0
        %1940 = vmatpush1.msra.mxu0 0.0
        %1941 = vmatprep.subr.mxu0 0.0
        %1942 = vmatpush1.msra.mxu0 0.0
        %1943 = vmatprep.subr.mxu0 0.0
        %1944 = vmatpush1.msra.mxu0 0.0
        %1945 = vmatprep.subr.mxu0 0.0
        %1946 = vmatpush1.msra.mxu0 0.0
        %1947 = vmatprep.subr.mxu0 0.0
        %1948 = vmatpush1.msra.mxu0 0.0
        %1949 = vmatprep.subr.mxu0 0.0
        %1950 = vmatpush1.msra.mxu0 0.0
        %1951 = vmatprep.subr.mxu0 0.0
        %1952 = vmatpush1.msra.mxu0 0.0
        %1953 = vmatprep.subr.mxu0 0.0
        %1954 = vmatpush1.msra.mxu0 0.0
        %1955 = vmatprep.subr.mxu0 0.0
        %1956 = vmatpush1.msra.mxu0 0.0
        %1957 = vmatprep.subr.mxu0 0.0
        %1958 = vmatpush1.msra.mxu0 0.0
        %1959 = vmatprep.subr.mxu0 0.0
        %1960 = vmatpush1.msra.mxu0 0.0
        %1961 = vmatprep.subr.mxu0 0.0
        %1962 = vmatpush1.msra.mxu0 0.0
        %1963 = vmatprep.subr.mxu0 0.0
        %1964 = vmatpush1.msra.mxu0 0.0
        %1965 = vmatprep.subr.mxu0 0.0
        %1966 = vmatpush1.msra.mxu0 0.0
        %1967 = vmatprep.subr.mxu0 0.0
        %1968 = vmatpush1.msra.mxu0 0.0
        %1969 = vmatprep.mubr.f32.mxu0 0.0
        %1970 = vmatmul.mubr.f32.gmra.mrb[0].mxu0 %v1900
        %v1971 = vpop.f32.mrb[0].mxu0
        %v1972 = vadd.f32 0.0, %v1971
        %v1973 = vpop.f32.mrb[0].mxu0
        %1974 = vmatprep.mubr.f32.mxu0 0.0
        %1975 = vmatmul.mubr.f32.gmra.mrb[0].mxu0 %v1903
        %v1976 = vpop.f32.mrb[0].mxu0
        %v1977 = vadd.f32 0.0, %v1976
        %v1978 = vpop.f32.mrb[0].mxu0
        %1979 = vdwg.mxu0
        %v1981 = vsel %vm1292, %v1876, 0
        %v1984 = vsel %vm1292, %v1875, 0
        %1986 = vmatprep.subr.mxu0 0.0
        %1987 = vmatpush1.msra.mxu0 %v1878
        %1988 = vmatprep.subr.mxu0 0.0
        %1989 = vmatpush1.msra.mxu0 %v1879
        %1990 = vmatprep.subr.mxu0 0.0
        %1991 = vmatpush1.msra.mxu0 %v1880
        %1992 = vmatprep.subr.mxu0 0.0
        %1993 = vmatpush1.msra.mxu0 %v1881
        %1994 = vmatprep.subr.mxu0 0.0
        %1995 = vmatpush1.msra.mxu0 %v1882
        %1996 = vmatprep.subr.mxu0 0.0
        %1997 = vmatpush1.msra.mxu0 %v1883
        %1998 = vmatprep.subr.mxu0 0.0
        %1999 = vmatpush1.msra.mxu0 %v1884
        %2000 = vmatprep.subr.mxu0 0.0
        %2001 = vmatpush1.msra.mxu0 %v1885
        %2002 = vmatprep.subr.mxu0 0.0
        %2003 = vmatpush1.msra.mxu0 %v1886
        %2004 = vmatprep.subr.mxu0 0.0
        %2005 = vmatpush1.msra.mxu0 %v1887
        %2006 = vmatprep.subr.mxu0 0.0
        %2007 = vmatpush1.msra.mxu0 0.0
        %2008 = vmatprep.subr.mxu0 0.0
        %2009 = vmatpush1.msra.mxu0 0.0
        %2010 = vmatprep.subr.mxu0 0.0
        %2011 = vmatpush1.msra.mxu0 0.0
        %2012 = vmatprep.subr.mxu0 0.0
        %2013 = vmatpush1.msra.mxu0 0.0
        %2014 = vmatprep.subr.mxu0 0.0
        %2015 = vmatpush1.msra.mxu0 0.0
        %2016 = vmatprep.subr.mxu0 0.0
        %2017 = vmatpush1.msra.mxu0 0.0
        %2018 = vmatprep.subr.mxu0 0.0
        %2019 = vmatpush1.msra.mxu0 0.0
        %2020 = vmatprep.subr.mxu0 0.0
        %2021 = vmatpush1.msra.mxu0 0.0
        %2022 = vmatprep.subr.mxu0 0.0
        %2023 = vmatpush1.msra.mxu0 0.0
        %2024 = vmatprep.subr.mxu0 0.0
        %2025 = vmatpush1.msra.mxu0 0.0
        %2026 = vmatprep.subr.mxu0 0.0
        %2027 = vmatpush1.msra.mxu0 0.0
        %2028 = vmatprep.subr.mxu0 0.0
        %2029 = vmatpush1.msra.mxu0 0.0
        %2030 = vmatprep.subr.mxu0 0.0
        %2031 = vmatpush1.msra.mxu0 0.0
        %2032 = vmatprep.subr.mxu0 0.0
        %2033 = vmatpush1.msra.mxu0 0.0
        %2034 = vmatprep.subr.mxu0 0.0
        %2035 = vmatpush1.msra.mxu0 0.0
        %2036 = vmatprep.subr.mxu0 0.0
        %2037 = vmatpush1.msra.mxu0 0.0
        %2038 = vmatprep.subr.mxu0 0.0
        %2039 = vmatpush1.msra.mxu0 0.0
        %2040 = vmatprep.subr.mxu0 0.0
        %2041 = vmatpush1.msra.mxu0 0.0
        %2042 = vmatprep.subr.mxu0 0.0
        %2043 = vmatpush1.msra.mxu0 0.0
        %2044 = vmatprep.subr.mxu0 0.0
        %2045 = vmatpush1.msra.mxu0 0.0
        %2046 = vmatprep.subr.mxu0 0.0
        %2047 = vmatpush1.msra.mxu0 0.0
        %2048 = vmatprep.subr.mxu0 0.0
        %2049 = vmatpush1.msra.mxu0 0.0
        %2050 = vmatprep.mubr.f32.mxu0 0.0
        %2051 = vmatmul.mubr.f32.gmra.mrb[0].mxu0 %v1981
        %v2052 = vpop.f32.mrb[0].mxu0
        %v2053 = vadd.f32 %v1972, %v2052
        %v2054 = vpop.f32.mrb[0].mxu0
        %2055 = vmatprep.mubr.f32.mxu0 0.0
        %2056 = vmatmul.mubr.f32.gmra.mrb[0].mxu0 %v1984
        %v2057 = vpop.f32.mrb[0].mxu0
        %v2058 = vadd.f32 %v1977, %v2057
        %v2059 = vpop.f32.mrb[0].mxu0
        %2060 = vdwg.mxu0
        %v2061 = vrot.slane %v1869, 1
        %v2062 = vrot.slane %v1870, 1
        %v2063 = vsel %vm806, %v2061, %v2062
        %v2064 = vsel %vm806, %v2062, %v2061
        %s2065 = scalar_lea.vmem [#allocation12], 400
        %v2066 = vld [vmem:[%s2065] sm:$0xff]
        %v2067 = vld [vmem:[%s2065 + $0x8] sm:$0xff]
        %v2068 = vld [vmem:[%s2065 + $0x10] sm:$0xff]
        %v2069 = vld [vmem:[%s2065 + $0x18] sm:$0xff]
        %v2070 = vld [vmem:[%s2065 + $0x20] sm:$0xff]
        %v2071 = vld [vmem:[%s2065 + $0x28] sm:$0xff]
        %v2072 = vld [vmem:[%s2065 + $0x30] sm:$0xff]
        %v2073 = vld [vmem:[%s2065 + $0x38] sm:$0xff]
        %v2074 = vld [vmem:[%s2065 + $0x40] sm:$0xff]
        %v2075 = vld [vmem:[%s2065 + $0x48] sm:$0xff]
        %v2077 = vsel %vm1292, %v2063, 0
        %v2080 = vsel %vm1292, %v2064, 0
        %2082 = vmatprep.subr.mxu0 0.0
        %2083 = vmatpush1.msra.mxu0 %v2066
        %2084 = vmatprep.subr.mxu0 0.0
        %2085 = vmatpush1.msra.mxu0 %v2067
        %2086 = vmatprep.subr.mxu0 0.0
        %2087 = vmatpush1.msra.mxu0 %v2068
        %2088 = vmatprep.subr.mxu0 0.0
        %2089 = vmatpush1.msra.mxu0 %v2069
        %2090 = vmatprep.subr.mxu0 0.0
        %2091 = vmatpush1.msra.mxu0 %v2070
        %2092 = vmatprep.subr.mxu0 0.0
        %2093 = vmatpush1.msra.mxu0 %v2071
        %2094 = vmatprep.subr.mxu0 0.0
        %2095 = vmatpush1.msra.mxu0 %v2072
        %2096 = vmatprep.subr.mxu0 0.0
        %2097 = vmatpush1.msra.mxu0 %v2073
        %2098 = vmatprep.subr.mxu0 0.0
        %2099 = vmatpush1.msra.mxu0 %v2074
        %2100 = vmatprep.subr.mxu0 0.0
        %2101 = vmatpush1.msra.mxu0 %v2075
        %2102 = vmatprep.subr.mxu0 0.0
        %2103 = vmatpush1.msra.mxu0 0.0
        %2104 = vmatprep.subr.mxu0 0.0
        %2105 = vmatpush1.msra.mxu0 0.0
        %2106 = vmatprep.subr.mxu0 0.0
        %2107 = vmatpush1.msra.mxu0 0.0
        %2108 = vmatprep.subr.mxu0 0.0
        %2109 = vmatpush1.msra.mxu0 0.0
        %2110 = vmatprep.subr.mxu0 0.0
        %2111 = vmatpush1.msra.mxu0 0.0
        %2112 = vmatprep.subr.mxu0 0.0
        %2113 = vmatpush1.msra.mxu0 0.0
        %2114 = vmatprep.subr.mxu0 0.0
        %2115 = vmatpush1.msra.mxu0 0.0
        %2116 = vmatprep.subr.mxu0 0.0
        %2117 = vmatpush1.msra.mxu0 0.0
        %2118 = vmatprep.subr.mxu0 0.0
        %2119 = vmatpush1.msra.mxu0 0.0
        %2120 = vmatprep.subr.mxu0 0.0
        %2121 = vmatpush1.msra.mxu0 0.0
        %2122 = vmatprep.subr.mxu0 0.0
        %2123 = vmatpush1.msra.mxu0 0.0
        %2124 = vmatprep.subr.mxu0 0.0
        %2125 = vmatpush1.msra.mxu0 0.0
        %2126 = vmatprep.subr.mxu0 0.0
        %2127 = vmatpush1.msra.mxu0 0.0
        %2128 = vmatprep.subr.mxu0 0.0
        %2129 = vmatpush1.msra.mxu0 0.0
        %2130 = vmatprep.subr.mxu0 0.0
        %2131 = vmatpush1.msra.mxu0 0.0
        %2132 = vmatprep.subr.mxu0 0.0
        %2133 = vmatpush1.msra.mxu0 0.0
        %2134 = vmatprep.subr.mxu0 0.0
        %2135 = vmatpush1.msra.mxu0 0.0
        %2136 = vmatprep.subr.mxu0 0.0
        %2137 = vmatpush1.msra.mxu0 0.0
        %2138 = vmatprep.subr.mxu0 0.0
        %2139 = vmatpush1.msra.mxu0 0.0
        %2140 = vmatprep.subr.mxu0 0.0
        %2141 = vmatpush1.msra.mxu0 0.0
        %2142 = vmatprep.subr.mxu0 0.0
        %2143 = vmatpush1.msra.mxu0 0.0
        %2144 = vmatprep.subr.mxu0 0.0
        %2145 = vmatpush1.msra.mxu0 0.0
        %2146 = vmatprep.mubr.f32.mxu0 0.0
        %2147 = vmatmul.mubr.f32.gmra.mrb[0].mxu0 %v2077
        %v2148 = vpop.f32.mrb[0].mxu0
        %v2149 = vadd.f32 0.0, %v2148
        %v2150 = vpop.f32.mrb[0].mxu0
        %2151 = vmatprep.mubr.f32.mxu0 0.0
        %2152 = vmatmul.mubr.f32.gmra.mrb[0].mxu0 %v2080
        %v2153 = vpop.f32.mrb[0].mxu0
        %v2154 = vadd.f32 0.0, %v2153
        %v2155 = vpop.f32.mrb[0].mxu0
        %2156 = vdwg.mxu0
        %v2157 = vadd.f32 %v2053, %v2149
        %v2158 = vadd.f32 %v2058, %v2154
        %v2160 = vlaneseq
        %v2161 = vshrl.u32 %v2160, 7
        %v2162 = vsub.s32 0, %v2161
        %v2163 = vrot.slane %v1872, %v2162
        %v2165 = vadd.f32 %v2157, %v2163
        %v2166 = vadd.f32 %v2158, %v2163
        %vm2167 = vcmp.gt.f32.partialorder %v2165, 0.0
        %vm2168 = vcmp.gt.f32.partialorder %v2166, 0.0
        %v2169 = vmul.f32 %v2165, 0.01
        %v2170 = vmul.f32 %v2166, 0.01
        %v2171 = vsel %vm2167, %v2165, %v2169
        %v2172 = vsel %vm2168, %v2166, %v2170
        %v2173 = vmul.f32 %v2171, %v1264
        %v2174 = vmul.f32 %v2172, %v1265
        %s2175 = scalar_lea.vmem [#allocation13], 2
        %v2176 = vld [vmem:[%s2175] sm:$0x1]
        %v2177 = vrot.slane %v2173, 7
        %v2178 = vrot.slane %v2174, 7
        %v2179 = vsel %vm588, %v2177, %v2178
        %v2180 = vsel %vm588, %v2178, %v2177
        %s2181 = scalar_lea.vmem [#allocation12], 480
        %v2182 = vld [vmem:[%s2181] sm:$0xff]
        %v2183 = vld [vmem:[%s2181 + $0x8] sm:$0xff]
        %v2184 = vld [vmem:[%s2181 + $0x10] sm:$0xff]
        %v2185 = vld [vmem:[%s2181 + $0x18] sm:$0xff]
        %v2186 = vld [vmem:[%s2181 + $0x20] sm:$0xff]
        %v2187 = vld [vmem:[%s2181 + $0x28] sm:$0xff]
        %v2188 = vld [vmem:[%s2181 + $0x30] sm:$0xff]
        %v2189 = vld [vmem:[%s2181 + $0x38] sm:$0xff]
        %v2190 = vld [vmem:[%s2181 + $0x40] sm:$0xff]
        %v2191 = vld [vmem:[%s2181 + $0x48] sm:$0xff]
        %s2192 = scalar_lea.vmem [#allocation12], 560
        %v2193 = vld [vmem:[%s2192] sm:$0xff]
        %v2194 = vld [vmem:[%s2192 + $0x8] sm:$0xff]
        %v2195 = vld [vmem:[%s2192 + $0x10] sm:$0xff]
        %v2196 = vld [vmem:[%s2192 + $0x18] sm:$0xff]
        %v2197 = vld [vmem:[%s2192 + $0x20] sm:$0xff]
        %v2198 = vld [vmem:[%s2192 + $0x28] sm:$0xff]
        %v2199 = vld [vmem:[%s2192 + $0x30] sm:$0xff]
        %v2200 = vld [vmem:[%s2192 + $0x38] sm:$0xff]
        %v2201 = vld [vmem:[%s2192 + $0x40] sm:$0xff]
        %v2202 = vld [vmem:[%s2192 + $0x48] sm:$0xff]
        %v2204 = vsel %vm1292, %v2173, 0
        %v2207 = vsel %vm1292, %v2174, 0
        %2209 = vmatprep.subr.mxu0 0.0
        %2210 = vmatpush1.msra.mxu0 %v2193
        %2211 = vmatprep.subr.mxu0 0.0
        %2212 = vmatpush1.msra.mxu0 %v2194
        %2213 = vmatprep.subr.mxu0 0.0
        %2214 = vmatpush1.msra.mxu0 %v2195
        %2215 = vmatprep.subr.mxu0 0.0
        %2216 = vmatpush1.msra.mxu0 %v2196
        %2217 = vmatprep.subr.mxu0 0.0
        %2218 = vmatpush1.msra.mxu0 %v2197
        %2219 = vmatprep.subr.mxu0 0.0
        %2220 = vmatpush1.msra.mxu0 %v2198
        %2221 = vmatprep.subr.mxu0 0.0
        %2222 = vmatpush1.msra.mxu0 %v2199
        %2223 = vmatprep.subr.mxu0 0.0
        %2224 = vmatpush1.msra.mxu0 %v2200
        %2225 = vmatprep.subr.mxu0 0.0
        %2226 = vmatpush1.msra.mxu0 %v2201
        %2227 = vmatprep.subr.mxu0 0.0
        %2228 = vmatpush1.msra.mxu0 %v2202
        %2229 = vmatprep.subr.mxu0 0.0
        %2230 = vmatpush1.msra.mxu0 0.0
        %2231 = vmatprep.subr.mxu0 0.0
        %2232 = vmatpush1.msra.mxu0 0.0
        %2233 = vmatprep.subr.mxu0 0.0
        %2234 = vmatpush1.msra.mxu0 0.0
        %2235 = vmatprep.subr.mxu0 0.0
        %2236 = vmatpush1.msra.mxu0 0.0
        %2237 = vmatprep.subr.mxu0 0.0
        %2238 = vmatpush1.msra.mxu0 0.0
        %2239 = vmatprep.subr.mxu0 0.0
        %2240 = vmatpush1.msra.mxu0 0.0
        %2241 = vmatprep.subr.mxu0 0.0
        %2242 = vmatpush1.msra.mxu0 0.0
        %2243 = vmatprep.subr.mxu0 0.0
        %2244 = vmatpush1.msra.mxu0 0.0
        %2245 = vmatprep.subr.mxu0 0.0
        %2246 = vmatpush1.msra.mxu0 0.0
        %2247 = vmatprep.subr.mxu0 0.0
        %2248 = vmatpush1.msra.mxu0 0.0
        %2249 = vmatprep.subr.mxu0 0.0
        %2250 = vmatpush1.msra.mxu0 0.0
        %2251 = vmatprep.subr.mxu0 0.0
        %2252 = vmatpush1.msra.mxu0 0.0
        %2253 = vmatprep.subr.mxu0 0.0
        %2254 = vmatpush1.msra.mxu0 0.0
        %2255 = vmatprep.subr.mxu0 0.0
        %2256 = vmatpush1.msra.mxu0 0.0
        %2257 = vmatprep.subr.mxu0 0.0
        %2258 = vmatpush1.msra.mxu0 0.0
        %2259 = vmatprep.subr.mxu0 0.0
        %2260 = vmatpush1.msra.mxu0 0.0
        %2261 = vmatprep.subr.mxu0 0.0
        %2262 = vmatpush1.msra.mxu0 0.0
        %2263 = vmatprep.subr.mxu0 0.0
        %2264 = vmatpush1.msra.mxu0 0.0
        %2265 = vmatprep.subr.mxu0 0.0
        %2266 = vmatpush1.msra.mxu0 0.0
        %2267 = vmatprep.subr.mxu0 0.0
        %2268 = vmatpush1.msra.mxu0 0.0
        %2269 = vmatprep.subr.mxu0 0.0
        %2270 = vmatpush1.msra.mxu0 0.0
        %2271 = vmatprep.subr.mxu0 0.0
        %2272 = vmatpush1.msra.mxu0 0.0
        %2273 = vmatprep.mubr.f32.mxu0 0.0
        %2274 = vmatmul.mubr.f32.gmra.mrb[0].mxu0 %v2204
        %v2275 = vpop.f32.mrb[0].mxu0
        %v2276 = vadd.f32 0.0, %v2275
        %v2277 = vpop.f32.mrb[0].mxu0
        %2278 = vmatprep.mubr.f32.mxu0 0.0
        %2279 = vmatmul.mubr.f32.gmra.mrb[0].mxu0 %v2207
        %v2280 = vpop.f32.mrb[0].mxu0
        %v2281 = vadd.f32 0.0, %v2280
        %v2282 = vpop.f32.mrb[0].mxu0
        %2283 = vdwg.mxu0
        %v2285 = vsel %vm1292, %v2180, 0
        %v2288 = vsel %vm1292, %v2179, 0
        %2290 = vmatprep.subr.mxu0 0.0
        %2291 = vmatpush1.msra.mxu0 %v2182
        %2292 = vmatprep.subr.mxu0 0.0
        %2293 = vmatpush1.msra.mxu0 %v2183
        %2294 = vmatprep.subr.mxu0 0.0
        %2295 = vmatpush1.msra.mxu0 %v2184
        %2296 = vmatprep.subr.mxu0 0.0
        %2297 = vmatpush1.msra.mxu0 %v2185
        %2298 = vmatprep.subr.mxu0 0.0
        %2299 = vmatpush1.msra.mxu0 %v2186
        %2300 = vmatprep.subr.mxu0 0.0
        %2301 = vmatpush1.msra.mxu0 %v2187
        %2302 = vmatprep.subr.mxu0 0.0
        %2303 = vmatpush1.msra.mxu0 %v2188
        %2304 = vmatprep.subr.mxu0 0.0
        %2305 = vmatpush1.msra.mxu0 %v2189
        %2306 = vmatprep.subr.mxu0 0.0
        %2307 = vmatpush1.msra.mxu0 %v2190
        %2308 = vmatprep.subr.mxu0 0.0
        %2309 = vmatpush1.msra.mxu0 %v2191
        %2310 = vmatprep.subr.mxu0 0.0
        %2311 = vmatpush1.msra.mxu0 0.0
        %2312 = vmatprep.subr.mxu0 0.0
        %2313 = vmatpush1.msra.mxu0 0.0
        %2314 = vmatprep.subr.mxu0 0.0
        %2315 = vmatpush1.msra.mxu0 0.0
        %2316 = vmatprep.subr.mxu0 0.0
        %2317 = vmatpush1.msra.mxu0 0.0
        %2318 = vmatprep.subr.mxu0 0.0
        %2319 = vmatpush1.msra.mxu0 0.0
        %2320 = vmatprep.subr.mxu0 0.0
        %2321 = vmatpush1.msra.mxu0 0.0
        %2322 = vmatprep.subr.mxu0 0.0
        %2323 = vmatpush1.msra.mxu0 0.0
        %2324 = vmatprep.subr.mxu0 0.0
        %2325 = vmatpush1.msra.mxu0 0.0
        %2326 = vmatprep.subr.mxu0 0.0
        %2327 = vmatpush1.msra.mxu0 0.0
        %2328 = vmatprep.subr.mxu0 0.0
        %2329 = vmatpush1.msra.mxu0 0.0
        %2330 = vmatprep.subr.mxu0 0.0
        %2331 = vmatpush1.msra.mxu0 0.0
        %2332 = vmatprep.subr.mxu0 0.0
        %2333 = vmatpush1.msra.mxu0 0.0
        %2334 = vmatprep.subr.mxu0 0.0
        %2335 = vmatpush1.msra.mxu0 0.0
        %2336 = vmatprep.subr.mxu0 0.0
        %2337 = vmatpush1.msra.mxu0 0.0
        %2338 = vmatprep.subr.mxu0 0.0
        %2339 = vmatpush1.msra.mxu0 0.0
        %2340 = vmatprep.subr.mxu0 0.0
        %2341 = vmatpush1.msra.mxu0 0.0
        %2342 = vmatprep.subr.mxu0 0.0
        %2343 = vmatpush1.msra.mxu0 0.0
        %2344 = vmatprep.subr.mxu0 0.0
        %2345 = vmatpush1.msra.mxu0 0.0
        %2346 = vmatprep.subr.mxu0 0.0
        %2347 = vmatpush1.msra.mxu0 0.0
        %2348 = vmatprep.subr.mxu0 0.0
        %2349 = vmatpush1.msra.mxu0 0.0
        %2350 = vmatprep.subr.mxu0 0.0
        %2351 = vmatpush1.msra.mxu0 0.0
        %2352 = vmatprep.subr.mxu0 0.0
        %2353 = vmatpush1.msra.mxu0 0.0
        %2354 = vmatprep.mubr.f32.mxu0 0.0
        %2355 = vmatmul.mubr.f32.gmra.mrb[0].mxu0 %v2285
        %v2356 = vpop.f32.mrb[0].mxu0
        %v2357 = vadd.f32 %v2276, %v2356
        %v2358 = vpop.f32.mrb[0].mxu0
        %2359 = vmatprep.mubr.f32.mxu0 0.0
        %2360 = vmatmul.mubr.f32.gmra.mrb[0].mxu0 %v2288
        %v2361 = vpop.f32.mrb[0].mxu0
        %v2362 = vadd.f32 %v2281, %v2361
        %v2363 = vpop.f32.mrb[0].mxu0
        %2364 = vdwg.mxu0
        %v2365 = vrot.slane %v2173, 1
        %v2366 = vrot.slane %v2174, 1
        %v2367 = vsel %vm806, %v2365, %v2366
        %v2368 = vsel %vm806, %v2366, %v2365
        %s2369 = scalar_lea.vmem [#allocation12], 640
        %v2370 = vld [vmem:[%s2369] sm:$0xff]
        %v2371 = vld [vmem:[%s2369 + $0x8] sm:$0xff]
        %v2372 = vld [vmem:[%s2369 + $0x10] sm:$0xff]
        %v2373 = vld [vmem:[%s2369 + $0x18] sm:$0xff]
        %v2374 = vld [vmem:[%s2369 + $0x20] sm:$0xff]
        %v2375 = vld [vmem:[%s2369 + $0x28] sm:$0xff]
        %v2376 = vld [vmem:[%s2369 + $0x30] sm:$0xff]
        %v2377 = vld [vmem:[%s2369 + $0x38] sm:$0xff]
        %v2378 = vld [vmem:[%s2369 + $0x40] sm:$0xff]
        %v2379 = vld [vmem:[%s2369 + $0x48] sm:$0xff]
        %v2381 = vsel %vm1292, %v2367, 0
        %v2384 = vsel %vm1292, %v2368, 0
        %2386 = vmatprep.subr.mxu0 0.0
        %2387 = vmatpush1.msra.mxu0 %v2370
        %2388 = vmatprep.subr.mxu0 0.0
        %2389 = vmatpush1.msra.mxu0 %v2371
        %2390 = vmatprep.subr.mxu0 0.0
        %2391 = vmatpush1.msra.mxu0 %v2372
        %2392 = vmatprep.subr.mxu0 0.0
        %2393 = vmatpush1.msra.mxu0 %v2373
        %2394 = vmatprep.subr.mxu0 0.0
        %2395 = vmatpush1.msra.mxu0 %v2374
        %2396 = vmatprep.subr.mxu0 0.0
        %2397 = vmatpush1.msra.mxu0 %v2375
        %2398 = vmatprep.subr.mxu0 0.0
        %2399 = vmatpush1.msra.mxu0 %v2376
        %2400 = vmatprep.subr.mxu0 0.0
        %2401 = vmatpush1.msra.mxu0 %v2377
        %2402 = vmatprep.subr.mxu0 0.0
        %2403 = vmatpush1.msra.mxu0 %v2378
        %2404 = vmatprep.subr.mxu0 0.0
        %2405 = vmatpush1.msra.mxu0 %v2379
        %2406 = vmatprep.subr.mxu0 0.0
        %2407 = vmatpush1.msra.mxu0 0.0
        %2408 = vmatprep.subr.mxu0 0.0
        %2409 = vmatpush1.msra.mxu0 0.0
        %2410 = vmatprep.subr.mxu0 0.0
        %2411 = vmatpush1.msra.mxu0 0.0
        %2412 = vmatprep.subr.mxu0 0.0
        %2413 = vmatpush1.msra.mxu0 0.0
        %2414 = vmatprep.subr.mxu0 0.0
        %2415 = vmatpush1.msra.mxu0 0.0
        %2416 = vmatprep.subr.mxu0 0.0
        %2417 = vmatpush1.msra.mxu0 0.0
        %2418 = vmatprep.subr.mxu0 0.0
        %2419 = vmatpush1.msra.mxu0 0.0
        %2420 = vmatprep.subr.mxu0 0.0
        %2421 = vmatpush1.msra.mxu0 0.0
        %2422 = vmatprep.subr.mxu0 0.0
        %2423 = vmatpush1.msra.mxu0 0.0
        %2424 = vmatprep.subr.mxu0 0.0
        %2425 = vmatpush1.msra.mxu0 0.0
        %2426 = vmatprep.subr.mxu0 0.0
        %2427 = vmatpush1.msra.mxu0 0.0
        %2428 = vmatprep.subr.mxu0 0.0
        %2429 = vmatpush1.msra.mxu0 0.0
        %2430 = vmatprep.subr.mxu0 0.0
        %2431 = vmatpush1.msra.mxu0 0.0
        %2432 = vmatprep.subr.mxu0 0.0
        %2433 = vmatpush1.msra.mxu0 0.0
        %2434 = vmatprep.subr.mxu0 0.0
        %2435 = vmatpush1.msra.mxu0 0.0
        %2436 = vmatprep.subr.mxu0 0.0
        %2437 = vmatpush1.msra.mxu0 0.0
        %2438 = vmatprep.subr.mxu0 0.0
        %2439 = vmatpush1.msra.mxu0 0.0
        %2440 = vmatprep.subr.mxu0 0.0
        %2441 = vmatpush1.msra.mxu0 0.0
        %2442 = vmatprep.subr.mxu0 0.0
        %2443 = vmatpush1.msra.mxu0 0.0
        %2444 = vmatprep.subr.mxu0 0.0
        %2445 = vmatpush1.msra.mxu0 0.0
        %2446 = vmatprep.subr.mxu0 0.0
        %2447 = vmatpush1.msra.mxu0 0.0
        %2448 = vmatprep.subr.mxu0 0.0
        %2449 = vmatpush1.msra.mxu0 0.0
        %2450 = vmatprep.mubr.f32.mxu0 0.0
        %2451 = vmatmul.mubr.f32.gmra.mrb[0].mxu0 %v2381
        %v2452 = vpop.f32.mrb[0].mxu0
        %v2453 = vadd.f32 0.0, %v2452
        %v2454 = vpop.f32.mrb[0].mxu0
        %2455 = vmatprep.mubr.f32.mxu0 0.0
        %2456 = vmatmul.mubr.f32.gmra.mrb[0].mxu0 %v2384
        %v2457 = vpop.f32.mrb[0].mxu0
        %v2458 = vadd.f32 0.0, %v2457
        %v2459 = vpop.f32.mrb[0].mxu0
        %2460 = vdwg.mxu0
        %v2461 = vadd.f32 %v2357, %v2453
        %v2462 = vadd.f32 %v2362, %v2458
        %v2464 = vlaneseq
        %v2465 = vshrl.u32 %v2464, 7
        %v2466 = vsub.s32 0, %v2465
        %v2467 = vrot.slane %v2176, %v2466
        %v2469 = vadd.f32 %v2461, %v2467
        %v2470 = vadd.f32 %v2462, %v2467
        %vm2471 = vcmp.gt.f32.partialorder %v2469, 0.0
        %vm2472 = vcmp.gt.f32.partialorder %v2470, 0.0
        %v2473 = vmul.f32 %v2469, 0.01
        %v2474 = vmul.f32 %v2470, 0.01
        %v2475 = vsel %vm2471, %v2469, %v2473
        %v2476 = vsel %vm2472, %v2470, %v2474
        %v2477 = vmul.f32 %v2475, %v1264
        %v2478 = vmul.f32 %v2476, %v1265
        %s2479 = scalar_lea.vmem [#allocation13], 3
        %v2480 = vld [vmem:[%s2479] sm:$0x1]
        %v2481 = vrot.slane %v2477, 7
        %v2482 = vrot.slane %v2478, 7
        %v2483 = vsel %vm588, %v2481, %v2482
        %v2484 = vsel %vm588, %v2482, %v2481
        %s2485 = scalar_lea.vmem [#allocation12], 720
        %v2486 = vld [vmem:[%s2485] sm:$0xff]
        %v2487 = vld [vmem:[%s2485 + $0x8] sm:$0xff]
        %v2488 = vld [vmem:[%s2485 + $0x10] sm:$0xff]
        %v2489 = vld [vmem:[%s2485 + $0x18] sm:$0xff]
        %v2490 = vld [vmem:[%s2485 + $0x20] sm:$0xff]
        %v2491 = vld [vmem:[%s2485 + $0x28] sm:$0xff]
        %v2492 = vld [vmem:[%s2485 + $0x30] sm:$0xff]
        %v2493 = vld [vmem:[%s2485 + $0x38] sm:$0xff]
        %v2494 = vld [vmem:[%s2485 + $0x40] sm:$0xff]
        %v2495 = vld [vmem:[%s2485 + $0x48] sm:$0xff]
        %s2496 = scalar_lea.vmem [#allocation12], 800
        %v2497 = vld [vmem:[%s2496] sm:$0xff]
        %v2498 = vld [vmem:[%s2496 + $0x8] sm:$0xff]
        %v2499 = vld [vmem:[%s2496 + $0x10] sm:$0xff]
        %v2500 = vld [vmem:[%s2496 + $0x18] sm:$0xff]
        %v2501 = vld [vmem:[%s2496 + $0x20] sm:$0xff]
        %v2502 = vld [vmem:[%s2496 + $0x28] sm:$0xff]
        %v2503 = vld [vmem:[%s2496 + $0x30] sm:$0xff]
        %v2504 = vld [vmem:[%s2496 + $0x38] sm:$0xff]
        %v2505 = vld [vmem:[%s2496 + $0x40] sm:$0xff]
        %v2506 = vld [vmem:[%s2496 + $0x48] sm:$0xff]
        %v2508 = vsel %vm1292, %v2477, 0
        %v2511 = vsel %vm1292, %v2478, 0
        %2513 = vmatprep.subr.mxu0 0.0
        %2514 = vmatpush1.msra.mxu0 %v2497
        %2515 = vmatprep.subr.mxu0 0.0
        %2516 = vmatpush1.msra.mxu0 %v2498
        %2517 = vmatprep.subr.mxu0 0.0
        %2518 = vmatpush1.msra.mxu0 %v2499
        %2519 = vmatprep.subr.mxu0 0.0
        %2520 = vmatpush1.msra.mxu0 %v2500
        %2521 = vmatprep.subr.mxu0 0.0
        %2522 = vmatpush1.msra.mxu0 %v2501
        %2523 = vmatprep.subr.mxu0 0.0
        %2524 = vmatpush1.msra.mxu0 %v2502
        %2525 = vmatprep.subr.mxu0 0.0
        %2526 = vmatpush1.msra.mxu0 %v2503
        %2527 = vmatprep.subr.mxu0 0.0
        %2528 = vmatpush1.msra.mxu0 %v2504
        %2529 = vmatprep.subr.mxu0 0.0
        %2530 = vmatpush1.msra.mxu0 %v2505
        %2531 = vmatprep.subr.mxu0 0.0
        %2532 = vmatpush1.msra.mxu0 %v2506
        %2533 = vmatprep.subr.mxu0 0.0
        %2534 = vmatpush1.msra.mxu0 0.0
        %2535 = vmatprep.subr.mxu0 0.0
        %2536 = vmatpush1.msra.mxu0 0.0
        %2537 = vmatprep.subr.mxu0 0.0
        %2538 = vmatpush1.msra.mxu0 0.0
        %2539 = vmatprep.subr.mxu0 0.0
        %2540 = vmatpush1.msra.mxu0 0.0
        %2541 = vmatprep.subr.mxu0 0.0
        %2542 = vmatpush1.msra.mxu0 0.0
        %2543 = vmatprep.subr.mxu0 0.0
        %2544 = vmatpush1.msra.mxu0 0.0
        %2545 = vmatprep.subr.mxu0 0.0
        %2546 = vmatpush1.msra.mxu0 0.0
        %2547 = vmatprep.subr.mxu0 0.0
        %2548 = vmatpush1.msra.mxu0 0.0
        %2549 = vmatprep.subr.mxu0 0.0
        %2550 = vmatpush1.msra.mxu0 0.0
        %2551 = vmatprep.subr.mxu0 0.0
        %2552 = vmatpush1.msra.mxu0 0.0
        %2553 = vmatprep.subr.mxu0 0.0
        %2554 = vmatpush1.msra.mxu0 0.0
        %2555 = vmatprep.subr.mxu0 0.0
        %2556 = vmatpush1.msra.mxu0 0.0
        %2557 = vmatprep.subr.mxu0 0.0
        %2558 = vmatpush1.msra.mxu0 0.0
        %2559 = vmatprep.subr.mxu0 0.0
        %2560 = vmatpush1.msra.mxu0 0.0
        %2561 = vmatprep.subr.mxu0 0.0
        %2562 = vmatpush1.msra.mxu0 0.0
        %2563 = vmatprep.subr.mxu0 0.0
        %2564 = vmatpush1.msra.mxu0 0.0
        %2565 = vmatprep.subr.mxu0 0.0
        %2566 = vmatpush1.msra.mxu0 0.0
        %2567 = vmatprep.subr.mxu0 0.0
        %2568 = vmatpush1.msra.mxu0 0.0
        %2569 = vmatprep.subr.mxu0 0.0
        %2570 = vmatpush1.msra.mxu0 0.0
        %2571 = vmatprep.subr.mxu0 0.0
        %2572 = vmatpush1.msra.mxu0 0.0
        %2573 = vmatprep.subr.mxu0 0.0
        %2574 = vmatpush1.msra.mxu0 0.0
        %2575 = vmatprep.subr.mxu0 0.0
        %2576 = vmatpush1.msra.mxu0 0.0
        %2577 = vmatprep.mubr.f32.mxu0 0.0
        %2578 = vmatmul.mubr.f32.gmra.mrb[0].mxu0 %v2508
        %v2579 = vpop.f32.mrb[0].mxu0
        %v2580 = vadd.f32 0.0, %v2579
        %v2581 = vpop.f32.mrb[0].mxu0
        %2582 = vmatprep.mubr.f32.mxu0 0.0
        %2583 = vmatmul.mubr.f32.gmra.mrb[0].mxu0 %v2511
        %v2584 = vpop.f32.mrb[0].mxu0
        %v2585 = vadd.f32 0.0, %v2584
        %v2586 = vpop.f32.mrb[0].mxu0
        %2587 = vdwg.mxu0
        %v2589 = vsel %vm1292, %v2484, 0
        %v2592 = vsel %vm1292, %v2483, 0
        %2594 = vmatprep.subr.mxu0 0.0
        %2595 = vmatpush1.msra.mxu0 %v2486
        %2596 = vmatprep.subr.mxu0 0.0
        %2597 = vmatpush1.msra.mxu0 %v2487
        %2598 = vmatprep.subr.mxu0 0.0
        %2599 = vmatpush1.msra.mxu0 %v2488
        %2600 = vmatprep.subr.mxu0 0.0
        %2601 = vmatpush1.msra.mxu0 %v2489
        %2602 = vmatprep.subr.mxu0 0.0
        %2603 = vmatpush1.msra.mxu0 %v2490
        %2604 = vmatprep.subr.mxu0 0.0
        %2605 = vmatpush1.msra.mxu0 %v2491
        %2606 = vmatprep.subr.mxu0 0.0
        %2607 = vmatpush1.msra.mxu0 %v2492
        %2608 = vmatprep.subr.mxu0 0.0
        %2609 = vmatpush1.msra.mxu0 %v2493
        %2610 = vmatprep.subr.mxu0 0.0
        %2611 = vmatpush1.msra.mxu0 %v2494
        %2612 = vmatprep.subr.mxu0 0.0
        %2613 = vmatpush1.msra.mxu0 %v2495
        %2614 = vmatprep.subr.mxu0 0.0
        %2615 = vmatpush1.msra.mxu0 0.0
        %2616 = vmatprep.subr.mxu0 0.0
        %2617 = vmatpush1.msra.mxu0 0.0
        %2618 = vmatprep.subr.mxu0 0.0
        %2619 = vmatpush1.msra.mxu0 0.0
        %2620 = vmatprep.subr.mxu0 0.0
        %2621 = vmatpush1.msra.mxu0 0.0
        %2622 = vmatprep.subr.mxu0 0.0
        %2623 = vmatpush1.msra.mxu0 0.0
        %2624 = vmatprep.subr.mxu0 0.0
        %2625 = vmatpush1.msra.mxu0 0.0
        %2626 = vmatprep.subr.mxu0 0.0
        %2627 = vmatpush1.msra.mxu0 0.0
        %2628 = vmatprep.subr.mxu0 0.0
        %2629 = vmatpush1.msra.mxu0 0.0
        %2630 = vmatprep.subr.mxu0 0.0
        %2631 = vmatpush1.msra.mxu0 0.0
        %2632 = vmatprep.subr.mxu0 0.0
        %2633 = vmatpush1.msra.mxu0 0.0
        %2634 = vmatprep.subr.mxu0 0.0
        %2635 = vmatpush1.msra.mxu0 0.0
        %2636 = vmatprep.subr.mxu0 0.0
        %2637 = vmatpush1.msra.mxu0 0.0
        %2638 = vmatprep.subr.mxu0 0.0
        %2639 = vmatpush1.msra.mxu0 0.0
        %2640 = vmatprep.subr.mxu0 0.0
        %2641 = vmatpush1.msra.mxu0 0.0
        %2642 = vmatprep.subr.mxu0 0.0
        %2643 = vmatpush1.msra.mxu0 0.0
        %2644 = vmatprep.subr.mxu0 0.0
        %2645 = vmatpush1.msra.mxu0 0.0
        %2646 = vmatprep.subr.mxu0 0.0
        %2647 = vmatpush1.msra.mxu0 0.0
        %2648 = vmatprep.subr.mxu0 0.0
        %2649 = vmatpush1.msra.mxu0 0.0
        %2650 = vmatprep.subr.mxu0 0.0
        %2651 = vmatpush1.msra.mxu0 0.0
        %2652 = vmatprep.subr.mxu0 0.0
        %2653 = vmatpush1.msra.mxu0 0.0
        %2654 = vmatprep.subr.mxu0 0.0
        %2655 = vmatpush1.msra.mxu0 0.0
        %2656 = vmatprep.subr.mxu0 0.0
        %2657 = vmatpush1.msra.mxu0 0.0
        %2658 = vmatprep.mubr.f32.mxu0 0.0
        %2659 = vmatmul.mubr.f32.gmra.mrb[0].mxu0 %v2589
        %v2660 = vpop.f32.mrb[0].mxu0
        %v2661 = vadd.f32 %v2580, %v2660
        %v2662 = vpop.f32.mrb[0].mxu0
        %2663 = vmatprep.mubr.f32.mxu0 0.0
        %2664 = vmatmul.mubr.f32.gmra.mrb[0].mxu0 %v2592
        %v2665 = vpop.f32.mrb[0].mxu0
        %v2666 = vadd.f32 %v2585, %v2665
        %v2667 = vpop.f32.mrb[0].mxu0
        %2668 = vdwg.mxu0
        %v2669 = vrot.slane %v2477, 1
        %v2670 = vrot.slane %v2478, 1
        %v2671 = vsel %vm806, %v2669, %v2670
        %v2672 = vsel %vm806, %v2670, %v2669
        %s2673 = scalar_lea.vmem [#allocation12], 880
        %v2674 = vld [vmem:[%s2673] sm:$0xff]
        %v2675 = vld [vmem:[%s2673 + $0x8] sm:$0xff]
        %v2676 = vld [vmem:[%s2673 + $0x10] sm:$0xff]
        %v2677 = vld [vmem:[%s2673 + $0x18] sm:$0xff]
        %v2678 = vld [vmem:[%s2673 + $0x20] sm:$0xff]
        %v2679 = vld [vmem:[%s2673 + $0x28] sm:$0xff]
        %v2680 = vld [vmem:[%s2673 + $0x30] sm:$0xff]
        %v2681 = vld [vmem:[%s2673 + $0x38] sm:$0xff]
        %v2682 = vld [vmem:[%s2673 + $0x40] sm:$0xff]
        %v2683 = vld [vmem:[%s2673 + $0x48] sm:$0xff]
        %v2685 = vsel %vm1292, %v2671, 0
        %v2688 = vsel %vm1292, %v2672, 0
        %2690 = vmatprep.subr.mxu0 0.0
        %2691 = vmatpush1.msra.mxu0 %v2674
        %2692 = vmatprep.subr.mxu0 0.0
        %2693 = vmatpush1.msra.mxu0 %v2675
        %2694 = vmatprep.subr.mxu0 0.0
        %2695 = vmatpush1.msra.mxu0 %v2676
        %2696 = vmatprep.subr.mxu0 0.0
        %2697 = vmatpush1.msra.mxu0 %v2677
        %2698 = vmatprep.subr.mxu0 0.0
        %2699 = vmatpush1.msra.mxu0 %v2678
        %2700 = vmatprep.subr.mxu0 0.0
        %2701 = vmatpush1.msra.mxu0 %v2679
        %2702 = vmatprep.subr.mxu0 0.0
        %2703 = vmatpush1.msra.mxu0 %v2680
        %2704 = vmatprep.subr.mxu0 0.0
        %2705 = vmatpush1.msra.mxu0 %v2681
        %2706 = vmatprep.subr.mxu0 0.0
        %2707 = vmatpush1.msra.mxu0 %v2682
        %2708 = vmatprep.subr.mxu0 0.0
        %2709 = vmatpush1.msra.mxu0 %v2683
        %2710 = vmatprep.subr.mxu0 0.0
        %2711 = vmatpush1.msra.mxu0 0.0
        %2712 = vmatprep.subr.mxu0 0.0
        %2713 = vmatpush1.msra.mxu0 0.0
        %2714 = vmatprep.subr.mxu0 0.0
        %2715 = vmatpush1.msra.mxu0 0.0
        %2716 = vmatprep.subr.mxu0 0.0
        %2717 = vmatpush1.msra.mxu0 0.0
        %2718 = vmatprep.subr.mxu0 0.0
        %2719 = vmatpush1.msra.mxu0 0.0
        %2720 = vmatprep.subr.mxu0 0.0
        %2721 = vmatpush1.msra.mxu0 0.0
        %2722 = vmatprep.subr.mxu0 0.0
        %2723 = vmatpush1.msra.mxu0 0.0
        %2724 = vmatprep.subr.mxu0 0.0
        %2725 = vmatpush1.msra.mxu0 0.0
        %2726 = vmatprep.subr.mxu0 0.0
        %2727 = vmatpush1.msra.mxu0 0.0
        %2728 = vmatprep.subr.mxu0 0.0
        %2729 = vmatpush1.msra.mxu0 0.0
        %2730 = vmatprep.subr.mxu0 0.0
        %2731 = vmatpush1.msra.mxu0 0.0
        %2732 = vmatprep.subr.mxu0 0.0
        %2733 = vmatpush1.msra.mxu0 0.0
        %2734 = vmatprep.subr.mxu0 0.0
        %2735 = vmatpush1.msra.mxu0 0.0
        %2736 = vmatprep.subr.mxu0 0.0
        %2737 = vmatpush1.msra.mxu0 0.0
        %2738 = vmatprep.subr.mxu0 0.0
        %2739 = vmatpush1.msra.mxu0 0.0
        %2740 = vmatprep.subr.mxu0 0.0
        %2741 = vmatpush1.msra.mxu0 0.0
        %2742 = vmatprep.subr.mxu0 0.0
        %2743 = vmatpush1.msra.mxu0 0.0
        %2744 = vmatprep.subr.mxu0 0.0
        %2745 = vmatpush1.msra.mxu0 0.0
        %2746 = vmatprep.subr.mxu0 0.0
        %2747 = vmatpush1.msra.mxu0 0.0
        %2748 = vmatprep.subr.mxu0 0.0
        %2749 = vmatpush1.msra.mxu0 0.0
        %2750 = vmatprep.subr.mxu0 0.0
        %2751 = vmatpush1.msra.mxu0 0.0
        %2752 = vmatprep.subr.mxu0 0.0
        %2753 = vmatpush1.msra.mxu0 0.0
        %2754 = vmatprep.mubr.f32.mxu0 0.0
        %2755 = vmatmul.mubr.f32.gmra.mrb[0].mxu0 %v2685
        %v2756 = vpop.f32.mrb[0].mxu0
        %v2757 = vadd.f32 0.0, %v2756
        %v2758 = vpop.f32.mrb[0].mxu0
        %2759 = vmatprep.mubr.f32.mxu0 0.0
        %2760 = vmatmul.mubr.f32.gmra.mrb[0].mxu0 %v2688
        %v2761 = vpop.f32.mrb[0].mxu0
        %v2762 = vadd.f32 0.0, %v2761
        %v2763 = vpop.f32.mrb[0].mxu0
        %2764 = vdwg.mxu0
        %v2765 = vadd.f32 %v2661, %v2757
        %v2766 = vadd.f32 %v2666, %v2762
        %v2768 = vlaneseq
        %v2769 = vshrl.u32 %v2768, 7
        %v2770 = vsub.s32 0, %v2769
        %v2771 = vrot.slane %v2480, %v2770
        %v2773 = vadd.f32 %v2765, %v2771
        %v2774 = vadd.f32 %v2766, %v2771
        %vm2775 = vcmp.gt.f32.partialorder %v2773, 0.0
        %vm2776 = vcmp.gt.f32.partialorder %v2774, 0.0
        %v2777 = vmul.f32 %v2773, 0.01
        %v2778 = vmul.f32 %v2774, 0.01
        %v2779 = vsel %vm2775, %v2773, %v2777
        %v2780 = vsel %vm2776, %v2774, %v2778
        %v2781 = vld [vmem:[#allocation15] sm:$0xff]
        %v2783 = vsel %vm1078, %v2781, 0
        %2785 = vmatprep.subr.mxu0 0.0
        %2786 = vmatpush1.msra.mxu0 %v2779
        %2787 = vmatprep.subr.mxu0 0.0
        %2788 = vmatpush1.msra.mxu0 %v2780
        %2789 = vmatprep.subr.mxu0 0.0
        %2790 = vmatpush1.msra.mxu0 0.0
        %2791 = vmatprep.subr.mxu0 0.0
        %2792 = vmatpush1.msra.mxu0 0.0
        %2793 = vmatprep.subr.mxu0 0.0
        %2794 = vmatpush1.msra.mxu0 0.0
        %2795 = vmatprep.subr.mxu0 0.0
        %2796 = vmatpush1.msra.mxu0 0.0
        %2797 = vmatprep.subr.mxu0 0.0
        %2798 = vmatpush1.msra.mxu0 0.0
        %2799 = vmatprep.subr.mxu0 0.0
        %2800 = vmatpush1.msra.mxu0 0.0
        %2801 = vmatprep.subr.mxu0 0.0
        %2802 = vmatpush1.msra.mxu0 0.0
        %2803 = vmatprep.subr.mxu0 0.0
        %2804 = vmatpush1.msra.mxu0 0.0
        %2805 = vmatprep.subr.mxu0 0.0
        %2806 = vmatpush1.msra.mxu0 0.0
        %2807 = vmatprep.subr.mxu0 0.0
        %2808 = vmatpush1.msra.mxu0 0.0
        %2809 = vmatprep.subr.mxu0 0.0
        %2810 = vmatpush1.msra.mxu0 0.0
        %2811 = vmatprep.subr.mxu0 0.0
        %2812 = vmatpush1.msra.mxu0 0.0
        %2813 = vmatprep.subr.mxu0 0.0
        %2814 = vmatpush1.msra.mxu0 0.0
        %2815 = vmatprep.subr.mxu0 0.0
        %2816 = vmatpush1.msra.mxu0 0.0
        %2817 = vmatprep.subr.mxu0 0.0
        %2818 = vmatpush1.msra.mxu0 0.0
        %2819 = vmatprep.subr.mxu0 0.0
        %2820 = vmatpush1.msra.mxu0 0.0
        %2821 = vmatprep.subr.mxu0 0.0
        %2822 = vmatpush1.msra.mxu0 0.0
        %2823 = vmatprep.subr.mxu0 0.0
        %2824 = vmatpush1.msra.mxu0 0.0
        %2825 = vmatprep.subr.mxu0 0.0
        %2826 = vmatpush1.msra.mxu0 0.0
        %2827 = vmatprep.subr.mxu0 0.0
        %2828 = vmatpush1.msra.mxu0 0.0
        %2829 = vmatprep.subr.mxu0 0.0
        %2830 = vmatpush1.msra.mxu0 0.0
        %2831 = vmatprep.subr.mxu0 0.0
        %2832 = vmatpush1.msra.mxu0 0.0
        %2833 = vmatprep.subr.mxu0 0.0
        %2834 = vmatpush1.msra.mxu0 0.0
        %2835 = vmatprep.subr.mxu0 0.0
        %2836 = vmatpush1.msra.mxu0 0.0
        %2837 = vmatprep.subr.mxu0 0.0
        %2838 = vmatpush1.msra.mxu0 0.0
        %2839 = vmatprep.subr.mxu0 0.0
        %2840 = vmatpush1.msra.mxu0 0.0
        %2841 = vmatprep.subr.mxu0 0.0
        %2842 = vmatpush1.msra.mxu0 0.0
        %2843 = vmatprep.subr.mxu0 0.0
        %2844 = vmatpush1.msra.mxu0 0.0
        %2845 = vmatprep.subr.mxu0 0.0
        %2846 = vmatpush1.msra.mxu0 0.0
        %2847 = vmatprep.subr.mxu0 0.0
        %2848 = vmatpush1.msra.mxu0 0.0
        %2849 = vmatprep.mubr.f32.mxu0 0.0
        %2850 = vmatmul.mubr.f32.gmra.mrb[0].mxu0 %v2783
        %v2851 = vpop.f32.mrb[0].mxu0
        %v2852 = vadd.f32 0.0, %v2851
        %v2853 = vpop.f32.mrb[0].mxu0
        %2854 = vdwg.mxu0
        %v2855 = vld [vmem:[%s11] sm:$0xff]
        %v2856 = vld [vmem:[%s11 + $0x8] sm:$0xff]
        %v2857 = vld [vmem:[%s11 + $0x10] sm:$0xff]
        %v2858 = vld [vmem:[%s11 + $0x18] sm:$0xff]
        %v2859 = vld [vmem:[%s11 + $0x20] sm:$0xff]
        %v2860 = vld [vmem:[%s11 + $0x28] sm:$0xff]
        %v2861 = vld [vmem:[%s11 + $0x30] sm:$0xff]
        %v2862 = vld [vmem:[%s11 + $0x38] sm:$0xff]
        %v2863 = vld [vmem:[%s11 + $0x40] sm:$0xff]
        %v2864 = vld [vmem:[%s11 + $0x48] sm:$0xff]
        %v2865 = vld [vmem:[#allocation16] sm:$0x1]
        %v2867 = vlaneseq
        %v2868 = vshrl.u32 %v2867, 7
        %v2869 = vsub.s32 0, %v2868
        %v2870 = vrot.slane %v2865, %v2869
        %v2873 = vsel %vm1292, %v2852, 0
        %2875 = vmatprep.subr.mxu0 0.0
        %2876 = vmatpush1.msra.mxu0 %v2855
        %2877 = vmatprep.subr.mxu0 0.0
        %2878 = vmatpush1.msra.mxu0 %v2856
        %2879 = vmatprep.subr.mxu0 0.0
        %2880 = vmatpush1.msra.mxu0 %v2857
        %2881 = vmatprep.subr.mxu0 0.0
        %2882 = vmatpush1.msra.mxu0 %v2858
        %2883 = vmatprep.subr.mxu0 0.0
        %2884 = vmatpush1.msra.mxu0 %v2859
        %2885 = vmatprep.subr.mxu0 0.0
        %2886 = vmatpush1.msra.mxu0 %v2860
        %2887 = vmatprep.subr.mxu0 0.0
        %2888 = vmatpush1.msra.mxu0 %v2861
        %2889 = vmatprep.subr.mxu0 0.0
        %2890 = vmatpush1.msra.mxu0 %v2862
        %2891 = vmatprep.subr.mxu0 0.0
        %2892 = vmatpush1.msra.mxu0 %v2863
        %2893 = vmatprep.subr.mxu0 0.0
        %2894 = vmatpush1.msra.mxu0 %v2864
        %2895 = vmatprep.subr.mxu0 0.0
        %2896 = vmatpush1.msra.mxu0 0.0
        %2897 = vmatprep.subr.mxu0 0.0
        %2898 = vmatpush1.msra.mxu0 0.0
        %2899 = vmatprep.subr.mxu0 0.0
        %2900 = vmatpush1.msra.mxu0 0.0
        %2901 = vmatprep.subr.mxu0 0.0
        %2902 = vmatpush1.msra.mxu0 0.0
        %2903 = vmatprep.subr.mxu0 0.0
        %2904 = vmatpush1.msra.mxu0 0.0
        %2905 = vmatprep.subr.mxu0 0.0
        %2906 = vmatpush1.msra.mxu0 0.0
        %2907 = vmatprep.subr.mxu0 0.0
        %2908 = vmatpush1.msra.mxu0 0.0
        %2909 = vmatprep.subr.mxu0 0.0
        %2910 = vmatpush1.msra.mxu0 0.0
        %2911 = vmatprep.subr.mxu0 0.0
        %2912 = vmatpush1.msra.mxu0 0.0
        %2913 = vmatprep.subr.mxu0 0.0
        %2914 = vmatpush1.msra.mxu0 0.0
        %2915 = vmatprep.subr.mxu0 0.0
        %2916 = vmatpush1.msra.mxu0 0.0
        %2917 = vmatprep.subr.mxu0 0.0
        %2918 = vmatpush1.msra.mxu0 0.0
        %2919 = vmatprep.subr.mxu0 0.0
        %2920 = vmatpush1.msra.mxu0 0.0
        %2921 = vmatprep.subr.mxu0 0.0
        %2922 = vmatpush1.msra.mxu0 0.0
        %2923 = vmatprep.subr.mxu0 0.0
        %2924 = vmatpush1.msra.mxu0 0.0
        %2925 = vmatprep.subr.mxu0 0.0
        %2926 = vmatpush1.msra.mxu0 0.0
        %2927 = vmatprep.subr.mxu0 0.0
        %2928 = vmatpush1.msra.mxu0 0.0
        %2929 = vmatprep.subr.mxu0 0.0
        %2930 = vmatpush1.msra.mxu0 0.0
        %2931 = vmatprep.subr.mxu0 0.0
        %2932 = vmatpush1.msra.mxu0 0.0
        %2933 = vmatprep.subr.mxu0 0.0
        %2934 = vmatpush1.msra.mxu0 0.0
        %2935 = vmatprep.subr.mxu0 0.0
        %2936 = vmatpush1.msra.mxu0 0.0
        %2937 = vmatprep.subr.mxu0 0.0
        %2938 = vmatpush1.msra.mxu0 0.0
        %2939 = vmatprep.mubr.f32.mxu0 0.0
        %2940 = vmatmul.mubr.f32.gmra.mrb[0].mxu0 %v2873
        %v2941 = vpop.f32.mrb[0].mxu0
        %v2942 = vadd.f32 %v2870, %v2941
        %v2943 = vpop.f32.mrb[0].mxu0
        %2944 = vdwg.mxu0
        %vm2945 = vcmp.gt.f32.partialorder %v2942, 0.0
        %v2946 = vmul.f32 %v2942, 0.01
        %v2947 = vsel %vm2945, %v2942, %v2946
        %vm2948 = vcmask 261120
        %2949 = vst.msk [vmem:[%s578] sm:$0xff] %vm2948, %v2947
        %p2950 = scmp.lt.s32.totalorder %s30, 1
        %s2951 = scalar_select %p2950, %s30, 1
        %s2952 = smul.addr %s2951, 8
        %s2953 = scalar_lea.vmem %s13, %s2952
        // Predicated region
        $region113: #{arcnn_forward.2} parent=71 // pred_check
          %p2954 = pneg %p326
        $region114: #{arcnn_forward.2} parent=71 // pred_check_branch
          %2956 = sbr.rel (%p2954) target = $region116
        $region115: #{arcnn_forward.2} parent=71 // pred_region
          _
        $region116: #{arcnn_forward.2} parent=71 // pred_fallthru
          _
      $region72: #{arcnn_forward.2} parent=5 // pred_fallthru
        _
      %p2957 = scmp.le.s32.totalorder 2, %s25
      // Predicated region
      $region117: #{arcnn_forward.2} parent=5 // pred_check
        %p2958 = pneg %p2957
      $region118: #{arcnn_forward.2} parent=5 // pred_check_branch
        %2960 = sbr.rel (%p2958) target = $region120
      $region119: #{arcnn_forward.2} parent=5 // pred_region
        %s2961 = ssub.s32 %s25, 2
        // Predicated region
        $region121: #{arcnn_forward.2} parent=119 // pred_check
          %p2962 = pneg %p332
        $region122: #{arcnn_forward.2} parent=119 // pred_check_branch
          %2964 = sbr.rel (%p2962) target = $region124
        $region123: #{arcnn_forward.2} parent=119 // pred_region
          %p2965 = scmp.lt.s32.totalorder %s31, 1
          %s2966 = scalar_select %p2965, %s31, 1
          %s2967 = smul.addr %s2966, 8
          %s2968 = scalar_lea.vmem %s13, %s2967
        $region124: #{arcnn_forward.2} parent=119 // pred_fallthru
          _
      $region120: #{arcnn_forward.2} parent=5 // pred_fallthru
        _
    $region6: #{arcnn_forward.2} parent=1 // loop_footer
      %s29 = sadd.s32 1, %s25
    $region7: #{arcnn_forward.2} parent=1 // loop_footer_branch
      %24 = sbr.rel target = $region3
    $region8: #{arcnn_forward.2} parent=1 // loop_exit
      _
    %2969 = vsyncpa [#allocation3], 1
    %s2970 = scalar_lea.sflag [#allocation3], 1
    %2971 = vsyncpa %s2970, 1
    %2972 = vsyncpa [#allocation5], 1
    %2973 = vsyncpa [#allocation8], 1
    %2974 = vsyncpa [#allocation11], 1
    %2975 = vsyncpa [#allocation14], 1
    %2976 = vsyncpa [#allocation17], 1

</llo_original>
